<compile_context>
chip_gen: v5e
topology: v5e:2x2
jax: 0.10.0
libtpu: 0.0.40
codegen_flags: <defaults>
</compile_context>

<pallas_src>
import jax
import jax.numpy as jnp
from jax.experimental import pallas as pl
from jax.experimental.pallas import tpu as pltpu

BASIC_LETTERS = "MRAagbpyw"          # len == 9
HEIGHT = 13
WIDTH = 6
MULTIPLES = 10
NARROW = 6
EMB_N = 128 - 32                      # 96 rows
EMB_D = 128 - 32                      # 96 dims

IN_DIM = len(BASIC_LETTERS) * WIDTH * HEIGHT + EMB_D   # 702 + 96 = 798
HID = MULTIPLES * WIDTH * HEIGHT                       # 780
NAR = NARROW * WIDTH * HEIGHT                          # 468
OUT_DIM = WIDTH * HEIGHT                               # 78

# (in, out) per Linear layer of self.layer
LAYER_DIMS = [
    (IN_DIM, HID),
    (HID, HID),
    (HID, NAR),
    (NAR, HID),
    (HID, HID),
    (HID, OUT_DIM),
]


def _round_up(x, m):
    return ((x + m - 1) // m) * m


# Padded feature widths: multiples of 8 only (sublane alignment on the weight's
# contraction dim); the final output is padded to 128 for lane-dense stores.
_PADDED = [_round_up(IN_DIM, 8)]                       # 800
for _li, (_din, _dout) in enumerate(LAYER_DIMS):
    if _li == len(LAYER_DIMS) - 1:
        _PADDED.append(_round_up(_dout, 128))          # 128
    else:
        _PADDED.append(_round_up(_dout, 8))            # 784 / 472 / ...
PAD_DIMS = list(zip(_PADDED[:-1], _PADDED[1:]))        # padded (din, dout) per layer
IN_PAD = _PADDED[0]
OUT_PAD = _PADDED[-1]


def mlp_kernel(x_ref, *refs):
    """Fused MLP: 5x (bf16 matmul + bias + relu) + final matmul + bias + sigmoid."""
    *wb_refs, o_ref = refs
    n_layers = len(wb_refs) // 2
    h = x_ref[...]                                     # bf16 (TB, IN_PAD)
    for i in range(n_layers):
        w = wb_refs[2 * i][...]                        # bf16 (din_p, dout_p)
        b = wb_refs[2 * i + 1][...]                    # f32  (1, dout_p)
        acc = jnp.dot(h, w, preferred_element_type=jnp.float32) + b
        if i < n_layers - 1:
            # ReLU (Dropout p=0.2 is identity at inference); back to bf16 for the MXU.
            h = jnp.maximum(acc, 0.0).astype(jnp.bfloat16)
        else:
            # sigmoid; divide routed to the EUP slot.
            o_ref[...] = pl.reciprocal(1.0 + jnp.exp(-acc), approx=True)


def init_params(key):
    """Deterministic synthetic params matching the PyTorch module's shapes (f32)."""
    keys = jax.random.split(key, 1 + 2 * len(LAYER_DIMS))
    params = {}
    params["emb"] = jax.random.normal(keys[0], (EMB_N, EMB_D), jnp.float32)
    layers = []
    for li, (din, dout) in enumerate(LAYER_DIMS):
        bound = 1.0 / jnp.sqrt(jnp.float32(din))
        w = jax.random.uniform(keys[1 + 2 * li], (din, dout), jnp.float32, -bound, bound)
        b = jax.random.uniform(keys[2 + 2 * li], (dout,), jnp.float32, -bound, bound)
        layers.append((w, b))
    params["layers"] = layers
    return params


def pack_params(params):
    """Pad (to multiples of 8 / lane-dense final) and cast to bf16 ONCE, outside the jit."""
    flat = []
    for (w, b), (din, dout), (dip, dop) in zip(params["layers"], LAYER_DIMS, PAD_DIMS):
        wp = jnp.zeros((dip, dop), jnp.bfloat16).at[:din, :dout].set(w.astype(jnp.bfloat16))
        bp = jnp.zeros((1, dop), jnp.float32).at[0, :dout].set(b)
        flat += [wp, bp]
    return tuple(jax.device_put(a) for a in flat)


@jax.jit
def convnet_forward(code, inputs, emb_table, *packed_wb):
    """code: int32 (B,), inputs: float32 (B, 9, 13, 6) -> (B, 13, 6)."""
    # Glue in plain JAX: embedding gather, reshape, concat (tiny vs. weight traffic).
    # TODO(synk): fold the gather/concat into the kernel via PrefetchScalarGridSpec later.
    emb = emb_table[code]                                          # (B, 96)
    flat = inputs.reshape(-1, len(BASIC_LETTERS) * WIDTH * HEIGHT)  # (B, 702)
    x = jnp.concatenate([emb, flat], axis=1)                       # (B, 798)

    B = x.shape[0]
    if B <= 256:
        tb = _round_up(max(B, 8), 8)
        bp = tb
    else:
        tb = 256
        bp = _round_up(B, tb)

    # Only the (small) activation gets padded per call; weights arrive pre-packed.
    xp = jnp.zeros((bp, IN_PAD), jnp.bfloat16).at[:B, :IN_DIM].set(x.astype(jnp.bfloat16))

    in_specs = [pl.BlockSpec((tb, IN_PAD), lambda i: (i, 0))]
    for a in packed_wb:
        # Full-array blocks pinned to (0, 0): weights/biases stay VMEM-resident
        # across all batch tiles (single DMA per call).
        in_specs.append(pl.BlockSpec(a.shape, lambda i: (0, 0)))

    out = pl.pallas_call(
        mlp_kernel,
        out_shape=jax.ShapeDtypeStruct((bp, OUT_PAD), jnp.float32),
        grid=(bp // tb,),
        in_specs=in_specs,
        out_specs=pl.BlockSpec((tb, OUT_PAD), lambda i: (i, 0)),
        compiler_params=pltpu.CompilerParams(
            dimension_semantics=("parallel",),
            vmem_limit_bytes=32 << 20,
        ),
    )(xp, *packed_wb)

    return out[:B, :OUT_DIM].reshape(-1, HEIGHT, WIDTH)


if __name__ == "__main__":
    key = jax.random.PRNGKey(0)
    k_params, k_code, k_in = jax.random.split(key, 3)

    params = init_params(k_params)
    packed = pack_params(params)          # one-time pad + bf16 cast, outside the jit

    B = 2
    code = jax.random.randint(k_code, (B,), 0, EMB_N, dtype=jnp.int32)
    inputs = jax.random.normal(k_in, (B, len(BASIC_LETTERS), HEIGHT, WIDTH), jnp.float32)

    out = convnet_forward(code, inputs, params["emb"], *packed)
    out = jax.block_until_ready(out)

    # Pure-JAX f32 reference of the same math (kernel uses bf16 weights/activations
    # with f32 accumulation, so tolerance is loosened accordingly).
    def ref_forward(code, inputs):
        h = jnp.concatenate(
            [params["emb"][code], inputs.reshape(-1, len(BASIC_LETTERS) * WIDTH * HEIGHT)],
            axis=1,
        )
        for i, (w, b) in enumerate(params["layers"]):
            h = h @ w + b
            if i < len(params["layers"]) - 1:
                h = jnp.maximum(h, 0.0)
        return jax.nn.sigmoid(h).reshape(-1, HEIGHT, WIDTH)

    ref = ref_forward(code, inputs)
    assert out.shape == (B, HEIGHT, WIDTH), out.shape
    max_err = float(jnp.max(jnp.abs(out - ref)))
    assert max_err < 2e-2, max_err
    print("KERNEL_OK")
</pallas_src>

<mosaic_0001>
module attributes {stable_mosaic.version = 11 : i64} {
  func.func @mlp_kernel(%arg0: i32, %arg1: memref<8x800xbf16, #tpu.memory_space<vmem>>, %arg2: memref<800x784xbf16, #tpu.memory_space<vmem>>, %arg3: memref<1x784xf32, #tpu.memory_space<vmem>>, %arg4: memref<784x784xbf16, #tpu.memory_space<vmem>>, %arg5: memref<1x784xf32, #tpu.memory_space<vmem>>, %arg6: memref<784x472xbf16, #tpu.memory_space<vmem>>, %arg7: memref<1x472xf32, #tpu.memory_space<vmem>>, %arg8: memref<472x784xbf16, #tpu.memory_space<vmem>>, %arg9: memref<1x784xf32, #tpu.memory_space<vmem>>, %arg10: memref<784x784xbf16, #tpu.memory_space<vmem>>, %arg11: memref<1x784xf32, #tpu.memory_space<vmem>>, %arg12: memref<784x128xbf16, #tpu.memory_space<vmem>>, %arg13: memref<1x128xf32, #tpu.memory_space<vmem>>, %arg14: memref<8x128xf32, #tpu.memory_space<vmem>>) attributes {dimension_semantics = [#tpu.dimension_semantics<parallel>], iteration_bounds = array<i64: 1>, scalar_prefetch = 0 : i64, scratch_operands = 0 : i64, tpu.core_type = #tpu.core_type<tc>, window_params = [{transform_indices = @transform_0, window_bounds = array<i64: 8, 800>}, {pipeline_mode = #tpu.pipeline_mode<synchronous>, transform_indices = @transform_1, window_bounds = array<i64: 800, 784>}, {pipeline_mode = #tpu.pipeline_mode<synchronous>, transform_indices = @transform_2, window_bounds = array<i64: 1, 784>}, {pipeline_mode = #tpu.pipeline_mode<synchronous>, transform_indices = @transform_3, window_bounds = array<i64: 784, 784>}, {pipeline_mode = #tpu.pipeline_mode<synchronous>, transform_indices = @transform_4, window_bounds = array<i64: 1, 784>}, {pipeline_mode = #tpu.pipeline_mode<synchronous>, transform_indices = @transform_5, window_bounds = array<i64: 784, 472>}, {pipeline_mode = #tpu.pipeline_mode<synchronous>, transform_indices = @transform_6, window_bounds = array<i64: 1, 472>}, {pipeline_mode = #tpu.pipeline_mode<synchronous>, transform_indices = @transform_7, window_bounds = array<i64: 472, 784>}, {pipeline_mode = #tpu.pipeline_mode<synchronous>, transform_indices = @transform_8, window_bounds = array<i64: 1, 784>}, {pipeline_mode = #tpu.pipeline_mode<synchronous>, transform_indices = @transform_9, window_bounds = array<i64: 784, 784>}, {pipeline_mode = #tpu.pipeline_mode<synchronous>, transform_indices = @transform_10, window_bounds = array<i64: 1, 784>}, {pipeline_mode = #tpu.pipeline_mode<synchronous>, transform_indices = @transform_11, window_bounds = array<i64: 784, 128>}, {pipeline_mode = #tpu.pipeline_mode<synchronous>, transform_indices = @transform_12, window_bounds = array<i64: 1, 128>}, {transform_indices = @transform_13, window_bounds = array<i64: 8, 128>}]} {
    %c0 = arith.constant 0 : index
    %c0_0 = arith.constant 0 : index
    %0 = vector.load %arg1[%c0, %c0_0] : memref<8x800xbf16, #tpu.memory_space<vmem>>, vector<8x800xbf16>
    %c0_1 = arith.constant 0 : index
    %c0_2 = arith.constant 0 : index
    %1 = vector.load %arg2[%c0_1, %c0_2] : memref<800x784xbf16, #tpu.memory_space<vmem>>, vector<800x784xbf16>
    %c0_3 = arith.constant 0 : index
    %c0_4 = arith.constant 0 : index
    %2 = vector.load %arg3[%c0_3, %c0_4] : memref<1x784xf32, #tpu.memory_space<vmem>>, vector<1x784xf32>
    %cst = arith.constant dense<0.000000e+00> : vector<8x784xf32>
    %3 = tpu.matmul %0, %1, %cst {dimension_numbers = #tpu.dot_dimension_numbers<[1], [0], [0], [1], [0, 0, 1, 1], [], []>} : vector<8x800xbf16>, vector<800x784xbf16>, vector<8x784xf32> -> vector<8x784xf32>
    %4 = vector.broadcast %2 : vector<1x784xf32> to vector<8x784xf32>
    %5 = arith.addf %3, %4 : vector<8x784xf32>
    %cst_5 = arith.constant 0.000000e+00 : f32
    %6 = vector.broadcast %cst_5 : f32 to vector<8x784xf32>
    %7 = arith.maximumf %5, %6 : vector<8x784xf32>
    %8 = arith.truncf %7 : vector<8x784xf32> to vector<8x784xbf16>
    %c0_6 = arith.constant 0 : index
    %c0_7 = arith.constant 0 : index
    %9 = vector.load %arg4[%c0_6, %c0_7] : memref<784x784xbf16, #tpu.memory_space<vmem>>, vector<784x784xbf16>
    %c0_8 = arith.constant 0 : index
    %c0_9 = arith.constant 0 : index
    %10 = vector.load %arg5[%c0_8, %c0_9] : memref<1x784xf32, #tpu.memory_space<vmem>>, vector<1x784xf32>
    %cst_10 = arith.constant dense<0.000000e+00> : vector<8x784xf32>
    %11 = tpu.matmul %8, %9, %cst_10 {dimension_numbers = #tpu.dot_dimension_numbers<[1], [0], [0], [1], [0, 0, 1, 1], [], []>} : vector<8x784xbf16>, vector<784x784xbf16>, vector<8x784xf32> -> vector<8x784xf32>
    %12 = vector.broadcast %10 : vector<1x784xf32> to vector<8x784xf32>
    %13 = arith.addf %11, %12 : vector<8x784xf32>
    %cst_11 = arith.constant 0.000000e+00 : f32
    %14 = vector.broadcast %cst_11 : f32 to vector<8x784xf32>
    %15 = arith.maximumf %13, %14 : vector<8x784xf32>
    %16 = arith.truncf %15 : vector<8x784xf32> to vector<8x784xbf16>
    %c0_12 = arith.constant 0 : index
    %c0_13 = arith.constant 0 : index
    %17 = vector.load %arg6[%c0_12, %c0_13] : memref<784x472xbf16, #tpu.memory_space<vmem>>, vector<784x472xbf16>
    %c0_14 = arith.constant 0 : index
    %c0_15 = arith.constant 0 : index
    %18 = vector.load %arg7[%c0_14, %c0_15] : memref<1x472xf32, #tpu.memory_space<vmem>>, vector<1x472xf32>
    %cst_16 = arith.constant dense<0.000000e+00> : vector<8x472xf32>
    %19 = tpu.matmul %16, %17, %cst_16 {dimension_numbers = #tpu.dot_dimension_numbers<[1], [0], [0], [1], [0, 0, 1, 1], [], []>} : vector<8x784xbf16>, vector<784x472xbf16>, vector<8x472xf32> -> vector<8x472xf32>
    %20 = vector.broadcast %18 : vector<1x472xf32> to vector<8x472xf32>
    %21 = arith.addf %19, %20 : vector<8x472xf32>
    %cst_17 = arith.constant 0.000000e+00 : f32
    %22 = vector.broadcast %cst_17 : f32 to vector<8x472xf32>
    %23 = arith.maximumf %21, %22 : vector<8x472xf32>
    %24 = arith.truncf %23 : vector<8x472xf32> to vector<8x472xbf16>
    %c0_18 = arith.constant 0 : index
    %c0_19 = arith.constant 0 : index
    %25 = vector.load %arg8[%c0_18, %c0_19] : memref<472x784xbf16, #tpu.memory_space<vmem>>, vector<472x784xbf16>
    %c0_20 = arith.constant 0 : index
    %c0_21 = arith.constant 0 : index
    %26 = vector.load %arg9[%c0_20, %c0_21] : memref<1x784xf32, #tpu.memory_space<vmem>>, vector<1x784xf32>
    %cst_22 = arith.constant dense<0.000000e+00> : vector<8x784xf32>
    %27 = tpu.matmul %24, %25, %cst_22 {dimension_numbers = #tpu.dot_dimension_numbers<[1], [0], [0], [1], [0, 0, 1, 1], [], []>} : vector<8x472xbf16>, vector<472x784xbf16>, vector<8x784xf32> -> vector<8x784xf32>
    %28 = vector.broadcast %26 : vector<1x784xf32> to vector<8x784xf32>
    %29 = arith.addf %27, %28 : vector<8x784xf32>
    %cst_23 = arith.constant 0.000000e+00 : f32
    %30 = vector.broadcast %cst_23 : f32 to vector<8x784xf32>
    %31 = arith.maximumf %29, %30 : vector<8x784xf32>
    %32 = arith.truncf %31 : vector<8x784xf32> to vector<8x784xbf16>
    %c0_24 = arith.constant 0 : index
    %c0_25 = arith.constant 0 : index
    %33 = vector.load %arg10[%c0_24, %c0_25] : memref<784x784xbf16, #tpu.memory_space<vmem>>, vector<784x784xbf16>
    %c0_26 = arith.constant 0 : index
    %c0_27 = arith.constant 0 : index
    %34 = vector.load %arg11[%c0_26, %c0_27] : memref<1x784xf32, #tpu.memory_space<vmem>>, vector<1x784xf32>
    %cst_28 = arith.constant dense<0.000000e+00> : vector<8x784xf32>
    %35 = tpu.matmul %32, %33, %cst_28 {dimension_numbers = #tpu.dot_dimension_numbers<[1], [0], [0], [1], [0, 0, 1, 1], [], []>} : vector<8x784xbf16>, vector<784x784xbf16>, vector<8x784xf32> -> vector<8x784xf32>
    %36 = vector.broadcast %34 : vector<1x784xf32> to vector<8x784xf32>
    %37 = arith.addf %35, %36 : vector<8x784xf32>
    %cst_29 = arith.constant 0.000000e+00 : f32
    %38 = vector.broadcast %cst_29 : f32 to vector<8x784xf32>
    %39 = arith.maximumf %37, %38 : vector<8x784xf32>
    %40 = arith.truncf %39 : vector<8x784xf32> to vector<8x784xbf16>
    %c0_30 = arith.constant 0 : index
    %c0_31 = arith.constant 0 : index
    %41 = vector.load %arg12[%c0_30, %c0_31] : memref<784x128xbf16, #tpu.memory_space<vmem>>, vector<784x128xbf16>
    %c0_32 = arith.constant 0 : index
    %c0_33 = arith.constant 0 : index
    %42 = vector.load %arg13[%c0_32, %c0_33] : memref<1x128xf32, #tpu.memory_space<vmem>>, vector<1x128xf32>
    %cst_34 = arith.constant dense<0.000000e+00> : vector<8x128xf32>
    %43 = tpu.matmul %40, %41, %cst_34 {dimension_numbers = #tpu.dot_dimension_numbers<[1], [0], [0], [1], [0, 0, 1, 1], [], []>} : vector<8x784xbf16>, vector<784x128xbf16>, vector<8x128xf32> -> vector<8x128xf32>
    %44 = vector.broadcast %42 : vector<1x128xf32> to vector<8x128xf32>
    %45 = arith.addf %43, %44 : vector<8x128xf32>
    %cst_35 = arith.constant 0.000000e+00 : f32
    %46 = vector.broadcast %cst_35 : f32 to vector<8x128xf32>
    %47 = arith.subf %46, %45 : vector<8x128xf32>
    %48 = math.exp %47 : vector<8x128xf32>
    %cst_36 = arith.constant 1.000000e+00 : f32
    %49 = vector.broadcast %cst_36 : f32 to vector<8x128xf32>
    %50 = arith.addf %49, %48 : vector<8x128xf32>
    %51 = tpu.reciprocal %50 {approx = true} : vector<8x128xf32> -> vector<8x128xf32>
    %c0_37 = arith.constant 0 : index
    %c0_38 = arith.constant 0 : index
    %52 = vector.load %arg14[%c0_37, %c0_38] : memref<8x128xf32, #tpu.memory_space<vmem>>, vector<8x128xf32>
    tpu.vector_store %arg14[%c0_37, %c0_38], %51 {strides = array<i32>} : memref<8x128xf32, #tpu.memory_space<vmem>>, vector<8x128xf32>,
    return
  }
  func.func @transform_0(%arg0: i32) -> (i32, i32) {
    %c0_i32 = arith.constant 0 : i32
    %c0_i32_0 = arith.constant 0 : i32
    return %arg0, %c0_i32 : i32, i32
  }
  func.func @transform_1(%arg0: i32) -> (i32, i32) {
    %c0_i32 = arith.constant 0 : i32
    %c0_i32_0 = arith.constant 0 : i32
    %c0_i32_1 = arith.constant 0 : i32
    return %c0_i32, %c0_i32_0 : i32, i32
  }
  func.func @transform_2(%arg0: i32) -> (i32, i32) {
    %c0_i32 = arith.constant 0 : i32
    %c0_i32_0 = arith.constant 0 : i32
    %c0_i32_1 = arith.constant 0 : i32
    return %c0_i32, %c0_i32_0 : i32, i32
  }
  func.func @transform_3(%arg0: i32) -> (i32, i32) {
    %c0_i32 = arith.constant 0 : i32
    %c0_i32_0 = arith.constant 0 : i32
    %c0_i32_1 = arith.constant 0 : i32
    return %c0_i32, %c0_i32_0 : i32, i32
  }
  func.func @transform_4(%arg0: i32) -> (i32, i32) {
    %c0_i32 = arith.constant 0 : i32
    %c0_i32_0 = arith.constant 0 : i32
    %c0_i32_1 = arith.constant 0 : i32
    return %c0_i32, %c0_i32_0 : i32, i32
  }
  func.func @transform_5(%arg0: i32) -> (i32, i32) {
    %c0_i32 = arith.constant 0 : i32
    %c0_i32_0 = arith.constant 0 : i32
    %c0_i32_1 = arith.constant 0 : i32
    return %c0_i32, %c0_i32_0 : i32, i32
  }
  func.func @transform_6(%arg0: i32) -> (i32, i32) {
    %c0_i32 = arith.constant 0 : i32
    %c0_i32_0 = arith.constant 0 : i32
    %c0_i32_1 = arith.constant 0 : i32
    return %c0_i32, %c0_i32_0 : i32, i32
  }
  func.func @transform_7(%arg0: i32) -> (i32, i32) {
    %c0_i32 = arith.constant 0 : i32
    %c0_i32_0 = arith.constant 0 : i32
    %c0_i32_1 = arith.constant 0 : i32
    return %c0_i32, %c0_i32_0 : i32, i32
  }
  func.func @transform_8(%arg0: i32) -> (i32, i32) {
    %c0_i32 = arith.constant 0 : i32
    %c0_i32_0 = arith.constant 0 : i32
    %c0_i32_1 = arith.constant 0 : i32
    return %c0_i32, %c0_i32_0 : i32, i32
  }
  func.func @transform_9(%arg0: i32) -> (i32, i32) {
    %c0_i32 = arith.constant 0 : i32
    %c0_i32_0 = arith.constant 0 : i32
    %c0_i32_1 = arith.constant 0 : i32
    return %c0_i32, %c0_i32_0 : i32, i32
  }
  func.func @transform_10(%arg0: i32) -> (i32, i32) {
    %c0_i32 = arith.constant 0 : i32
    %c0_i32_0 = arith.constant 0 : i32
    %c0_i32_1 = arith.constant 0 : i32
    return %c0_i32, %c0_i32_0 : i32, i32
  }
  func.func @transform_11(%arg0: i32) -> (i32, i32) {
    %c0_i32 = arith.constant 0 : i32
    %c0_i32_0 = arith.constant 0 : i32
    %c0_i32_1 = arith.constant 0 : i32
    return %c0_i32, %c0_i32_0 : i32, i32
  }
  func.func @transform_12(%arg0: i32) -> (i32, i32) {
    %c0_i32 = arith.constant 0 : i32
    %c0_i32_0 = arith.constant 0 : i32
    %c0_i32_1 = arith.constant 0 : i32
    return %c0_i32, %c0_i32_0 : i32, i32
  }
  func.func @transform_13(%arg0: i32) -> (i32, i32) {
    %c0_i32 = arith.constant 0 : i32
    %c0_i32_0 = arith.constant 0 : i32
    return %arg0, %c0_i32 : i32, i32
  }
}

</mosaic_0001>

<llo_original>
// kernel: convnet_forward.1
$region0: #{convnet_forward.1}
  #allocation0 [shape = 'u32[]', space=smem, size = 0x4, offset = 0x4, fixed_abs, tag = 'smem constant byte address 0x4 - core index']
  #allocation1 [shape = 'u32[72,128]{1,0:T(1,128)}', space=vmem, size = 0x9000, scoped, tag = 'internal scratch']
  %s0 = inlined_call_operand.vmem [shape: bf16[8,800], index: 0, kind: input, shape index: {}]
  %s1 = inlined_call_operand.vmem [shape: bf16[800,784], index: 1, kind: input, shape index: {}]
  %s2 = inlined_call_operand.vmem [shape: f32[1,784], index: 2, kind: input, shape index: {}]
  %s3 = inlined_call_operand.vmem [shape: bf16[784,784], index: 3, kind: input, shape index: {}]
  %s4 = inlined_call_operand.vmem [shape: f32[1,784], index: 4, kind: input, shape index: {}]
  %s5 = inlined_call_operand.hbm [shape: bf16[784,472], index: 5, kind: input, shape index: {}]
  %s6 = inlined_call_operand.vmem [shape: f32[1,472], index: 6, kind: input, shape index: {}]
  %s7 = inlined_call_operand.vmem [shape: bf16[472,784], index: 7, kind: input, shape index: {}]
  %s8 = inlined_call_operand.vmem [shape: f32[1,784], index: 8, kind: input, shape index: {}]
  %s9 = inlined_call_operand.vmem [shape: bf16[784,784], index: 9, kind: input, shape index: {}]
  %s10 = inlined_call_operand.vmem [shape: f32[1,784], index: 10, kind: input, shape index: {}]
  %s11 = inlined_call_operand.vmem [shape: bf16[784,128], index: 11, kind: input, shape index: {}]
  %s12 = inlined_call_operand.vmem [shape: f32[1,128], index: 12, kind: input, shape index: {}]
  %s13 = inlined_call_operand.vmem [shape: f32[8,128], index: 13, kind: output, shape index: {}]
  %s14 = sld [smem:[#allocation0]]
  $region66: #{convnet_forward.1} parent=0
    _
  %s16 = ssub.s32 1, %s14
  %s17 = scalar_select 0, %s16, %s14
  $region1: #{convnet_forward.1} parent=0
    #allocation2 [shape = 'u8[802816]{0}', space=vmem, size = 0xc4000, scoped, tag = 'input window, operand 5, single buffered']
    #allocation3 [shape = 's32[1]{0}', space=sflag, size = 0x4, scoped, tag = 'scoped memory for convnet_forward.1']
    %18 = vsyncpa [#allocation3], 0
    // Predicated region
    $region2: #{convnet_forward.1} parent=1 // pred_check
      _
    $region3: #{convnet_forward.1} parent=1 // pred_check_branch
      %20 = sbr.rel (0) target = $region5
    $region4: #{convnet_forward.1} parent=1 // pred_region
      _
    $region5: #{convnet_forward.1} parent=1 // pred_fallthru
      _
    // Predicated region
    $region6: #{convnet_forward.1} parent=1 // pred_check
      _
    $region7: #{convnet_forward.1} parent=1 // pred_check_branch
      %22 = sbr.rel (0) target = $region9
    $region8: #{convnet_forward.1} parent=1 // pred_region
      _
    $region9: #{convnet_forward.1} parent=1 // pred_fallthru
      _
    // Predicated region
    $region10: #{convnet_forward.1} parent=1 // pred_check
      _
    $region11: #{convnet_forward.1} parent=1 // pred_check_branch
      %24 = sbr.rel (0) target = $region13
    $region12: #{convnet_forward.1} parent=1 // pred_region
      _
    $region13: #{convnet_forward.1} parent=1 // pred_fallthru
      _
    // Predicated region
    $region14: #{convnet_forward.1} parent=1 // pred_check
      _
    $region15: #{convnet_forward.1} parent=1 // pred_check_branch
      %26 = sbr.rel (0) target = $region17
    $region16: #{convnet_forward.1} parent=1 // pred_region
      _
    $region17: #{convnet_forward.1} parent=1 // pred_fallthru
      _
    // Predicated region
    $region18: #{convnet_forward.1} parent=1 // pred_check
      _
    $region19: #{convnet_forward.1} parent=1 // pred_check_branch
      %28 = sbr.rel (0) target = $region21
    $region20: #{convnet_forward.1} parent=1 // pred_region
      _
    $region21: #{convnet_forward.1} parent=1 // pred_fallthru
      _
    // Predicated region
    $region22: #{convnet_forward.1} parent=1 // pred_check
      _
    $region23: #{convnet_forward.1} parent=1 // pred_check_branch
      %30 = sbr.rel (0) target = $region25
    $region24: #{convnet_forward.1} parent=1 // pred_region
      %32 = vsyncadd [#allocation3], 0
      %s33 = sshll.u32 %s5, 4
      %s34 = int_to_ptr.hbm [resolvable:$true] %s33
      %s35 = sshll.u32 [#allocation2], 4
      %s36 = int_to_ptr.vmem [resolvable:$true] %s35
      %41 = dma.hbm_to_vmem [thread:$0]  %s34, 25088, %s36, [#allocation3], 256, 256, 16
    $region25: #{convnet_forward.1} parent=1 // pred_fallthru
      _
    // Predicated region
    $region26: #{convnet_forward.1} parent=1 // pred_check
      _
    $region27: #{convnet_forward.1} parent=1 // pred_check_branch
      %43 = sbr.rel (0) target = $region29
    $region28: #{convnet_forward.1} parent=1 // pred_region
      _
    $region29: #{convnet_forward.1} parent=1 // pred_fallthru
      _
    // Predicated region
    $region30: #{convnet_forward.1} parent=1 // pred_check
      _
    $region31: #{convnet_forward.1} parent=1 // pred_check_branch
      %45 = sbr.rel (0) target = $region33
    $region32: #{convnet_forward.1} parent=1 // pred_region
      _
    $region33: #{convnet_forward.1} parent=1 // pred_fallthru
      _
    // Predicated region
    $region34: #{convnet_forward.1} parent=1 // pred_check
      _
    $region35: #{convnet_forward.1} parent=1 // pred_check_branch
      %47 = sbr.rel (0) target = $region37
    $region36: #{convnet_forward.1} parent=1 // pred_region
      _
    $region37: #{convnet_forward.1} parent=1 // pred_fallthru
      _
    // Predicated region
    $region38: #{convnet_forward.1} parent=1 // pred_check
      _
    $region39: #{convnet_forward.1} parent=1 // pred_check_branch
      %49 = sbr.rel (0) target = $region41
    $region40: #{convnet_forward.1} parent=1 // pred_region
      _
    $region41: #{convnet_forward.1} parent=1 // pred_fallthru
      _
    // Predicated region
    $region42: #{convnet_forward.1} parent=1 // pred_check
      _
    $region43: #{convnet_forward.1} parent=1 // pred_check_branch
      %51 = sbr.rel (0) target = $region45
    $region44: #{convnet_forward.1} parent=1 // pred_region
      _
    $region45: #{convnet_forward.1} parent=1 // pred_fallthru
      _
    // Predicated region
    $region46: #{convnet_forward.1} parent=1 // pred_check
      _
    $region47: #{convnet_forward.1} parent=1 // pred_check_branch
      %53 = sbr.rel (0) target = $region49
    $region48: #{convnet_forward.1} parent=1 // pred_region
      _
    $region49: #{convnet_forward.1} parent=1 // pred_fallthru
      _
    // Predicated region
    $region50: #{convnet_forward.1} parent=1 // pred_check
      _
    $region51: #{convnet_forward.1} parent=1 // pred_check_branch
      %55 = sbr.rel (0) target = $region53
    $region52: #{convnet_forward.1} parent=1 // pred_region
      _
    $region53: #{convnet_forward.1} parent=1 // pred_fallthru
      _
    // Predicated region
    $region54: #{convnet_forward.1} parent=1 // pred_check
      _
    $region55: #{convnet_forward.1} parent=1 // pred_check_branch
      %57 = sbr.rel (0) target = $region57
    $region56: #{convnet_forward.1} parent=1 // pred_region
      %59 = dma.done [#allocation3], 25088
    $region57: #{convnet_forward.1} parent=1 // pred_fallthru
      _
    %v61 = vld [vmem:[%s0] sm:$0xff]
    %v62 = vld [vmem:[%s0 + $0x8] sm:$0xff]
    %v63 = vld [vmem:[%s0 + $0x10] sm:$0xff]
    %v64 = vld [vmem:[%s0 + $0x18] sm:$0xf]
    %v65 = vld [vmem:[%s1] sm:$0xff]
    %v66 = vld [vmem:[%s1 + $0x8] sm:$0xff]
    %v67 = vld [vmem:[%s1 + $0x10] sm:$0xff]
    %v68 = vld [vmem:[%s1 + $0x18] sm:$0xf]
    %v69 = vld [vmem:[%s1 + $0x1c] sm:$0xff]
    %v70 = vld [vmem:[%s1 + $0x24] sm:$0xff]
    %v71 = vld [vmem:[%s1 + $0x2c] sm:$0xff]
    %v72 = vld [vmem:[%s1 + $0x34] sm:$0xf]
    %v73 = vld [vmem:[%s1 + $0x38] sm:$0xff]
    %v74 = vld [vmem:[%s1 + $0x40] sm:$0xff]
    %v75 = vld [vmem:[%s1 + $0x48] sm:$0xff]
    %v76 = vld [vmem:[%s1 + $0x50] sm:$0xf]
    %v77 = vld [vmem:[%s1 + $0x54] sm:$0xff]
    %v78 = vld [vmem:[%s1 + $0x5c] sm:$0xff]
    %v79 = vld [vmem:[%s1 + $0x64] sm:$0xff]
    %v80 = vld [vmem:[%s1 + $0x6c] sm:$0xf]
    %v81 = vld [vmem:[%s1 + $0x70] sm:$0xff]
    %v82 = vld [vmem:[%s1 + $0x78] sm:$0xff]
    %v83 = vld [vmem:[%s1 + $0x80] sm:$0xff]
    %v84 = vld [vmem:[%s1 + $0x88] sm:$0xf]
    %v85 = vld [vmem:[%s1 + $0x8c] sm:$0xff]
    %v86 = vld [vmem:[%s1 + $0x94] sm:$0xff]
    %v87 = vld [vmem:[%s1 + $0x9c] sm:$0xff]
    %v88 = vld [vmem:[%s1 + $0xa4] sm:$0xf]
    %v89 = vld [vmem:[%s1 + $0xa8] sm:$0xff]
    %v90 = vld [vmem:[%s1 + $0xb0] sm:$0xff]
    %v91 = vld [vmem:[%s1 + $0xb8] sm:$0xff]
    %v92 = vld [vmem:[%s1 + $0xc0] sm:$0xf]
    %v93 = vld [vmem:[%s1 + $0xc4] sm:$0xff]
    %v94 = vld [vmem:[%s1 + $0xcc] sm:$0xff]
    %v95 = vld [vmem:[%s1 + $0xd4] sm:$0xff]
    %v96 = vld [vmem:[%s1 + $0xdc] sm:$0xf]
    %v97 = vld [vmem:[%s1 + $0xe0] sm:$0xff]
    %v98 = vld [vmem:[%s1 + $0xe8] sm:$0xff]
    %v99 = vld [vmem:[%s1 + $0xf0] sm:$0xff]
    %v100 = vld [vmem:[%s1 + $0xf8] sm:$0xf]
    %v101 = vld [vmem:[%s1 + $0xfc] sm:$0xff]
    %v102 = vld [vmem:[%s1 + $0x104] sm:$0xff]
    %v103 = vld [vmem:[%s1 + $0x10c] sm:$0xff]
    %v104 = vld [vmem:[%s1 + $0x114] sm:$0xf]
    %v105 = vld [vmem:[%s1 + $0x118] sm:$0xff]
    %v106 = vld [vmem:[%s1 + $0x120] sm:$0xff]
    %v107 = vld [vmem:[%s1 + $0x128] sm:$0xff]
    %v108 = vld [vmem:[%s1 + $0x130] sm:$0xf]
    %v109 = vld [vmem:[%s1 + $0x134] sm:$0xff]
    %v110 = vld [vmem:[%s1 + $0x13c] sm:$0xff]
    %v111 = vld [vmem:[%s1 + $0x144] sm:$0xff]
    %v112 = vld [vmem:[%s1 + $0x14c] sm:$0xf]
    %v113 = vld [vmem:[%s1 + $0x150] sm:$0xff]
    %v114 = vld [vmem:[%s1 + $0x158] sm:$0xff]
    %v115 = vld [vmem:[%s1 + $0x160] sm:$0xff]
    %v116 = vld [vmem:[%s1 + $0x168] sm:$0xf]
    %v117 = vld [vmem:[%s1 + $0x16c] sm:$0xff]
    %v118 = vld [vmem:[%s1 + $0x174] sm:$0xff]
    %v119 = vld [vmem:[%s1 + $0x17c] sm:$0xff]
    %v120 = vld [vmem:[%s1 + $0x184] sm:$0xf]
    %v121 = vld [vmem:[%s1 + $0x188] sm:$0xff]
    %v122 = vld [vmem:[%s1 + $0x190] sm:$0xff]
    %v123 = vld [vmem:[%s1 + $0x198] sm:$0xff]
    %v124 = vld [vmem:[%s1 + $0x1a0] sm:$0xf]
    %v125 = vld [vmem:[%s1 + $0x1a4] sm:$0xff]
    %v126 = vld [vmem:[%s1 + $0x1ac] sm:$0xff]
    %v127 = vld [vmem:[%s1 + $0x1b4] sm:$0xff]
    %v128 = vld [vmem:[%s1 + $0x1bc] sm:$0xf]
    %v129 = vld [vmem:[%s1 + $0x1c0] sm:$0xff]
    %v130 = vld [vmem:[%s1 + $0x1c8] sm:$0xff]
    %v131 = vld [vmem:[%s1 + $0x1d0] sm:$0xff]
    %v132 = vld [vmem:[%s1 + $0x1d8] sm:$0xf]
    %v133 = vld [vmem:[%s1 + $0x1dc] sm:$0xff]
    %v134 = vld [vmem:[%s1 + $0x1e4] sm:$0xff]
    %v135 = vld [vmem:[%s1 + $0x1ec] sm:$0xff]
    %v136 = vld [vmem:[%s1 + $0x1f4] sm:$0xf]
    %v137 = vld [vmem:[%s1 + $0x1f8] sm:$0xff]
    %v138 = vld [vmem:[%s1 + $0x200] sm:$0xff]
    %v139 = vld [vmem:[%s1 + $0x208] sm:$0xff]
    %v140 = vld [vmem:[%s1 + $0x210] sm:$0xf]
    %v141 = vld [vmem:[%s1 + $0x214] sm:$0xff]
    %v142 = vld [vmem:[%s1 + $0x21c] sm:$0xff]
    %v143 = vld [vmem:[%s1 + $0x224] sm:$0xff]
    %v144 = vld [vmem:[%s1 + $0x22c] sm:$0xf]
    %v145 = vld [vmem:[%s1 + $0x230] sm:$0xff]
    %v146 = vld [vmem:[%s1 + $0x238] sm:$0xff]
    %v147 = vld [vmem:[%s1 + $0x240] sm:$0xff]
    %v148 = vld [vmem:[%s1 + $0x248] sm:$0xf]
    %v149 = vld [vmem:[%s1 + $0x24c] sm:$0xff]
    %v150 = vld [vmem:[%s1 + $0x254] sm:$0xff]
    %v151 = vld [vmem:[%s1 + $0x25c] sm:$0xff]
    %v152 = vld [vmem:[%s1 + $0x264] sm:$0xf]
    %v153 = vld [vmem:[%s1 + $0x268] sm:$0xff]
    %v154 = vld [vmem:[%s1 + $0x270] sm:$0xff]
    %v155 = vld [vmem:[%s1 + $0x278] sm:$0xff]
    %v156 = vld [vmem:[%s1 + $0x280] sm:$0xf]
    %v157 = vld [vmem:[%s1 + $0x284] sm:$0xff]
    %v158 = vld [vmem:[%s1 + $0x28c] sm:$0xff]
    %v159 = vld [vmem:[%s1 + $0x294] sm:$0xff]
    %v160 = vld [vmem:[%s1 + $0x29c] sm:$0xf]
    %v161 = vld [vmem:[%s1 + $0x2a0] sm:$0xff]
    %v162 = vld [vmem:[%s1 + $0x2a8] sm:$0xff]
    %v163 = vld [vmem:[%s1 + $0x2b0] sm:$0xff]
    %v164 = vld [vmem:[%s1 + $0x2b8] sm:$0xf]
    %v165 = vld [vmem:[%s1 + $0x2bc] sm:$0xff]
    %v166 = vld [vmem:[%s1 + $0x2c4] sm:$0xff]
    %v167 = vld [vmem:[%s1 + $0x2cc] sm:$0xff]
    %v168 = vld [vmem:[%s1 + $0x2d4] sm:$0xf]
    %v169 = vld [vmem:[%s1 + $0x2d8] sm:$0xff]
    %v170 = vld [vmem:[%s1 + $0x2e0] sm:$0xff]
    %v171 = vld [vmem:[%s1 + $0x2e8] sm:$0xff]
    %v172 = vld [vmem:[%s1 + $0x2f0] sm:$0xf]
    %v173 = vld [vmem:[%s1 + $0x2f4] sm:$0xff]
    %v174 = vld [vmem:[%s1 + $0x2fc] sm:$0xff]
    %v175 = vld [vmem:[%s1 + $0x304] sm:$0xff]
    %v176 = vld [vmem:[%s1 + $0x30c] sm:$0xf]
    %v177 = vld [vmem:[%s1 + $0x310] sm:$0xff]
    %v178 = vld [vmem:[%s1 + $0x318] sm:$0xff]
    %v179 = vld [vmem:[%s1 + $0x320] sm:$0xff]
    %v180 = vld [vmem:[%s1 + $0x328] sm:$0xf]
    %v181 = vld [vmem:[%s1 + $0x32c] sm:$0xff]
    %v182 = vld [vmem:[%s1 + $0x334] sm:$0xff]
    %v183 = vld [vmem:[%s1 + $0x33c] sm:$0xff]
    %v184 = vld [vmem:[%s1 + $0x344] sm:$0xf]
    %v185 = vld [vmem:[%s1 + $0x348] sm:$0xff]
    %v186 = vld [vmem:[%s1 + $0x350] sm:$0xff]
    %v187 = vld [vmem:[%s1 + $0x358] sm:$0xff]
    %v188 = vld [vmem:[%s1 + $0x360] sm:$0xf]
    %v189 = vld [vmem:[%s1 + $0x364] sm:$0xff]
    %v190 = vld [vmem:[%s1 + $0x36c] sm:$0xff]
    %v191 = vld [vmem:[%s1 + $0x374] sm:$0xff]
    %v192 = vld [vmem:[%s1 + $0x37c] sm:$0xf]
    %v193 = vld [vmem:[%s1 + $0x380] sm:$0xff]
    %v194 = vld [vmem:[%s1 + $0x388] sm:$0xff]
    %v195 = vld [vmem:[%s1 + $0x390] sm:$0xff]
    %v196 = vld [vmem:[%s1 + $0x398] sm:$0xf]
    %v197 = vld [vmem:[%s1 + $0x39c] sm:$0xff]
    %v198 = vld [vmem:[%s1 + $0x3a4] sm:$0xff]
    %v199 = vld [vmem:[%s1 + $0x3ac] sm:$0xff]
    %v200 = vld [vmem:[%s1 + $0x3b4] sm:$0xf]
    %v201 = vld [vmem:[%s1 + $0x3b8] sm:$0xff]
    %v202 = vld [vmem:[%s1 + $0x3c0] sm:$0xff]
    %v203 = vld [vmem:[%s1 + $0x3c8] sm:$0xff]
    %v204 = vld [vmem:[%s1 + $0x3d0] sm:$0xf]
    %v205 = vld [vmem:[%s1 + $0x3d4] sm:$0xff]
    %v206 = vld [vmem:[%s1 + $0x3dc] sm:$0xff]
    %v207 = vld [vmem:[%s1 + $0x3e4] sm:$0xff]
    %v208 = vld [vmem:[%s1 + $0x3ec] sm:$0xf]
    %v209 = vld [vmem:[%s1 + $0x3f0] sm:$0xff]
    %v210 = vld [vmem:[%s1 + $0x3f8] sm:$0xff]
    %v211 = vld [vmem:[%s1 + $0x400] sm:$0xff]
    %v212 = vld [vmem:[%s1 + $0x408] sm:$0xf]
    %v213 = vld [vmem:[%s1 + $0x40c] sm:$0xff]
    %v214 = vld [vmem:[%s1 + $0x414] sm:$0xff]
    %v215 = vld [vmem:[%s1 + $0x41c] sm:$0xff]
    %v216 = vld [vmem:[%s1 + $0x424] sm:$0xf]
    %v217 = vld [vmem:[%s1 + $0x428] sm:$0xff]
    %v218 = vld [vmem:[%s1 + $0x430] sm:$0xff]
    %v219 = vld [vmem:[%s1 + $0x438] sm:$0xff]
    %v220 = vld [vmem:[%s1 + $0x440] sm:$0xf]
    %v221 = vld [vmem:[%s1 + $0x444] sm:$0xff]
    %v222 = vld [vmem:[%s1 + $0x44c] sm:$0xff]
    %v223 = vld [vmem:[%s1 + $0x454] sm:$0xff]
    %v224 = vld [vmem:[%s1 + $0x45c] sm:$0xf]
    %v225 = vld [vmem:[%s1 + $0x460] sm:$0xff]
    %v226 = vld [vmem:[%s1 + $0x468] sm:$0xff]
    %v227 = vld [vmem:[%s1 + $0x470] sm:$0xff]
    %v228 = vld [vmem:[%s1 + $0x478] sm:$0xf]
    %v229 = vld [vmem:[%s1 + $0x47c] sm:$0xff]
    %v230 = vld [vmem:[%s1 + $0x484] sm:$0xff]
    %v231 = vld [vmem:[%s1 + $0x48c] sm:$0xff]
    %v232 = vld [vmem:[%s1 + $0x494] sm:$0xf]
    %v233 = vld [vmem:[%s1 + $0x498] sm:$0xff]
    %v234 = vld [vmem:[%s1 + $0x4a0] sm:$0xff]
    %v235 = vld [vmem:[%s1 + $0x4a8] sm:$0xff]
    %v236 = vld [vmem:[%s1 + $0x4b0] sm:$0xf]
    %v237 = vld [vmem:[%s1 + $0x4b4] sm:$0xff]
    %v238 = vld [vmem:[%s1 + $0x4bc] sm:$0xff]
    %v239 = vld [vmem:[%s1 + $0x4c4] sm:$0xff]
    %v240 = vld [vmem:[%s1 + $0x4cc] sm:$0xf]
    %v241 = vld [vmem:[%s1 + $0x4d0] sm:$0xff]
    %v242 = vld [vmem:[%s1 + $0x4d8] sm:$0xff]
    %v243 = vld [vmem:[%s1 + $0x4e0] sm:$0xff]
    %v244 = vld [vmem:[%s1 + $0x4e8] sm:$0xf]
    %v245 = vld [vmem:[%s1 + $0x4ec] sm:$0xff]
    %v246 = vld [vmem:[%s1 + $0x4f4] sm:$0xff]
    %v247 = vld [vmem:[%s1 + $0x4fc] sm:$0xff]
    %v248 = vld [vmem:[%s1 + $0x504] sm:$0xf]
    %v249 = vld [vmem:[%s1 + $0x508] sm:$0xff]
    %v250 = vld [vmem:[%s1 + $0x510] sm:$0xff]
    %v251 = vld [vmem:[%s1 + $0x518] sm:$0xff]
    %v252 = vld [vmem:[%s1 + $0x520] sm:$0xf]
    %v253 = vld [vmem:[%s1 + $0x524] sm:$0xff]
    %v254 = vld [vmem:[%s1 + $0x52c] sm:$0xff]
    %v255 = vld [vmem:[%s1 + $0x534] sm:$0xff]
    %v256 = vld [vmem:[%s1 + $0x53c] sm:$0xf]
    %v257 = vld [vmem:[%s1 + $0x540] sm:$0xff]
    %v258 = vld [vmem:[%s1 + $0x548] sm:$0xff]
    %v259 = vld [vmem:[%s1 + $0x550] sm:$0xff]
    %v260 = vld [vmem:[%s1 + $0x558] sm:$0xf]
    %v261 = vld [vmem:[%s1 + $0x55c] sm:$0xff]
    %v262 = vld [vmem:[%s1 + $0x564] sm:$0xff]
    %v263 = vld [vmem:[%s1 + $0x56c] sm:$0xff]
    %v264 = vld [vmem:[%s1 + $0x574] sm:$0xf]
    %v265 = vld [vmem:[%s1 + $0x578] sm:$0xff]
    %v266 = vld [vmem:[%s1 + $0x580] sm:$0xff]
    %v267 = vld [vmem:[%s1 + $0x588] sm:$0xff]
    %v268 = vld [vmem:[%s1 + $0x590] sm:$0xf]
    %v269 = vld [vmem:[%s1 + $0x594] sm:$0xff]
    %v270 = vld [vmem:[%s1 + $0x59c] sm:$0xff]
    %v271 = vld [vmem:[%s1 + $0x5a4] sm:$0xff]
    %v272 = vld [vmem:[%s1 + $0x5ac] sm:$0xf]
    %v273 = vld [vmem:[%s1 + $0x5b0] sm:$0xff]
    %v274 = vld [vmem:[%s1 + $0x5b8] sm:$0xff]
    %v275 = vld [vmem:[%s1 + $0x5c0] sm:$0xff]
    %v276 = vld [vmem:[%s1 + $0x5c8] sm:$0xf]
    %v277 = vld [vmem:[%s1 + $0x5cc] sm:$0xff]
    %v278 = vld [vmem:[%s1 + $0x5d4] sm:$0xff]
    %v279 = vld [vmem:[%s1 + $0x5dc] sm:$0xff]
    %v280 = vld [vmem:[%s1 + $0x5e4] sm:$0xf]
    %v281 = vld [vmem:[%s1 + $0x5e8] sm:$0xff]
    %v282 = vld [vmem:[%s1 + $0x5f0] sm:$0xff]
    %v283 = vld [vmem:[%s1 + $0x5f8] sm:$0xff]
    %v284 = vld [vmem:[%s1 + $0x600] sm:$0xf]
    %v285 = vld [vmem:[%s1 + $0x604] sm:$0xff]
    %v286 = vld [vmem:[%s1 + $0x60c] sm:$0xff]
    %v287 = vld [vmem:[%s1 + $0x614] sm:$0xff]
    %v288 = vld [vmem:[%s1 + $0x61c] sm:$0xf]
    %v289 = vld [vmem:[%s1 + $0x620] sm:$0xff]
    %v290 = vld [vmem:[%s1 + $0x628] sm:$0xff]
    %v291 = vld [vmem:[%s1 + $0x630] sm:$0xff]
    %v292 = vld [vmem:[%s1 + $0x638] sm:$0xf]
    %v293 = vld [vmem:[%s1 + $0x63c] sm:$0xff]
    %v294 = vld [vmem:[%s1 + $0x644] sm:$0xff]
    %v295 = vld [vmem:[%s1 + $0x64c] sm:$0xff]
    %v296 = vld [vmem:[%s1 + $0x654] sm:$0xf]
    %v297 = vld [vmem:[%s1 + $0x658] sm:$0xff]
    %v298 = vld [vmem:[%s1 + $0x660] sm:$0xff]
    %v299 = vld [vmem:[%s1 + $0x668] sm:$0xff]
    %v300 = vld [vmem:[%s1 + $0x670] sm:$0xf]
    %v301 = vld [vmem:[%s1 + $0x674] sm:$0xff]
    %v302 = vld [vmem:[%s1 + $0x67c] sm:$0xff]
    %v303 = vld [vmem:[%s1 + $0x684] sm:$0xff]
    %v304 = vld [vmem:[%s1 + $0x68c] sm:$0xf]
    %v305 = vld [vmem:[%s1 + $0x690] sm:$0xff]
    %v306 = vld [vmem:[%s1 + $0x698] sm:$0xff]
    %v307 = vld [vmem:[%s1 + $0x6a0] sm:$0xff]
    %v308 = vld [vmem:[%s1 + $0x6a8] sm:$0xf]
    %v309 = vld [vmem:[%s1 + $0x6ac] sm:$0xff]
    %v310 = vld [vmem:[%s1 + $0x6b4] sm:$0xff]
    %v311 = vld [vmem:[%s1 + $0x6bc] sm:$0xff]
    %v312 = vld [vmem:[%s1 + $0x6c4] sm:$0xf]
    %v313 = vld [vmem:[%s1 + $0x6c8] sm:$0xff]
    %v314 = vld [vmem:[%s1 + $0x6d0] sm:$0xff]
    %v315 = vld [vmem:[%s1 + $0x6d8] sm:$0xff]
    %v316 = vld [vmem:[%s1 + $0x6e0] sm:$0xf]
    %v317 = vld [vmem:[%s1 + $0x6e4] sm:$0xff]
    %v318 = vld [vmem:[%s1 + $0x6ec] sm:$0xff]
    %v319 = vld [vmem:[%s1 + $0x6f4] sm:$0xff]
    %v320 = vld [vmem:[%s1 + $0x6fc] sm:$0xf]
    %v321 = vld [vmem:[%s1 + $0x700] sm:$0xff]
    %v322 = vld [vmem:[%s1 + $0x708] sm:$0xff]
    %v323 = vld [vmem:[%s1 + $0x710] sm:$0xff]
    %v324 = vld [vmem:[%s1 + $0x718] sm:$0xf]
    %v325 = vld [vmem:[%s1 + $0x71c] sm:$0xff]
    %v326 = vld [vmem:[%s1 + $0x724] sm:$0xff]
    %v327 = vld [vmem:[%s1 + $0x72c] sm:$0xff]
    %v328 = vld [vmem:[%s1 + $0x734] sm:$0xf]
    %v329 = vld [vmem:[%s1 + $0x738] sm:$0xff]
    %v330 = vld [vmem:[%s1 + $0x740] sm:$0xff]
    %v331 = vld [vmem:[%s1 + $0x748] sm:$0xff]
    %v332 = vld [vmem:[%s1 + $0x750] sm:$0xf]
    %v333 = vld [vmem:[%s1 + $0x754] sm:$0xff]
    %v334 = vld [vmem:[%s1 + $0x75c] sm:$0xff]
    %v335 = vld [vmem:[%s1 + $0x764] sm:$0xff]
    %v336 = vld [vmem:[%s1 + $0x76c] sm:$0xf]
    %v337 = vld [vmem:[%s1 + $0x770] sm:$0xff]
    %v338 = vld [vmem:[%s1 + $0x778] sm:$0xff]
    %v339 = vld [vmem:[%s1 + $0x780] sm:$0xff]
    %v340 = vld [vmem:[%s1 + $0x788] sm:$0xf]
    %v341 = vld [vmem:[%s1 + $0x78c] sm:$0xff]
    %v342 = vld [vmem:[%s1 + $0x794] sm:$0xff]
    %v343 = vld [vmem:[%s1 + $0x79c] sm:$0xff]
    %v344 = vld [vmem:[%s1 + $0x7a4] sm:$0xf]
    %v345 = vld [vmem:[%s1 + $0x7a8] sm:$0xff]
    %v346 = vld [vmem:[%s1 + $0x7b0] sm:$0xff]
    %v347 = vld [vmem:[%s1 + $0x7b8] sm:$0xff]
    %v348 = vld [vmem:[%s1 + $0x7c0] sm:$0xf]
    %v349 = vld [vmem:[%s1 + $0x7c4] sm:$0xff]
    %v350 = vld [vmem:[%s1 + $0x7cc] sm:$0xff]
    %v351 = vld [vmem:[%s1 + $0x7d4] sm:$0xff]
    %v352 = vld [vmem:[%s1 + $0x7dc] sm:$0xf]
    %v353 = vld [vmem:[%s1 + $0x7e0] sm:$0xff]
    %v354 = vld [vmem:[%s1 + $0x7e8] sm:$0xff]
    %v355 = vld [vmem:[%s1 + $0x7f0] sm:$0xff]
    %v356 = vld [vmem:[%s1 + $0x7f8] sm:$0xf]
    %v357 = vld [vmem:[%s1 + $0x7fc] sm:$0xff]
    %v358 = vld [vmem:[%s1 + $0x804] sm:$0xff]
    %v359 = vld [vmem:[%s1 + $0x80c] sm:$0xff]
    %v360 = vld [vmem:[%s1 + $0x814] sm:$0xf]
    %v361 = vld [vmem:[%s1 + $0x818] sm:$0xff]
    %v362 = vld [vmem:[%s1 + $0x820] sm:$0xff]
    %v363 = vld [vmem:[%s1 + $0x828] sm:$0xff]
    %v364 = vld [vmem:[%s1 + $0x830] sm:$0xf]
    %v365 = vld [vmem:[%s1 + $0x834] sm:$0xff]
    %v366 = vld [vmem:[%s1 + $0x83c] sm:$0xff]
    %v367 = vld [vmem:[%s1 + $0x844] sm:$0xff]
    %v368 = vld [vmem:[%s1 + $0x84c] sm:$0xf]
    %v369 = vld [vmem:[%s1 + $0x850] sm:$0xff]
    %v370 = vld [vmem:[%s1 + $0x858] sm:$0xff]
    %v371 = vld [vmem:[%s1 + $0x860] sm:$0xff]
    %v372 = vld [vmem:[%s1 + $0x868] sm:$0xf]
    %v373 = vld [vmem:[%s1 + $0x86c] sm:$0xff]
    %v374 = vld [vmem:[%s1 + $0x874] sm:$0xff]
    %v375 = vld [vmem:[%s1 + $0x87c] sm:$0xff]
    %v376 = vld [vmem:[%s1 + $0x884] sm:$0xf]
    %v377 = vld [vmem:[%s1 + $0x888] sm:$0xff]
    %v378 = vld [vmem:[%s1 + $0x890] sm:$0xff]
    %v379 = vld [vmem:[%s1 + $0x898] sm:$0xff]
    %v380 = vld [vmem:[%s1 + $0x8a0] sm:$0xf]
    %v381 = vld [vmem:[%s1 + $0x8a4] sm:$0xff]
    %v382 = vld [vmem:[%s1 + $0x8ac] sm:$0xff]
    %v383 = vld [vmem:[%s1 + $0x8b4] sm:$0xff]
    %v384 = vld [vmem:[%s1 + $0x8bc] sm:$0xf]
    %v385 = vld [vmem:[%s1 + $0x8c0] sm:$0xff]
    %v386 = vld [vmem:[%s1 + $0x8c8] sm:$0xff]
    %v387 = vld [vmem:[%s1 + $0x8d0] sm:$0xff]
    %v388 = vld [vmem:[%s1 + $0x8d8] sm:$0xf]
    %v389 = vld [vmem:[%s1 + $0x8dc] sm:$0xff]
    %v390 = vld [vmem:[%s1 + $0x8e4] sm:$0xff]
    %v391 = vld [vmem:[%s1 + $0x8ec] sm:$0xff]
    %v392 = vld [vmem:[%s1 + $0x8f4] sm:$0xf]
    %v393 = vld [vmem:[%s1 + $0x8f8] sm:$0xff]
    %v394 = vld [vmem:[%s1 + $0x900] sm:$0xff]
    %v395 = vld [vmem:[%s1 + $0x908] sm:$0xff]
    %v396 = vld [vmem:[%s1 + $0x910] sm:$0xf]
    %v397 = vld [vmem:[%s1 + $0x914] sm:$0xff]
    %v398 = vld [vmem:[%s1 + $0x91c] sm:$0xff]
    %v399 = vld [vmem:[%s1 + $0x924] sm:$0xff]
    %v400 = vld [vmem:[%s1 + $0x92c] sm:$0xf]
    %v401 = vld [vmem:[%s1 + $0x930] sm:$0xff]
    %v402 = vld [vmem:[%s1 + $0x938] sm:$0xff]
    %v403 = vld [vmem:[%s1 + $0x940] sm:$0xff]
    %v404 = vld [vmem:[%s1 + $0x948] sm:$0xf]
    %v405 = vld [vmem:[%s1 + $0x94c] sm:$0xff]
    %v406 = vld [vmem:[%s1 + $0x954] sm:$0xff]
    %v407 = vld [vmem:[%s1 + $0x95c] sm:$0xff]
    %v408 = vld [vmem:[%s1 + $0x964] sm:$0xf]
    %v409 = vld [vmem:[%s1 + $0x968] sm:$0xff]
    %v410 = vld [vmem:[%s1 + $0x970] sm:$0xff]
    %v411 = vld [vmem:[%s1 + $0x978] sm:$0xff]
    %v412 = vld [vmem:[%s1 + $0x980] sm:$0xf]
    %v413 = vld [vmem:[%s1 + $0x984] sm:$0xff]
    %v414 = vld [vmem:[%s1 + $0x98c] sm:$0xff]
    %v415 = vld [vmem:[%s1 + $0x994] sm:$0xff]
    %v416 = vld [vmem:[%s1 + $0x99c] sm:$0xf]
    %v417 = vld [vmem:[%s1 + $0x9a0] sm:$0xff]
    %v418 = vld [vmem:[%s1 + $0x9a8] sm:$0xff]
    %v419 = vld [vmem:[%s1 + $0x9b0] sm:$0xff]
    %v420 = vld [vmem:[%s1 + $0x9b8] sm:$0xf]
    %v421 = vld [vmem:[%s1 + $0x9bc] sm:$0xff]
    %v422 = vld [vmem:[%s1 + $0x9c4] sm:$0xff]
    %v423 = vld [vmem:[%s1 + $0x9cc] sm:$0xff]
    %v424 = vld [vmem:[%s1 + $0x9d4] sm:$0xf]
    %v425 = vld [vmem:[%s1 + $0x9d8] sm:$0xff]
    %v426 = vld [vmem:[%s1 + $0x9e0] sm:$0xff]
    %v427 = vld [vmem:[%s1 + $0x9e8] sm:$0xff]
    %v428 = vld [vmem:[%s1 + $0x9f0] sm:$0xf]
    %v429 = vld [vmem:[%s1 + $0x9f4] sm:$0xff]
    %v430 = vld [vmem:[%s1 + $0x9fc] sm:$0xff]
    %v431 = vld [vmem:[%s1 + $0xa04] sm:$0xff]
    %v432 = vld [vmem:[%s1 + $0xa0c] sm:$0xf]
    %v433 = vld [vmem:[%s1 + $0xa10] sm:$0xff]
    %v434 = vld [vmem:[%s1 + $0xa18] sm:$0xff]
    %v435 = vld [vmem:[%s1 + $0xa20] sm:$0xff]
    %v436 = vld [vmem:[%s1 + $0xa28] sm:$0xf]
    %v437 = vld [vmem:[%s1 + $0xa2c] sm:$0xff]
    %v438 = vld [vmem:[%s1 + $0xa34] sm:$0xff]
    %v439 = vld [vmem:[%s1 + $0xa3c] sm:$0xff]
    %v440 = vld [vmem:[%s1 + $0xa44] sm:$0xf]
    %v441 = vld [vmem:[%s1 + $0xa48] sm:$0xff]
    %v442 = vld [vmem:[%s1 + $0xa50] sm:$0xff]
    %v443 = vld [vmem:[%s1 + $0xa58] sm:$0xff]
    %v444 = vld [vmem:[%s1 + $0xa60] sm:$0xf]
    %v445 = vld [vmem:[%s1 + $0xa64] sm:$0xff]
    %v446 = vld [vmem:[%s1 + $0xa6c] sm:$0xff]
    %v447 = vld [vmem:[%s1 + $0xa74] sm:$0xff]
    %v448 = vld [vmem:[%s1 + $0xa7c] sm:$0xf]
    %v449 = vld [vmem:[%s1 + $0xa80] sm:$0xff]
    %v450 = vld [vmem:[%s1 + $0xa88] sm:$0xff]
    %v451 = vld [vmem:[%s1 + $0xa90] sm:$0xff]
    %v452 = vld [vmem:[%s1 + $0xa98] sm:$0xf]
    %v453 = vld [vmem:[%s1 + $0xa9c] sm:$0xff]
    %v454 = vld [vmem:[%s1 + $0xaa4] sm:$0xff]
    %v455 = vld [vmem:[%s1 + $0xaac] sm:$0xff]
    %v456 = vld [vmem:[%s1 + $0xab4] sm:$0xf]
    %v457 = vld [vmem:[%s1 + $0xab8] sm:$0xff]
    %v458 = vld [vmem:[%s1 + $0xac0] sm:$0xff]
    %v459 = vld [vmem:[%s1 + $0xac8] sm:$0xff]
    %v460 = vld [vmem:[%s1 + $0xad0] sm:$0xf]
    %v461 = vld [vmem:[%s1 + $0xad4] sm:$0xff]
    %v462 = vld [vmem:[%s1 + $0xadc] sm:$0xff]
    %v463 = vld [vmem:[%s1 + $0xae4] sm:$0xff]
    %v464 = vld [vmem:[%s1 + $0xaec] sm:$0xf]
    %v465 = vld [vmem:[%s2] sm:$0x7f]
    %v467 = vperm.slane %v465, 0
    %v468 = vperm.slane %v465, 1
    %v469 = vperm.slane %v465, 2
    %v470 = vperm.slane %v465, 3
    %v471 = vperm.slane %v465, 4
    %v472 = vperm.slane %v465, 5
    %v473 = vperm.slane %v465, 6
    %v485 = vunpack.c.l.b16 %v61
    %v486 = vunpack.c.h.b16 %v61
    %v487 = vunpack.c.l.b16 %v62
    %v488 = vunpack.c.h.b16 %v62
    %v489 = vunpack.c.l.b16 %v63
    %v490 = vunpack.c.h.b16 %v63
    %v491 = vunpack.c.l.b16 %v64
    %v492 = vpack.c.b16 %v485, %v485
    %v493 = vpack.c.b16 %v486, %v486
    %v494 = vpack.c.b16 %v487, %v487
    %v495 = vpack.c.b16 %v488, %v488
    %v496 = vpack.c.b16 %v489, %v489
    %v497 = vpack.c.b16 %v490, %v490
    %v498 = vpack.c.b16 %v491, %v491
    %v905 = vunpack.c.l.b16 %v65
    %v906 = vunpack.c.h.b16 %v65
    %v907 = vunpack.c.l.b16 %v66
    %v908 = vunpack.c.h.b16 %v66
    %v909 = vunpack.c.l.b16 %v67
    %v910 = vunpack.c.h.b16 %v67
    %v911 = vunpack.c.l.b16 %v68
    %v912 = vunpack.c.l.b16 %v69
    %v913 = vunpack.c.h.b16 %v69
    %v914 = vunpack.c.l.b16 %v70
    %v915 = vunpack.c.h.b16 %v70
    %v916 = vunpack.c.l.b16 %v71
    %v917 = vunpack.c.h.b16 %v71
    %v918 = vunpack.c.l.b16 %v72
    %v919 = vunpack.c.l.b16 %v73
    %v920 = vunpack.c.h.b16 %v73
    %v921 = vunpack.c.l.b16 %v74
    %v922 = vunpack.c.h.b16 %v74
    %v923 = vunpack.c.l.b16 %v75
    %v924 = vunpack.c.h.b16 %v75
    %v925 = vunpack.c.l.b16 %v76
    %v926 = vunpack.c.l.b16 %v77
    %v927 = vunpack.c.h.b16 %v77
    %v928 = vunpack.c.l.b16 %v78
    %v929 = vunpack.c.h.b16 %v78
    %v930 = vunpack.c.l.b16 %v79
    %v931 = vunpack.c.h.b16 %v79
    %v932 = vunpack.c.l.b16 %v80
    %v933 = vunpack.c.l.b16 %v81
    %v934 = vunpack.c.h.b16 %v81
    %v935 = vunpack.c.l.b16 %v82
    %v936 = vunpack.c.h.b16 %v82
    %v937 = vunpack.c.l.b16 %v83
    %v938 = vunpack.c.h.b16 %v83
    %v939 = vunpack.c.l.b16 %v84
    %v940 = vunpack.c.l.b16 %v85
    %v941 = vunpack.c.h.b16 %v85
    %v942 = vunpack.c.l.b16 %v86
    %v943 = vunpack.c.h.b16 %v86
    %v944 = vunpack.c.l.b16 %v87
    %v945 = vunpack.c.h.b16 %v87
    %v946 = vunpack.c.l.b16 %v88
    %v947 = vunpack.c.l.b16 %v89
    %v948 = vunpack.c.h.b16 %v89
    %v949 = vunpack.c.l.b16 %v90
    %v950 = vunpack.c.h.b16 %v90
    %v951 = vunpack.c.l.b16 %v91
    %v952 = vunpack.c.h.b16 %v91
    %v953 = vunpack.c.l.b16 %v92
    %v954 = vunpack.c.l.b16 %v93
    %v955 = vunpack.c.h.b16 %v93
    %v956 = vunpack.c.l.b16 %v94
    %v957 = vunpack.c.h.b16 %v94
    %v958 = vunpack.c.l.b16 %v95
    %v959 = vunpack.c.h.b16 %v95
    %v960 = vunpack.c.l.b16 %v96
    %v961 = vunpack.c.l.b16 %v97
    %v962 = vunpack.c.h.b16 %v97
    %v963 = vunpack.c.l.b16 %v98
    %v964 = vunpack.c.h.b16 %v98
    %v965 = vunpack.c.l.b16 %v99
    %v966 = vunpack.c.h.b16 %v99
    %v967 = vunpack.c.l.b16 %v100
    %v968 = vunpack.c.l.b16 %v101
    %v969 = vunpack.c.h.b16 %v101
    %v970 = vunpack.c.l.b16 %v102
    %v971 = vunpack.c.h.b16 %v102
    %v972 = vunpack.c.l.b16 %v103
    %v973 = vunpack.c.h.b16 %v103
    %v974 = vunpack.c.l.b16 %v104
    %v975 = vunpack.c.l.b16 %v105
    %v976 = vunpack.c.h.b16 %v105
    %v977 = vunpack.c.l.b16 %v106
    %v978 = vunpack.c.h.b16 %v106
    %v979 = vunpack.c.l.b16 %v107
    %v980 = vunpack.c.h.b16 %v107
    %v981 = vunpack.c.l.b16 %v108
    %v982 = vunpack.c.l.b16 %v109
    %v983 = vunpack.c.h.b16 %v109
    %v984 = vunpack.c.l.b16 %v110
    %v985 = vunpack.c.h.b16 %v110
    %v986 = vunpack.c.l.b16 %v111
    %v987 = vunpack.c.h.b16 %v111
    %v988 = vunpack.c.l.b16 %v112
    %v989 = vunpack.c.l.b16 %v113
    %v990 = vunpack.c.h.b16 %v113
    %v991 = vunpack.c.l.b16 %v114
    %v992 = vunpack.c.h.b16 %v114
    %v993 = vunpack.c.l.b16 %v115
    %v994 = vunpack.c.h.b16 %v115
    %v995 = vunpack.c.l.b16 %v116
    %v996 = vunpack.c.l.b16 %v117
    %v997 = vunpack.c.h.b16 %v117
    %v998 = vunpack.c.l.b16 %v118
    %v999 = vunpack.c.h.b16 %v118
    %v1000 = vunpack.c.l.b16 %v119
    %v1001 = vunpack.c.h.b16 %v119
    %v1002 = vunpack.c.l.b16 %v120
    %v1003 = vunpack.c.l.b16 %v121
    %v1004 = vunpack.c.h.b16 %v121
    %v1005 = vunpack.c.l.b16 %v122
    %v1006 = vunpack.c.h.b16 %v122
    %v1007 = vunpack.c.l.b16 %v123
    %v1008 = vunpack.c.h.b16 %v123
    %v1009 = vunpack.c.l.b16 %v124
    %v1010 = vunpack.c.l.b16 %v125
    %v1011 = vunpack.c.h.b16 %v125
    %v1012 = vunpack.c.l.b16 %v126
    %v1013 = vunpack.c.h.b16 %v126
    %v1014 = vunpack.c.l.b16 %v127
    %v1015 = vunpack.c.h.b16 %v127
    %v1016 = vunpack.c.l.b16 %v128
    %v1017 = vunpack.c.l.b16 %v129
    %v1018 = vunpack.c.h.b16 %v129
    %v1019 = vunpack.c.l.b16 %v130
    %v1020 = vunpack.c.h.b16 %v130
    %v1021 = vunpack.c.l.b16 %v131
    %v1022 = vunpack.c.h.b16 %v131
    %v1023 = vunpack.c.l.b16 %v132
    %v1024 = vunpack.c.l.b16 %v133
    %v1025 = vunpack.c.h.b16 %v133
    %v1026 = vunpack.c.l.b16 %v134
    %v1027 = vunpack.c.h.b16 %v134
    %v1028 = vunpack.c.l.b16 %v135
    %v1029 = vunpack.c.h.b16 %v135
    %v1030 = vunpack.c.l.b16 %v136
    %v1031 = vunpack.c.l.b16 %v137
    %v1032 = vunpack.c.h.b16 %v137
    %v1033 = vunpack.c.l.b16 %v138
    %v1034 = vunpack.c.h.b16 %v138
    %v1035 = vunpack.c.l.b16 %v139
    %v1036 = vunpack.c.h.b16 %v139
    %v1037 = vunpack.c.l.b16 %v140
    %v1038 = vunpack.c.l.b16 %v141
    %v1039 = vunpack.c.h.b16 %v141
    %v1040 = vunpack.c.l.b16 %v142
    %v1041 = vunpack.c.h.b16 %v142
    %v1042 = vunpack.c.l.b16 %v143
    %v1043 = vunpack.c.h.b16 %v143
    %v1044 = vunpack.c.l.b16 %v144
    %v1045 = vunpack.c.l.b16 %v145
    %v1046 = vunpack.c.h.b16 %v145
    %v1047 = vunpack.c.l.b16 %v146
    %v1048 = vunpack.c.h.b16 %v146
    %v1049 = vunpack.c.l.b16 %v147
    %v1050 = vunpack.c.h.b16 %v147
    %v1051 = vunpack.c.l.b16 %v148
    %v1052 = vunpack.c.l.b16 %v149
    %v1053 = vunpack.c.h.b16 %v149
    %v1054 = vunpack.c.l.b16 %v150
    %v1055 = vunpack.c.h.b16 %v150
    %v1056 = vunpack.c.l.b16 %v151
    %v1057 = vunpack.c.h.b16 %v151
    %v1058 = vunpack.c.l.b16 %v152
    %v1059 = vunpack.c.l.b16 %v153
    %v1060 = vunpack.c.h.b16 %v153
    %v1061 = vunpack.c.l.b16 %v154
    %v1062 = vunpack.c.h.b16 %v154
    %v1063 = vunpack.c.l.b16 %v155
    %v1064 = vunpack.c.h.b16 %v155
    %v1065 = vunpack.c.l.b16 %v156
    %v1066 = vunpack.c.l.b16 %v157
    %v1067 = vunpack.c.h.b16 %v157
    %v1068 = vunpack.c.l.b16 %v158
    %v1069 = vunpack.c.h.b16 %v158
    %v1070 = vunpack.c.l.b16 %v159
    %v1071 = vunpack.c.h.b16 %v159
    %v1072 = vunpack.c.l.b16 %v160
    %v1073 = vunpack.c.l.b16 %v161
    %v1074 = vunpack.c.h.b16 %v161
    %v1075 = vunpack.c.l.b16 %v162
    %v1076 = vunpack.c.h.b16 %v162
    %v1077 = vunpack.c.l.b16 %v163
    %v1078 = vunpack.c.h.b16 %v163
    %v1079 = vunpack.c.l.b16 %v164
    %v1080 = vunpack.c.l.b16 %v165
    %v1081 = vunpack.c.h.b16 %v165
    %v1082 = vunpack.c.l.b16 %v166
    %v1083 = vunpack.c.h.b16 %v166
    %v1084 = vunpack.c.l.b16 %v167
    %v1085 = vunpack.c.h.b16 %v167
    %v1086 = vunpack.c.l.b16 %v168
    %v1087 = vunpack.c.l.b16 %v169
    %v1088 = vunpack.c.h.b16 %v169
    %v1089 = vunpack.c.l.b16 %v170
    %v1090 = vunpack.c.h.b16 %v170
    %v1091 = vunpack.c.l.b16 %v171
    %v1092 = vunpack.c.h.b16 %v171
    %v1093 = vunpack.c.l.b16 %v172
    %v1094 = vunpack.c.l.b16 %v173
    %v1095 = vunpack.c.h.b16 %v173
    %v1096 = vunpack.c.l.b16 %v174
    %v1097 = vunpack.c.h.b16 %v174
    %v1098 = vunpack.c.l.b16 %v175
    %v1099 = vunpack.c.h.b16 %v175
    %v1100 = vunpack.c.l.b16 %v176
    %v1101 = vunpack.c.l.b16 %v177
    %v1102 = vunpack.c.h.b16 %v177
    %v1103 = vunpack.c.l.b16 %v178
    %v1104 = vunpack.c.h.b16 %v178
    %v1105 = vunpack.c.l.b16 %v179
    %v1106 = vunpack.c.h.b16 %v179
    %v1107 = vunpack.c.l.b16 %v180
    %v1108 = vunpack.c.l.b16 %v181
    %v1109 = vunpack.c.h.b16 %v181
    %v1110 = vunpack.c.l.b16 %v182
    %v1111 = vunpack.c.h.b16 %v182
    %v1112 = vunpack.c.l.b16 %v183
    %v1113 = vunpack.c.h.b16 %v183
    %v1114 = vunpack.c.l.b16 %v184
    %v1115 = vunpack.c.l.b16 %v185
    %v1116 = vunpack.c.h.b16 %v185
    %v1117 = vunpack.c.l.b16 %v186
    %v1118 = vunpack.c.h.b16 %v186
    %v1119 = vunpack.c.l.b16 %v187
    %v1120 = vunpack.c.h.b16 %v187
    %v1121 = vunpack.c.l.b16 %v188
    %v1122 = vunpack.c.l.b16 %v189
    %v1123 = vunpack.c.h.b16 %v189
    %v1124 = vunpack.c.l.b16 %v190
    %v1125 = vunpack.c.h.b16 %v190
    %v1126 = vunpack.c.l.b16 %v191
    %v1127 = vunpack.c.h.b16 %v191
    %v1128 = vunpack.c.l.b16 %v192
    %v1129 = vunpack.c.l.b16 %v193
    %v1130 = vunpack.c.h.b16 %v193
    %v1131 = vunpack.c.l.b16 %v194
    %v1132 = vunpack.c.h.b16 %v194
    %v1133 = vunpack.c.l.b16 %v195
    %v1134 = vunpack.c.h.b16 %v195
    %v1135 = vunpack.c.l.b16 %v196
    %v1136 = vunpack.c.l.b16 %v197
    %v1137 = vunpack.c.h.b16 %v197
    %v1138 = vunpack.c.l.b16 %v198
    %v1139 = vunpack.c.h.b16 %v198
    %v1140 = vunpack.c.l.b16 %v199
    %v1141 = vunpack.c.h.b16 %v199
    %v1142 = vunpack.c.l.b16 %v200
    %v1143 = vunpack.c.l.b16 %v201
    %v1144 = vunpack.c.h.b16 %v201
    %v1145 = vunpack.c.l.b16 %v202
    %v1146 = vunpack.c.h.b16 %v202
    %v1147 = vunpack.c.l.b16 %v203
    %v1148 = vunpack.c.h.b16 %v203
    %v1149 = vunpack.c.l.b16 %v204
    %v1150 = vunpack.c.l.b16 %v205
    %v1151 = vunpack.c.h.b16 %v205
    %v1152 = vunpack.c.l.b16 %v206
    %v1153 = vunpack.c.h.b16 %v206
    %v1154 = vunpack.c.l.b16 %v207
    %v1155 = vunpack.c.h.b16 %v207
    %v1156 = vunpack.c.l.b16 %v208
    %v1157 = vunpack.c.l.b16 %v209
    %v1158 = vunpack.c.h.b16 %v209
    %v1159 = vunpack.c.l.b16 %v210
    %v1160 = vunpack.c.h.b16 %v210
    %v1161 = vunpack.c.l.b16 %v211
    %v1162 = vunpack.c.h.b16 %v211
    %v1163 = vunpack.c.l.b16 %v212
    %v1164 = vunpack.c.l.b16 %v213
    %v1165 = vunpack.c.h.b16 %v213
    %v1166 = vunpack.c.l.b16 %v214
    %v1167 = vunpack.c.h.b16 %v214
    %v1168 = vunpack.c.l.b16 %v215
    %v1169 = vunpack.c.h.b16 %v215
    %v1170 = vunpack.c.l.b16 %v216
    %v1171 = vunpack.c.l.b16 %v217
    %v1172 = vunpack.c.h.b16 %v217
    %v1173 = vunpack.c.l.b16 %v218
    %v1174 = vunpack.c.h.b16 %v218
    %v1175 = vunpack.c.l.b16 %v219
    %v1176 = vunpack.c.h.b16 %v219
    %v1177 = vunpack.c.l.b16 %v220
    %v1178 = vunpack.c.l.b16 %v221
    %v1179 = vunpack.c.h.b16 %v221
    %v1180 = vunpack.c.l.b16 %v222
    %v1181 = vunpack.c.h.b16 %v222
    %v1182 = vunpack.c.l.b16 %v223
    %v1183 = vunpack.c.h.b16 %v223
    %v1184 = vunpack.c.l.b16 %v224
    %v1185 = vunpack.c.l.b16 %v225
    %v1186 = vunpack.c.h.b16 %v225
    %v1187 = vunpack.c.l.b16 %v226
    %v1188 = vunpack.c.h.b16 %v226
    %v1189 = vunpack.c.l.b16 %v227
    %v1190 = vunpack.c.h.b16 %v227
    %v1191 = vunpack.c.l.b16 %v228
    %v1192 = vunpack.c.l.b16 %v229
    %v1193 = vunpack.c.h.b16 %v229
    %v1194 = vunpack.c.l.b16 %v230
    %v1195 = vunpack.c.h.b16 %v230
    %v1196 = vunpack.c.l.b16 %v231
    %v1197 = vunpack.c.h.b16 %v231
    %v1198 = vunpack.c.l.b16 %v232
    %v1199 = vunpack.c.l.b16 %v233
    %v1200 = vunpack.c.h.b16 %v233
    %v1201 = vunpack.c.l.b16 %v234
    %v1202 = vunpack.c.h.b16 %v234
    %v1203 = vunpack.c.l.b16 %v235
    %v1204 = vunpack.c.h.b16 %v235
    %v1205 = vunpack.c.l.b16 %v236
    %v1206 = vunpack.c.l.b16 %v237
    %v1207 = vunpack.c.h.b16 %v237
    %v1208 = vunpack.c.l.b16 %v238
    %v1209 = vunpack.c.h.b16 %v238
    %v1210 = vunpack.c.l.b16 %v239
    %v1211 = vunpack.c.h.b16 %v239
    %v1212 = vunpack.c.l.b16 %v240
    %v1213 = vunpack.c.l.b16 %v241
    %v1214 = vunpack.c.h.b16 %v241
    %v1215 = vunpack.c.l.b16 %v242
    %v1216 = vunpack.c.h.b16 %v242
    %v1217 = vunpack.c.l.b16 %v243
    %v1218 = vunpack.c.h.b16 %v243
    %v1219 = vunpack.c.l.b16 %v244
    %v1220 = vunpack.c.l.b16 %v245
    %v1221 = vunpack.c.h.b16 %v245
    %v1222 = vunpack.c.l.b16 %v246
    %v1223 = vunpack.c.h.b16 %v246
    %v1224 = vunpack.c.l.b16 %v247
    %v1225 = vunpack.c.h.b16 %v247
    %v1226 = vunpack.c.l.b16 %v248
    %v1227 = vunpack.c.l.b16 %v249
    %v1228 = vunpack.c.h.b16 %v249
    %v1229 = vunpack.c.l.b16 %v250
    %v1230 = vunpack.c.h.b16 %v250
    %v1231 = vunpack.c.l.b16 %v251
    %v1232 = vunpack.c.h.b16 %v251
    %v1233 = vunpack.c.l.b16 %v252
    %v1234 = vunpack.c.l.b16 %v253
    %v1235 = vunpack.c.h.b16 %v253
    %v1236 = vunpack.c.l.b16 %v254
    %v1237 = vunpack.c.h.b16 %v254
    %v1238 = vunpack.c.l.b16 %v255
    %v1239 = vunpack.c.h.b16 %v255
    %v1240 = vunpack.c.l.b16 %v256
    %v1241 = vunpack.c.l.b16 %v257
    %v1242 = vunpack.c.h.b16 %v257
    %v1243 = vunpack.c.l.b16 %v258
    %v1244 = vunpack.c.h.b16 %v258
    %v1245 = vunpack.c.l.b16 %v259
    %v1246 = vunpack.c.h.b16 %v259
    %v1247 = vunpack.c.l.b16 %v260
    %v1248 = vunpack.c.l.b16 %v261
    %v1249 = vunpack.c.h.b16 %v261
    %v1250 = vunpack.c.l.b16 %v262
    %v1251 = vunpack.c.h.b16 %v262
    %v1252 = vunpack.c.l.b16 %v263
    %v1253 = vunpack.c.h.b16 %v263
    %v1254 = vunpack.c.l.b16 %v264
    %v1255 = vunpack.c.l.b16 %v265
    %v1256 = vunpack.c.h.b16 %v265
    %v1257 = vunpack.c.l.b16 %v266
    %v1258 = vunpack.c.h.b16 %v266
    %v1259 = vunpack.c.l.b16 %v267
    %v1260 = vunpack.c.h.b16 %v267
    %v1261 = vunpack.c.l.b16 %v268
    %v1262 = vunpack.c.l.b16 %v269
    %v1263 = vunpack.c.h.b16 %v269
    %v1264 = vunpack.c.l.b16 %v270
    %v1265 = vunpack.c.h.b16 %v270
    %v1266 = vunpack.c.l.b16 %v271
    %v1267 = vunpack.c.h.b16 %v271
    %v1268 = vunpack.c.l.b16 %v272
    %v1269 = vunpack.c.l.b16 %v273
    %v1270 = vunpack.c.h.b16 %v273
    %v1271 = vunpack.c.l.b16 %v274
    %v1272 = vunpack.c.h.b16 %v274
    %v1273 = vunpack.c.l.b16 %v275
    %v1274 = vunpack.c.h.b16 %v275
    %v1275 = vunpack.c.l.b16 %v276
    %v1276 = vunpack.c.l.b16 %v277
    %v1277 = vunpack.c.h.b16 %v277
    %v1278 = vunpack.c.l.b16 %v278
    %v1279 = vunpack.c.h.b16 %v278
    %v1280 = vunpack.c.l.b16 %v279
    %v1281 = vunpack.c.h.b16 %v279
    %v1282 = vunpack.c.l.b16 %v280
    %v1283 = vunpack.c.l.b16 %v281
    %v1284 = vunpack.c.h.b16 %v281
    %v1285 = vunpack.c.l.b16 %v282
    %v1286 = vunpack.c.h.b16 %v282
    %v1287 = vunpack.c.l.b16 %v283
    %v1288 = vunpack.c.h.b16 %v283
    %v1289 = vunpack.c.l.b16 %v284
    %v1290 = vunpack.c.l.b16 %v285
    %v1291 = vunpack.c.h.b16 %v285
    %v1292 = vunpack.c.l.b16 %v286
    %v1293 = vunpack.c.h.b16 %v286
    %v1294 = vunpack.c.l.b16 %v287
    %v1295 = vunpack.c.h.b16 %v287
    %v1296 = vunpack.c.l.b16 %v288
    %v1297 = vunpack.c.l.b16 %v289
    %v1298 = vunpack.c.h.b16 %v289
    %v1299 = vunpack.c.l.b16 %v290
    %v1300 = vunpack.c.h.b16 %v290
    %v1301 = vunpack.c.l.b16 %v291
    %v1302 = vunpack.c.h.b16 %v291
    %v1303 = vunpack.c.l.b16 %v292
    %v1304 = vunpack.c.l.b16 %v293
    %v1305 = vunpack.c.h.b16 %v293
    %v1306 = vunpack.c.l.b16 %v294
    %v1307 = vunpack.c.h.b16 %v294
    %v1308 = vunpack.c.l.b16 %v295
    %v1309 = vunpack.c.h.b16 %v295
    %v1310 = vunpack.c.l.b16 %v296
    %v1311 = vunpack.c.l.b16 %v297
    %v1312 = vunpack.c.h.b16 %v297
    %v1313 = vunpack.c.l.b16 %v298
    %v1314 = vunpack.c.h.b16 %v298
    %v1315 = vunpack.c.l.b16 %v299
    %v1316 = vunpack.c.h.b16 %v299
    %v1317 = vunpack.c.l.b16 %v300
    %v1318 = vunpack.c.l.b16 %v301
    %v1319 = vunpack.c.h.b16 %v301
    %v1320 = vunpack.c.l.b16 %v302
    %v1321 = vunpack.c.h.b16 %v302
    %v1322 = vunpack.c.l.b16 %v303
    %v1323 = vunpack.c.h.b16 %v303
    %v1324 = vunpack.c.l.b16 %v304
    %v1325 = vunpack.c.l.b16 %v305
    %v1326 = vunpack.c.h.b16 %v305
    %v1327 = vunpack.c.l.b16 %v306
    %v1328 = vunpack.c.h.b16 %v306
    %v1329 = vunpack.c.l.b16 %v307
    %v1330 = vunpack.c.h.b16 %v307
    %v1331 = vunpack.c.l.b16 %v308
    %v1332 = vunpack.c.l.b16 %v309
    %v1333 = vunpack.c.h.b16 %v309
    %v1334 = vunpack.c.l.b16 %v310
    %v1335 = vunpack.c.h.b16 %v310
    %v1336 = vunpack.c.l.b16 %v311
    %v1337 = vunpack.c.h.b16 %v311
    %v1338 = vunpack.c.l.b16 %v312
    %v1339 = vunpack.c.l.b16 %v313
    %v1340 = vunpack.c.h.b16 %v313
    %v1341 = vunpack.c.l.b16 %v314
    %v1342 = vunpack.c.h.b16 %v314
    %v1343 = vunpack.c.l.b16 %v315
    %v1344 = vunpack.c.h.b16 %v315
    %v1345 = vunpack.c.l.b16 %v316
    %v1346 = vunpack.c.l.b16 %v317
    %v1347 = vunpack.c.h.b16 %v317
    %v1348 = vunpack.c.l.b16 %v318
    %v1349 = vunpack.c.h.b16 %v318
    %v1350 = vunpack.c.l.b16 %v319
    %v1351 = vunpack.c.h.b16 %v319
    %v1352 = vunpack.c.l.b16 %v320
    %v1353 = vunpack.c.l.b16 %v321
    %v1354 = vunpack.c.h.b16 %v321
    %v1355 = vunpack.c.l.b16 %v322
    %v1356 = vunpack.c.h.b16 %v322
    %v1357 = vunpack.c.l.b16 %v323
    %v1358 = vunpack.c.h.b16 %v323
    %v1359 = vunpack.c.l.b16 %v324
    %v1360 = vunpack.c.l.b16 %v325
    %v1361 = vunpack.c.h.b16 %v325
    %v1362 = vunpack.c.l.b16 %v326
    %v1363 = vunpack.c.h.b16 %v326
    %v1364 = vunpack.c.l.b16 %v327
    %v1365 = vunpack.c.h.b16 %v327
    %v1366 = vunpack.c.l.b16 %v328
    %v1367 = vunpack.c.l.b16 %v329
    %v1368 = vunpack.c.h.b16 %v329
    %v1369 = vunpack.c.l.b16 %v330
    %v1370 = vunpack.c.h.b16 %v330
    %v1371 = vunpack.c.l.b16 %v331
    %v1372 = vunpack.c.h.b16 %v331
    %v1373 = vunpack.c.l.b16 %v332
    %v1374 = vunpack.c.l.b16 %v333
    %v1375 = vunpack.c.h.b16 %v333
    %v1376 = vunpack.c.l.b16 %v334
    %v1377 = vunpack.c.h.b16 %v334
    %v1378 = vunpack.c.l.b16 %v335
    %v1379 = vunpack.c.h.b16 %v335
    %v1380 = vunpack.c.l.b16 %v336
    %v1381 = vunpack.c.l.b16 %v337
    %v1382 = vunpack.c.h.b16 %v337
    %v1383 = vunpack.c.l.b16 %v338
    %v1384 = vunpack.c.h.b16 %v338
    %v1385 = vunpack.c.l.b16 %v339
    %v1386 = vunpack.c.h.b16 %v339
    %v1387 = vunpack.c.l.b16 %v340
    %v1388 = vunpack.c.l.b16 %v341
    %v1389 = vunpack.c.h.b16 %v341
    %v1390 = vunpack.c.l.b16 %v342
    %v1391 = vunpack.c.h.b16 %v342
    %v1392 = vunpack.c.l.b16 %v343
    %v1393 = vunpack.c.h.b16 %v343
    %v1394 = vunpack.c.l.b16 %v344
    %v1395 = vunpack.c.l.b16 %v345
    %v1396 = vunpack.c.h.b16 %v345
    %v1397 = vunpack.c.l.b16 %v346
    %v1398 = vunpack.c.h.b16 %v346
    %v1399 = vunpack.c.l.b16 %v347
    %v1400 = vunpack.c.h.b16 %v347
    %v1401 = vunpack.c.l.b16 %v348
    %v1402 = vunpack.c.l.b16 %v349
    %v1403 = vunpack.c.h.b16 %v349
    %v1404 = vunpack.c.l.b16 %v350
    %v1405 = vunpack.c.h.b16 %v350
    %v1406 = vunpack.c.l.b16 %v351
    %v1407 = vunpack.c.h.b16 %v351
    %v1408 = vunpack.c.l.b16 %v352
    %v1409 = vunpack.c.l.b16 %v353
    %v1410 = vunpack.c.h.b16 %v353
    %v1411 = vunpack.c.l.b16 %v354
    %v1412 = vunpack.c.h.b16 %v354
    %v1413 = vunpack.c.l.b16 %v355
    %v1414 = vunpack.c.h.b16 %v355
    %v1415 = vunpack.c.l.b16 %v356
    %v1416 = vunpack.c.l.b16 %v357
    %v1417 = vunpack.c.h.b16 %v357
    %v1418 = vunpack.c.l.b16 %v358
    %v1419 = vunpack.c.h.b16 %v358
    %v1420 = vunpack.c.l.b16 %v359
    %v1421 = vunpack.c.h.b16 %v359
    %v1422 = vunpack.c.l.b16 %v360
    %v1423 = vunpack.c.l.b16 %v361
    %v1424 = vunpack.c.h.b16 %v361
    %v1425 = vunpack.c.l.b16 %v362
    %v1426 = vunpack.c.h.b16 %v362
    %v1427 = vunpack.c.l.b16 %v363
    %v1428 = vunpack.c.h.b16 %v363
    %v1429 = vunpack.c.l.b16 %v364
    %v1430 = vunpack.c.l.b16 %v365
    %v1431 = vunpack.c.h.b16 %v365
    %v1432 = vunpack.c.l.b16 %v366
    %v1433 = vunpack.c.h.b16 %v366
    %v1434 = vunpack.c.l.b16 %v367
    %v1435 = vunpack.c.h.b16 %v367
    %v1436 = vunpack.c.l.b16 %v368
    %v1437 = vunpack.c.l.b16 %v369
    %v1438 = vunpack.c.h.b16 %v369
    %v1439 = vunpack.c.l.b16 %v370
    %v1440 = vunpack.c.h.b16 %v370
    %v1441 = vunpack.c.l.b16 %v371
    %v1442 = vunpack.c.h.b16 %v371
    %v1443 = vunpack.c.l.b16 %v372
    %v1444 = vunpack.c.l.b16 %v373
    %v1445 = vunpack.c.h.b16 %v373
    %v1446 = vunpack.c.l.b16 %v374
    %v1447 = vunpack.c.h.b16 %v374
    %v1448 = vunpack.c.l.b16 %v375
    %v1449 = vunpack.c.h.b16 %v375
    %v1450 = vunpack.c.l.b16 %v376
    %v1451 = vunpack.c.l.b16 %v377
    %v1452 = vunpack.c.h.b16 %v377
    %v1453 = vunpack.c.l.b16 %v378
    %v1454 = vunpack.c.h.b16 %v378
    %v1455 = vunpack.c.l.b16 %v379
    %v1456 = vunpack.c.h.b16 %v379
    %v1457 = vunpack.c.l.b16 %v380
    %v1458 = vunpack.c.l.b16 %v381
    %v1459 = vunpack.c.h.b16 %v381
    %v1460 = vunpack.c.l.b16 %v382
    %v1461 = vunpack.c.h.b16 %v382
    %v1462 = vunpack.c.l.b16 %v383
    %v1463 = vunpack.c.h.b16 %v383
    %v1464 = vunpack.c.l.b16 %v384
    %v1465 = vunpack.c.l.b16 %v385
    %v1466 = vunpack.c.h.b16 %v385
    %v1467 = vunpack.c.l.b16 %v386
    %v1468 = vunpack.c.h.b16 %v386
    %v1469 = vunpack.c.l.b16 %v387
    %v1470 = vunpack.c.h.b16 %v387
    %v1471 = vunpack.c.l.b16 %v388
    %v1472 = vunpack.c.l.b16 %v389
    %v1473 = vunpack.c.h.b16 %v389
    %v1474 = vunpack.c.l.b16 %v390
    %v1475 = vunpack.c.h.b16 %v390
    %v1476 = vunpack.c.l.b16 %v391
    %v1477 = vunpack.c.h.b16 %v391
    %v1478 = vunpack.c.l.b16 %v392
    %v1479 = vunpack.c.l.b16 %v393
    %v1480 = vunpack.c.h.b16 %v393
    %v1481 = vunpack.c.l.b16 %v394
    %v1482 = vunpack.c.h.b16 %v394
    %v1483 = vunpack.c.l.b16 %v395
    %v1484 = vunpack.c.h.b16 %v395
    %v1485 = vunpack.c.l.b16 %v396
    %v1486 = vunpack.c.l.b16 %v397
    %v1487 = vunpack.c.h.b16 %v397
    %v1488 = vunpack.c.l.b16 %v398
    %v1489 = vunpack.c.h.b16 %v398
    %v1490 = vunpack.c.l.b16 %v399
    %v1491 = vunpack.c.h.b16 %v399
    %v1492 = vunpack.c.l.b16 %v400
    %v1493 = vunpack.c.l.b16 %v401
    %v1494 = vunpack.c.h.b16 %v401
    %v1495 = vunpack.c.l.b16 %v402
    %v1496 = vunpack.c.h.b16 %v402
    %v1497 = vunpack.c.l.b16 %v403
    %v1498 = vunpack.c.h.b16 %v403
    %v1499 = vunpack.c.l.b16 %v404
    %v1500 = vunpack.c.l.b16 %v405
    %v1501 = vunpack.c.h.b16 %v405
    %v1502 = vunpack.c.l.b16 %v406
    %v1503 = vunpack.c.h.b16 %v406
    %v1504 = vunpack.c.l.b16 %v407
    %v1505 = vunpack.c.h.b16 %v407
    %v1506 = vunpack.c.l.b16 %v408
    %v1507 = vunpack.c.l.b16 %v409
    %v1508 = vunpack.c.h.b16 %v409
    %v1509 = vunpack.c.l.b16 %v410
    %v1510 = vunpack.c.h.b16 %v410
    %v1511 = vunpack.c.l.b16 %v411
    %v1512 = vunpack.c.h.b16 %v411
    %v1513 = vunpack.c.l.b16 %v412
    %v1514 = vunpack.c.l.b16 %v413
    %v1515 = vunpack.c.h.b16 %v413
    %v1516 = vunpack.c.l.b16 %v414
    %v1517 = vunpack.c.h.b16 %v414
    %v1518 = vunpack.c.l.b16 %v415
    %v1519 = vunpack.c.h.b16 %v415
    %v1520 = vunpack.c.l.b16 %v416
    %v1521 = vunpack.c.l.b16 %v417
    %v1522 = vunpack.c.h.b16 %v417
    %v1523 = vunpack.c.l.b16 %v418
    %v1524 = vunpack.c.h.b16 %v418
    %v1525 = vunpack.c.l.b16 %v419
    %v1526 = vunpack.c.h.b16 %v419
    %v1527 = vunpack.c.l.b16 %v420
    %v1528 = vunpack.c.l.b16 %v421
    %v1529 = vunpack.c.h.b16 %v421
    %v1530 = vunpack.c.l.b16 %v422
    %v1531 = vunpack.c.h.b16 %v422
    %v1532 = vunpack.c.l.b16 %v423
    %v1533 = vunpack.c.h.b16 %v423
    %v1534 = vunpack.c.l.b16 %v424
    %v1535 = vunpack.c.l.b16 %v425
    %v1536 = vunpack.c.h.b16 %v425
    %v1537 = vunpack.c.l.b16 %v426
    %v1538 = vunpack.c.h.b16 %v426
    %v1539 = vunpack.c.l.b16 %v427
    %v1540 = vunpack.c.h.b16 %v427
    %v1541 = vunpack.c.l.b16 %v428
    %v1542 = vunpack.c.l.b16 %v429
    %v1543 = vunpack.c.h.b16 %v429
    %v1544 = vunpack.c.l.b16 %v430
    %v1545 = vunpack.c.h.b16 %v430
    %v1546 = vunpack.c.l.b16 %v431
    %v1547 = vunpack.c.h.b16 %v431
    %v1548 = vunpack.c.l.b16 %v432
    %v1549 = vunpack.c.l.b16 %v433
    %v1550 = vunpack.c.h.b16 %v433
    %v1551 = vunpack.c.l.b16 %v434
    %v1552 = vunpack.c.h.b16 %v434
    %v1553 = vunpack.c.l.b16 %v435
    %v1554 = vunpack.c.h.b16 %v435
    %v1555 = vunpack.c.l.b16 %v436
    %v1556 = vunpack.c.l.b16 %v437
    %v1557 = vunpack.c.h.b16 %v437
    %v1558 = vunpack.c.l.b16 %v438
    %v1559 = vunpack.c.h.b16 %v438
    %v1560 = vunpack.c.l.b16 %v439
    %v1561 = vunpack.c.h.b16 %v439
    %v1562 = vunpack.c.l.b16 %v440
    %v1563 = vunpack.c.l.b16 %v441
    %v1564 = vunpack.c.h.b16 %v441
    %v1565 = vunpack.c.l.b16 %v442
    %v1566 = vunpack.c.h.b16 %v442
    %v1567 = vunpack.c.l.b16 %v443
    %v1568 = vunpack.c.h.b16 %v443
    %v1569 = vunpack.c.l.b16 %v444
    %v1570 = vunpack.c.l.b16 %v445
    %v1571 = vunpack.c.h.b16 %v445
    %v1572 = vunpack.c.l.b16 %v446
    %v1573 = vunpack.c.h.b16 %v446
    %v1574 = vunpack.c.l.b16 %v447
    %v1575 = vunpack.c.h.b16 %v447
    %v1576 = vunpack.c.l.b16 %v448
    %v1577 = vunpack.c.l.b16 %v449
    %v1578 = vunpack.c.h.b16 %v449
    %v1579 = vunpack.c.l.b16 %v450
    %v1580 = vunpack.c.h.b16 %v450
    %v1581 = vunpack.c.l.b16 %v451
    %v1582 = vunpack.c.h.b16 %v451
    %v1583 = vunpack.c.l.b16 %v452
    %v1584 = vunpack.c.l.b16 %v453
    %v1585 = vunpack.c.h.b16 %v453
    %v1586 = vunpack.c.l.b16 %v454
    %v1587 = vunpack.c.h.b16 %v454
    %v1588 = vunpack.c.l.b16 %v455
    %v1589 = vunpack.c.h.b16 %v455
    %v1590 = vunpack.c.l.b16 %v456
    %v1591 = vunpack.c.l.b16 %v457
    %v1592 = vunpack.c.h.b16 %v457
    %v1593 = vunpack.c.l.b16 %v458
    %v1594 = vunpack.c.h.b16 %v458
    %v1595 = vunpack.c.l.b16 %v459
    %v1596 = vunpack.c.h.b16 %v459
    %v1597 = vunpack.c.l.b16 %v460
    %v1598 = vunpack.c.l.b16 %v461
    %v1599 = vunpack.c.h.b16 %v461
    %v1600 = vunpack.c.l.b16 %v462
    %v1601 = vunpack.c.h.b16 %v462
    %v1602 = vunpack.c.l.b16 %v463
    %v1603 = vunpack.c.h.b16 %v463
    %v1604 = vunpack.c.l.b16 %v464
    %v1605 = vpack.c.b16 %v912, %v905
    %v1606 = vpack.c.b16 %v913, %v906
    %v1607 = vpack.c.b16 %v914, %v907
    %v1608 = vpack.c.b16 %v915, %v908
    %v1609 = vpack.c.b16 %v916, %v909
    %v1610 = vpack.c.b16 %v917, %v910
    %v1611 = vpack.c.b16 %v918, %v911
    %v1612 = vpack.c.b16 %v926, %v919
    %v1613 = vpack.c.b16 %v927, %v920
    %v1614 = vpack.c.b16 %v928, %v921
    %v1615 = vpack.c.b16 %v929, %v922
    %v1616 = vpack.c.b16 %v930, %v923
    %v1617 = vpack.c.b16 %v931, %v924
    %v1618 = vpack.c.b16 %v932, %v925
    %v1619 = vpack.c.b16 %v940, %v933
    %v1620 = vpack.c.b16 %v941, %v934
    %v1621 = vpack.c.b16 %v942, %v935
    %v1622 = vpack.c.b16 %v943, %v936
    %v1623 = vpack.c.b16 %v944, %v937
    %v1624 = vpack.c.b16 %v945, %v938
    %v1625 = vpack.c.b16 %v946, %v939
    %v1626 = vpack.c.b16 %v954, %v947
    %v1627 = vpack.c.b16 %v955, %v948
    %v1628 = vpack.c.b16 %v956, %v949
    %v1629 = vpack.c.b16 %v957, %v950
    %v1630 = vpack.c.b16 %v958, %v951
    %v1631 = vpack.c.b16 %v959, %v952
    %v1632 = vpack.c.b16 %v960, %v953
    %v1633 = vpack.c.b16 %v968, %v961
    %v1634 = vpack.c.b16 %v969, %v962
    %v1635 = vpack.c.b16 %v970, %v963
    %v1636 = vpack.c.b16 %v971, %v964
    %v1637 = vpack.c.b16 %v972, %v965
    %v1638 = vpack.c.b16 %v973, %v966
    %v1639 = vpack.c.b16 %v974, %v967
    %v1640 = vpack.c.b16 %v982, %v975
    %v1641 = vpack.c.b16 %v983, %v976
    %v1642 = vpack.c.b16 %v984, %v977
    %v1643 = vpack.c.b16 %v985, %v978
    %v1644 = vpack.c.b16 %v986, %v979
    %v1645 = vpack.c.b16 %v987, %v980
    %v1646 = vpack.c.b16 %v988, %v981
    %v1647 = vpack.c.b16 %v996, %v989
    %v1648 = vpack.c.b16 %v997, %v990
    %v1649 = vpack.c.b16 %v998, %v991
    %v1650 = vpack.c.b16 %v999, %v992
    %v1651 = vpack.c.b16 %v1000, %v993
    %v1652 = vpack.c.b16 %v1001, %v994
    %v1653 = vpack.c.b16 %v1002, %v995
    %v1654 = vpack.c.b16 %v1010, %v1003
    %v1655 = vpack.c.b16 %v1011, %v1004
    %v1656 = vpack.c.b16 %v1012, %v1005
    %v1657 = vpack.c.b16 %v1013, %v1006
    %v1658 = vpack.c.b16 %v1014, %v1007
    %v1659 = vpack.c.b16 %v1015, %v1008
    %v1660 = vpack.c.b16 %v1016, %v1009
    %v1661 = vpack.c.b16 %v1024, %v1017
    %v1662 = vpack.c.b16 %v1025, %v1018
    %v1663 = vpack.c.b16 %v1026, %v1019
    %v1664 = vpack.c.b16 %v1027, %v1020
    %v1665 = vpack.c.b16 %v1028, %v1021
    %v1666 = vpack.c.b16 %v1029, %v1022
    %v1667 = vpack.c.b16 %v1030, %v1023
    %v1668 = vpack.c.b16 %v1038, %v1031
    %v1669 = vpack.c.b16 %v1039, %v1032
    %v1670 = vpack.c.b16 %v1040, %v1033
    %v1671 = vpack.c.b16 %v1041, %v1034
    %v1672 = vpack.c.b16 %v1042, %v1035
    %v1673 = vpack.c.b16 %v1043, %v1036
    %v1674 = vpack.c.b16 %v1044, %v1037
    %v1675 = vpack.c.b16 %v1052, %v1045
    %v1676 = vpack.c.b16 %v1053, %v1046
    %v1677 = vpack.c.b16 %v1054, %v1047
    %v1678 = vpack.c.b16 %v1055, %v1048
    %v1679 = vpack.c.b16 %v1056, %v1049
    %v1680 = vpack.c.b16 %v1057, %v1050
    %v1681 = vpack.c.b16 %v1058, %v1051
    %v1682 = vpack.c.b16 %v1066, %v1059
    %v1683 = vpack.c.b16 %v1067, %v1060
    %v1684 = vpack.c.b16 %v1068, %v1061
    %v1685 = vpack.c.b16 %v1069, %v1062
    %v1686 = vpack.c.b16 %v1070, %v1063
    %v1687 = vpack.c.b16 %v1071, %v1064
    %v1688 = vpack.c.b16 %v1072, %v1065
    %v1689 = vpack.c.b16 %v1080, %v1073
    %v1690 = vpack.c.b16 %v1081, %v1074
    %v1691 = vpack.c.b16 %v1082, %v1075
    %v1692 = vpack.c.b16 %v1083, %v1076
    %v1693 = vpack.c.b16 %v1084, %v1077
    %v1694 = vpack.c.b16 %v1085, %v1078
    %v1695 = vpack.c.b16 %v1086, %v1079
    %v1696 = vpack.c.b16 %v1094, %v1087
    %v1697 = vpack.c.b16 %v1095, %v1088
    %v1698 = vpack.c.b16 %v1096, %v1089
    %v1699 = vpack.c.b16 %v1097, %v1090
    %v1700 = vpack.c.b16 %v1098, %v1091
    %v1701 = vpack.c.b16 %v1099, %v1092
    %v1702 = vpack.c.b16 %v1100, %v1093
    %v1703 = vpack.c.b16 %v1108, %v1101
    %v1704 = vpack.c.b16 %v1109, %v1102
    %v1705 = vpack.c.b16 %v1110, %v1103
    %v1706 = vpack.c.b16 %v1111, %v1104
    %v1707 = vpack.c.b16 %v1112, %v1105
    %v1708 = vpack.c.b16 %v1113, %v1106
    %v1709 = vpack.c.b16 %v1114, %v1107
    %v1710 = vpack.c.b16 %v1122, %v1115
    %v1711 = vpack.c.b16 %v1123, %v1116
    %v1712 = vpack.c.b16 %v1124, %v1117
    %v1713 = vpack.c.b16 %v1125, %v1118
    %v1714 = vpack.c.b16 %v1126, %v1119
    %v1715 = vpack.c.b16 %v1127, %v1120
    %v1716 = vpack.c.b16 %v1128, %v1121
    %v1717 = vpack.c.b16 %v1136, %v1129
    %v1718 = vpack.c.b16 %v1137, %v1130
    %v1719 = vpack.c.b16 %v1138, %v1131
    %v1720 = vpack.c.b16 %v1139, %v1132
    %v1721 = vpack.c.b16 %v1140, %v1133
    %v1722 = vpack.c.b16 %v1141, %v1134
    %v1723 = vpack.c.b16 %v1142, %v1135
    %v1724 = vpack.c.b16 %v1150, %v1143
    %v1725 = vpack.c.b16 %v1151, %v1144
    %v1726 = vpack.c.b16 %v1152, %v1145
    %v1727 = vpack.c.b16 %v1153, %v1146
    %v1728 = vpack.c.b16 %v1154, %v1147
    %v1729 = vpack.c.b16 %v1155, %v1148
    %v1730 = vpack.c.b16 %v1156, %v1149
    %v1731 = vpack.c.b16 %v1164, %v1157
    %v1732 = vpack.c.b16 %v1165, %v1158
    %v1733 = vpack.c.b16 %v1166, %v1159
    %v1734 = vpack.c.b16 %v1167, %v1160
    %v1735 = vpack.c.b16 %v1168, %v1161
    %v1736 = vpack.c.b16 %v1169, %v1162
    %v1737 = vpack.c.b16 %v1170, %v1163
    %v1738 = vpack.c.b16 %v1178, %v1171
    %v1739 = vpack.c.b16 %v1179, %v1172
    %v1740 = vpack.c.b16 %v1180, %v1173
    %v1741 = vpack.c.b16 %v1181, %v1174
    %v1742 = vpack.c.b16 %v1182, %v1175
    %v1743 = vpack.c.b16 %v1183, %v1176
    %v1744 = vpack.c.b16 %v1184, %v1177
    %v1745 = vpack.c.b16 %v1192, %v1185
    %v1746 = vpack.c.b16 %v1193, %v1186
    %v1747 = vpack.c.b16 %v1194, %v1187
    %v1748 = vpack.c.b16 %v1195, %v1188
    %v1749 = vpack.c.b16 %v1196, %v1189
    %v1750 = vpack.c.b16 %v1197, %v1190
    %v1751 = vpack.c.b16 %v1198, %v1191
    %v1752 = vpack.c.b16 %v1206, %v1199
    %v1753 = vpack.c.b16 %v1207, %v1200
    %v1754 = vpack.c.b16 %v1208, %v1201
    %v1755 = vpack.c.b16 %v1209, %v1202
    %v1756 = vpack.c.b16 %v1210, %v1203
    %v1757 = vpack.c.b16 %v1211, %v1204
    %v1758 = vpack.c.b16 %v1212, %v1205
    %v1759 = vpack.c.b16 %v1220, %v1213
    %v1760 = vpack.c.b16 %v1221, %v1214
    %v1761 = vpack.c.b16 %v1222, %v1215
    %v1762 = vpack.c.b16 %v1223, %v1216
    %v1763 = vpack.c.b16 %v1224, %v1217
    %v1764 = vpack.c.b16 %v1225, %v1218
    %v1765 = vpack.c.b16 %v1226, %v1219
    %v1766 = vpack.c.b16 %v1234, %v1227
    %v1767 = vpack.c.b16 %v1235, %v1228
    %v1768 = vpack.c.b16 %v1236, %v1229
    %v1769 = vpack.c.b16 %v1237, %v1230
    %v1770 = vpack.c.b16 %v1238, %v1231
    %v1771 = vpack.c.b16 %v1239, %v1232
    %v1772 = vpack.c.b16 %v1240, %v1233
    %v1773 = vpack.c.b16 %v1248, %v1241
    %v1774 = vpack.c.b16 %v1249, %v1242
    %v1775 = vpack.c.b16 %v1250, %v1243
    %v1776 = vpack.c.b16 %v1251, %v1244
    %v1777 = vpack.c.b16 %v1252, %v1245
    %v1778 = vpack.c.b16 %v1253, %v1246
    %v1779 = vpack.c.b16 %v1254, %v1247
    %v1780 = vpack.c.b16 %v1262, %v1255
    %v1781 = vpack.c.b16 %v1263, %v1256
    %v1782 = vpack.c.b16 %v1264, %v1257
    %v1783 = vpack.c.b16 %v1265, %v1258
    %v1784 = vpack.c.b16 %v1266, %v1259
    %v1785 = vpack.c.b16 %v1267, %v1260
    %v1786 = vpack.c.b16 %v1268, %v1261
    %v1787 = vpack.c.b16 %v1276, %v1269
    %v1788 = vpack.c.b16 %v1277, %v1270
    %v1789 = vpack.c.b16 %v1278, %v1271
    %v1790 = vpack.c.b16 %v1279, %v1272
    %v1791 = vpack.c.b16 %v1280, %v1273
    %v1792 = vpack.c.b16 %v1281, %v1274
    %v1793 = vpack.c.b16 %v1282, %v1275
    %v1794 = vpack.c.b16 %v1290, %v1283
    %v1795 = vpack.c.b16 %v1291, %v1284
    %v1796 = vpack.c.b16 %v1292, %v1285
    %v1797 = vpack.c.b16 %v1293, %v1286
    %v1798 = vpack.c.b16 %v1294, %v1287
    %v1799 = vpack.c.b16 %v1295, %v1288
    %v1800 = vpack.c.b16 %v1296, %v1289
    %v1801 = vpack.c.b16 %v1304, %v1297
    %v1802 = vpack.c.b16 %v1305, %v1298
    %v1803 = vpack.c.b16 %v1306, %v1299
    %v1804 = vpack.c.b16 %v1307, %v1300
    %v1805 = vpack.c.b16 %v1308, %v1301
    %v1806 = vpack.c.b16 %v1309, %v1302
    %v1807 = vpack.c.b16 %v1310, %v1303
    %v1808 = vpack.c.b16 %v1318, %v1311
    %v1809 = vpack.c.b16 %v1319, %v1312
    %v1810 = vpack.c.b16 %v1320, %v1313
    %v1811 = vpack.c.b16 %v1321, %v1314
    %v1812 = vpack.c.b16 %v1322, %v1315
    %v1813 = vpack.c.b16 %v1323, %v1316
    %v1814 = vpack.c.b16 %v1324, %v1317
    %v1815 = vpack.c.b16 %v1332, %v1325
    %v1816 = vpack.c.b16 %v1333, %v1326
    %v1817 = vpack.c.b16 %v1334, %v1327
    %v1818 = vpack.c.b16 %v1335, %v1328
    %v1819 = vpack.c.b16 %v1336, %v1329
    %v1820 = vpack.c.b16 %v1337, %v1330
    %v1821 = vpack.c.b16 %v1338, %v1331
    %v1822 = vpack.c.b16 %v1346, %v1339
    %v1823 = vpack.c.b16 %v1347, %v1340
    %v1824 = vpack.c.b16 %v1348, %v1341
    %v1825 = vpack.c.b16 %v1349, %v1342
    %v1826 = vpack.c.b16 %v1350, %v1343
    %v1827 = vpack.c.b16 %v1351, %v1344
    %v1828 = vpack.c.b16 %v1352, %v1345
    %v1829 = vpack.c.b16 %v1360, %v1353
    %v1830 = vpack.c.b16 %v1361, %v1354
    %v1831 = vpack.c.b16 %v1362, %v1355
    %v1832 = vpack.c.b16 %v1363, %v1356
    %v1833 = vpack.c.b16 %v1364, %v1357
    %v1834 = vpack.c.b16 %v1365, %v1358
    %v1835 = vpack.c.b16 %v1366, %v1359
    %v1836 = vpack.c.b16 %v1374, %v1367
    %v1837 = vpack.c.b16 %v1375, %v1368
    %v1838 = vpack.c.b16 %v1376, %v1369
    %v1839 = vpack.c.b16 %v1377, %v1370
    %v1840 = vpack.c.b16 %v1378, %v1371
    %v1841 = vpack.c.b16 %v1379, %v1372
    %v1842 = vpack.c.b16 %v1380, %v1373
    %v1843 = vpack.c.b16 %v1388, %v1381
    %v1844 = vpack.c.b16 %v1389, %v1382
    %v1845 = vpack.c.b16 %v1390, %v1383
    %v1846 = vpack.c.b16 %v1391, %v1384
    %v1847 = vpack.c.b16 %v1392, %v1385
    %v1848 = vpack.c.b16 %v1393, %v1386
    %v1849 = vpack.c.b16 %v1394, %v1387
    %v1850 = vpack.c.b16 %v1402, %v1395
    %v1851 = vpack.c.b16 %v1403, %v1396
    %v1852 = vpack.c.b16 %v1404, %v1397
    %v1853 = vpack.c.b16 %v1405, %v1398
    %v1854 = vpack.c.b16 %v1406, %v1399
    %v1855 = vpack.c.b16 %v1407, %v1400
    %v1856 = vpack.c.b16 %v1408, %v1401
    %v1857 = vpack.c.b16 %v1416, %v1409
    %v1858 = vpack.c.b16 %v1417, %v1410
    %v1859 = vpack.c.b16 %v1418, %v1411
    %v1860 = vpack.c.b16 %v1419, %v1412
    %v1861 = vpack.c.b16 %v1420, %v1413
    %v1862 = vpack.c.b16 %v1421, %v1414
    %v1863 = vpack.c.b16 %v1422, %v1415
    %v1864 = vpack.c.b16 %v1430, %v1423
    %v1865 = vpack.c.b16 %v1431, %v1424
    %v1866 = vpack.c.b16 %v1432, %v1425
    %v1867 = vpack.c.b16 %v1433, %v1426
    %v1868 = vpack.c.b16 %v1434, %v1427
    %v1869 = vpack.c.b16 %v1435, %v1428
    %v1870 = vpack.c.b16 %v1436, %v1429
    %v1871 = vpack.c.b16 %v1444, %v1437
    %v1872 = vpack.c.b16 %v1445, %v1438
    %v1873 = vpack.c.b16 %v1446, %v1439
    %v1874 = vpack.c.b16 %v1447, %v1440
    %v1875 = vpack.c.b16 %v1448, %v1441
    %v1876 = vpack.c.b16 %v1449, %v1442
    %v1877 = vpack.c.b16 %v1450, %v1443
    %v1878 = vpack.c.b16 %v1458, %v1451
    %v1879 = vpack.c.b16 %v1459, %v1452
    %v1880 = vpack.c.b16 %v1460, %v1453
    %v1881 = vpack.c.b16 %v1461, %v1454
    %v1882 = vpack.c.b16 %v1462, %v1455
    %v1883 = vpack.c.b16 %v1463, %v1456
    %v1884 = vpack.c.b16 %v1464, %v1457
    %v1885 = vpack.c.b16 %v1472, %v1465
    %v1886 = vpack.c.b16 %v1473, %v1466
    %v1887 = vpack.c.b16 %v1474, %v1467
    %v1888 = vpack.c.b16 %v1475, %v1468
    %v1889 = vpack.c.b16 %v1476, %v1469
    %v1890 = vpack.c.b16 %v1477, %v1470
    %v1891 = vpack.c.b16 %v1478, %v1471
    %v1892 = vpack.c.b16 %v1486, %v1479
    %v1893 = vpack.c.b16 %v1487, %v1480
    %v1894 = vpack.c.b16 %v1488, %v1481
    %v1895 = vpack.c.b16 %v1489, %v1482
    %v1896 = vpack.c.b16 %v1490, %v1483
    %v1897 = vpack.c.b16 %v1491, %v1484
    %v1898 = vpack.c.b16 %v1492, %v1485
    %v1899 = vpack.c.b16 %v1500, %v1493
    %v1900 = vpack.c.b16 %v1501, %v1494
    %v1901 = vpack.c.b16 %v1502, %v1495
    %v1902 = vpack.c.b16 %v1503, %v1496
    %v1903 = vpack.c.b16 %v1504, %v1497
    %v1904 = vpack.c.b16 %v1505, %v1498
    %v1905 = vpack.c.b16 %v1506, %v1499
    %v1906 = vpack.c.b16 %v1514, %v1507
    %v1907 = vpack.c.b16 %v1515, %v1508
    %v1908 = vpack.c.b16 %v1516, %v1509
    %v1909 = vpack.c.b16 %v1517, %v1510
    %v1910 = vpack.c.b16 %v1518, %v1511
    %v1911 = vpack.c.b16 %v1519, %v1512
    %v1912 = vpack.c.b16 %v1520, %v1513
    %v1913 = vpack.c.b16 %v1528, %v1521
    %v1914 = vpack.c.b16 %v1529, %v1522
    %v1915 = vpack.c.b16 %v1530, %v1523
    %v1916 = vpack.c.b16 %v1531, %v1524
    %v1917 = vpack.c.b16 %v1532, %v1525
    %v1918 = vpack.c.b16 %v1533, %v1526
    %v1919 = vpack.c.b16 %v1534, %v1527
    %v1920 = vpack.c.b16 %v1542, %v1535
    %v1921 = vpack.c.b16 %v1543, %v1536
    %v1922 = vpack.c.b16 %v1544, %v1537
    %v1923 = vpack.c.b16 %v1545, %v1538
    %v1924 = vpack.c.b16 %v1546, %v1539
    %v1925 = vpack.c.b16 %v1547, %v1540
    %v1926 = vpack.c.b16 %v1548, %v1541
    %v1927 = vpack.c.b16 %v1556, %v1549
    %v1928 = vpack.c.b16 %v1557, %v1550
    %v1929 = vpack.c.b16 %v1558, %v1551
    %v1930 = vpack.c.b16 %v1559, %v1552
    %v1931 = vpack.c.b16 %v1560, %v1553
    %v1932 = vpack.c.b16 %v1561, %v1554
    %v1933 = vpack.c.b16 %v1562, %v1555
    %v1934 = vpack.c.b16 %v1570, %v1563
    %v1935 = vpack.c.b16 %v1571, %v1564
    %v1936 = vpack.c.b16 %v1572, %v1565
    %v1937 = vpack.c.b16 %v1573, %v1566
    %v1938 = vpack.c.b16 %v1574, %v1567
    %v1939 = vpack.c.b16 %v1575, %v1568
    %v1940 = vpack.c.b16 %v1576, %v1569
    %v1941 = vpack.c.b16 %v1584, %v1577
    %v1942 = vpack.c.b16 %v1585, %v1578
    %v1943 = vpack.c.b16 %v1586, %v1579
    %v1944 = vpack.c.b16 %v1587, %v1580
    %v1945 = vpack.c.b16 %v1588, %v1581
    %v1946 = vpack.c.b16 %v1589, %v1582
    %v1947 = vpack.c.b16 %v1590, %v1583
    %v1948 = vpack.c.b16 %v1598, %v1591
    %v1949 = vpack.c.b16 %v1599, %v1592
    %v1950 = vpack.c.b16 %v1600, %v1593
    %v1951 = vpack.c.b16 %v1601, %v1594
    %v1952 = vpack.c.b16 %v1602, %v1595
    %v1953 = vpack.c.b16 %v1603, %v1596
    %v1954 = vpack.c.b16 %v1604, %v1597
    %vm2305 = vcmask 261120
    %v2307 = vsel %vm2305, %v498, 0
    %2309 = vmatpush.bf16.msra.mxu0 %v1654
    %2310 = vmatpush.bf16.msra.mxu0 %v1647
    %2311 = vmatpush.bf16.msra.mxu0 %v1640
    %2312 = vmatpush.bf16.msra.mxu0 %v1633
    %2313 = vmatpush.bf16.msra.mxu0 %v1626
    %2314 = vmatpush.bf16.msra.mxu0 %v1619
    %2315 = vmatpush.bf16.msra.mxu0 %v1612
    %2316 = vmatpush.bf16.msra.mxu0 %v1605
    %2317 = vmatmul.bf16.gmra.mxu0 %v492
    %v2318 = vpop.f32.mrf.mxu0
    %v2319 = vadd.f32 %v467, %v2318
    %v2320 = vpop.f32.mrf.mxu0
    %2321 = vdwg.mxu0
    %2322 = vmatpush.bf16.msra.mxu0 %v1710
    %2323 = vmatpush.bf16.msra.mxu0 %v1703
    %2324 = vmatpush.bf16.msra.mxu0 %v1696
    %2325 = vmatpush.bf16.msra.mxu0 %v1689
    %2326 = vmatpush.bf16.msra.mxu0 %v1682
    %2327 = vmatpush.bf16.msra.mxu0 %v1675
    %2328 = vmatpush.bf16.msra.mxu0 %v1668
    %2329 = vmatpush.bf16.msra.mxu0 %v1661
    %2330 = vmatmul.bf16.gmra.mxu0 %v493
    %v2331 = vpop.f32.mrf.mxu0
    %v2332 = vadd.f32 %v2319, %v2331
    %v2333 = vpop.f32.mrf.mxu0
    %2334 = vdwg.mxu0
    %2335 = vmatpush.bf16.msra.mxu0 %v1766
    %2336 = vmatpush.bf16.msra.mxu0 %v1759
    %2337 = vmatpush.bf16.msra.mxu0 %v1752
    %2338 = vmatpush.bf16.msra.mxu0 %v1745
    %2339 = vmatpush.bf16.msra.mxu0 %v1738
    %2340 = vmatpush.bf16.msra.mxu0 %v1731
    %2341 = vmatpush.bf16.msra.mxu0 %v1724
    %2342 = vmatpush.bf16.msra.mxu0 %v1717
    %2343 = vmatmul.bf16.gmra.mxu0 %v494
    %v2344 = vpop.f32.mrf.mxu0
    %v2345 = vadd.f32 %v2332, %v2344
    %v2346 = vpop.f32.mrf.mxu0
    %2347 = vdwg.mxu0
    %2348 = vmatpush.bf16.msra.mxu0 %v1822
    %2349 = vmatpush.bf16.msra.mxu0 %v1815
    %2350 = vmatpush.bf16.msra.mxu0 %v1808
    %2351 = vmatpush.bf16.msra.mxu0 %v1801
    %2352 = vmatpush.bf16.msra.mxu0 %v1794
    %2353 = vmatpush.bf16.msra.mxu0 %v1787
    %2354 = vmatpush.bf16.msra.mxu0 %v1780
    %2355 = vmatpush.bf16.msra.mxu0 %v1773
    %2356 = vmatmul.bf16.gmra.mxu0 %v495
    %v2357 = vpop.f32.mrf.mxu0
    %v2358 = vadd.f32 %v2345, %v2357
    %v2359 = vpop.f32.mrf.mxu0
    %2360 = vdwg.mxu0
    %2361 = vmatpush.bf16.msra.mxu0 %v1878
    %2362 = vmatpush.bf16.msra.mxu0 %v1871
    %2363 = vmatpush.bf16.msra.mxu0 %v1864
    %2364 = vmatpush.bf16.msra.mxu0 %v1857
    %2365 = vmatpush.bf16.msra.mxu0 %v1850
    %2366 = vmatpush.bf16.msra.mxu0 %v1843
    %2367 = vmatpush.bf16.msra.mxu0 %v1836
    %2368 = vmatpush.bf16.msra.mxu0 %v1829
    %2369 = vmatmul.bf16.gmra.mxu0 %v496
    %v2370 = vpop.f32.mrf.mxu0
    %v2371 = vadd.f32 %v2358, %v2370
    %v2372 = vpop.f32.mrf.mxu0
    %2373 = vdwg.mxu0
    %2374 = vmatpush.bf16.msra.mxu0 %v1934
    %2375 = vmatpush.bf16.msra.mxu0 %v1927
    %2376 = vmatpush.bf16.msra.mxu0 %v1920
    %2377 = vmatpush.bf16.msra.mxu0 %v1913
    %2378 = vmatpush.bf16.msra.mxu0 %v1906
    %2379 = vmatpush.bf16.msra.mxu0 %v1899
    %2380 = vmatpush.bf16.msra.mxu0 %v1892
    %2381 = vmatpush.bf16.msra.mxu0 %v1885
    %2382 = vmatmul.bf16.gmra.mxu0 %v497
    %v2383 = vpop.f32.mrf.mxu0
    %v2384 = vadd.f32 %v2371, %v2383
    %v2385 = vpop.f32.mrf.mxu0
    %2386 = vdwg.mxu0
    %2387 = vmatpush.bf16.msra.mxu0 0
    %2388 = vmatpush.bf16.msra.mxu0 0
    %2389 = vmatpush.bf16.msra.mxu0 0
    %2390 = vmatpush.bf16.msra.mxu0 0
    %2391 = vmatpush.bf16.msra.mxu0 0
    %2392 = vmatpush.bf16.msra.mxu0 0
    %2393 = vmatpush.bf16.msra.mxu0 %v1948
    %2394 = vmatpush.bf16.msra.mxu0 %v1941
    %2395 = vmatmul.bf16.gmra.mxu0 %v2307
    %v2396 = vpop.f32.mrf.mxu0
    %v2397 = vadd.f32 %v2384, %v2396
    %v2398 = vpop.f32.mrf.mxu0
    %2399 = vdwg.mxu0
    %2400 = vmatpush.bf16.msra.mxu0 %v1655
    %2401 = vmatpush.bf16.msra.mxu0 %v1648
    %2402 = vmatpush.bf16.msra.mxu0 %v1641
    %2403 = vmatpush.bf16.msra.mxu0 %v1634
    %2404 = vmatpush.bf16.msra.mxu0 %v1627
    %2405 = vmatpush.bf16.msra.mxu0 %v1620
    %2406 = vmatpush.bf16.msra.mxu0 %v1613
    %2407 = vmatpush.bf16.msra.mxu0 %v1606
    %2408 = vmatmul.bf16.gmra.mxu0 %v492
    %v2409 = vpop.f32.mrf.mxu0
    %v2410 = vadd.f32 %v468, %v2409
    %v2411 = vpop.f32.mrf.mxu0
    %2412 = vdwg.mxu0
    %2413 = vmatpush.bf16.msra.mxu0 %v1711
    %2414 = vmatpush.bf16.msra.mxu0 %v1704
    %2415 = vmatpush.bf16.msra.mxu0 %v1697
    %2416 = vmatpush.bf16.msra.mxu0 %v1690
    %2417 = vmatpush.bf16.msra.mxu0 %v1683
    %2418 = vmatpush.bf16.msra.mxu0 %v1676
    %2419 = vmatpush.bf16.msra.mxu0 %v1669
    %2420 = vmatpush.bf16.msra.mxu0 %v1662
    %2421 = vmatmul.bf16.gmra.mxu0 %v493
    %v2422 = vpop.f32.mrf.mxu0
    %v2423 = vadd.f32 %v2410, %v2422
    %v2424 = vpop.f32.mrf.mxu0
    %2425 = vdwg.mxu0
    %2426 = vmatpush.bf16.msra.mxu0 %v1767
    %2427 = vmatpush.bf16.msra.mxu0 %v1760
    %2428 = vmatpush.bf16.msra.mxu0 %v1753
    %2429 = vmatpush.bf16.msra.mxu0 %v1746
    %2430 = vmatpush.bf16.msra.mxu0 %v1739
    %2431 = vmatpush.bf16.msra.mxu0 %v1732
    %2432 = vmatpush.bf16.msra.mxu0 %v1725
    %2433 = vmatpush.bf16.msra.mxu0 %v1718
    %2434 = vmatmul.bf16.gmra.mxu0 %v494
    %v2435 = vpop.f32.mrf.mxu0
    %v2436 = vadd.f32 %v2423, %v2435
    %v2437 = vpop.f32.mrf.mxu0
    %2438 = vdwg.mxu0
    %2439 = vmatpush.bf16.msra.mxu0 %v1823
    %2440 = vmatpush.bf16.msra.mxu0 %v1816
    %2441 = vmatpush.bf16.msra.mxu0 %v1809
    %2442 = vmatpush.bf16.msra.mxu0 %v1802
    %2443 = vmatpush.bf16.msra.mxu0 %v1795
    %2444 = vmatpush.bf16.msra.mxu0 %v1788
    %2445 = vmatpush.bf16.msra.mxu0 %v1781
    %2446 = vmatpush.bf16.msra.mxu0 %v1774
    %2447 = vmatmul.bf16.gmra.mxu0 %v495
    %v2448 = vpop.f32.mrf.mxu0
    %v2449 = vadd.f32 %v2436, %v2448
    %v2450 = vpop.f32.mrf.mxu0
    %2451 = vdwg.mxu0
    %2452 = vmatpush.bf16.msra.mxu0 %v1879
    %2453 = vmatpush.bf16.msra.mxu0 %v1872
    %2454 = vmatpush.bf16.msra.mxu0 %v1865
    %2455 = vmatpush.bf16.msra.mxu0 %v1858
    %2456 = vmatpush.bf16.msra.mxu0 %v1851
    %2457 = vmatpush.bf16.msra.mxu0 %v1844
    %2458 = vmatpush.bf16.msra.mxu0 %v1837
    %2459 = vmatpush.bf16.msra.mxu0 %v1830
    %2460 = vmatmul.bf16.gmra.mxu0 %v496
    %v2461 = vpop.f32.mrf.mxu0
    %v2462 = vadd.f32 %v2449, %v2461
    %v2463 = vpop.f32.mrf.mxu0
    %2464 = vdwg.mxu0
    %2465 = vmatpush.bf16.msra.mxu0 %v1935
    %2466 = vmatpush.bf16.msra.mxu0 %v1928
    %2467 = vmatpush.bf16.msra.mxu0 %v1921
    %2468 = vmatpush.bf16.msra.mxu0 %v1914
    %2469 = vmatpush.bf16.msra.mxu0 %v1907
    %2470 = vmatpush.bf16.msra.mxu0 %v1900
    %2471 = vmatpush.bf16.msra.mxu0 %v1893
    %2472 = vmatpush.bf16.msra.mxu0 %v1886
    %2473 = vmatmul.bf16.gmra.mxu0 %v497
    %v2474 = vpop.f32.mrf.mxu0
    %v2475 = vadd.f32 %v2462, %v2474
    %v2476 = vpop.f32.mrf.mxu0
    %2477 = vdwg.mxu0
    %2478 = vmatpush.bf16.msra.mxu0 0
    %2479 = vmatpush.bf16.msra.mxu0 0
    %2480 = vmatpush.bf16.msra.mxu0 0
    %2481 = vmatpush.bf16.msra.mxu0 0
    %2482 = vmatpush.bf16.msra.mxu0 0
    %2483 = vmatpush.bf16.msra.mxu0 0
    %2484 = vmatpush.bf16.msra.mxu0 %v1949
    %2485 = vmatpush.bf16.msra.mxu0 %v1942
    %2486 = vmatmul.bf16.gmra.mxu0 %v2307
    %v2487 = vpop.f32.mrf.mxu0
    %v2488 = vadd.f32 %v2475, %v2487
    %v2489 = vpop.f32.mrf.mxu0
    %2490 = vdwg.mxu0
    %2491 = vmatpush.bf16.msra.mxu0 %v1656
    %2492 = vmatpush.bf16.msra.mxu0 %v1649
    %2493 = vmatpush.bf16.msra.mxu0 %v1642
    %2494 = vmatpush.bf16.msra.mxu0 %v1635
    %2495 = vmatpush.bf16.msra.mxu0 %v1628
    %2496 = vmatpush.bf16.msra.mxu0 %v1621
    %2497 = vmatpush.bf16.msra.mxu0 %v1614
    %2498 = vmatpush.bf16.msra.mxu0 %v1607
    %2499 = vmatmul.bf16.gmra.mxu0 %v492
    %v2500 = vpop.f32.mrf.mxu0
    %v2501 = vadd.f32 %v469, %v2500
    %v2502 = vpop.f32.mrf.mxu0
    %2503 = vdwg.mxu0
    %2504 = vmatpush.bf16.msra.mxu0 %v1712
    %2505 = vmatpush.bf16.msra.mxu0 %v1705
    %2506 = vmatpush.bf16.msra.mxu0 %v1698
    %2507 = vmatpush.bf16.msra.mxu0 %v1691
    %2508 = vmatpush.bf16.msra.mxu0 %v1684
    %2509 = vmatpush.bf16.msra.mxu0 %v1677
    %2510 = vmatpush.bf16.msra.mxu0 %v1670
    %2511 = vmatpush.bf16.msra.mxu0 %v1663
    %2512 = vmatmul.bf16.gmra.mxu0 %v493
    %v2513 = vpop.f32.mrf.mxu0
    %v2514 = vadd.f32 %v2501, %v2513
    %v2515 = vpop.f32.mrf.mxu0
    %2516 = vdwg.mxu0
    %2517 = vmatpush.bf16.msra.mxu0 %v1768
    %2518 = vmatpush.bf16.msra.mxu0 %v1761
    %2519 = vmatpush.bf16.msra.mxu0 %v1754
    %2520 = vmatpush.bf16.msra.mxu0 %v1747
    %2521 = vmatpush.bf16.msra.mxu0 %v1740
    %2522 = vmatpush.bf16.msra.mxu0 %v1733
    %2523 = vmatpush.bf16.msra.mxu0 %v1726
    %2524 = vmatpush.bf16.msra.mxu0 %v1719
    %2525 = vmatmul.bf16.gmra.mxu0 %v494
    %v2526 = vpop.f32.mrf.mxu0
    %v2527 = vadd.f32 %v2514, %v2526
    %v2528 = vpop.f32.mrf.mxu0
    %2529 = vdwg.mxu0
    %2530 = vmatpush.bf16.msra.mxu0 %v1824
    %2531 = vmatpush.bf16.msra.mxu0 %v1817
    %2532 = vmatpush.bf16.msra.mxu0 %v1810
    %2533 = vmatpush.bf16.msra.mxu0 %v1803
    %2534 = vmatpush.bf16.msra.mxu0 %v1796
    %2535 = vmatpush.bf16.msra.mxu0 %v1789
    %2536 = vmatpush.bf16.msra.mxu0 %v1782
    %2537 = vmatpush.bf16.msra.mxu0 %v1775
    %2538 = vmatmul.bf16.gmra.mxu0 %v495
    %v2539 = vpop.f32.mrf.mxu0
    %v2540 = vadd.f32 %v2527, %v2539
    %v2541 = vpop.f32.mrf.mxu0
    %2542 = vdwg.mxu0
    %2543 = vmatpush.bf16.msra.mxu0 %v1880
    %2544 = vmatpush.bf16.msra.mxu0 %v1873
    %2545 = vmatpush.bf16.msra.mxu0 %v1866
    %2546 = vmatpush.bf16.msra.mxu0 %v1859
    %2547 = vmatpush.bf16.msra.mxu0 %v1852
    %2548 = vmatpush.bf16.msra.mxu0 %v1845
    %2549 = vmatpush.bf16.msra.mxu0 %v1838
    %2550 = vmatpush.bf16.msra.mxu0 %v1831
    %2551 = vmatmul.bf16.gmra.mxu0 %v496
    %v2552 = vpop.f32.mrf.mxu0
    %v2553 = vadd.f32 %v2540, %v2552
    %v2554 = vpop.f32.mrf.mxu0
    %2555 = vdwg.mxu0
    %2556 = vmatpush.bf16.msra.mxu0 %v1936
    %2557 = vmatpush.bf16.msra.mxu0 %v1929
    %2558 = vmatpush.bf16.msra.mxu0 %v1922
    %2559 = vmatpush.bf16.msra.mxu0 %v1915
    %2560 = vmatpush.bf16.msra.mxu0 %v1908
    %2561 = vmatpush.bf16.msra.mxu0 %v1901
    %2562 = vmatpush.bf16.msra.mxu0 %v1894
    %2563 = vmatpush.bf16.msra.mxu0 %v1887
    %2564 = vmatmul.bf16.gmra.mxu0 %v497
    %v2565 = vpop.f32.mrf.mxu0
    %v2566 = vadd.f32 %v2553, %v2565
    %v2567 = vpop.f32.mrf.mxu0
    %2568 = vdwg.mxu0
    %2569 = vmatpush.bf16.msra.mxu0 0
    %2570 = vmatpush.bf16.msra.mxu0 0
    %2571 = vmatpush.bf16.msra.mxu0 0
    %2572 = vmatpush.bf16.msra.mxu0 0
    %2573 = vmatpush.bf16.msra.mxu0 0
    %2574 = vmatpush.bf16.msra.mxu0 0
    %2575 = vmatpush.bf16.msra.mxu0 %v1950
    %2576 = vmatpush.bf16.msra.mxu0 %v1943
    %2577 = vmatmul.bf16.gmra.mxu0 %v2307
    %v2578 = vpop.f32.mrf.mxu0
    %v2579 = vadd.f32 %v2566, %v2578
    %v2580 = vpop.f32.mrf.mxu0
    %2581 = vdwg.mxu0
    %2582 = vmatpush.bf16.msra.mxu0 %v1657
    %2583 = vmatpush.bf16.msra.mxu0 %v1650
    %2584 = vmatpush.bf16.msra.mxu0 %v1643
    %2585 = vmatpush.bf16.msra.mxu0 %v1636
    %2586 = vmatpush.bf16.msra.mxu0 %v1629
    %2587 = vmatpush.bf16.msra.mxu0 %v1622
    %2588 = vmatpush.bf16.msra.mxu0 %v1615
    %2589 = vmatpush.bf16.msra.mxu0 %v1608
    %2590 = vmatmul.bf16.gmra.mxu0 %v492
    %v2591 = vpop.f32.mrf.mxu0
    %v2592 = vadd.f32 %v470, %v2591
    %v2593 = vpop.f32.mrf.mxu0
    %2594 = vdwg.mxu0
    %2595 = vmatpush.bf16.msra.mxu0 %v1713
    %2596 = vmatpush.bf16.msra.mxu0 %v1706
    %2597 = vmatpush.bf16.msra.mxu0 %v1699
    %2598 = vmatpush.bf16.msra.mxu0 %v1692
    %2599 = vmatpush.bf16.msra.mxu0 %v1685
    %2600 = vmatpush.bf16.msra.mxu0 %v1678
    %2601 = vmatpush.bf16.msra.mxu0 %v1671
    %2602 = vmatpush.bf16.msra.mxu0 %v1664
    %2603 = vmatmul.bf16.gmra.mxu0 %v493
    %v2604 = vpop.f32.mrf.mxu0
    %v2605 = vadd.f32 %v2592, %v2604
    %v2606 = vpop.f32.mrf.mxu0
    %2607 = vdwg.mxu0
    %2608 = vmatpush.bf16.msra.mxu0 %v1769
    %2609 = vmatpush.bf16.msra.mxu0 %v1762
    %2610 = vmatpush.bf16.msra.mxu0 %v1755
    %2611 = vmatpush.bf16.msra.mxu0 %v1748
    %2612 = vmatpush.bf16.msra.mxu0 %v1741
    %2613 = vmatpush.bf16.msra.mxu0 %v1734
    %2614 = vmatpush.bf16.msra.mxu0 %v1727
    %2615 = vmatpush.bf16.msra.mxu0 %v1720
    %2616 = vmatmul.bf16.gmra.mxu0 %v494
    %v2617 = vpop.f32.mrf.mxu0
    %v2618 = vadd.f32 %v2605, %v2617
    %v2619 = vpop.f32.mrf.mxu0
    %2620 = vdwg.mxu0
    %2621 = vmatpush.bf16.msra.mxu0 %v1825
    %2622 = vmatpush.bf16.msra.mxu0 %v1818
    %2623 = vmatpush.bf16.msra.mxu0 %v1811
    %2624 = vmatpush.bf16.msra.mxu0 %v1804
    %2625 = vmatpush.bf16.msra.mxu0 %v1797
    %2626 = vmatpush.bf16.msra.mxu0 %v1790
    %2627 = vmatpush.bf16.msra.mxu0 %v1783
    %2628 = vmatpush.bf16.msra.mxu0 %v1776
    %2629 = vmatmul.bf16.gmra.mxu0 %v495
    %v2630 = vpop.f32.mrf.mxu0
    %v2631 = vadd.f32 %v2618, %v2630
    %v2632 = vpop.f32.mrf.mxu0
    %2633 = vdwg.mxu0
    %2634 = vmatpush.bf16.msra.mxu0 %v1881
    %2635 = vmatpush.bf16.msra.mxu0 %v1874
    %2636 = vmatpush.bf16.msra.mxu0 %v1867
    %2637 = vmatpush.bf16.msra.mxu0 %v1860
    %2638 = vmatpush.bf16.msra.mxu0 %v1853
    %2639 = vmatpush.bf16.msra.mxu0 %v1846
    %2640 = vmatpush.bf16.msra.mxu0 %v1839
    %2641 = vmatpush.bf16.msra.mxu0 %v1832
    %2642 = vmatmul.bf16.gmra.mxu0 %v496
    %v2643 = vpop.f32.mrf.mxu0
    %v2644 = vadd.f32 %v2631, %v2643
    %v2645 = vpop.f32.mrf.mxu0
    %2646 = vdwg.mxu0
    %2647 = vmatpush.bf16.msra.mxu0 %v1937
    %2648 = vmatpush.bf16.msra.mxu0 %v1930
    %2649 = vmatpush.bf16.msra.mxu0 %v1923
    %2650 = vmatpush.bf16.msra.mxu0 %v1916
    %2651 = vmatpush.bf16.msra.mxu0 %v1909
    %2652 = vmatpush.bf16.msra.mxu0 %v1902
    %2653 = vmatpush.bf16.msra.mxu0 %v1895
    %2654 = vmatpush.bf16.msra.mxu0 %v1888
    %2655 = vmatmul.bf16.gmra.mxu0 %v497
    %v2656 = vpop.f32.mrf.mxu0
    %v2657 = vadd.f32 %v2644, %v2656
    %v2658 = vpop.f32.mrf.mxu0
    %2659 = vdwg.mxu0
    %2660 = vmatpush.bf16.msra.mxu0 0
    %2661 = vmatpush.bf16.msra.mxu0 0
    %2662 = vmatpush.bf16.msra.mxu0 0
    %2663 = vmatpush.bf16.msra.mxu0 0
    %2664 = vmatpush.bf16.msra.mxu0 0
    %2665 = vmatpush.bf16.msra.mxu0 0
    %2666 = vmatpush.bf16.msra.mxu0 %v1951
    %2667 = vmatpush.bf16.msra.mxu0 %v1944
    %2668 = vmatmul.bf16.gmra.mxu0 %v2307
    %v2669 = vpop.f32.mrf.mxu0
    %v2670 = vadd.f32 %v2657, %v2669
    %v2671 = vpop.f32.mrf.mxu0
    %2672 = vdwg.mxu0
    %2673 = vmatpush.bf16.msra.mxu0 %v1658
    %2674 = vmatpush.bf16.msra.mxu0 %v1651
    %2675 = vmatpush.bf16.msra.mxu0 %v1644
    %2676 = vmatpush.bf16.msra.mxu0 %v1637
    %2677 = vmatpush.bf16.msra.mxu0 %v1630
    %2678 = vmatpush.bf16.msra.mxu0 %v1623
    %2679 = vmatpush.bf16.msra.mxu0 %v1616
    %2680 = vmatpush.bf16.msra.mxu0 %v1609
    %2681 = vmatmul.bf16.gmra.mxu0 %v492
    %v2682 = vpop.f32.mrf.mxu0
    %v2683 = vadd.f32 %v471, %v2682
    %v2684 = vpop.f32.mrf.mxu0
    %2685 = vdwg.mxu0
    %2686 = vmatpush.bf16.msra.mxu0 %v1714
    %2687 = vmatpush.bf16.msra.mxu0 %v1707
    %2688 = vmatpush.bf16.msra.mxu0 %v1700
    %2689 = vmatpush.bf16.msra.mxu0 %v1693
    %2690 = vmatpush.bf16.msra.mxu0 %v1686
    %2691 = vmatpush.bf16.msra.mxu0 %v1679
    %2692 = vmatpush.bf16.msra.mxu0 %v1672
    %2693 = vmatpush.bf16.msra.mxu0 %v1665
    %2694 = vmatmul.bf16.gmra.mxu0 %v493
    %v2695 = vpop.f32.mrf.mxu0
    %v2696 = vadd.f32 %v2683, %v2695
    %v2697 = vpop.f32.mrf.mxu0
    %2698 = vdwg.mxu0
    %2699 = vmatpush.bf16.msra.mxu0 %v1770
    %2700 = vmatpush.bf16.msra.mxu0 %v1763
    %2701 = vmatpush.bf16.msra.mxu0 %v1756
    %2702 = vmatpush.bf16.msra.mxu0 %v1749
    %2703 = vmatpush.bf16.msra.mxu0 %v1742
    %2704 = vmatpush.bf16.msra.mxu0 %v1735
    %2705 = vmatpush.bf16.msra.mxu0 %v1728
    %2706 = vmatpush.bf16.msra.mxu0 %v1721
    %2707 = vmatmul.bf16.gmra.mxu0 %v494
    %v2708 = vpop.f32.mrf.mxu0
    %v2709 = vadd.f32 %v2696, %v2708
    %v2710 = vpop.f32.mrf.mxu0
    %2711 = vdwg.mxu0
    %2712 = vmatpush.bf16.msra.mxu0 %v1826
    %2713 = vmatpush.bf16.msra.mxu0 %v1819
    %2714 = vmatpush.bf16.msra.mxu0 %v1812
    %2715 = vmatpush.bf16.msra.mxu0 %v1805
    %2716 = vmatpush.bf16.msra.mxu0 %v1798
    %2717 = vmatpush.bf16.msra.mxu0 %v1791
    %2718 = vmatpush.bf16.msra.mxu0 %v1784
    %2719 = vmatpush.bf16.msra.mxu0 %v1777
    %2720 = vmatmul.bf16.gmra.mxu0 %v495
    %v2721 = vpop.f32.mrf.mxu0
    %v2722 = vadd.f32 %v2709, %v2721
    %v2723 = vpop.f32.mrf.mxu0
    %2724 = vdwg.mxu0
    %2725 = vmatpush.bf16.msra.mxu0 %v1882
    %2726 = vmatpush.bf16.msra.mxu0 %v1875
    %2727 = vmatpush.bf16.msra.mxu0 %v1868
    %2728 = vmatpush.bf16.msra.mxu0 %v1861
    %2729 = vmatpush.bf16.msra.mxu0 %v1854
    %2730 = vmatpush.bf16.msra.mxu0 %v1847
    %2731 = vmatpush.bf16.msra.mxu0 %v1840
    %2732 = vmatpush.bf16.msra.mxu0 %v1833
    %2733 = vmatmul.bf16.gmra.mxu0 %v496
    %v2734 = vpop.f32.mrf.mxu0
    %v2735 = vadd.f32 %v2722, %v2734
    %v2736 = vpop.f32.mrf.mxu0
    %2737 = vdwg.mxu0
    %2738 = vmatpush.bf16.msra.mxu0 %v1938
    %2739 = vmatpush.bf16.msra.mxu0 %v1931
    %2740 = vmatpush.bf16.msra.mxu0 %v1924
    %2741 = vmatpush.bf16.msra.mxu0 %v1917
    %2742 = vmatpush.bf16.msra.mxu0 %v1910
    %2743 = vmatpush.bf16.msra.mxu0 %v1903
    %2744 = vmatpush.bf16.msra.mxu0 %v1896
    %2745 = vmatpush.bf16.msra.mxu0 %v1889
    %2746 = vmatmul.bf16.gmra.mxu0 %v497
    %v2747 = vpop.f32.mrf.mxu0
    %v2748 = vadd.f32 %v2735, %v2747
    %v2749 = vpop.f32.mrf.mxu0
    %2750 = vdwg.mxu0
    %2751 = vmatpush.bf16.msra.mxu0 0
    %2752 = vmatpush.bf16.msra.mxu0 0
    %2753 = vmatpush.bf16.msra.mxu0 0
    %2754 = vmatpush.bf16.msra.mxu0 0
    %2755 = vmatpush.bf16.msra.mxu0 0
    %2756 = vmatpush.bf16.msra.mxu0 0
    %2757 = vmatpush.bf16.msra.mxu0 %v1952
    %2758 = vmatpush.bf16.msra.mxu0 %v1945
    %2759 = vmatmul.bf16.gmra.mxu0 %v2307
    %v2760 = vpop.f32.mrf.mxu0
    %v2761 = vadd.f32 %v2748, %v2760
    %v2762 = vpop.f32.mrf.mxu0
    %2763 = vdwg.mxu0
    %2764 = vmatpush.bf16.msra.mxu0 %v1659
    %2765 = vmatpush.bf16.msra.mxu0 %v1652
    %2766 = vmatpush.bf16.msra.mxu0 %v1645
    %2767 = vmatpush.bf16.msra.mxu0 %v1638
    %2768 = vmatpush.bf16.msra.mxu0 %v1631
    %2769 = vmatpush.bf16.msra.mxu0 %v1624
    %2770 = vmatpush.bf16.msra.mxu0 %v1617
    %2771 = vmatpush.bf16.msra.mxu0 %v1610
    %2772 = vmatmul.bf16.gmra.mxu0 %v492
    %v2773 = vpop.f32.mrf.mxu0
    %v2774 = vadd.f32 %v472, %v2773
    %v2775 = vpop.f32.mrf.mxu0
    %2776 = vdwg.mxu0
    %2777 = vmatpush.bf16.msra.mxu0 %v1715
    %2778 = vmatpush.bf16.msra.mxu0 %v1708
    %2779 = vmatpush.bf16.msra.mxu0 %v1701
    %2780 = vmatpush.bf16.msra.mxu0 %v1694
    %2781 = vmatpush.bf16.msra.mxu0 %v1687
    %2782 = vmatpush.bf16.msra.mxu0 %v1680
    %2783 = vmatpush.bf16.msra.mxu0 %v1673
    %2784 = vmatpush.bf16.msra.mxu0 %v1666
    %2785 = vmatmul.bf16.gmra.mxu0 %v493
    %v2786 = vpop.f32.mrf.mxu0
    %v2787 = vadd.f32 %v2774, %v2786
    %v2788 = vpop.f32.mrf.mxu0
    %2789 = vdwg.mxu0
    %2790 = vmatpush.bf16.msra.mxu0 %v1771
    %2791 = vmatpush.bf16.msra.mxu0 %v1764
    %2792 = vmatpush.bf16.msra.mxu0 %v1757
    %2793 = vmatpush.bf16.msra.mxu0 %v1750
    %2794 = vmatpush.bf16.msra.mxu0 %v1743
    %2795 = vmatpush.bf16.msra.mxu0 %v1736
    %2796 = vmatpush.bf16.msra.mxu0 %v1729
    %2797 = vmatpush.bf16.msra.mxu0 %v1722
    %2798 = vmatmul.bf16.gmra.mxu0 %v494
    %v2799 = vpop.f32.mrf.mxu0
    %v2800 = vadd.f32 %v2787, %v2799
    %v2801 = vpop.f32.mrf.mxu0
    %2802 = vdwg.mxu0
    %2803 = vmatpush.bf16.msra.mxu0 %v1827
    %2804 = vmatpush.bf16.msra.mxu0 %v1820
    %2805 = vmatpush.bf16.msra.mxu0 %v1813
    %2806 = vmatpush.bf16.msra.mxu0 %v1806
    %2807 = vmatpush.bf16.msra.mxu0 %v1799
    %2808 = vmatpush.bf16.msra.mxu0 %v1792
    %2809 = vmatpush.bf16.msra.mxu0 %v1785
    %2810 = vmatpush.bf16.msra.mxu0 %v1778
    %2811 = vmatmul.bf16.gmra.mxu0 %v495
    %v2812 = vpop.f32.mrf.mxu0
    %v2813 = vadd.f32 %v2800, %v2812
    %v2814 = vpop.f32.mrf.mxu0
    %2815 = vdwg.mxu0
    %2816 = vmatpush.bf16.msra.mxu0 %v1883
    %2817 = vmatpush.bf16.msra.mxu0 %v1876
    %2818 = vmatpush.bf16.msra.mxu0 %v1869
    %2819 = vmatpush.bf16.msra.mxu0 %v1862
    %2820 = vmatpush.bf16.msra.mxu0 %v1855
    %2821 = vmatpush.bf16.msra.mxu0 %v1848
    %2822 = vmatpush.bf16.msra.mxu0 %v1841
    %2823 = vmatpush.bf16.msra.mxu0 %v1834
    %2824 = vmatmul.bf16.gmra.mxu0 %v496
    %v2825 = vpop.f32.mrf.mxu0
    %v2826 = vadd.f32 %v2813, %v2825
    %v2827 = vpop.f32.mrf.mxu0
    %2828 = vdwg.mxu0
    %2829 = vmatpush.bf16.msra.mxu0 %v1939
    %2830 = vmatpush.bf16.msra.mxu0 %v1932
    %2831 = vmatpush.bf16.msra.mxu0 %v1925
    %2832 = vmatpush.bf16.msra.mxu0 %v1918
    %2833 = vmatpush.bf16.msra.mxu0 %v1911
    %2834 = vmatpush.bf16.msra.mxu0 %v1904
    %2835 = vmatpush.bf16.msra.mxu0 %v1897
    %2836 = vmatpush.bf16.msra.mxu0 %v1890
    %2837 = vmatmul.bf16.gmra.mxu0 %v497
    %v2838 = vpop.f32.mrf.mxu0
    %v2839 = vadd.f32 %v2826, %v2838
    %v2840 = vpop.f32.mrf.mxu0
    %2841 = vdwg.mxu0
    %2842 = vmatpush.bf16.msra.mxu0 0
    %2843 = vmatpush.bf16.msra.mxu0 0
    %2844 = vmatpush.bf16.msra.mxu0 0
    %2845 = vmatpush.bf16.msra.mxu0 0
    %2846 = vmatpush.bf16.msra.mxu0 0
    %2847 = vmatpush.bf16.msra.mxu0 0
    %2848 = vmatpush.bf16.msra.mxu0 %v1953
    %2849 = vmatpush.bf16.msra.mxu0 %v1946
    %2850 = vmatmul.bf16.gmra.mxu0 %v2307
    %v2851 = vpop.f32.mrf.mxu0
    %v2852 = vadd.f32 %v2839, %v2851
    %v2853 = vpop.f32.mrf.mxu0
    %2854 = vdwg.mxu0
    %2855 = vmatpush.bf16.msra.mxu0 %v1660
    %2856 = vmatpush.bf16.msra.mxu0 %v1653
    %2857 = vmatpush.bf16.msra.mxu0 %v1646
    %2858 = vmatpush.bf16.msra.mxu0 %v1639
    %2859 = vmatpush.bf16.msra.mxu0 %v1632
    %2860 = vmatpush.bf16.msra.mxu0 %v1625
    %2861 = vmatpush.bf16.msra.mxu0 %v1618
    %2862 = vmatpush.bf16.msra.mxu0 %v1611
    %2863 = vmatmul.bf16.gmra.mxu0 %v492
    %v2864 = vpop.f32.mrf.mxu0
    %v2865 = vadd.f32 %v473, %v2864
    %v2866 = vpop.f32.mrf.mxu0
    %2867 = vdwg.mxu0
    %2868 = vmatpush.bf16.msra.mxu0 %v1716
    %2869 = vmatpush.bf16.msra.mxu0 %v1709
    %2870 = vmatpush.bf16.msra.mxu0 %v1702
    %2871 = vmatpush.bf16.msra.mxu0 %v1695
    %2872 = vmatpush.bf16.msra.mxu0 %v1688
    %2873 = vmatpush.bf16.msra.mxu0 %v1681
    %2874 = vmatpush.bf16.msra.mxu0 %v1674
    %2875 = vmatpush.bf16.msra.mxu0 %v1667
    %2876 = vmatmul.bf16.gmra.mxu0 %v493
    %v2877 = vpop.f32.mrf.mxu0
    %v2878 = vadd.f32 %v2865, %v2877
    %v2879 = vpop.f32.mrf.mxu0
    %2880 = vdwg.mxu0
    %2881 = vmatpush.bf16.msra.mxu0 %v1772
    %2882 = vmatpush.bf16.msra.mxu0 %v1765
    %2883 = vmatpush.bf16.msra.mxu0 %v1758
    %2884 = vmatpush.bf16.msra.mxu0 %v1751
    %2885 = vmatpush.bf16.msra.mxu0 %v1744
    %2886 = vmatpush.bf16.msra.mxu0 %v1737
    %2887 = vmatpush.bf16.msra.mxu0 %v1730
    %2888 = vmatpush.bf16.msra.mxu0 %v1723
    %2889 = vmatmul.bf16.gmra.mxu0 %v494
    %v2890 = vpop.f32.mrf.mxu0
    %v2891 = vadd.f32 %v2878, %v2890
    %v2892 = vpop.f32.mrf.mxu0
    %2893 = vdwg.mxu0
    %2894 = vmatpush.bf16.msra.mxu0 %v1828
    %2895 = vmatpush.bf16.msra.mxu0 %v1821
    %2896 = vmatpush.bf16.msra.mxu0 %v1814
    %2897 = vmatpush.bf16.msra.mxu0 %v1807
    %2898 = vmatpush.bf16.msra.mxu0 %v1800
    %2899 = vmatpush.bf16.msra.mxu0 %v1793
    %2900 = vmatpush.bf16.msra.mxu0 %v1786
    %2901 = vmatpush.bf16.msra.mxu0 %v1779
    %2902 = vmatmul.bf16.gmra.mxu0 %v495
    %v2903 = vpop.f32.mrf.mxu0
    %v2904 = vadd.f32 %v2891, %v2903
    %v2905 = vpop.f32.mrf.mxu0
    %2906 = vdwg.mxu0
    %2907 = vmatpush.bf16.msra.mxu0 %v1884
    %2908 = vmatpush.bf16.msra.mxu0 %v1877
    %2909 = vmatpush.bf16.msra.mxu0 %v1870
    %2910 = vmatpush.bf16.msra.mxu0 %v1863
    %2911 = vmatpush.bf16.msra.mxu0 %v1856
    %2912 = vmatpush.bf16.msra.mxu0 %v1849
    %2913 = vmatpush.bf16.msra.mxu0 %v1842
    %2914 = vmatpush.bf16.msra.mxu0 %v1835
    %2915 = vmatmul.bf16.gmra.mxu0 %v496
    %v2916 = vpop.f32.mrf.mxu0
    %v2917 = vadd.f32 %v2904, %v2916
    %v2918 = vpop.f32.mrf.mxu0
    %2919 = vdwg.mxu0
    %2920 = vmatpush.bf16.msra.mxu0 %v1940
    %2921 = vmatpush.bf16.msra.mxu0 %v1933
    %2922 = vmatpush.bf16.msra.mxu0 %v1926
    %2923 = vmatpush.bf16.msra.mxu0 %v1919
    %2924 = vmatpush.bf16.msra.mxu0 %v1912
    %2925 = vmatpush.bf16.msra.mxu0 %v1905
    %2926 = vmatpush.bf16.msra.mxu0 %v1898
    %2927 = vmatpush.bf16.msra.mxu0 %v1891
    %2928 = vmatmul.bf16.gmra.mxu0 %v497
    %v2929 = vpop.f32.mrf.mxu0
    %v2930 = vadd.f32 %v2917, %v2929
    %v2931 = vpop.f32.mrf.mxu0
    %2932 = vdwg.mxu0
    %2933 = vmatpush.bf16.msra.mxu0 0
    %2934 = vmatpush.bf16.msra.mxu0 0
    %2935 = vmatpush.bf16.msra.mxu0 0
    %2936 = vmatpush.bf16.msra.mxu0 0
    %2937 = vmatpush.bf16.msra.mxu0 0
    %2938 = vmatpush.bf16.msra.mxu0 0
    %2939 = vmatpush.bf16.msra.mxu0 %v1954
    %2940 = vmatpush.bf16.msra.mxu0 %v1947
    %2941 = vmatmul.bf16.gmra.mxu0 %v2307
    %v2942 = vpop.f32.mrf.mxu0
    %v2943 = vadd.f32 %v2930, %v2942
    %v2944 = vpop.f32.mrf.mxu0
    %2945 = vdwg.mxu0
    %v2946 = vmax.f32 %v2397, 0.0
    %v2947 = vmax.f32 %v2488, 0.0
    %v2948 = vmax.f32 %v2579, 0.0
    %v2949 = vmax.f32 %v2670, 0.0
    %v2950 = vmax.f32 %v2761, 0.0
    %v2951 = vmax.f32 %v2852, 0.0
    %v2952 = vmax.f32 %v2943, 0.0
    %v2953 = vpack.c.bf16 %v2946, %v2946
    %v2954 = vpack.c.bf16 %v2947, %v2947
    %v2955 = vpack.c.bf16 %v2948, %v2948
    %v2956 = vpack.c.bf16 %v2949, %v2949
    %v2957 = vpack.c.bf16 %v2950, %v2950
    %v2958 = vpack.c.bf16 %v2951, %v2951
    %v2959 = vpack.c.bf16 %v2952, %v2952
    %v2960 = vld [vmem:[%s3] sm:$0xff]
    %v2961 = vld [vmem:[%s3 + $0x8] sm:$0xff]
    %v2962 = vld [vmem:[%s3 + $0x10] sm:$0xff]
    %v2963 = vld [vmem:[%s3 + $0x18] sm:$0xf]
    %v2964 = vld [vmem:[%s3 + $0x1c] sm:$0xff]
    %v2965 = vld [vmem:[%s3 + $0x24] sm:$0xff]
    %v2966 = vld [vmem:[%s3 + $0x2c] sm:$0xff]
    %v2967 = vld [vmem:[%s3 + $0x34] sm:$0xf]
    %v2968 = vld [vmem:[%s3 + $0x38] sm:$0xff]
    %v2969 = vld [vmem:[%s3 + $0x40] sm:$0xff]
    %v2970 = vld [vmem:[%s3 + $0x48] sm:$0xff]
    %v2971 = vld [vmem:[%s3 + $0x50] sm:$0xf]
    %v2972 = vld [vmem:[%s3 + $0x54] sm:$0xff]
    %v2973 = vld [vmem:[%s3 + $0x5c] sm:$0xff]
    %v2974 = vld [vmem:[%s3 + $0x64] sm:$0xff]
    %v2975 = vld [vmem:[%s3 + $0x6c] sm:$0xf]
    %v2976 = vld [vmem:[%s3 + $0x70] sm:$0xff]
    %v2977 = vld [vmem:[%s3 + $0x78] sm:$0xff]
    %v2978 = vld [vmem:[%s3 + $0x80] sm:$0xff]
    %v2979 = vld [vmem:[%s3 + $0x88] sm:$0xf]
    %v2980 = vld [vmem:[%s3 + $0x8c] sm:$0xff]
    %v2981 = vld [vmem:[%s3 + $0x94] sm:$0xff]
    %v2982 = vld [vmem:[%s3 + $0x9c] sm:$0xff]
    %v2983 = vld [vmem:[%s3 + $0xa4] sm:$0xf]
    %v2984 = vld [vmem:[%s3 + $0xa8] sm:$0xff]
    %v2985 = vld [vmem:[%s3 + $0xb0] sm:$0xff]
    %v2986 = vld [vmem:[%s3 + $0xb8] sm:$0xff]
    %v2987 = vld [vmem:[%s3 + $0xc0] sm:$0xf]
    %v2988 = vld [vmem:[%s3 + $0xc4] sm:$0xff]
    %v2989 = vld [vmem:[%s3 + $0xcc] sm:$0xff]
    %v2990 = vld [vmem:[%s3 + $0xd4] sm:$0xff]
    %v2991 = vld [vmem:[%s3 + $0xdc] sm:$0xf]
    %v2992 = vld [vmem:[%s3 + $0xe0] sm:$0xff]
    %v2993 = vld [vmem:[%s3 + $0xe8] sm:$0xff]
    %v2994 = vld [vmem:[%s3 + $0xf0] sm:$0xff]
    %v2995 = vld [vmem:[%s3 + $0xf8] sm:$0xf]
    %v2996 = vld [vmem:[%s3 + $0xfc] sm:$0xff]
    %v2997 = vld [vmem:[%s3 + $0x104] sm:$0xff]
    %v2998 = vld [vmem:[%s3 + $0x10c] sm:$0xff]
    %v2999 = vld [vmem:[%s3 + $0x114] sm:$0xf]
    %v3000 = vld [vmem:[%s3 + $0x118] sm:$0xff]
    %v3001 = vld [vmem:[%s3 + $0x120] sm:$0xff]
    %v3002 = vld [vmem:[%s3 + $0x128] sm:$0xff]
    %v3003 = vld [vmem:[%s3 + $0x130] sm:$0xf]
    %v3004 = vld [vmem:[%s3 + $0x134] sm:$0xff]
    %v3005 = vld [vmem:[%s3 + $0x13c] sm:$0xff]
    %v3006 = vld [vmem:[%s3 + $0x144] sm:$0xff]
    %v3007 = vld [vmem:[%s3 + $0x14c] sm:$0xf]
    %v3008 = vld [vmem:[%s3 + $0x150] sm:$0xff]
    %v3009 = vld [vmem:[%s3 + $0x158] sm:$0xff]
    %v3010 = vld [vmem:[%s3 + $0x160] sm:$0xff]
    %v3011 = vld [vmem:[%s3 + $0x168] sm:$0xf]
    %v3012 = vld [vmem:[%s3 + $0x16c] sm:$0xff]
    %v3013 = vld [vmem:[%s3 + $0x174] sm:$0xff]
    %v3014 = vld [vmem:[%s3 + $0x17c] sm:$0xff]
    %v3015 = vld [vmem:[%s3 + $0x184] sm:$0xf]
    %v3016 = vld [vmem:[%s3 + $0x188] sm:$0xff]
    %v3017 = vld [vmem:[%s3 + $0x190] sm:$0xff]
    %v3018 = vld [vmem:[%s3 + $0x198] sm:$0xff]
    %v3019 = vld [vmem:[%s3 + $0x1a0] sm:$0xf]
    %v3020 = vld [vmem:[%s3 + $0x1a4] sm:$0xff]
    %v3021 = vld [vmem:[%s3 + $0x1ac] sm:$0xff]
    %v3022 = vld [vmem:[%s3 + $0x1b4] sm:$0xff]
    %v3023 = vld [vmem:[%s3 + $0x1bc] sm:$0xf]
    %v3024 = vld [vmem:[%s3 + $0x1c0] sm:$0xff]
    %v3025 = vld [vmem:[%s3 + $0x1c8] sm:$0xff]
    %v3026 = vld [vmem:[%s3 + $0x1d0] sm:$0xff]
    %v3027 = vld [vmem:[%s3 + $0x1d8] sm:$0xf]
    %v3028 = vld [vmem:[%s3 + $0x1dc] sm:$0xff]
    %v3029 = vld [vmem:[%s3 + $0x1e4] sm:$0xff]
    %v3030 = vld [vmem:[%s3 + $0x1ec] sm:$0xff]
    %v3031 = vld [vmem:[%s3 + $0x1f4] sm:$0xf]
    %v3032 = vld [vmem:[%s3 + $0x1f8] sm:$0xff]
    %v3033 = vld [vmem:[%s3 + $0x200] sm:$0xff]
    %v3034 = vld [vmem:[%s3 + $0x208] sm:$0xff]
    %v3035 = vld [vmem:[%s3 + $0x210] sm:$0xf]
    %v3036 = vld [vmem:[%s3 + $0x214] sm:$0xff]
    %v3037 = vld [vmem:[%s3 + $0x21c] sm:$0xff]
    %v3038 = vld [vmem:[%s3 + $0x224] sm:$0xff]
    %v3039 = vld [vmem:[%s3 + $0x22c] sm:$0xf]
    %v3040 = vld [vmem:[%s3 + $0x230] sm:$0xff]
    %v3041 = vld [vmem:[%s3 + $0x238] sm:$0xff]
    %v3042 = vld [vmem:[%s3 + $0x240] sm:$0xff]
    %v3043 = vld [vmem:[%s3 + $0x248] sm:$0xf]
    %v3044 = vld [vmem:[%s3 + $0x24c] sm:$0xff]
    %v3045 = vld [vmem:[%s3 + $0x254] sm:$0xff]
    %v3046 = vld [vmem:[%s3 + $0x25c] sm:$0xff]
    %v3047 = vld [vmem:[%s3 + $0x264] sm:$0xf]
    %v3048 = vld [vmem:[%s3 + $0x268] sm:$0xff]
    %v3049 = vld [vmem:[%s3 + $0x270] sm:$0xff]
    %v3050 = vld [vmem:[%s3 + $0x278] sm:$0xff]
    %v3051 = vld [vmem:[%s3 + $0x280] sm:$0xf]
    %v3052 = vld [vmem:[%s3 + $0x284] sm:$0xff]
    %v3053 = vld [vmem:[%s3 + $0x28c] sm:$0xff]
    %v3054 = vld [vmem:[%s3 + $0x294] sm:$0xff]
    %v3055 = vld [vmem:[%s3 + $0x29c] sm:$0xf]
    %v3056 = vld [vmem:[%s3 + $0x2a0] sm:$0xff]
    %v3057 = vld [vmem:[%s3 + $0x2a8] sm:$0xff]
    %v3058 = vld [vmem:[%s3 + $0x2b0] sm:$0xff]
    %v3059 = vld [vmem:[%s3 + $0x2b8] sm:$0xf]
    %v3060 = vld [vmem:[%s3 + $0x2bc] sm:$0xff]
    %v3061 = vld [vmem:[%s3 + $0x2c4] sm:$0xff]
    %v3062 = vld [vmem:[%s3 + $0x2cc] sm:$0xff]
    %v3063 = vld [vmem:[%s3 + $0x2d4] sm:$0xf]
    %v3064 = vld [vmem:[%s3 + $0x2d8] sm:$0xff]
    %v3065 = vld [vmem:[%s3 + $0x2e0] sm:$0xff]
    %v3066 = vld [vmem:[%s3 + $0x2e8] sm:$0xff]
    %v3067 = vld [vmem:[%s3 + $0x2f0] sm:$0xf]
    %v3068 = vld [vmem:[%s3 + $0x2f4] sm:$0xff]
    %v3069 = vld [vmem:[%s3 + $0x2fc] sm:$0xff]
    %v3070 = vld [vmem:[%s3 + $0x304] sm:$0xff]
    %v3071 = vld [vmem:[%s3 + $0x30c] sm:$0xf]
    %v3072 = vld [vmem:[%s3 + $0x310] sm:$0xff]
    %v3073 = vld [vmem:[%s3 + $0x318] sm:$0xff]
    %v3074 = vld [vmem:[%s3 + $0x320] sm:$0xff]
    %v3075 = vld [vmem:[%s3 + $0x328] sm:$0xf]
    %v3076 = vld [vmem:[%s3 + $0x32c] sm:$0xff]
    %v3077 = vld [vmem:[%s3 + $0x334] sm:$0xff]
    %v3078 = vld [vmem:[%s3 + $0x33c] sm:$0xff]
    %v3079 = vld [vmem:[%s3 + $0x344] sm:$0xf]
    %v3080 = vld [vmem:[%s3 + $0x348] sm:$0xff]
    %v3081 = vld [vmem:[%s3 + $0x350] sm:$0xff]
    %v3082 = vld [vmem:[%s3 + $0x358] sm:$0xff]
    %v3083 = vld [vmem:[%s3 + $0x360] sm:$0xf]
    %v3084 = vld [vmem:[%s3 + $0x364] sm:$0xff]
    %v3085 = vld [vmem:[%s3 + $0x36c] sm:$0xff]
    %v3086 = vld [vmem:[%s3 + $0x374] sm:$0xff]
    %v3087 = vld [vmem:[%s3 + $0x37c] sm:$0xf]
    %v3088 = vld [vmem:[%s3 + $0x380] sm:$0xff]
    %v3089 = vld [vmem:[%s3 + $0x388] sm:$0xff]
    %v3090 = vld [vmem:[%s3 + $0x390] sm:$0xff]
    %v3091 = vld [vmem:[%s3 + $0x398] sm:$0xf]
    %v3092 = vld [vmem:[%s3 + $0x39c] sm:$0xff]
    %v3093 = vld [vmem:[%s3 + $0x3a4] sm:$0xff]
    %v3094 = vld [vmem:[%s3 + $0x3ac] sm:$0xff]
    %v3095 = vld [vmem:[%s3 + $0x3b4] sm:$0xf]
    %v3096 = vld [vmem:[%s3 + $0x3b8] sm:$0xff]
    %v3097 = vld [vmem:[%s3 + $0x3c0] sm:$0xff]
    %v3098 = vld [vmem:[%s3 + $0x3c8] sm:$0xff]
    %v3099 = vld [vmem:[%s3 + $0x3d0] sm:$0xf]
    %v3100 = vld [vmem:[%s3 + $0x3d4] sm:$0xff]
    %v3101 = vld [vmem:[%s3 + $0x3dc] sm:$0xff]
    %v3102 = vld [vmem:[%s3 + $0x3e4] sm:$0xff]
    %v3103 = vld [vmem:[%s3 + $0x3ec] sm:$0xf]
    %v3104 = vld [vmem:[%s3 + $0x3f0] sm:$0xff]
    %v3105 = vld [vmem:[%s3 + $0x3f8] sm:$0xff]
    %v3106 = vld [vmem:[%s3 + $0x400] sm:$0xff]
    %v3107 = vld [vmem:[%s3 + $0x408] sm:$0xf]
    %v3108 = vld [vmem:[%s3 + $0x40c] sm:$0xff]
    %v3109 = vld [vmem:[%s3 + $0x414] sm:$0xff]
    %v3110 = vld [vmem:[%s3 + $0x41c] sm:$0xff]
    %v3111 = vld [vmem:[%s3 + $0x424] sm:$0xf]
    %v3112 = vld [vmem:[%s3 + $0x428] sm:$0xff]
    %v3113 = vld [vmem:[%s3 + $0x430] sm:$0xff]
    %v3114 = vld [vmem:[%s3 + $0x438] sm:$0xff]
    %v3115 = vld [vmem:[%s3 + $0x440] sm:$0xf]
    %v3116 = vld [vmem:[%s3 + $0x444] sm:$0xff]
    %v3117 = vld [vmem:[%s3 + $0x44c] sm:$0xff]
    %v3118 = vld [vmem:[%s3 + $0x454] sm:$0xff]
    %v3119 = vld [vmem:[%s3 + $0x45c] sm:$0xf]
    %v3120 = vld [vmem:[%s3 + $0x460] sm:$0xff]
    %v3121 = vld [vmem:[%s3 + $0x468] sm:$0xff]
    %v3122 = vld [vmem:[%s3 + $0x470] sm:$0xff]
    %v3123 = vld [vmem:[%s3 + $0x478] sm:$0xf]
    %v3124 = vld [vmem:[%s3 + $0x47c] sm:$0xff]
    %v3125 = vld [vmem:[%s3 + $0x484] sm:$0xff]
    %v3126 = vld [vmem:[%s3 + $0x48c] sm:$0xff]
    %v3127 = vld [vmem:[%s3 + $0x494] sm:$0xf]
    %v3128 = vld [vmem:[%s3 + $0x498] sm:$0xff]
    %v3129 = vld [vmem:[%s3 + $0x4a0] sm:$0xff]
    %v3130 = vld [vmem:[%s3 + $0x4a8] sm:$0xff]
    %v3131 = vld [vmem:[%s3 + $0x4b0] sm:$0xf]
    %v3132 = vld [vmem:[%s3 + $0x4b4] sm:$0xff]
    %v3133 = vld [vmem:[%s3 + $0x4bc] sm:$0xff]
    %v3134 = vld [vmem:[%s3 + $0x4c4] sm:$0xff]
    %v3135 = vld [vmem:[%s3 + $0x4cc] sm:$0xf]
    %v3136 = vld [vmem:[%s3 + $0x4d0] sm:$0xff]
    %v3137 = vld [vmem:[%s3 + $0x4d8] sm:$0xff]
    %v3138 = vld [vmem:[%s3 + $0x4e0] sm:$0xff]
    %v3139 = vld [vmem:[%s3 + $0x4e8] sm:$0xf]
    %v3140 = vld [vmem:[%s3 + $0x4ec] sm:$0xff]
    %v3141 = vld [vmem:[%s3 + $0x4f4] sm:$0xff]
    %v3142 = vld [vmem:[%s3 + $0x4fc] sm:$0xff]
    %v3143 = vld [vmem:[%s3 + $0x504] sm:$0xf]
    %v3144 = vld [vmem:[%s3 + $0x508] sm:$0xff]
    %v3145 = vld [vmem:[%s3 + $0x510] sm:$0xff]
    %v3146 = vld [vmem:[%s3 + $0x518] sm:$0xff]
    %v3147 = vld [vmem:[%s3 + $0x520] sm:$0xf]
    %v3148 = vld [vmem:[%s3 + $0x524] sm:$0xff]
    %v3149 = vld [vmem:[%s3 + $0x52c] sm:$0xff]
    %v3150 = vld [vmem:[%s3 + $0x534] sm:$0xff]
    %v3151 = vld [vmem:[%s3 + $0x53c] sm:$0xf]
    %v3152 = vld [vmem:[%s3 + $0x540] sm:$0xff]
    %v3153 = vld [vmem:[%s3 + $0x548] sm:$0xff]
    %v3154 = vld [vmem:[%s3 + $0x550] sm:$0xff]
    %v3155 = vld [vmem:[%s3 + $0x558] sm:$0xf]
    %v3156 = vld [vmem:[%s3 + $0x55c] sm:$0xff]
    %v3157 = vld [vmem:[%s3 + $0x564] sm:$0xff]
    %v3158 = vld [vmem:[%s3 + $0x56c] sm:$0xff]
    %v3159 = vld [vmem:[%s3 + $0x574] sm:$0xf]
    %v3160 = vld [vmem:[%s3 + $0x578] sm:$0xff]
    %v3161 = vld [vmem:[%s3 + $0x580] sm:$0xff]
    %v3162 = vld [vmem:[%s3 + $0x588] sm:$0xff]
    %v3163 = vld [vmem:[%s3 + $0x590] sm:$0xf]
    %v3164 = vld [vmem:[%s3 + $0x594] sm:$0xff]
    %v3165 = vld [vmem:[%s3 + $0x59c] sm:$0xff]
    %v3166 = vld [vmem:[%s3 + $0x5a4] sm:$0xff]
    %v3167 = vld [vmem:[%s3 + $0x5ac] sm:$0xf]
    %v3168 = vld [vmem:[%s3 + $0x5b0] sm:$0xff]
    %v3169 = vld [vmem:[%s3 + $0x5b8] sm:$0xff]
    %v3170 = vld [vmem:[%s3 + $0x5c0] sm:$0xff]
    %v3171 = vld [vmem:[%s3 + $0x5c8] sm:$0xf]
    %v3172 = vld [vmem:[%s3 + $0x5cc] sm:$0xff]
    %v3173 = vld [vmem:[%s3 + $0x5d4] sm:$0xff]
    %v3174 = vld [vmem:[%s3 + $0x5dc] sm:$0xff]
    %v3175 = vld [vmem:[%s3 + $0x5e4] sm:$0xf]
    %v3176 = vld [vmem:[%s3 + $0x5e8] sm:$0xff]
    %v3177 = vld [vmem:[%s3 + $0x5f0] sm:$0xff]
    %v3178 = vld [vmem:[%s3 + $0x5f8] sm:$0xff]
    %v3179 = vld [vmem:[%s3 + $0x600] sm:$0xf]
    %v3180 = vld [vmem:[%s3 + $0x604] sm:$0xff]
    %v3181 = vld [vmem:[%s3 + $0x60c] sm:$0xff]
    %v3182 = vld [vmem:[%s3 + $0x614] sm:$0xff]
    %v3183 = vld [vmem:[%s3 + $0x61c] sm:$0xf]
    %v3184 = vld [vmem:[%s3 + $0x620] sm:$0xff]
    %v3185 = vld [vmem:[%s3 + $0x628] sm:$0xff]
    %v3186 = vld [vmem:[%s3 + $0x630] sm:$0xff]
    %v3187 = vld [vmem:[%s3 + $0x638] sm:$0xf]
    %v3188 = vld [vmem:[%s3 + $0x63c] sm:$0xff]
    %v3189 = vld [vmem:[%s3 + $0x644] sm:$0xff]
    %v3190 = vld [vmem:[%s3 + $0x64c] sm:$0xff]
    %v3191 = vld [vmem:[%s3 + $0x654] sm:$0xf]
    %v3192 = vld [vmem:[%s3 + $0x658] sm:$0xff]
    %v3193 = vld [vmem:[%s3 + $0x660] sm:$0xff]
    %v3194 = vld [vmem:[%s3 + $0x668] sm:$0xff]
    %v3195 = vld [vmem:[%s3 + $0x670] sm:$0xf]
    %v3196 = vld [vmem:[%s3 + $0x674] sm:$0xff]
    %v3197 = vld [vmem:[%s3 + $0x67c] sm:$0xff]
    %v3198 = vld [vmem:[%s3 + $0x684] sm:$0xff]
    %v3199 = vld [vmem:[%s3 + $0x68c] sm:$0xf]
    %v3200 = vld [vmem:[%s3 + $0x690] sm:$0xff]
    %v3201 = vld [vmem:[%s3 + $0x698] sm:$0xff]
    %v3202 = vld [vmem:[%s3 + $0x6a0] sm:$0xff]
    %v3203 = vld [vmem:[%s3 + $0x6a8] sm:$0xf]
    %v3204 = vld [vmem:[%s3 + $0x6ac] sm:$0xff]
    %v3205 = vld [vmem:[%s3 + $0x6b4] sm:$0xff]
    %v3206 = vld [vmem:[%s3 + $0x6bc] sm:$0xff]
    %v3207 = vld [vmem:[%s3 + $0x6c4] sm:$0xf]
    %v3208 = vld [vmem:[%s3 + $0x6c8] sm:$0xff]
    %v3209 = vld [vmem:[%s3 + $0x6d0] sm:$0xff]
    %v3210 = vld [vmem:[%s3 + $0x6d8] sm:$0xff]
    %v3211 = vld [vmem:[%s3 + $0x6e0] sm:$0xf]
    %v3212 = vld [vmem:[%s3 + $0x6e4] sm:$0xff]
    %v3213 = vld [vmem:[%s3 + $0x6ec] sm:$0xff]
    %v3214 = vld [vmem:[%s3 + $0x6f4] sm:$0xff]
    %v3215 = vld [vmem:[%s3 + $0x6fc] sm:$0xf]
    %v3216 = vld [vmem:[%s3 + $0x700] sm:$0xff]
    %v3217 = vld [vmem:[%s3 + $0x708] sm:$0xff]
    %v3218 = vld [vmem:[%s3 + $0x710] sm:$0xff]
    %v3219 = vld [vmem:[%s3 + $0x718] sm:$0xf]
    %v3220 = vld [vmem:[%s3 + $0x71c] sm:$0xff]
    %v3221 = vld [vmem:[%s3 + $0x724] sm:$0xff]
    %v3222 = vld [vmem:[%s3 + $0x72c] sm:$0xff]
    %v3223 = vld [vmem:[%s3 + $0x734] sm:$0xf]
    %v3224 = vld [vmem:[%s3 + $0x738] sm:$0xff]
    %v3225 = vld [vmem:[%s3 + $0x740] sm:$0xff]
    %v3226 = vld [vmem:[%s3 + $0x748] sm:$0xff]
    %v3227 = vld [vmem:[%s3 + $0x750] sm:$0xf]
    %v3228 = vld [vmem:[%s3 + $0x754] sm:$0xff]
    %v3229 = vld [vmem:[%s3 + $0x75c] sm:$0xff]
    %v3230 = vld [vmem:[%s3 + $0x764] sm:$0xff]
    %v3231 = vld [vmem:[%s3 + $0x76c] sm:$0xf]
    %v3232 = vld [vmem:[%s3 + $0x770] sm:$0xff]
    %v3233 = vld [vmem:[%s3 + $0x778] sm:$0xff]
    %v3234 = vld [vmem:[%s3 + $0x780] sm:$0xff]
    %v3235 = vld [vmem:[%s3 + $0x788] sm:$0xf]
    %v3236 = vld [vmem:[%s3 + $0x78c] sm:$0xff]
    %v3237 = vld [vmem:[%s3 + $0x794] sm:$0xff]
    %v3238 = vld [vmem:[%s3 + $0x79c] sm:$0xff]
    %v3239 = vld [vmem:[%s3 + $0x7a4] sm:$0xf]
    %v3240 = vld [vmem:[%s3 + $0x7a8] sm:$0xff]
    %v3241 = vld [vmem:[%s3 + $0x7b0] sm:$0xff]
    %v3242 = vld [vmem:[%s3 + $0x7b8] sm:$0xff]
    %v3243 = vld [vmem:[%s3 + $0x7c0] sm:$0xf]
    %v3244 = vld [vmem:[%s3 + $0x7c4] sm:$0xff]
    %v3245 = vld [vmem:[%s3 + $0x7cc] sm:$0xff]
    %v3246 = vld [vmem:[%s3 + $0x7d4] sm:$0xff]
    %v3247 = vld [vmem:[%s3 + $0x7dc] sm:$0xf]
    %v3248 = vld [vmem:[%s3 + $0x7e0] sm:$0xff]
    %v3249 = vld [vmem:[%s3 + $0x7e8] sm:$0xff]
    %v3250 = vld [vmem:[%s3 + $0x7f0] sm:$0xff]
    %v3251 = vld [vmem:[%s3 + $0x7f8] sm:$0xf]
    %v3252 = vld [vmem:[%s3 + $0x7fc] sm:$0xff]
    %v3253 = vld [vmem:[%s3 + $0x804] sm:$0xff]
    %v3254 = vld [vmem:[%s3 + $0x80c] sm:$0xff]
    %v3255 = vld [vmem:[%s3 + $0x814] sm:$0xf]
    %v3256 = vld [vmem:[%s3 + $0x818] sm:$0xff]
    %v3257 = vld [vmem:[%s3 + $0x820] sm:$0xff]
    %v3258 = vld [vmem:[%s3 + $0x828] sm:$0xff]
    %v3259 = vld [vmem:[%s3 + $0x830] sm:$0xf]
    %v3260 = vld [vmem:[%s3 + $0x834] sm:$0xff]
    %v3261 = vld [vmem:[%s3 + $0x83c] sm:$0xff]
    %v3262 = vld [vmem:[%s3 + $0x844] sm:$0xff]
    %v3263 = vld [vmem:[%s3 + $0x84c] sm:$0xf]
    %v3264 = vld [vmem:[%s3 + $0x850] sm:$0xff]
    %v3265 = vld [vmem:[%s3 + $0x858] sm:$0xff]
    %v3266 = vld [vmem:[%s3 + $0x860] sm:$0xff]
    %v3267 = vld [vmem:[%s3 + $0x868] sm:$0xf]
    %v3268 = vld [vmem:[%s3 + $0x86c] sm:$0xff]
    %v3269 = vld [vmem:[%s3 + $0x874] sm:$0xff]
    %v3270 = vld [vmem:[%s3 + $0x87c] sm:$0xff]
    %v3271 = vld [vmem:[%s3 + $0x884] sm:$0xf]
    %v3272 = vld [vmem:[%s3 + $0x888] sm:$0xff]
    %v3273 = vld [vmem:[%s3 + $0x890] sm:$0xff]
    %v3274 = vld [vmem:[%s3 + $0x898] sm:$0xff]
    %v3275 = vld [vmem:[%s3 + $0x8a0] sm:$0xf]
    %v3276 = vld [vmem:[%s3 + $0x8a4] sm:$0xff]
    %v3277 = vld [vmem:[%s3 + $0x8ac] sm:$0xff]
    %v3278 = vld [vmem:[%s3 + $0x8b4] sm:$0xff]
    %v3279 = vld [vmem:[%s3 + $0x8bc] sm:$0xf]
    %v3280 = vld [vmem:[%s3 + $0x8c0] sm:$0xff]
    %v3281 = vld [vmem:[%s3 + $0x8c8] sm:$0xff]
    %v3282 = vld [vmem:[%s3 + $0x8d0] sm:$0xff]
    %v3283 = vld [vmem:[%s3 + $0x8d8] sm:$0xf]
    %v3284 = vld [vmem:[%s3 + $0x8dc] sm:$0xff]
    %v3285 = vld [vmem:[%s3 + $0x8e4] sm:$0xff]
    %v3286 = vld [vmem:[%s3 + $0x8ec] sm:$0xff]
    %v3287 = vld [vmem:[%s3 + $0x8f4] sm:$0xf]
    %v3288 = vld [vmem:[%s3 + $0x8f8] sm:$0xff]
    %v3289 = vld [vmem:[%s3 + $0x900] sm:$0xff]
    %v3290 = vld [vmem:[%s3 + $0x908] sm:$0xff]
    %v3291 = vld [vmem:[%s3 + $0x910] sm:$0xf]
    %v3292 = vld [vmem:[%s3 + $0x914] sm:$0xff]
    %v3293 = vld [vmem:[%s3 + $0x91c] sm:$0xff]
    %v3294 = vld [vmem:[%s3 + $0x924] sm:$0xff]
    %v3295 = vld [vmem:[%s3 + $0x92c] sm:$0xf]
    %v3296 = vld [vmem:[%s3 + $0x930] sm:$0xff]
    %v3297 = vld [vmem:[%s3 + $0x938] sm:$0xff]
    %v3298 = vld [vmem:[%s3 + $0x940] sm:$0xff]
    %v3299 = vld [vmem:[%s3 + $0x948] sm:$0xf]
    %v3300 = vld [vmem:[%s3 + $0x94c] sm:$0xff]
    %v3301 = vld [vmem:[%s3 + $0x954] sm:$0xff]
    %v3302 = vld [vmem:[%s3 + $0x95c] sm:$0xff]
    %v3303 = vld [vmem:[%s3 + $0x964] sm:$0xf]
    %v3304 = vld [vmem:[%s3 + $0x968] sm:$0xff]
    %v3305 = vld [vmem:[%s3 + $0x970] sm:$0xff]
    %v3306 = vld [vmem:[%s3 + $0x978] sm:$0xff]
    %v3307 = vld [vmem:[%s3 + $0x980] sm:$0xf]
    %v3308 = vld [vmem:[%s3 + $0x984] sm:$0xff]
    %v3309 = vld [vmem:[%s3 + $0x98c] sm:$0xff]
    %v3310 = vld [vmem:[%s3 + $0x994] sm:$0xff]
    %v3311 = vld [vmem:[%s3 + $0x99c] sm:$0xf]
    %v3312 = vld [vmem:[%s3 + $0x9a0] sm:$0xff]
    %v3313 = vld [vmem:[%s3 + $0x9a8] sm:$0xff]
    %v3314 = vld [vmem:[%s3 + $0x9b0] sm:$0xff]
    %v3315 = vld [vmem:[%s3 + $0x9b8] sm:$0xf]
    %v3316 = vld [vmem:[%s3 + $0x9bc] sm:$0xff]
    %v3317 = vld [vmem:[%s3 + $0x9c4] sm:$0xff]
    %v3318 = vld [vmem:[%s3 + $0x9cc] sm:$0xff]
    %v3319 = vld [vmem:[%s3 + $0x9d4] sm:$0xf]
    %v3320 = vld [vmem:[%s3 + $0x9d8] sm:$0xff]
    %v3321 = vld [vmem:[%s3 + $0x9e0] sm:$0xff]
    %v3322 = vld [vmem:[%s3 + $0x9e8] sm:$0xff]
    %v3323 = vld [vmem:[%s3 + $0x9f0] sm:$0xf]
    %v3324 = vld [vmem:[%s3 + $0x9f4] sm:$0xff]
    %v3325 = vld [vmem:[%s3 + $0x9fc] sm:$0xff]
    %v3326 = vld [vmem:[%s3 + $0xa04] sm:$0xff]
    %v3327 = vld [vmem:[%s3 + $0xa0c] sm:$0xf]
    %v3328 = vld [vmem:[%s3 + $0xa10] sm:$0xff]
    %v3329 = vld [vmem:[%s3 + $0xa18] sm:$0xff]
    %v3330 = vld [vmem:[%s3 + $0xa20] sm:$0xff]
    %v3331 = vld [vmem:[%s3 + $0xa28] sm:$0xf]
    %v3332 = vld [vmem:[%s3 + $0xa2c] sm:$0xff]
    %v3333 = vld [vmem:[%s3 + $0xa34] sm:$0xff]
    %v3334 = vld [vmem:[%s3 + $0xa3c] sm:$0xff]
    %v3335 = vld [vmem:[%s3 + $0xa44] sm:$0xf]
    %v3336 = vld [vmem:[%s3 + $0xa48] sm:$0xff]
    %v3337 = vld [vmem:[%s3 + $0xa50] sm:$0xff]
    %v3338 = vld [vmem:[%s3 + $0xa58] sm:$0xff]
    %v3339 = vld [vmem:[%s3 + $0xa60] sm:$0xf]
    %v3340 = vld [vmem:[%s3 + $0xa64] sm:$0xff]
    %v3341 = vld [vmem:[%s3 + $0xa6c] sm:$0xff]
    %v3342 = vld [vmem:[%s3 + $0xa74] sm:$0xff]
    %v3343 = vld [vmem:[%s3 + $0xa7c] sm:$0xf]
    %v3344 = vld [vmem:[%s3 + $0xa80] sm:$0xff]
    %v3345 = vld [vmem:[%s3 + $0xa88] sm:$0xff]
    %v3346 = vld [vmem:[%s3 + $0xa90] sm:$0xff]
    %v3347 = vld [vmem:[%s3 + $0xa98] sm:$0xf]
    %v3348 = vld [vmem:[%s3 + $0xa9c] sm:$0xff]
    %v3349 = vld [vmem:[%s3 + $0xaa4] sm:$0xff]
    %v3350 = vld [vmem:[%s3 + $0xaac] sm:$0xff]
    %v3351 = vld [vmem:[%s3 + $0xab4] sm:$0xf]
    %v3352 = vld [vmem:[%s4] sm:$0x7f]
    %v3354 = vperm.slane %v3352, 0
    %v3355 = vperm.slane %v3352, 1
    %v3356 = vperm.slane %v3352, 2
    %v3357 = vperm.slane %v3352, 3
    %v3358 = vperm.slane %v3352, 4
    %v3359 = vperm.slane %v3352, 5
    %v3360 = vperm.slane %v3352, 6
    %v3760 = vunpack.c.l.b16 %v2960
    %v3761 = vunpack.c.h.b16 %v2960
    %v3762 = vunpack.c.l.b16 %v2961
    %v3763 = vunpack.c.h.b16 %v2961
    %v3764 = vunpack.c.l.b16 %v2962
    %v3765 = vunpack.c.h.b16 %v2962
    %v3766 = vunpack.c.l.b16 %v2963
    %v3767 = vunpack.c.l.b16 %v2964
    %v3768 = vunpack.c.h.b16 %v2964
    %v3769 = vunpack.c.l.b16 %v2965
    %v3770 = vunpack.c.h.b16 %v2965
    %v3771 = vunpack.c.l.b16 %v2966
    %v3772 = vunpack.c.h.b16 %v2966
    %v3773 = vunpack.c.l.b16 %v2967
    %v3774 = vunpack.c.l.b16 %v2968
    %v3775 = vunpack.c.h.b16 %v2968
    %v3776 = vunpack.c.l.b16 %v2969
    %v3777 = vunpack.c.h.b16 %v2969
    %v3778 = vunpack.c.l.b16 %v2970
    %v3779 = vunpack.c.h.b16 %v2970
    %v3780 = vunpack.c.l.b16 %v2971
    %v3781 = vunpack.c.l.b16 %v2972
    %v3782 = vunpack.c.h.b16 %v2972
    %v3783 = vunpack.c.l.b16 %v2973
    %v3784 = vunpack.c.h.b16 %v2973
    %v3785 = vunpack.c.l.b16 %v2974
    %v3786 = vunpack.c.h.b16 %v2974
    %v3787 = vunpack.c.l.b16 %v2975
    %v3788 = vunpack.c.l.b16 %v2976
    %v3789 = vunpack.c.h.b16 %v2976
    %v3790 = vunpack.c.l.b16 %v2977
    %v3791 = vunpack.c.h.b16 %v2977
    %v3792 = vunpack.c.l.b16 %v2978
    %v3793 = vunpack.c.h.b16 %v2978
    %v3794 = vunpack.c.l.b16 %v2979
    %v3795 = vunpack.c.l.b16 %v2980
    %v3796 = vunpack.c.h.b16 %v2980
    %v3797 = vunpack.c.l.b16 %v2981
    %v3798 = vunpack.c.h.b16 %v2981
    %v3799 = vunpack.c.l.b16 %v2982
    %v3800 = vunpack.c.h.b16 %v2982
    %v3801 = vunpack.c.l.b16 %v2983
    %v3802 = vunpack.c.l.b16 %v2984
    %v3803 = vunpack.c.h.b16 %v2984
    %v3804 = vunpack.c.l.b16 %v2985
    %v3805 = vunpack.c.h.b16 %v2985
    %v3806 = vunpack.c.l.b16 %v2986
    %v3807 = vunpack.c.h.b16 %v2986
    %v3808 = vunpack.c.l.b16 %v2987
    %v3809 = vunpack.c.l.b16 %v2988
    %v3810 = vunpack.c.h.b16 %v2988
    %v3811 = vunpack.c.l.b16 %v2989
    %v3812 = vunpack.c.h.b16 %v2989
    %v3813 = vunpack.c.l.b16 %v2990
    %v3814 = vunpack.c.h.b16 %v2990
    %v3815 = vunpack.c.l.b16 %v2991
    %v3816 = vunpack.c.l.b16 %v2992
    %v3817 = vunpack.c.h.b16 %v2992
    %v3818 = vunpack.c.l.b16 %v2993
    %v3819 = vunpack.c.h.b16 %v2993
    %v3820 = vunpack.c.l.b16 %v2994
    %v3821 = vunpack.c.h.b16 %v2994
    %v3822 = vunpack.c.l.b16 %v2995
    %v3823 = vunpack.c.l.b16 %v2996
    %v3824 = vunpack.c.h.b16 %v2996
    %v3825 = vunpack.c.l.b16 %v2997
    %v3826 = vunpack.c.h.b16 %v2997
    %v3827 = vunpack.c.l.b16 %v2998
    %v3828 = vunpack.c.h.b16 %v2998
    %v3829 = vunpack.c.l.b16 %v2999
    %v3830 = vunpack.c.l.b16 %v3000
    %v3831 = vunpack.c.h.b16 %v3000
    %v3832 = vunpack.c.l.b16 %v3001
    %v3833 = vunpack.c.h.b16 %v3001
    %v3834 = vunpack.c.l.b16 %v3002
    %v3835 = vunpack.c.h.b16 %v3002
    %v3836 = vunpack.c.l.b16 %v3003
    %v3837 = vunpack.c.l.b16 %v3004
    %v3838 = vunpack.c.h.b16 %v3004
    %v3839 = vunpack.c.l.b16 %v3005
    %v3840 = vunpack.c.h.b16 %v3005
    %v3841 = vunpack.c.l.b16 %v3006
    %v3842 = vunpack.c.h.b16 %v3006
    %v3843 = vunpack.c.l.b16 %v3007
    %v3844 = vunpack.c.l.b16 %v3008
    %v3845 = vunpack.c.h.b16 %v3008
    %v3846 = vunpack.c.l.b16 %v3009
    %v3847 = vunpack.c.h.b16 %v3009
    %v3848 = vunpack.c.l.b16 %v3010
    %v3849 = vunpack.c.h.b16 %v3010
    %v3850 = vunpack.c.l.b16 %v3011
    %v3851 = vunpack.c.l.b16 %v3012
    %v3852 = vunpack.c.h.b16 %v3012
    %v3853 = vunpack.c.l.b16 %v3013
    %v3854 = vunpack.c.h.b16 %v3013
    %v3855 = vunpack.c.l.b16 %v3014
    %v3856 = vunpack.c.h.b16 %v3014
    %v3857 = vunpack.c.l.b16 %v3015
    %v3858 = vunpack.c.l.b16 %v3016
    %v3859 = vunpack.c.h.b16 %v3016
    %v3860 = vunpack.c.l.b16 %v3017
    %v3861 = vunpack.c.h.b16 %v3017
    %v3862 = vunpack.c.l.b16 %v3018
    %v3863 = vunpack.c.h.b16 %v3018
    %v3864 = vunpack.c.l.b16 %v3019
    %v3865 = vunpack.c.l.b16 %v3020
    %v3866 = vunpack.c.h.b16 %v3020
    %v3867 = vunpack.c.l.b16 %v3021
    %v3868 = vunpack.c.h.b16 %v3021
    %v3869 = vunpack.c.l.b16 %v3022
    %v3870 = vunpack.c.h.b16 %v3022
    %v3871 = vunpack.c.l.b16 %v3023
    %v3872 = vunpack.c.l.b16 %v3024
    %v3873 = vunpack.c.h.b16 %v3024
    %v3874 = vunpack.c.l.b16 %v3025
    %v3875 = vunpack.c.h.b16 %v3025
    %v3876 = vunpack.c.l.b16 %v3026
    %v3877 = vunpack.c.h.b16 %v3026
    %v3878 = vunpack.c.l.b16 %v3027
    %v3879 = vunpack.c.l.b16 %v3028
    %v3880 = vunpack.c.h.b16 %v3028
    %v3881 = vunpack.c.l.b16 %v3029
    %v3882 = vunpack.c.h.b16 %v3029
    %v3883 = vunpack.c.l.b16 %v3030
    %v3884 = vunpack.c.h.b16 %v3030
    %v3885 = vunpack.c.l.b16 %v3031
    %v3886 = vunpack.c.l.b16 %v3032
    %v3887 = vunpack.c.h.b16 %v3032
    %v3888 = vunpack.c.l.b16 %v3033
    %v3889 = vunpack.c.h.b16 %v3033
    %v3890 = vunpack.c.l.b16 %v3034
    %v3891 = vunpack.c.h.b16 %v3034
    %v3892 = vunpack.c.l.b16 %v3035
    %v3893 = vunpack.c.l.b16 %v3036
    %v3894 = vunpack.c.h.b16 %v3036
    %v3895 = vunpack.c.l.b16 %v3037
    %v3896 = vunpack.c.h.b16 %v3037
    %v3897 = vunpack.c.l.b16 %v3038
    %v3898 = vunpack.c.h.b16 %v3038
    %v3899 = vunpack.c.l.b16 %v3039
    %v3900 = vunpack.c.l.b16 %v3040
    %v3901 = vunpack.c.h.b16 %v3040
    %v3902 = vunpack.c.l.b16 %v3041
    %v3903 = vunpack.c.h.b16 %v3041
    %v3904 = vunpack.c.l.b16 %v3042
    %v3905 = vunpack.c.h.b16 %v3042
    %v3906 = vunpack.c.l.b16 %v3043
    %v3907 = vunpack.c.l.b16 %v3044
    %v3908 = vunpack.c.h.b16 %v3044
    %v3909 = vunpack.c.l.b16 %v3045
    %v3910 = vunpack.c.h.b16 %v3045
    %v3911 = vunpack.c.l.b16 %v3046
    %v3912 = vunpack.c.h.b16 %v3046
    %v3913 = vunpack.c.l.b16 %v3047
    %v3914 = vunpack.c.l.b16 %v3048
    %v3915 = vunpack.c.h.b16 %v3048
    %v3916 = vunpack.c.l.b16 %v3049
    %v3917 = vunpack.c.h.b16 %v3049
    %v3918 = vunpack.c.l.b16 %v3050
    %v3919 = vunpack.c.h.b16 %v3050
    %v3920 = vunpack.c.l.b16 %v3051
    %v3921 = vunpack.c.l.b16 %v3052
    %v3922 = vunpack.c.h.b16 %v3052
    %v3923 = vunpack.c.l.b16 %v3053
    %v3924 = vunpack.c.h.b16 %v3053
    %v3925 = vunpack.c.l.b16 %v3054
    %v3926 = vunpack.c.h.b16 %v3054
    %v3927 = vunpack.c.l.b16 %v3055
    %v3928 = vunpack.c.l.b16 %v3056
    %v3929 = vunpack.c.h.b16 %v3056
    %v3930 = vunpack.c.l.b16 %v3057
    %v3931 = vunpack.c.h.b16 %v3057
    %v3932 = vunpack.c.l.b16 %v3058
    %v3933 = vunpack.c.h.b16 %v3058
    %v3934 = vunpack.c.l.b16 %v3059
    %v3935 = vunpack.c.l.b16 %v3060
    %v3936 = vunpack.c.h.b16 %v3060
    %v3937 = vunpack.c.l.b16 %v3061
    %v3938 = vunpack.c.h.b16 %v3061
    %v3939 = vunpack.c.l.b16 %v3062
    %v3940 = vunpack.c.h.b16 %v3062
    %v3941 = vunpack.c.l.b16 %v3063
    %v3942 = vunpack.c.l.b16 %v3064
    %v3943 = vunpack.c.h.b16 %v3064
    %v3944 = vunpack.c.l.b16 %v3065
    %v3945 = vunpack.c.h.b16 %v3065
    %v3946 = vunpack.c.l.b16 %v3066
    %v3947 = vunpack.c.h.b16 %v3066
    %v3948 = vunpack.c.l.b16 %v3067
    %v3949 = vunpack.c.l.b16 %v3068
    %v3950 = vunpack.c.h.b16 %v3068
    %v3951 = vunpack.c.l.b16 %v3069
    %v3952 = vunpack.c.h.b16 %v3069
    %v3953 = vunpack.c.l.b16 %v3070
    %v3954 = vunpack.c.h.b16 %v3070
    %v3955 = vunpack.c.l.b16 %v3071
    %v3956 = vunpack.c.l.b16 %v3072
    %v3957 = vunpack.c.h.b16 %v3072
    %v3958 = vunpack.c.l.b16 %v3073
    %v3959 = vunpack.c.h.b16 %v3073
    %v3960 = vunpack.c.l.b16 %v3074
    %v3961 = vunpack.c.h.b16 %v3074
    %v3962 = vunpack.c.l.b16 %v3075
    %v3963 = vunpack.c.l.b16 %v3076
    %v3964 = vunpack.c.h.b16 %v3076
    %v3965 = vunpack.c.l.b16 %v3077
    %v3966 = vunpack.c.h.b16 %v3077
    %v3967 = vunpack.c.l.b16 %v3078
    %v3968 = vunpack.c.h.b16 %v3078
    %v3969 = vunpack.c.l.b16 %v3079
    %v3970 = vunpack.c.l.b16 %v3080
    %v3971 = vunpack.c.h.b16 %v3080
    %v3972 = vunpack.c.l.b16 %v3081
    %v3973 = vunpack.c.h.b16 %v3081
    %v3974 = vunpack.c.l.b16 %v3082
    %v3975 = vunpack.c.h.b16 %v3082
    %v3976 = vunpack.c.l.b16 %v3083
    %v3977 = vunpack.c.l.b16 %v3084
    %v3978 = vunpack.c.h.b16 %v3084
    %v3979 = vunpack.c.l.b16 %v3085
    %v3980 = vunpack.c.h.b16 %v3085
    %v3981 = vunpack.c.l.b16 %v3086
    %v3982 = vunpack.c.h.b16 %v3086
    %v3983 = vunpack.c.l.b16 %v3087
    %v3984 = vunpack.c.l.b16 %v3088
    %v3985 = vunpack.c.h.b16 %v3088
    %v3986 = vunpack.c.l.b16 %v3089
    %v3987 = vunpack.c.h.b16 %v3089
    %v3988 = vunpack.c.l.b16 %v3090
    %v3989 = vunpack.c.h.b16 %v3090
    %v3990 = vunpack.c.l.b16 %v3091
    %v3991 = vunpack.c.l.b16 %v3092
    %v3992 = vunpack.c.h.b16 %v3092
    %v3993 = vunpack.c.l.b16 %v3093
    %v3994 = vunpack.c.h.b16 %v3093
    %v3995 = vunpack.c.l.b16 %v3094
    %v3996 = vunpack.c.h.b16 %v3094
    %v3997 = vunpack.c.l.b16 %v3095
    %v3998 = vunpack.c.l.b16 %v3096
    %v3999 = vunpack.c.h.b16 %v3096
    %v4000 = vunpack.c.l.b16 %v3097
    %v4001 = vunpack.c.h.b16 %v3097
    %v4002 = vunpack.c.l.b16 %v3098
    %v4003 = vunpack.c.h.b16 %v3098
    %v4004 = vunpack.c.l.b16 %v3099
    %v4005 = vunpack.c.l.b16 %v3100
    %v4006 = vunpack.c.h.b16 %v3100
    %v4007 = vunpack.c.l.b16 %v3101
    %v4008 = vunpack.c.h.b16 %v3101
    %v4009 = vunpack.c.l.b16 %v3102
    %v4010 = vunpack.c.h.b16 %v3102
    %v4011 = vunpack.c.l.b16 %v3103
    %v4012 = vunpack.c.l.b16 %v3104
    %v4013 = vunpack.c.h.b16 %v3104
    %v4014 = vunpack.c.l.b16 %v3105
    %v4015 = vunpack.c.h.b16 %v3105
    %v4016 = vunpack.c.l.b16 %v3106
    %v4017 = vunpack.c.h.b16 %v3106
    %v4018 = vunpack.c.l.b16 %v3107
    %v4019 = vunpack.c.l.b16 %v3108
    %v4020 = vunpack.c.h.b16 %v3108
    %v4021 = vunpack.c.l.b16 %v3109
    %v4022 = vunpack.c.h.b16 %v3109
    %v4023 = vunpack.c.l.b16 %v3110
    %v4024 = vunpack.c.h.b16 %v3110
    %v4025 = vunpack.c.l.b16 %v3111
    %v4026 = vunpack.c.l.b16 %v3112
    %v4027 = vunpack.c.h.b16 %v3112
    %v4028 = vunpack.c.l.b16 %v3113
    %v4029 = vunpack.c.h.b16 %v3113
    %v4030 = vunpack.c.l.b16 %v3114
    %v4031 = vunpack.c.h.b16 %v3114
    %v4032 = vunpack.c.l.b16 %v3115
    %v4033 = vunpack.c.l.b16 %v3116
    %v4034 = vunpack.c.h.b16 %v3116
    %v4035 = vunpack.c.l.b16 %v3117
    %v4036 = vunpack.c.h.b16 %v3117
    %v4037 = vunpack.c.l.b16 %v3118
    %v4038 = vunpack.c.h.b16 %v3118
    %v4039 = vunpack.c.l.b16 %v3119
    %v4040 = vunpack.c.l.b16 %v3120
    %v4041 = vunpack.c.h.b16 %v3120
    %v4042 = vunpack.c.l.b16 %v3121
    %v4043 = vunpack.c.h.b16 %v3121
    %v4044 = vunpack.c.l.b16 %v3122
    %v4045 = vunpack.c.h.b16 %v3122
    %v4046 = vunpack.c.l.b16 %v3123
    %v4047 = vunpack.c.l.b16 %v3124
    %v4048 = vunpack.c.h.b16 %v3124
    %v4049 = vunpack.c.l.b16 %v3125
    %v4050 = vunpack.c.h.b16 %v3125
    %v4051 = vunpack.c.l.b16 %v3126
    %v4052 = vunpack.c.h.b16 %v3126
    %v4053 = vunpack.c.l.b16 %v3127
    %v4054 = vunpack.c.l.b16 %v3128
    %v4055 = vunpack.c.h.b16 %v3128
    %v4056 = vunpack.c.l.b16 %v3129
    %v4057 = vunpack.c.h.b16 %v3129
    %v4058 = vunpack.c.l.b16 %v3130
    %v4059 = vunpack.c.h.b16 %v3130
    %v4060 = vunpack.c.l.b16 %v3131
    %v4061 = vunpack.c.l.b16 %v3132
    %v4062 = vunpack.c.h.b16 %v3132
    %v4063 = vunpack.c.l.b16 %v3133
    %v4064 = vunpack.c.h.b16 %v3133
    %v4065 = vunpack.c.l.b16 %v3134
    %v4066 = vunpack.c.h.b16 %v3134
    %v4067 = vunpack.c.l.b16 %v3135
    %v4068 = vunpack.c.l.b16 %v3136
    %v4069 = vunpack.c.h.b16 %v3136
    %v4070 = vunpack.c.l.b16 %v3137
    %v4071 = vunpack.c.h.b16 %v3137
    %v4072 = vunpack.c.l.b16 %v3138
    %v4073 = vunpack.c.h.b16 %v3138
    %v4074 = vunpack.c.l.b16 %v3139
    %v4075 = vunpack.c.l.b16 %v3140
    %v4076 = vunpack.c.h.b16 %v3140
    %v4077 = vunpack.c.l.b16 %v3141
    %v4078 = vunpack.c.h.b16 %v3141
    %v4079 = vunpack.c.l.b16 %v3142
    %v4080 = vunpack.c.h.b16 %v3142
    %v4081 = vunpack.c.l.b16 %v3143
    %v4082 = vunpack.c.l.b16 %v3144
    %v4083 = vunpack.c.h.b16 %v3144
    %v4084 = vunpack.c.l.b16 %v3145
    %v4085 = vunpack.c.h.b16 %v3145
    %v4086 = vunpack.c.l.b16 %v3146
    %v4087 = vunpack.c.h.b16 %v3146
    %v4088 = vunpack.c.l.b16 %v3147
    %v4089 = vunpack.c.l.b16 %v3148
    %v4090 = vunpack.c.h.b16 %v3148
    %v4091 = vunpack.c.l.b16 %v3149
    %v4092 = vunpack.c.h.b16 %v3149
    %v4093 = vunpack.c.l.b16 %v3150
    %v4094 = vunpack.c.h.b16 %v3150
    %v4095 = vunpack.c.l.b16 %v3151
    %v4096 = vunpack.c.l.b16 %v3152
    %v4097 = vunpack.c.h.b16 %v3152
    %v4098 = vunpack.c.l.b16 %v3153
    %v4099 = vunpack.c.h.b16 %v3153
    %v4100 = vunpack.c.l.b16 %v3154
    %v4101 = vunpack.c.h.b16 %v3154
    %v4102 = vunpack.c.l.b16 %v3155
    %v4103 = vunpack.c.l.b16 %v3156
    %v4104 = vunpack.c.h.b16 %v3156
    %v4105 = vunpack.c.l.b16 %v3157
    %v4106 = vunpack.c.h.b16 %v3157
    %v4107 = vunpack.c.l.b16 %v3158
    %v4108 = vunpack.c.h.b16 %v3158
    %v4109 = vunpack.c.l.b16 %v3159
    %v4110 = vunpack.c.l.b16 %v3160
    %v4111 = vunpack.c.h.b16 %v3160
    %v4112 = vunpack.c.l.b16 %v3161
    %v4113 = vunpack.c.h.b16 %v3161
    %v4114 = vunpack.c.l.b16 %v3162
    %v4115 = vunpack.c.h.b16 %v3162
    %v4116 = vunpack.c.l.b16 %v3163
    %v4117 = vunpack.c.l.b16 %v3164
    %v4118 = vunpack.c.h.b16 %v3164
    %v4119 = vunpack.c.l.b16 %v3165
    %v4120 = vunpack.c.h.b16 %v3165
    %v4121 = vunpack.c.l.b16 %v3166
    %v4122 = vunpack.c.h.b16 %v3166
    %v4123 = vunpack.c.l.b16 %v3167
    %v4124 = vunpack.c.l.b16 %v3168
    %v4125 = vunpack.c.h.b16 %v3168
    %v4126 = vunpack.c.l.b16 %v3169
    %v4127 = vunpack.c.h.b16 %v3169
    %v4128 = vunpack.c.l.b16 %v3170
    %v4129 = vunpack.c.h.b16 %v3170
    %v4130 = vunpack.c.l.b16 %v3171
    %v4131 = vunpack.c.l.b16 %v3172
    %v4132 = vunpack.c.h.b16 %v3172
    %v4133 = vunpack.c.l.b16 %v3173
    %v4134 = vunpack.c.h.b16 %v3173
    %v4135 = vunpack.c.l.b16 %v3174
    %v4136 = vunpack.c.h.b16 %v3174
    %v4137 = vunpack.c.l.b16 %v3175
    %v4138 = vunpack.c.l.b16 %v3176
    %v4139 = vunpack.c.h.b16 %v3176
    %v4140 = vunpack.c.l.b16 %v3177
    %v4141 = vunpack.c.h.b16 %v3177
    %v4142 = vunpack.c.l.b16 %v3178
    %v4143 = vunpack.c.h.b16 %v3178
    %v4144 = vunpack.c.l.b16 %v3179
    %v4145 = vunpack.c.l.b16 %v3180
    %v4146 = vunpack.c.h.b16 %v3180
    %v4147 = vunpack.c.l.b16 %v3181
    %v4148 = vunpack.c.h.b16 %v3181
    %v4149 = vunpack.c.l.b16 %v3182
    %v4150 = vunpack.c.h.b16 %v3182
    %v4151 = vunpack.c.l.b16 %v3183
    %v4152 = vunpack.c.l.b16 %v3184
    %v4153 = vunpack.c.h.b16 %v3184
    %v4154 = vunpack.c.l.b16 %v3185
    %v4155 = vunpack.c.h.b16 %v3185
    %v4156 = vunpack.c.l.b16 %v3186
    %v4157 = vunpack.c.h.b16 %v3186
    %v4158 = vunpack.c.l.b16 %v3187
    %v4159 = vunpack.c.l.b16 %v3188
    %v4160 = vunpack.c.h.b16 %v3188
    %v4161 = vunpack.c.l.b16 %v3189
    %v4162 = vunpack.c.h.b16 %v3189
    %v4163 = vunpack.c.l.b16 %v3190
    %v4164 = vunpack.c.h.b16 %v3190
    %v4165 = vunpack.c.l.b16 %v3191
    %v4166 = vunpack.c.l.b16 %v3192
    %v4167 = vunpack.c.h.b16 %v3192
    %v4168 = vunpack.c.l.b16 %v3193
    %v4169 = vunpack.c.h.b16 %v3193
    %v4170 = vunpack.c.l.b16 %v3194
    %v4171 = vunpack.c.h.b16 %v3194
    %v4172 = vunpack.c.l.b16 %v3195
    %v4173 = vunpack.c.l.b16 %v3196
    %v4174 = vunpack.c.h.b16 %v3196
    %v4175 = vunpack.c.l.b16 %v3197
    %v4176 = vunpack.c.h.b16 %v3197
    %v4177 = vunpack.c.l.b16 %v3198
    %v4178 = vunpack.c.h.b16 %v3198
    %v4179 = vunpack.c.l.b16 %v3199
    %v4180 = vunpack.c.l.b16 %v3200
    %v4181 = vunpack.c.h.b16 %v3200
    %v4182 = vunpack.c.l.b16 %v3201
    %v4183 = vunpack.c.h.b16 %v3201
    %v4184 = vunpack.c.l.b16 %v3202
    %v4185 = vunpack.c.h.b16 %v3202
    %v4186 = vunpack.c.l.b16 %v3203
    %v4187 = vunpack.c.l.b16 %v3204
    %v4188 = vunpack.c.h.b16 %v3204
    %v4189 = vunpack.c.l.b16 %v3205
    %v4190 = vunpack.c.h.b16 %v3205
    %v4191 = vunpack.c.l.b16 %v3206
    %v4192 = vunpack.c.h.b16 %v3206
    %v4193 = vunpack.c.l.b16 %v3207
    %v4194 = vunpack.c.l.b16 %v3208
    %v4195 = vunpack.c.h.b16 %v3208
    %v4196 = vunpack.c.l.b16 %v3209
    %v4197 = vunpack.c.h.b16 %v3209
    %v4198 = vunpack.c.l.b16 %v3210
    %v4199 = vunpack.c.h.b16 %v3210
    %v4200 = vunpack.c.l.b16 %v3211
    %v4201 = vunpack.c.l.b16 %v3212
    %v4202 = vunpack.c.h.b16 %v3212
    %v4203 = vunpack.c.l.b16 %v3213
    %v4204 = vunpack.c.h.b16 %v3213
    %v4205 = vunpack.c.l.b16 %v3214
    %v4206 = vunpack.c.h.b16 %v3214
    %v4207 = vunpack.c.l.b16 %v3215
    %v4208 = vunpack.c.l.b16 %v3216
    %v4209 = vunpack.c.h.b16 %v3216
    %v4210 = vunpack.c.l.b16 %v3217
    %v4211 = vunpack.c.h.b16 %v3217
    %v4212 = vunpack.c.l.b16 %v3218
    %v4213 = vunpack.c.h.b16 %v3218
    %v4214 = vunpack.c.l.b16 %v3219
    %v4215 = vunpack.c.l.b16 %v3220
    %v4216 = vunpack.c.h.b16 %v3220
    %v4217 = vunpack.c.l.b16 %v3221
    %v4218 = vunpack.c.h.b16 %v3221
    %v4219 = vunpack.c.l.b16 %v3222
    %v4220 = vunpack.c.h.b16 %v3222
    %v4221 = vunpack.c.l.b16 %v3223
    %v4222 = vunpack.c.l.b16 %v3224
    %v4223 = vunpack.c.h.b16 %v3224
    %v4224 = vunpack.c.l.b16 %v3225
    %v4225 = vunpack.c.h.b16 %v3225
    %v4226 = vunpack.c.l.b16 %v3226
    %v4227 = vunpack.c.h.b16 %v3226
    %v4228 = vunpack.c.l.b16 %v3227
    %v4229 = vunpack.c.l.b16 %v3228
    %v4230 = vunpack.c.h.b16 %v3228
    %v4231 = vunpack.c.l.b16 %v3229
    %v4232 = vunpack.c.h.b16 %v3229
    %v4233 = vunpack.c.l.b16 %v3230
    %v4234 = vunpack.c.h.b16 %v3230
    %v4235 = vunpack.c.l.b16 %v3231
    %v4236 = vunpack.c.l.b16 %v3232
    %v4237 = vunpack.c.h.b16 %v3232
    %v4238 = vunpack.c.l.b16 %v3233
    %v4239 = vunpack.c.h.b16 %v3233
    %v4240 = vunpack.c.l.b16 %v3234
    %v4241 = vunpack.c.h.b16 %v3234
    %v4242 = vunpack.c.l.b16 %v3235
    %v4243 = vunpack.c.l.b16 %v3236
    %v4244 = vunpack.c.h.b16 %v3236
    %v4245 = vunpack.c.l.b16 %v3237
    %v4246 = vunpack.c.h.b16 %v3237
    %v4247 = vunpack.c.l.b16 %v3238
    %v4248 = vunpack.c.h.b16 %v3238
    %v4249 = vunpack.c.l.b16 %v3239
    %v4250 = vunpack.c.l.b16 %v3240
    %v4251 = vunpack.c.h.b16 %v3240
    %v4252 = vunpack.c.l.b16 %v3241
    %v4253 = vunpack.c.h.b16 %v3241
    %v4254 = vunpack.c.l.b16 %v3242
    %v4255 = vunpack.c.h.b16 %v3242
    %v4256 = vunpack.c.l.b16 %v3243
    %v4257 = vunpack.c.l.b16 %v3244
    %v4258 = vunpack.c.h.b16 %v3244
    %v4259 = vunpack.c.l.b16 %v3245
    %v4260 = vunpack.c.h.b16 %v3245
    %v4261 = vunpack.c.l.b16 %v3246
    %v4262 = vunpack.c.h.b16 %v3246
    %v4263 = vunpack.c.l.b16 %v3247
    %v4264 = vunpack.c.l.b16 %v3248
    %v4265 = vunpack.c.h.b16 %v3248
    %v4266 = vunpack.c.l.b16 %v3249
    %v4267 = vunpack.c.h.b16 %v3249
    %v4268 = vunpack.c.l.b16 %v3250
    %v4269 = vunpack.c.h.b16 %v3250
    %v4270 = vunpack.c.l.b16 %v3251
    %v4271 = vunpack.c.l.b16 %v3252
    %v4272 = vunpack.c.h.b16 %v3252
    %v4273 = vunpack.c.l.b16 %v3253
    %v4274 = vunpack.c.h.b16 %v3253
    %v4275 = vunpack.c.l.b16 %v3254
    %v4276 = vunpack.c.h.b16 %v3254
    %v4277 = vunpack.c.l.b16 %v3255
    %v4278 = vunpack.c.l.b16 %v3256
    %v4279 = vunpack.c.h.b16 %v3256
    %v4280 = vunpack.c.l.b16 %v3257
    %v4281 = vunpack.c.h.b16 %v3257
    %v4282 = vunpack.c.l.b16 %v3258
    %v4283 = vunpack.c.h.b16 %v3258
    %v4284 = vunpack.c.l.b16 %v3259
    %v4285 = vunpack.c.l.b16 %v3260
    %v4286 = vunpack.c.h.b16 %v3260
    %v4287 = vunpack.c.l.b16 %v3261
    %v4288 = vunpack.c.h.b16 %v3261
    %v4289 = vunpack.c.l.b16 %v3262
    %v4290 = vunpack.c.h.b16 %v3262
    %v4291 = vunpack.c.l.b16 %v3263
    %v4292 = vunpack.c.l.b16 %v3264
    %v4293 = vunpack.c.h.b16 %v3264
    %v4294 = vunpack.c.l.b16 %v3265
    %v4295 = vunpack.c.h.b16 %v3265
    %v4296 = vunpack.c.l.b16 %v3266
    %v4297 = vunpack.c.h.b16 %v3266
    %v4298 = vunpack.c.l.b16 %v3267
    %v4299 = vunpack.c.l.b16 %v3268
    %v4300 = vunpack.c.h.b16 %v3268
    %v4301 = vunpack.c.l.b16 %v3269
    %v4302 = vunpack.c.h.b16 %v3269
    %v4303 = vunpack.c.l.b16 %v3270
    %v4304 = vunpack.c.h.b16 %v3270
    %v4305 = vunpack.c.l.b16 %v3271
    %v4306 = vunpack.c.l.b16 %v3272
    %v4307 = vunpack.c.h.b16 %v3272
    %v4308 = vunpack.c.l.b16 %v3273
    %v4309 = vunpack.c.h.b16 %v3273
    %v4310 = vunpack.c.l.b16 %v3274
    %v4311 = vunpack.c.h.b16 %v3274
    %v4312 = vunpack.c.l.b16 %v3275
    %v4313 = vunpack.c.l.b16 %v3276
    %v4314 = vunpack.c.h.b16 %v3276
    %v4315 = vunpack.c.l.b16 %v3277
    %v4316 = vunpack.c.h.b16 %v3277
    %v4317 = vunpack.c.l.b16 %v3278
    %v4318 = vunpack.c.h.b16 %v3278
    %v4319 = vunpack.c.l.b16 %v3279
    %v4320 = vunpack.c.l.b16 %v3280
    %v4321 = vunpack.c.h.b16 %v3280
    %v4322 = vunpack.c.l.b16 %v3281
    %v4323 = vunpack.c.h.b16 %v3281
    %v4324 = vunpack.c.l.b16 %v3282
    %v4325 = vunpack.c.h.b16 %v3282
    %v4326 = vunpack.c.l.b16 %v3283
    %v4327 = vunpack.c.l.b16 %v3284
    %v4328 = vunpack.c.h.b16 %v3284
    %v4329 = vunpack.c.l.b16 %v3285
    %v4330 = vunpack.c.h.b16 %v3285
    %v4331 = vunpack.c.l.b16 %v3286
    %v4332 = vunpack.c.h.b16 %v3286
    %v4333 = vunpack.c.l.b16 %v3287
    %v4334 = vunpack.c.l.b16 %v3288
    %v4335 = vunpack.c.h.b16 %v3288
    %v4336 = vunpack.c.l.b16 %v3289
    %v4337 = vunpack.c.h.b16 %v3289
    %v4338 = vunpack.c.l.b16 %v3290
    %v4339 = vunpack.c.h.b16 %v3290
    %v4340 = vunpack.c.l.b16 %v3291
    %v4341 = vunpack.c.l.b16 %v3292
    %v4342 = vunpack.c.h.b16 %v3292
    %v4343 = vunpack.c.l.b16 %v3293
    %v4344 = vunpack.c.h.b16 %v3293
    %v4345 = vunpack.c.l.b16 %v3294
    %v4346 = vunpack.c.h.b16 %v3294
    %v4347 = vunpack.c.l.b16 %v3295
    %v4348 = vunpack.c.l.b16 %v3296
    %v4349 = vunpack.c.h.b16 %v3296
    %v4350 = vunpack.c.l.b16 %v3297
    %v4351 = vunpack.c.h.b16 %v3297
    %v4352 = vunpack.c.l.b16 %v3298
    %v4353 = vunpack.c.h.b16 %v3298
    %v4354 = vunpack.c.l.b16 %v3299
    %v4355 = vunpack.c.l.b16 %v3300
    %v4356 = vunpack.c.h.b16 %v3300
    %v4357 = vunpack.c.l.b16 %v3301
    %v4358 = vunpack.c.h.b16 %v3301
    %v4359 = vunpack.c.l.b16 %v3302
    %v4360 = vunpack.c.h.b16 %v3302
    %v4361 = vunpack.c.l.b16 %v3303
    %v4362 = vunpack.c.l.b16 %v3304
    %v4363 = vunpack.c.h.b16 %v3304
    %v4364 = vunpack.c.l.b16 %v3305
    %v4365 = vunpack.c.h.b16 %v3305
    %v4366 = vunpack.c.l.b16 %v3306
    %v4367 = vunpack.c.h.b16 %v3306
    %v4368 = vunpack.c.l.b16 %v3307
    %v4369 = vunpack.c.l.b16 %v3308
    %v4370 = vunpack.c.h.b16 %v3308
    %v4371 = vunpack.c.l.b16 %v3309
    %v4372 = vunpack.c.h.b16 %v3309
    %v4373 = vunpack.c.l.b16 %v3310
    %v4374 = vunpack.c.h.b16 %v3310
    %v4375 = vunpack.c.l.b16 %v3311
    %v4376 = vunpack.c.l.b16 %v3312
    %v4377 = vunpack.c.h.b16 %v3312
    %v4378 = vunpack.c.l.b16 %v3313
    %v4379 = vunpack.c.h.b16 %v3313
    %v4380 = vunpack.c.l.b16 %v3314
    %v4381 = vunpack.c.h.b16 %v3314
    %v4382 = vunpack.c.l.b16 %v3315
    %v4383 = vunpack.c.l.b16 %v3316
    %v4384 = vunpack.c.h.b16 %v3316
    %v4385 = vunpack.c.l.b16 %v3317
    %v4386 = vunpack.c.h.b16 %v3317
    %v4387 = vunpack.c.l.b16 %v3318
    %v4388 = vunpack.c.h.b16 %v3318
    %v4389 = vunpack.c.l.b16 %v3319
    %v4390 = vunpack.c.l.b16 %v3320
    %v4391 = vunpack.c.h.b16 %v3320
    %v4392 = vunpack.c.l.b16 %v3321
    %v4393 = vunpack.c.h.b16 %v3321
    %v4394 = vunpack.c.l.b16 %v3322
    %v4395 = vunpack.c.h.b16 %v3322
    %v4396 = vunpack.c.l.b16 %v3323
    %v4397 = vunpack.c.l.b16 %v3324
    %v4398 = vunpack.c.h.b16 %v3324
    %v4399 = vunpack.c.l.b16 %v3325
    %v4400 = vunpack.c.h.b16 %v3325
    %v4401 = vunpack.c.l.b16 %v3326
    %v4402 = vunpack.c.h.b16 %v3326
    %v4403 = vunpack.c.l.b16 %v3327
    %v4404 = vunpack.c.l.b16 %v3328
    %v4405 = vunpack.c.h.b16 %v3328
    %v4406 = vunpack.c.l.b16 %v3329
    %v4407 = vunpack.c.h.b16 %v3329
    %v4408 = vunpack.c.l.b16 %v3330
    %v4409 = vunpack.c.h.b16 %v3330
    %v4410 = vunpack.c.l.b16 %v3331
    %v4411 = vunpack.c.l.b16 %v3332
    %v4412 = vunpack.c.h.b16 %v3332
    %v4413 = vunpack.c.l.b16 %v3333
    %v4414 = vunpack.c.h.b16 %v3333
    %v4415 = vunpack.c.l.b16 %v3334
    %v4416 = vunpack.c.h.b16 %v3334
    %v4417 = vunpack.c.l.b16 %v3335
    %v4418 = vunpack.c.l.b16 %v3336
    %v4419 = vunpack.c.h.b16 %v3336
    %v4420 = vunpack.c.l.b16 %v3337
    %v4421 = vunpack.c.h.b16 %v3337
    %v4422 = vunpack.c.l.b16 %v3338
    %v4423 = vunpack.c.h.b16 %v3338
    %v4424 = vunpack.c.l.b16 %v3339
    %v4425 = vunpack.c.l.b16 %v3340
    %v4426 = vunpack.c.h.b16 %v3340
    %v4427 = vunpack.c.l.b16 %v3341
    %v4428 = vunpack.c.h.b16 %v3341
    %v4429 = vunpack.c.l.b16 %v3342
    %v4430 = vunpack.c.h.b16 %v3342
    %v4431 = vunpack.c.l.b16 %v3343
    %v4432 = vunpack.c.l.b16 %v3344
    %v4433 = vunpack.c.h.b16 %v3344
    %v4434 = vunpack.c.l.b16 %v3345
    %v4435 = vunpack.c.h.b16 %v3345
    %v4436 = vunpack.c.l.b16 %v3346
    %v4437 = vunpack.c.h.b16 %v3346
    %v4438 = vunpack.c.l.b16 %v3347
    %v4439 = vunpack.c.l.b16 %v3348
    %v4440 = vunpack.c.h.b16 %v3348
    %v4441 = vunpack.c.l.b16 %v3349
    %v4442 = vunpack.c.h.b16 %v3349
    %v4443 = vunpack.c.l.b16 %v3350
    %v4444 = vunpack.c.h.b16 %v3350
    %v4445 = vunpack.c.l.b16 %v3351
    %v4446 = vpack.c.b16 %v3767, %v3760
    %v4447 = vpack.c.b16 %v3768, %v3761
    %v4448 = vpack.c.b16 %v3769, %v3762
    %v4449 = vpack.c.b16 %v3770, %v3763
    %v4450 = vpack.c.b16 %v3771, %v3764
    %v4451 = vpack.c.b16 %v3772, %v3765
    %v4452 = vpack.c.b16 %v3773, %v3766
    %v4453 = vpack.c.b16 %v3781, %v3774
    %v4454 = vpack.c.b16 %v3782, %v3775
    %v4455 = vpack.c.b16 %v3783, %v3776
    %v4456 = vpack.c.b16 %v3784, %v3777
    %v4457 = vpack.c.b16 %v3785, %v3778
    %v4458 = vpack.c.b16 %v3786, %v3779
    %v4459 = vpack.c.b16 %v3787, %v3780
    %v4460 = vpack.c.b16 %v3795, %v3788
    %v4461 = vpack.c.b16 %v3796, %v3789
    %v4462 = vpack.c.b16 %v3797, %v3790
    %v4463 = vpack.c.b16 %v3798, %v3791
    %v4464 = vpack.c.b16 %v3799, %v3792
    %v4465 = vpack.c.b16 %v3800, %v3793
    %v4466 = vpack.c.b16 %v3801, %v3794
    %v4467 = vpack.c.b16 %v3809, %v3802
    %v4468 = vpack.c.b16 %v3810, %v3803
    %v4469 = vpack.c.b16 %v3811, %v3804
    %v4470 = vpack.c.b16 %v3812, %v3805
    %v4471 = vpack.c.b16 %v3813, %v3806
    %v4472 = vpack.c.b16 %v3814, %v3807
    %v4473 = vpack.c.b16 %v3815, %v3808
    %v4474 = vpack.c.b16 %v3823, %v3816
    %v4475 = vpack.c.b16 %v3824, %v3817
    %v4476 = vpack.c.b16 %v3825, %v3818
    %v4477 = vpack.c.b16 %v3826, %v3819
    %v4478 = vpack.c.b16 %v3827, %v3820
    %v4479 = vpack.c.b16 %v3828, %v3821
    %v4480 = vpack.c.b16 %v3829, %v3822
    %v4481 = vpack.c.b16 %v3837, %v3830
    %v4482 = vpack.c.b16 %v3838, %v3831
    %v4483 = vpack.c.b16 %v3839, %v3832
    %v4484 = vpack.c.b16 %v3840, %v3833
    %v4485 = vpack.c.b16 %v3841, %v3834
    %v4486 = vpack.c.b16 %v3842, %v3835
    %v4487 = vpack.c.b16 %v3843, %v3836
    %v4488 = vpack.c.b16 %v3851, %v3844
    %v4489 = vpack.c.b16 %v3852, %v3845
    %v4490 = vpack.c.b16 %v3853, %v3846
    %v4491 = vpack.c.b16 %v3854, %v3847
    %v4492 = vpack.c.b16 %v3855, %v3848
    %v4493 = vpack.c.b16 %v3856, %v3849
    %v4494 = vpack.c.b16 %v3857, %v3850
    %v4495 = vpack.c.b16 %v3865, %v3858
    %v4496 = vpack.c.b16 %v3866, %v3859
    %v4497 = vpack.c.b16 %v3867, %v3860
    %v4498 = vpack.c.b16 %v3868, %v3861
    %v4499 = vpack.c.b16 %v3869, %v3862
    %v4500 = vpack.c.b16 %v3870, %v3863
    %v4501 = vpack.c.b16 %v3871, %v3864
    %v4502 = vpack.c.b16 %v3879, %v3872
    %v4503 = vpack.c.b16 %v3880, %v3873
    %v4504 = vpack.c.b16 %v3881, %v3874
    %v4505 = vpack.c.b16 %v3882, %v3875
    %v4506 = vpack.c.b16 %v3883, %v3876
    %v4507 = vpack.c.b16 %v3884, %v3877
    %v4508 = vpack.c.b16 %v3885, %v3878
    %v4509 = vpack.c.b16 %v3893, %v3886
    %v4510 = vpack.c.b16 %v3894, %v3887
    %v4511 = vpack.c.b16 %v3895, %v3888
    %v4512 = vpack.c.b16 %v3896, %v3889
    %v4513 = vpack.c.b16 %v3897, %v3890
    %v4514 = vpack.c.b16 %v3898, %v3891
    %v4515 = vpack.c.b16 %v3899, %v3892
    %v4516 = vpack.c.b16 %v3907, %v3900
    %v4517 = vpack.c.b16 %v3908, %v3901
    %v4518 = vpack.c.b16 %v3909, %v3902
    %v4519 = vpack.c.b16 %v3910, %v3903
    %v4520 = vpack.c.b16 %v3911, %v3904
    %v4521 = vpack.c.b16 %v3912, %v3905
    %v4522 = vpack.c.b16 %v3913, %v3906
    %v4523 = vpack.c.b16 %v3921, %v3914
    %v4524 = vpack.c.b16 %v3922, %v3915
    %v4525 = vpack.c.b16 %v3923, %v3916
    %v4526 = vpack.c.b16 %v3924, %v3917
    %v4527 = vpack.c.b16 %v3925, %v3918
    %v4528 = vpack.c.b16 %v3926, %v3919
    %v4529 = vpack.c.b16 %v3927, %v3920
    %v4530 = vpack.c.b16 %v3935, %v3928
    %v4531 = vpack.c.b16 %v3936, %v3929
    %v4532 = vpack.c.b16 %v3937, %v3930
    %v4533 = vpack.c.b16 %v3938, %v3931
    %v4534 = vpack.c.b16 %v3939, %v3932
    %v4535 = vpack.c.b16 %v3940, %v3933
    %v4536 = vpack.c.b16 %v3941, %v3934
    %v4537 = vpack.c.b16 %v3949, %v3942
    %v4538 = vpack.c.b16 %v3950, %v3943
    %v4539 = vpack.c.b16 %v3951, %v3944
    %v4540 = vpack.c.b16 %v3952, %v3945
    %v4541 = vpack.c.b16 %v3953, %v3946
    %v4542 = vpack.c.b16 %v3954, %v3947
    %v4543 = vpack.c.b16 %v3955, %v3948
    %v4544 = vpack.c.b16 %v3963, %v3956
    %v4545 = vpack.c.b16 %v3964, %v3957
    %v4546 = vpack.c.b16 %v3965, %v3958
    %v4547 = vpack.c.b16 %v3966, %v3959
    %v4548 = vpack.c.b16 %v3967, %v3960
    %v4549 = vpack.c.b16 %v3968, %v3961
    %v4550 = vpack.c.b16 %v3969, %v3962
    %v4551 = vpack.c.b16 %v3977, %v3970
    %v4552 = vpack.c.b16 %v3978, %v3971
    %v4553 = vpack.c.b16 %v3979, %v3972
    %v4554 = vpack.c.b16 %v3980, %v3973
    %v4555 = vpack.c.b16 %v3981, %v3974
    %v4556 = vpack.c.b16 %v3982, %v3975
    %v4557 = vpack.c.b16 %v3983, %v3976
    %v4558 = vpack.c.b16 %v3991, %v3984
    %v4559 = vpack.c.b16 %v3992, %v3985
    %v4560 = vpack.c.b16 %v3993, %v3986
    %v4561 = vpack.c.b16 %v3994, %v3987
    %v4562 = vpack.c.b16 %v3995, %v3988
    %v4563 = vpack.c.b16 %v3996, %v3989
    %v4564 = vpack.c.b16 %v3997, %v3990
    %v4565 = vpack.c.b16 %v4005, %v3998
    %v4566 = vpack.c.b16 %v4006, %v3999
    %v4567 = vpack.c.b16 %v4007, %v4000
    %v4568 = vpack.c.b16 %v4008, %v4001
    %v4569 = vpack.c.b16 %v4009, %v4002
    %v4570 = vpack.c.b16 %v4010, %v4003
    %v4571 = vpack.c.b16 %v4011, %v4004
    %v4572 = vpack.c.b16 %v4019, %v4012
    %v4573 = vpack.c.b16 %v4020, %v4013
    %v4574 = vpack.c.b16 %v4021, %v4014
    %v4575 = vpack.c.b16 %v4022, %v4015
    %v4576 = vpack.c.b16 %v4023, %v4016
    %v4577 = vpack.c.b16 %v4024, %v4017
    %v4578 = vpack.c.b16 %v4025, %v4018
    %v4579 = vpack.c.b16 %v4033, %v4026
    %v4580 = vpack.c.b16 %v4034, %v4027
    %v4581 = vpack.c.b16 %v4035, %v4028
    %v4582 = vpack.c.b16 %v4036, %v4029
    %v4583 = vpack.c.b16 %v4037, %v4030
    %v4584 = vpack.c.b16 %v4038, %v4031
    %v4585 = vpack.c.b16 %v4039, %v4032
    %v4586 = vpack.c.b16 %v4047, %v4040
    %v4587 = vpack.c.b16 %v4048, %v4041
    %v4588 = vpack.c.b16 %v4049, %v4042
    %v4589 = vpack.c.b16 %v4050, %v4043
    %v4590 = vpack.c.b16 %v4051, %v4044
    %v4591 = vpack.c.b16 %v4052, %v4045
    %v4592 = vpack.c.b16 %v4053, %v4046
    %v4593 = vpack.c.b16 %v4061, %v4054
    %v4594 = vpack.c.b16 %v4062, %v4055
    %v4595 = vpack.c.b16 %v4063, %v4056
    %v4596 = vpack.c.b16 %v4064, %v4057
    %v4597 = vpack.c.b16 %v4065, %v4058
    %v4598 = vpack.c.b16 %v4066, %v4059
    %v4599 = vpack.c.b16 %v4067, %v4060
    %v4600 = vpack.c.b16 %v4075, %v4068
    %v4601 = vpack.c.b16 %v4076, %v4069
    %v4602 = vpack.c.b16 %v4077, %v4070
    %v4603 = vpack.c.b16 %v4078, %v4071
    %v4604 = vpack.c.b16 %v4079, %v4072
    %v4605 = vpack.c.b16 %v4080, %v4073
    %v4606 = vpack.c.b16 %v4081, %v4074
    %v4607 = vpack.c.b16 %v4089, %v4082
    %v4608 = vpack.c.b16 %v4090, %v4083
    %v4609 = vpack.c.b16 %v4091, %v4084
    %v4610 = vpack.c.b16 %v4092, %v4085
    %v4611 = vpack.c.b16 %v4093, %v4086
    %v4612 = vpack.c.b16 %v4094, %v4087
    %v4613 = vpack.c.b16 %v4095, %v4088
    %v4614 = vpack.c.b16 %v4103, %v4096
    %v4615 = vpack.c.b16 %v4104, %v4097
    %v4616 = vpack.c.b16 %v4105, %v4098
    %v4617 = vpack.c.b16 %v4106, %v4099
    %v4618 = vpack.c.b16 %v4107, %v4100
    %v4619 = vpack.c.b16 %v4108, %v4101
    %v4620 = vpack.c.b16 %v4109, %v4102
    %v4621 = vpack.c.b16 %v4117, %v4110
    %v4622 = vpack.c.b16 %v4118, %v4111
    %v4623 = vpack.c.b16 %v4119, %v4112
    %v4624 = vpack.c.b16 %v4120, %v4113
    %v4625 = vpack.c.b16 %v4121, %v4114
    %v4626 = vpack.c.b16 %v4122, %v4115
    %v4627 = vpack.c.b16 %v4123, %v4116
    %v4628 = vpack.c.b16 %v4131, %v4124
    %v4629 = vpack.c.b16 %v4132, %v4125
    %v4630 = vpack.c.b16 %v4133, %v4126
    %v4631 = vpack.c.b16 %v4134, %v4127
    %v4632 = vpack.c.b16 %v4135, %v4128
    %v4633 = vpack.c.b16 %v4136, %v4129
    %v4634 = vpack.c.b16 %v4137, %v4130
    %v4635 = vpack.c.b16 %v4145, %v4138
    %v4636 = vpack.c.b16 %v4146, %v4139
    %v4637 = vpack.c.b16 %v4147, %v4140
    %v4638 = vpack.c.b16 %v4148, %v4141
    %v4639 = vpack.c.b16 %v4149, %v4142
    %v4640 = vpack.c.b16 %v4150, %v4143
    %v4641 = vpack.c.b16 %v4151, %v4144
    %v4642 = vpack.c.b16 %v4159, %v4152
    %v4643 = vpack.c.b16 %v4160, %v4153
    %v4644 = vpack.c.b16 %v4161, %v4154
    %v4645 = vpack.c.b16 %v4162, %v4155
    %v4646 = vpack.c.b16 %v4163, %v4156
    %v4647 = vpack.c.b16 %v4164, %v4157
    %v4648 = vpack.c.b16 %v4165, %v4158
    %v4649 = vpack.c.b16 %v4173, %v4166
    %v4650 = vpack.c.b16 %v4174, %v4167
    %v4651 = vpack.c.b16 %v4175, %v4168
    %v4652 = vpack.c.b16 %v4176, %v4169
    %v4653 = vpack.c.b16 %v4177, %v4170
    %v4654 = vpack.c.b16 %v4178, %v4171
    %v4655 = vpack.c.b16 %v4179, %v4172
    %v4656 = vpack.c.b16 %v4187, %v4180
    %v4657 = vpack.c.b16 %v4188, %v4181
    %v4658 = vpack.c.b16 %v4189, %v4182
    %v4659 = vpack.c.b16 %v4190, %v4183
    %v4660 = vpack.c.b16 %v4191, %v4184
    %v4661 = vpack.c.b16 %v4192, %v4185
    %v4662 = vpack.c.b16 %v4193, %v4186
    %v4663 = vpack.c.b16 %v4201, %v4194
    %v4664 = vpack.c.b16 %v4202, %v4195
    %v4665 = vpack.c.b16 %v4203, %v4196
    %v4666 = vpack.c.b16 %v4204, %v4197
    %v4667 = vpack.c.b16 %v4205, %v4198
    %v4668 = vpack.c.b16 %v4206, %v4199
    %v4669 = vpack.c.b16 %v4207, %v4200
    %v4670 = vpack.c.b16 %v4215, %v4208
    %v4671 = vpack.c.b16 %v4216, %v4209
    %v4672 = vpack.c.b16 %v4217, %v4210
    %v4673 = vpack.c.b16 %v4218, %v4211
    %v4674 = vpack.c.b16 %v4219, %v4212
    %v4675 = vpack.c.b16 %v4220, %v4213
    %v4676 = vpack.c.b16 %v4221, %v4214
    %v4677 = vpack.c.b16 %v4229, %v4222
    %v4678 = vpack.c.b16 %v4230, %v4223
    %v4679 = vpack.c.b16 %v4231, %v4224
    %v4680 = vpack.c.b16 %v4232, %v4225
    %v4681 = vpack.c.b16 %v4233, %v4226
    %v4682 = vpack.c.b16 %v4234, %v4227
    %v4683 = vpack.c.b16 %v4235, %v4228
    %v4684 = vpack.c.b16 %v4243, %v4236
    %v4685 = vpack.c.b16 %v4244, %v4237
    %v4686 = vpack.c.b16 %v4245, %v4238
    %v4687 = vpack.c.b16 %v4246, %v4239
    %v4688 = vpack.c.b16 %v4247, %v4240
    %v4689 = vpack.c.b16 %v4248, %v4241
    %v4690 = vpack.c.b16 %v4249, %v4242
    %v4691 = vpack.c.b16 %v4257, %v4250
    %v4692 = vpack.c.b16 %v4258, %v4251
    %v4693 = vpack.c.b16 %v4259, %v4252
    %v4694 = vpack.c.b16 %v4260, %v4253
    %v4695 = vpack.c.b16 %v4261, %v4254
    %v4696 = vpack.c.b16 %v4262, %v4255
    %v4697 = vpack.c.b16 %v4263, %v4256
    %v4698 = vpack.c.b16 %v4271, %v4264
    %v4699 = vpack.c.b16 %v4272, %v4265
    %v4700 = vpack.c.b16 %v4273, %v4266
    %v4701 = vpack.c.b16 %v4274, %v4267
    %v4702 = vpack.c.b16 %v4275, %v4268
    %v4703 = vpack.c.b16 %v4276, %v4269
    %v4704 = vpack.c.b16 %v4277, %v4270
    %v4705 = vpack.c.b16 %v4285, %v4278
    %v4706 = vpack.c.b16 %v4286, %v4279
    %v4707 = vpack.c.b16 %v4287, %v4280
    %v4708 = vpack.c.b16 %v4288, %v4281
    %v4709 = vpack.c.b16 %v4289, %v4282
    %v4710 = vpack.c.b16 %v4290, %v4283
    %v4711 = vpack.c.b16 %v4291, %v4284
    %v4712 = vpack.c.b16 %v4299, %v4292
    %v4713 = vpack.c.b16 %v4300, %v4293
    %v4714 = vpack.c.b16 %v4301, %v4294
    %v4715 = vpack.c.b16 %v4302, %v4295
    %v4716 = vpack.c.b16 %v4303, %v4296
    %v4717 = vpack.c.b16 %v4304, %v4297
    %v4718 = vpack.c.b16 %v4305, %v4298
    %v4719 = vpack.c.b16 %v4313, %v4306
    %v4720 = vpack.c.b16 %v4314, %v4307
    %v4721 = vpack.c.b16 %v4315, %v4308
    %v4722 = vpack.c.b16 %v4316, %v4309
    %v4723 = vpack.c.b16 %v4317, %v4310
    %v4724 = vpack.c.b16 %v4318, %v4311
    %v4725 = vpack.c.b16 %v4319, %v4312
    %v4726 = vpack.c.b16 %v4327, %v4320
    %v4727 = vpack.c.b16 %v4328, %v4321
    %v4728 = vpack.c.b16 %v4329, %v4322
    %v4729 = vpack.c.b16 %v4330, %v4323
    %v4730 = vpack.c.b16 %v4331, %v4324
    %v4731 = vpack.c.b16 %v4332, %v4325
    %v4732 = vpack.c.b16 %v4333, %v4326
    %v4733 = vpack.c.b16 %v4341, %v4334
    %v4734 = vpack.c.b16 %v4342, %v4335
    %v4735 = vpack.c.b16 %v4343, %v4336
    %v4736 = vpack.c.b16 %v4344, %v4337
    %v4737 = vpack.c.b16 %v4345, %v4338
    %v4738 = vpack.c.b16 %v4346, %v4339
    %v4739 = vpack.c.b16 %v4347, %v4340
    %v4740 = vpack.c.b16 %v4355, %v4348
    %v4741 = vpack.c.b16 %v4356, %v4349
    %v4742 = vpack.c.b16 %v4357, %v4350
    %v4743 = vpack.c.b16 %v4358, %v4351
    %v4744 = vpack.c.b16 %v4359, %v4352
    %v4745 = vpack.c.b16 %v4360, %v4353
    %v4746 = vpack.c.b16 %v4361, %v4354
    %v4747 = vpack.c.b16 %v4369, %v4362
    %v4748 = vpack.c.b16 %v4370, %v4363
    %v4749 = vpack.c.b16 %v4371, %v4364
    %v4750 = vpack.c.b16 %v4372, %v4365
    %v4751 = vpack.c.b16 %v4373, %v4366
    %v4752 = vpack.c.b16 %v4374, %v4367
    %v4753 = vpack.c.b16 %v4375, %v4368
    %v4754 = vpack.c.b16 %v4383, %v4376
    %v4755 = vpack.c.b16 %v4384, %v4377
    %v4756 = vpack.c.b16 %v4385, %v4378
    %v4757 = vpack.c.b16 %v4386, %v4379
    %v4758 = vpack.c.b16 %v4387, %v4380
    %v4759 = vpack.c.b16 %v4388, %v4381
    %v4760 = vpack.c.b16 %v4389, %v4382
    %v4761 = vpack.c.b16 %v4397, %v4390
    %v4762 = vpack.c.b16 %v4398, %v4391
    %v4763 = vpack.c.b16 %v4399, %v4392
    %v4764 = vpack.c.b16 %v4400, %v4393
    %v4765 = vpack.c.b16 %v4401, %v4394
    %v4766 = vpack.c.b16 %v4402, %v4395
    %v4767 = vpack.c.b16 %v4403, %v4396
    %v4768 = vpack.c.b16 %v4411, %v4404
    %v4769 = vpack.c.b16 %v4412, %v4405
    %v4770 = vpack.c.b16 %v4413, %v4406
    %v4771 = vpack.c.b16 %v4414, %v4407
    %v4772 = vpack.c.b16 %v4415, %v4408
    %v4773 = vpack.c.b16 %v4416, %v4409
    %v4774 = vpack.c.b16 %v4417, %v4410
    %v4775 = vpack.c.b16 %v4425, %v4418
    %v4776 = vpack.c.b16 %v4426, %v4419
    %v4777 = vpack.c.b16 %v4427, %v4420
    %v4778 = vpack.c.b16 %v4428, %v4421
    %v4779 = vpack.c.b16 %v4429, %v4422
    %v4780 = vpack.c.b16 %v4430, %v4423
    %v4781 = vpack.c.b16 %v4431, %v4424
    %v4782 = vpack.c.b16 %v4439, %v4432
    %v4783 = vpack.c.b16 %v4440, %v4433
    %v4784 = vpack.c.b16 %v4441, %v4434
    %v4785 = vpack.c.b16 %v4442, %v4435
    %v4786 = vpack.c.b16 %v4443, %v4436
    %v4787 = vpack.c.b16 %v4444, %v4437
    %v4788 = vpack.c.b16 %v4445, %v4438
    %vm5132 = vcmask 130048
    %v5134 = vsel %vm5132, %v2959, 0
    %5136 = vmatpush.bf16.msra.mxu0 %v4495
    %5137 = vmatpush.bf16.msra.mxu0 %v4488
    %5138 = vmatpush.bf16.msra.mxu0 %v4481
    %5139 = vmatpush.bf16.msra.mxu0 %v4474
    %5140 = vmatpush.bf16.msra.mxu0 %v4467
    %5141 = vmatpush.bf16.msra.mxu0 %v4460
    %5142 = vmatpush.bf16.msra.mxu0 %v4453
    %5143 = vmatpush.bf16.msra.mxu0 %v4446
    %5144 = vmatmul.bf16.gmra.mxu0 %v2953
    %v5145 = vpop.f32.mrf.mxu0
    %v5146 = vadd.f32 %v3354, %v5145
    %v5147 = vpop.f32.mrf.mxu0
    %5148 = vdwg.mxu0
    %5149 = vmatpush.bf16.msra.mxu0 %v4551
    %5150 = vmatpush.bf16.msra.mxu0 %v4544
    %5151 = vmatpush.bf16.msra.mxu0 %v4537
    %5152 = vmatpush.bf16.msra.mxu0 %v4530
    %5153 = vmatpush.bf16.msra.mxu0 %v4523
    %5154 = vmatpush.bf16.msra.mxu0 %v4516
    %5155 = vmatpush.bf16.msra.mxu0 %v4509
    %5156 = vmatpush.bf16.msra.mxu0 %v4502
    %5157 = vmatmul.bf16.gmra.mxu0 %v2954
    %v5158 = vpop.f32.mrf.mxu0
    %v5159 = vadd.f32 %v5146, %v5158
    %v5160 = vpop.f32.mrf.mxu0
    %5161 = vdwg.mxu0
    %5162 = vmatpush.bf16.msra.mxu0 %v4607
    %5163 = vmatpush.bf16.msra.mxu0 %v4600
    %5164 = vmatpush.bf16.msra.mxu0 %v4593
    %5165 = vmatpush.bf16.msra.mxu0 %v4586
    %5166 = vmatpush.bf16.msra.mxu0 %v4579
    %5167 = vmatpush.bf16.msra.mxu0 %v4572
    %5168 = vmatpush.bf16.msra.mxu0 %v4565
    %5169 = vmatpush.bf16.msra.mxu0 %v4558
    %5170 = vmatmul.bf16.gmra.mxu0 %v2955
    %v5171 = vpop.f32.mrf.mxu0
    %v5172 = vadd.f32 %v5159, %v5171
    %v5173 = vpop.f32.mrf.mxu0
    %5174 = vdwg.mxu0
    %5175 = vmatpush.bf16.msra.mxu0 %v4663
    %5176 = vmatpush.bf16.msra.mxu0 %v4656
    %5177 = vmatpush.bf16.msra.mxu0 %v4649
    %5178 = vmatpush.bf16.msra.mxu0 %v4642
    %5179 = vmatpush.bf16.msra.mxu0 %v4635
    %5180 = vmatpush.bf16.msra.mxu0 %v4628
    %5181 = vmatpush.bf16.msra.mxu0 %v4621
    %5182 = vmatpush.bf16.msra.mxu0 %v4614
    %5183 = vmatmul.bf16.gmra.mxu0 %v2956
    %v5184 = vpop.f32.mrf.mxu0
    %v5185 = vadd.f32 %v5172, %v5184
    %v5186 = vpop.f32.mrf.mxu0
    %5187 = vdwg.mxu0
    %5188 = vmatpush.bf16.msra.mxu0 %v4719
    %5189 = vmatpush.bf16.msra.mxu0 %v4712
    %5190 = vmatpush.bf16.msra.mxu0 %v4705
    %5191 = vmatpush.bf16.msra.mxu0 %v4698
    %5192 = vmatpush.bf16.msra.mxu0 %v4691
    %5193 = vmatpush.bf16.msra.mxu0 %v4684
    %5194 = vmatpush.bf16.msra.mxu0 %v4677
    %5195 = vmatpush.bf16.msra.mxu0 %v4670
    %5196 = vmatmul.bf16.gmra.mxu0 %v2957
    %v5197 = vpop.f32.mrf.mxu0
    %v5198 = vadd.f32 %v5185, %v5197
    %v5199 = vpop.f32.mrf.mxu0
    %5200 = vdwg.mxu0
    %5201 = vmatpush.bf16.msra.mxu0 %v4775
    %5202 = vmatpush.bf16.msra.mxu0 %v4768
    %5203 = vmatpush.bf16.msra.mxu0 %v4761
    %5204 = vmatpush.bf16.msra.mxu0 %v4754
    %5205 = vmatpush.bf16.msra.mxu0 %v4747
    %5206 = vmatpush.bf16.msra.mxu0 %v4740
    %5207 = vmatpush.bf16.msra.mxu0 %v4733
    %5208 = vmatpush.bf16.msra.mxu0 %v4726
    %5209 = vmatmul.bf16.gmra.mxu0 %v2958
    %v5210 = vpop.f32.mrf.mxu0
    %v5211 = vadd.f32 %v5198, %v5210
    %v5212 = vpop.f32.mrf.mxu0
    %5213 = vdwg.mxu0
    %5214 = vmatpush.bf16.msra.mxu0 0
    %5215 = vmatpush.bf16.msra.mxu0 0
    %5216 = vmatpush.bf16.msra.mxu0 0
    %5217 = vmatpush.bf16.msra.mxu0 0
    %5218 = vmatpush.bf16.msra.mxu0 0
    %5219 = vmatpush.bf16.msra.mxu0 0
    %5220 = vmatpush.bf16.msra.mxu0 0
    %5221 = vmatpush.bf16.msra.mxu0 %v4782
    %5222 = vmatmul.bf16.gmra.mxu0 %v5134
    %v5223 = vpop.f32.mrf.mxu0
    %v5224 = vadd.f32 %v5211, %v5223
    %v5225 = vpop.f32.mrf.mxu0
    %5226 = vdwg.mxu0
    %5227 = vmatpush.bf16.msra.mxu0 %v4496
    %5228 = vmatpush.bf16.msra.mxu0 %v4489
    %5229 = vmatpush.bf16.msra.mxu0 %v4482
    %5230 = vmatpush.bf16.msra.mxu0 %v4475
    %5231 = vmatpush.bf16.msra.mxu0 %v4468
    %5232 = vmatpush.bf16.msra.mxu0 %v4461
    %5233 = vmatpush.bf16.msra.mxu0 %v4454
    %5234 = vmatpush.bf16.msra.mxu0 %v4447
    %5235 = vmatmul.bf16.gmra.mxu0 %v2953
    %v5236 = vpop.f32.mrf.mxu0
    %v5237 = vadd.f32 %v3355, %v5236
    %v5238 = vpop.f32.mrf.mxu0
    %5239 = vdwg.mxu0
    %5240 = vmatpush.bf16.msra.mxu0 %v4552
    %5241 = vmatpush.bf16.msra.mxu0 %v4545
    %5242 = vmatpush.bf16.msra.mxu0 %v4538
    %5243 = vmatpush.bf16.msra.mxu0 %v4531
    %5244 = vmatpush.bf16.msra.mxu0 %v4524
    %5245 = vmatpush.bf16.msra.mxu0 %v4517
    %5246 = vmatpush.bf16.msra.mxu0 %v4510
    %5247 = vmatpush.bf16.msra.mxu0 %v4503
    %5248 = vmatmul.bf16.gmra.mxu0 %v2954
    %v5249 = vpop.f32.mrf.mxu0
    %v5250 = vadd.f32 %v5237, %v5249
    %v5251 = vpop.f32.mrf.mxu0
    %5252 = vdwg.mxu0
    %5253 = vmatpush.bf16.msra.mxu0 %v4608
    %5254 = vmatpush.bf16.msra.mxu0 %v4601
    %5255 = vmatpush.bf16.msra.mxu0 %v4594
    %5256 = vmatpush.bf16.msra.mxu0 %v4587
    %5257 = vmatpush.bf16.msra.mxu0 %v4580
    %5258 = vmatpush.bf16.msra.mxu0 %v4573
    %5259 = vmatpush.bf16.msra.mxu0 %v4566
    %5260 = vmatpush.bf16.msra.mxu0 %v4559
    %5261 = vmatmul.bf16.gmra.mxu0 %v2955
    %v5262 = vpop.f32.mrf.mxu0
    %v5263 = vadd.f32 %v5250, %v5262
    %v5264 = vpop.f32.mrf.mxu0
    %5265 = vdwg.mxu0
    %5266 = vmatpush.bf16.msra.mxu0 %v4664
    %5267 = vmatpush.bf16.msra.mxu0 %v4657
    %5268 = vmatpush.bf16.msra.mxu0 %v4650
    %5269 = vmatpush.bf16.msra.mxu0 %v4643
    %5270 = vmatpush.bf16.msra.mxu0 %v4636
    %5271 = vmatpush.bf16.msra.mxu0 %v4629
    %5272 = vmatpush.bf16.msra.mxu0 %v4622
    %5273 = vmatpush.bf16.msra.mxu0 %v4615
    %5274 = vmatmul.bf16.gmra.mxu0 %v2956
    %v5275 = vpop.f32.mrf.mxu0
    %v5276 = vadd.f32 %v5263, %v5275
    %v5277 = vpop.f32.mrf.mxu0
    %5278 = vdwg.mxu0
    %5279 = vmatpush.bf16.msra.mxu0 %v4720
    %5280 = vmatpush.bf16.msra.mxu0 %v4713
    %5281 = vmatpush.bf16.msra.mxu0 %v4706
    %5282 = vmatpush.bf16.msra.mxu0 %v4699
    %5283 = vmatpush.bf16.msra.mxu0 %v4692
    %5284 = vmatpush.bf16.msra.mxu0 %v4685
    %5285 = vmatpush.bf16.msra.mxu0 %v4678
    %5286 = vmatpush.bf16.msra.mxu0 %v4671
    %5287 = vmatmul.bf16.gmra.mxu0 %v2957
    %v5288 = vpop.f32.mrf.mxu0
    %v5289 = vadd.f32 %v5276, %v5288
    %v5290 = vpop.f32.mrf.mxu0
    %5291 = vdwg.mxu0
    %5292 = vmatpush.bf16.msra.mxu0 %v4776
    %5293 = vmatpush.bf16.msra.mxu0 %v4769
    %5294 = vmatpush.bf16.msra.mxu0 %v4762
    %5295 = vmatpush.bf16.msra.mxu0 %v4755
    %5296 = vmatpush.bf16.msra.mxu0 %v4748
    %5297 = vmatpush.bf16.msra.mxu0 %v4741
    %5298 = vmatpush.bf16.msra.mxu0 %v4734
    %5299 = vmatpush.bf16.msra.mxu0 %v4727
    %5300 = vmatmul.bf16.gmra.mxu0 %v2958
    %v5301 = vpop.f32.mrf.mxu0
    %v5302 = vadd.f32 %v5289, %v5301
    %v5303 = vpop.f32.mrf.mxu0
    %5304 = vdwg.mxu0
    %5305 = vmatpush.bf16.msra.mxu0 0
    %5306 = vmatpush.bf16.msra.mxu0 0
    %5307 = vmatpush.bf16.msra.mxu0 0
    %5308 = vmatpush.bf16.msra.mxu0 0
    %5309 = vmatpush.bf16.msra.mxu0 0
    %5310 = vmatpush.bf16.msra.mxu0 0
    %5311 = vmatpush.bf16.msra.mxu0 0
    %5312 = vmatpush.bf16.msra.mxu0 %v4783
    %5313 = vmatmul.bf16.gmra.mxu0 %v5134
    %v5314 = vpop.f32.mrf.mxu0
    %v5315 = vadd.f32 %v5302, %v5314
    %v5316 = vpop.f32.mrf.mxu0
    %5317 = vdwg.mxu0
    %5318 = vmatpush.bf16.msra.mxu0 %v4497
    %5319 = vmatpush.bf16.msra.mxu0 %v4490
    %5320 = vmatpush.bf16.msra.mxu0 %v4483
    %5321 = vmatpush.bf16.msra.mxu0 %v4476
    %5322 = vmatpush.bf16.msra.mxu0 %v4469
    %5323 = vmatpush.bf16.msra.mxu0 %v4462
    %5324 = vmatpush.bf16.msra.mxu0 %v4455
    %5325 = vmatpush.bf16.msra.mxu0 %v4448
    %5326 = vmatmul.bf16.gmra.mxu0 %v2953
    %v5327 = vpop.f32.mrf.mxu0
    %v5328 = vadd.f32 %v3356, %v5327
    %v5329 = vpop.f32.mrf.mxu0
    %5330 = vdwg.mxu0
    %5331 = vmatpush.bf16.msra.mxu0 %v4553
    %5332 = vmatpush.bf16.msra.mxu0 %v4546
    %5333 = vmatpush.bf16.msra.mxu0 %v4539
    %5334 = vmatpush.bf16.msra.mxu0 %v4532
    %5335 = vmatpush.bf16.msra.mxu0 %v4525
    %5336 = vmatpush.bf16.msra.mxu0 %v4518
    %5337 = vmatpush.bf16.msra.mxu0 %v4511
    %5338 = vmatpush.bf16.msra.mxu0 %v4504
    %5339 = vmatmul.bf16.gmra.mxu0 %v2954
    %v5340 = vpop.f32.mrf.mxu0
    %v5341 = vadd.f32 %v5328, %v5340
    %v5342 = vpop.f32.mrf.mxu0
    %5343 = vdwg.mxu0
    %5344 = vmatpush.bf16.msra.mxu0 %v4609
    %5345 = vmatpush.bf16.msra.mxu0 %v4602
    %5346 = vmatpush.bf16.msra.mxu0 %v4595
    %5347 = vmatpush.bf16.msra.mxu0 %v4588
    %5348 = vmatpush.bf16.msra.mxu0 %v4581
    %5349 = vmatpush.bf16.msra.mxu0 %v4574
    %5350 = vmatpush.bf16.msra.mxu0 %v4567
    %5351 = vmatpush.bf16.msra.mxu0 %v4560
    %5352 = vmatmul.bf16.gmra.mxu0 %v2955
    %v5353 = vpop.f32.mrf.mxu0
    %v5354 = vadd.f32 %v5341, %v5353
    %v5355 = vpop.f32.mrf.mxu0
    %5356 = vdwg.mxu0
    %5357 = vmatpush.bf16.msra.mxu0 %v4665
    %5358 = vmatpush.bf16.msra.mxu0 %v4658
    %5359 = vmatpush.bf16.msra.mxu0 %v4651
    %5360 = vmatpush.bf16.msra.mxu0 %v4644
    %5361 = vmatpush.bf16.msra.mxu0 %v4637
    %5362 = vmatpush.bf16.msra.mxu0 %v4630
    %5363 = vmatpush.bf16.msra.mxu0 %v4623
    %5364 = vmatpush.bf16.msra.mxu0 %v4616
    %5365 = vmatmul.bf16.gmra.mxu0 %v2956
    %v5366 = vpop.f32.mrf.mxu0
    %v5367 = vadd.f32 %v5354, %v5366
    %v5368 = vpop.f32.mrf.mxu0
    %5369 = vdwg.mxu0
    %5370 = vmatpush.bf16.msra.mxu0 %v4721
    %5371 = vmatpush.bf16.msra.mxu0 %v4714
    %5372 = vmatpush.bf16.msra.mxu0 %v4707
    %5373 = vmatpush.bf16.msra.mxu0 %v4700
    %5374 = vmatpush.bf16.msra.mxu0 %v4693
    %5375 = vmatpush.bf16.msra.mxu0 %v4686
    %5376 = vmatpush.bf16.msra.mxu0 %v4679
    %5377 = vmatpush.bf16.msra.mxu0 %v4672
    %5378 = vmatmul.bf16.gmra.mxu0 %v2957
    %v5379 = vpop.f32.mrf.mxu0
    %v5380 = vadd.f32 %v5367, %v5379
    %v5381 = vpop.f32.mrf.mxu0
    %5382 = vdwg.mxu0
    %5383 = vmatpush.bf16.msra.mxu0 %v4777
    %5384 = vmatpush.bf16.msra.mxu0 %v4770
    %5385 = vmatpush.bf16.msra.mxu0 %v4763
    %5386 = vmatpush.bf16.msra.mxu0 %v4756
    %5387 = vmatpush.bf16.msra.mxu0 %v4749
    %5388 = vmatpush.bf16.msra.mxu0 %v4742
    %5389 = vmatpush.bf16.msra.mxu0 %v4735
    %5390 = vmatpush.bf16.msra.mxu0 %v4728
    %5391 = vmatmul.bf16.gmra.mxu0 %v2958
    %v5392 = vpop.f32.mrf.mxu0
    %v5393 = vadd.f32 %v5380, %v5392
    %v5394 = vpop.f32.mrf.mxu0
    %5395 = vdwg.mxu0
    %5396 = vmatpush.bf16.msra.mxu0 0
    %5397 = vmatpush.bf16.msra.mxu0 0
    %5398 = vmatpush.bf16.msra.mxu0 0
    %5399 = vmatpush.bf16.msra.mxu0 0
    %5400 = vmatpush.bf16.msra.mxu0 0
    %5401 = vmatpush.bf16.msra.mxu0 0
    %5402 = vmatpush.bf16.msra.mxu0 0
    %5403 = vmatpush.bf16.msra.mxu0 %v4784
    %5404 = vmatmul.bf16.gmra.mxu0 %v5134
    %v5405 = vpop.f32.mrf.mxu0
    %v5406 = vadd.f32 %v5393, %v5405
    %v5407 = vpop.f32.mrf.mxu0
    %5408 = vdwg.mxu0
    %5409 = vmatpush.bf16.msra.mxu0 %v4498
    %5410 = vmatpush.bf16.msra.mxu0 %v4491
    %5411 = vmatpush.bf16.msra.mxu0 %v4484
    %5412 = vmatpush.bf16.msra.mxu0 %v4477
    %5413 = vmatpush.bf16.msra.mxu0 %v4470
    %5414 = vmatpush.bf16.msra.mxu0 %v4463
    %5415 = vmatpush.bf16.msra.mxu0 %v4456
    %5416 = vmatpush.bf16.msra.mxu0 %v4449
    %5417 = vmatmul.bf16.gmra.mxu0 %v2953
    %v5418 = vpop.f32.mrf.mxu0
    %v5419 = vadd.f32 %v3357, %v5418
    %v5420 = vpop.f32.mrf.mxu0
    %5421 = vdwg.mxu0
    %5422 = vmatpush.bf16.msra.mxu0 %v4554
    %5423 = vmatpush.bf16.msra.mxu0 %v4547
    %5424 = vmatpush.bf16.msra.mxu0 %v4540
    %5425 = vmatpush.bf16.msra.mxu0 %v4533
    %5426 = vmatpush.bf16.msra.mxu0 %v4526
    %5427 = vmatpush.bf16.msra.mxu0 %v4519
    %5428 = vmatpush.bf16.msra.mxu0 %v4512
    %5429 = vmatpush.bf16.msra.mxu0 %v4505
    %5430 = vmatmul.bf16.gmra.mxu0 %v2954
    %v5431 = vpop.f32.mrf.mxu0
    %v5432 = vadd.f32 %v5419, %v5431
    %v5433 = vpop.f32.mrf.mxu0
    %5434 = vdwg.mxu0
    %5435 = vmatpush.bf16.msra.mxu0 %v4610
    %5436 = vmatpush.bf16.msra.mxu0 %v4603
    %5437 = vmatpush.bf16.msra.mxu0 %v4596
    %5438 = vmatpush.bf16.msra.mxu0 %v4589
    %5439 = vmatpush.bf16.msra.mxu0 %v4582
    %5440 = vmatpush.bf16.msra.mxu0 %v4575
    %5441 = vmatpush.bf16.msra.mxu0 %v4568
    %5442 = vmatpush.bf16.msra.mxu0 %v4561
    %5443 = vmatmul.bf16.gmra.mxu0 %v2955
    %v5444 = vpop.f32.mrf.mxu0
    %v5445 = vadd.f32 %v5432, %v5444
    %v5446 = vpop.f32.mrf.mxu0
    %5447 = vdwg.mxu0
    %5448 = vmatpush.bf16.msra.mxu0 %v4666
    %5449 = vmatpush.bf16.msra.mxu0 %v4659
    %5450 = vmatpush.bf16.msra.mxu0 %v4652
    %5451 = vmatpush.bf16.msra.mxu0 %v4645
    %5452 = vmatpush.bf16.msra.mxu0 %v4638
    %5453 = vmatpush.bf16.msra.mxu0 %v4631
    %5454 = vmatpush.bf16.msra.mxu0 %v4624
    %5455 = vmatpush.bf16.msra.mxu0 %v4617
    %5456 = vmatmul.bf16.gmra.mxu0 %v2956
    %v5457 = vpop.f32.mrf.mxu0
    %v5458 = vadd.f32 %v5445, %v5457
    %v5459 = vpop.f32.mrf.mxu0
    %5460 = vdwg.mxu0
    %5461 = vmatpush.bf16.msra.mxu0 %v4722
    %5462 = vmatpush.bf16.msra.mxu0 %v4715
    %5463 = vmatpush.bf16.msra.mxu0 %v4708
    %5464 = vmatpush.bf16.msra.mxu0 %v4701
    %5465 = vmatpush.bf16.msra.mxu0 %v4694
    %5466 = vmatpush.bf16.msra.mxu0 %v4687
    %5467 = vmatpush.bf16.msra.mxu0 %v4680
    %5468 = vmatpush.bf16.msra.mxu0 %v4673
    %5469 = vmatmul.bf16.gmra.mxu0 %v2957
    %v5470 = vpop.f32.mrf.mxu0
    %v5471 = vadd.f32 %v5458, %v5470
    %v5472 = vpop.f32.mrf.mxu0
    %5473 = vdwg.mxu0
    %5474 = vmatpush.bf16.msra.mxu0 %v4778
    %5475 = vmatpush.bf16.msra.mxu0 %v4771
    %5476 = vmatpush.bf16.msra.mxu0 %v4764
    %5477 = vmatpush.bf16.msra.mxu0 %v4757
    %5478 = vmatpush.bf16.msra.mxu0 %v4750
    %5479 = vmatpush.bf16.msra.mxu0 %v4743
    %5480 = vmatpush.bf16.msra.mxu0 %v4736
    %5481 = vmatpush.bf16.msra.mxu0 %v4729
    %5482 = vmatmul.bf16.gmra.mxu0 %v2958
    %v5483 = vpop.f32.mrf.mxu0
    %v5484 = vadd.f32 %v5471, %v5483
    %v5485 = vpop.f32.mrf.mxu0
    %5486 = vdwg.mxu0
    %5487 = vmatpush.bf16.msra.mxu0 0
    %5488 = vmatpush.bf16.msra.mxu0 0
    %5489 = vmatpush.bf16.msra.mxu0 0
    %5490 = vmatpush.bf16.msra.mxu0 0
    %5491 = vmatpush.bf16.msra.mxu0 0
    %5492 = vmatpush.bf16.msra.mxu0 0
    %5493 = vmatpush.bf16.msra.mxu0 0
    %5494 = vmatpush.bf16.msra.mxu0 %v4785
    %5495 = vmatmul.bf16.gmra.mxu0 %v5134
    %v5496 = vpop.f32.mrf.mxu0
    %v5497 = vadd.f32 %v5484, %v5496
    %v5498 = vpop.f32.mrf.mxu0
    %5499 = vdwg.mxu0
    %5500 = vmatpush.bf16.msra.mxu0 %v4499
    %5501 = vmatpush.bf16.msra.mxu0 %v4492
    %5502 = vmatpush.bf16.msra.mxu0 %v4485
    %5503 = vmatpush.bf16.msra.mxu0 %v4478
    %5504 = vmatpush.bf16.msra.mxu0 %v4471
    %5505 = vmatpush.bf16.msra.mxu0 %v4464
    %5506 = vmatpush.bf16.msra.mxu0 %v4457
    %5507 = vmatpush.bf16.msra.mxu0 %v4450
    %5508 = vmatmul.bf16.gmra.mxu0 %v2953
    %v5509 = vpop.f32.mrf.mxu0
    %v5510 = vadd.f32 %v3358, %v5509
    %v5511 = vpop.f32.mrf.mxu0
    %5512 = vdwg.mxu0
    %5513 = vmatpush.bf16.msra.mxu0 %v4555
    %5514 = vmatpush.bf16.msra.mxu0 %v4548
    %5515 = vmatpush.bf16.msra.mxu0 %v4541
    %5516 = vmatpush.bf16.msra.mxu0 %v4534
    %5517 = vmatpush.bf16.msra.mxu0 %v4527
    %5518 = vmatpush.bf16.msra.mxu0 %v4520
    %5519 = vmatpush.bf16.msra.mxu0 %v4513
    %5520 = vmatpush.bf16.msra.mxu0 %v4506
    %5521 = vmatmul.bf16.gmra.mxu0 %v2954
    %v5522 = vpop.f32.mrf.mxu0
    %v5523 = vadd.f32 %v5510, %v5522
    %v5524 = vpop.f32.mrf.mxu0
    %5525 = vdwg.mxu0
    %5526 = vmatpush.bf16.msra.mxu0 %v4611
    %5527 = vmatpush.bf16.msra.mxu0 %v4604
    %5528 = vmatpush.bf16.msra.mxu0 %v4597
    %5529 = vmatpush.bf16.msra.mxu0 %v4590
    %5530 = vmatpush.bf16.msra.mxu0 %v4583
    %5531 = vmatpush.bf16.msra.mxu0 %v4576
    %5532 = vmatpush.bf16.msra.mxu0 %v4569
    %5533 = vmatpush.bf16.msra.mxu0 %v4562
    %5534 = vmatmul.bf16.gmra.mxu0 %v2955
    %v5535 = vpop.f32.mrf.mxu0
    %v5536 = vadd.f32 %v5523, %v5535
    %v5537 = vpop.f32.mrf.mxu0
    %5538 = vdwg.mxu0
    %5539 = vmatpush.bf16.msra.mxu0 %v4667
    %5540 = vmatpush.bf16.msra.mxu0 %v4660
    %5541 = vmatpush.bf16.msra.mxu0 %v4653
    %5542 = vmatpush.bf16.msra.mxu0 %v4646
    %5543 = vmatpush.bf16.msra.mxu0 %v4639
    %5544 = vmatpush.bf16.msra.mxu0 %v4632
    %5545 = vmatpush.bf16.msra.mxu0 %v4625
    %5546 = vmatpush.bf16.msra.mxu0 %v4618
    %5547 = vmatmul.bf16.gmra.mxu0 %v2956
    %v5548 = vpop.f32.mrf.mxu0
    %v5549 = vadd.f32 %v5536, %v5548
    %v5550 = vpop.f32.mrf.mxu0
    %5551 = vdwg.mxu0
    %5552 = vmatpush.bf16.msra.mxu0 %v4723
    %5553 = vmatpush.bf16.msra.mxu0 %v4716
    %5554 = vmatpush.bf16.msra.mxu0 %v4709
    %5555 = vmatpush.bf16.msra.mxu0 %v4702
    %5556 = vmatpush.bf16.msra.mxu0 %v4695
    %5557 = vmatpush.bf16.msra.mxu0 %v4688
    %5558 = vmatpush.bf16.msra.mxu0 %v4681
    %5559 = vmatpush.bf16.msra.mxu0 %v4674
    %5560 = vmatmul.bf16.gmra.mxu0 %v2957
    %v5561 = vpop.f32.mrf.mxu0
    %v5562 = vadd.f32 %v5549, %v5561
    %v5563 = vpop.f32.mrf.mxu0
    %5564 = vdwg.mxu0
    %5565 = vmatpush.bf16.msra.mxu0 %v4779
    %5566 = vmatpush.bf16.msra.mxu0 %v4772
    %5567 = vmatpush.bf16.msra.mxu0 %v4765
    %5568 = vmatpush.bf16.msra.mxu0 %v4758
    %5569 = vmatpush.bf16.msra.mxu0 %v4751
    %5570 = vmatpush.bf16.msra.mxu0 %v4744
    %5571 = vmatpush.bf16.msra.mxu0 %v4737
    %5572 = vmatpush.bf16.msra.mxu0 %v4730
    %5573 = vmatmul.bf16.gmra.mxu0 %v2958
    %v5574 = vpop.f32.mrf.mxu0
    %v5575 = vadd.f32 %v5562, %v5574
    %v5576 = vpop.f32.mrf.mxu0
    %5577 = vdwg.mxu0
    %5578 = vmatpush.bf16.msra.mxu0 0
    %5579 = vmatpush.bf16.msra.mxu0 0
    %5580 = vmatpush.bf16.msra.mxu0 0
    %5581 = vmatpush.bf16.msra.mxu0 0
    %5582 = vmatpush.bf16.msra.mxu0 0
    %5583 = vmatpush.bf16.msra.mxu0 0
    %5584 = vmatpush.bf16.msra.mxu0 0
    %5585 = vmatpush.bf16.msra.mxu0 %v4786
    %5586 = vmatmul.bf16.gmra.mxu0 %v5134
    %v5587 = vpop.f32.mrf.mxu0
    %v5588 = vadd.f32 %v5575, %v5587
    %v5589 = vpop.f32.mrf.mxu0
    %5590 = vdwg.mxu0
    %5591 = vmatpush.bf16.msra.mxu0 %v4500
    %5592 = vmatpush.bf16.msra.mxu0 %v4493
    %5593 = vmatpush.bf16.msra.mxu0 %v4486
    %5594 = vmatpush.bf16.msra.mxu0 %v4479
    %5595 = vmatpush.bf16.msra.mxu0 %v4472
    %5596 = vmatpush.bf16.msra.mxu0 %v4465
    %5597 = vmatpush.bf16.msra.mxu0 %v4458
    %5598 = vmatpush.bf16.msra.mxu0 %v4451
    %5599 = vmatmul.bf16.gmra.mxu0 %v2953
    %v5600 = vpop.f32.mrf.mxu0
    %v5601 = vadd.f32 %v3359, %v5600
    %v5602 = vpop.f32.mrf.mxu0
    %5603 = vdwg.mxu0
    %5604 = vmatpush.bf16.msra.mxu0 %v4556
    %5605 = vmatpush.bf16.msra.mxu0 %v4549
    %5606 = vmatpush.bf16.msra.mxu0 %v4542
    %5607 = vmatpush.bf16.msra.mxu0 %v4535
    %5608 = vmatpush.bf16.msra.mxu0 %v4528
    %5609 = vmatpush.bf16.msra.mxu0 %v4521
    %5610 = vmatpush.bf16.msra.mxu0 %v4514
    %5611 = vmatpush.bf16.msra.mxu0 %v4507
    %5612 = vmatmul.bf16.gmra.mxu0 %v2954
    %v5613 = vpop.f32.mrf.mxu0
    %v5614 = vadd.f32 %v5601, %v5613
    %v5615 = vpop.f32.mrf.mxu0
    %5616 = vdwg.mxu0
    %5617 = vmatpush.bf16.msra.mxu0 %v4612
    %5618 = vmatpush.bf16.msra.mxu0 %v4605
    %5619 = vmatpush.bf16.msra.mxu0 %v4598
    %5620 = vmatpush.bf16.msra.mxu0 %v4591
    %5621 = vmatpush.bf16.msra.mxu0 %v4584
    %5622 = vmatpush.bf16.msra.mxu0 %v4577
    %5623 = vmatpush.bf16.msra.mxu0 %v4570
    %5624 = vmatpush.bf16.msra.mxu0 %v4563
    %5625 = vmatmul.bf16.gmra.mxu0 %v2955
    %v5626 = vpop.f32.mrf.mxu0
    %v5627 = vadd.f32 %v5614, %v5626
    %v5628 = vpop.f32.mrf.mxu0
    %5629 = vdwg.mxu0
    %5630 = vmatpush.bf16.msra.mxu0 %v4668
    %5631 = vmatpush.bf16.msra.mxu0 %v4661
    %5632 = vmatpush.bf16.msra.mxu0 %v4654
    %5633 = vmatpush.bf16.msra.mxu0 %v4647
    %5634 = vmatpush.bf16.msra.mxu0 %v4640
    %5635 = vmatpush.bf16.msra.mxu0 %v4633
    %5636 = vmatpush.bf16.msra.mxu0 %v4626
    %5637 = vmatpush.bf16.msra.mxu0 %v4619
    %5638 = vmatmul.bf16.gmra.mxu0 %v2956
    %v5639 = vpop.f32.mrf.mxu0
    %v5640 = vadd.f32 %v5627, %v5639
    %v5641 = vpop.f32.mrf.mxu0
    %5642 = vdwg.mxu0
    %5643 = vmatpush.bf16.msra.mxu0 %v4724
    %5644 = vmatpush.bf16.msra.mxu0 %v4717
    %5645 = vmatpush.bf16.msra.mxu0 %v4710
    %5646 = vmatpush.bf16.msra.mxu0 %v4703
    %5647 = vmatpush.bf16.msra.mxu0 %v4696
    %5648 = vmatpush.bf16.msra.mxu0 %v4689
    %5649 = vmatpush.bf16.msra.mxu0 %v4682
    %5650 = vmatpush.bf16.msra.mxu0 %v4675
    %5651 = vmatmul.bf16.gmra.mxu0 %v2957
    %v5652 = vpop.f32.mrf.mxu0
    %v5653 = vadd.f32 %v5640, %v5652
    %v5654 = vpop.f32.mrf.mxu0
    %5655 = vdwg.mxu0
    %5656 = vmatpush.bf16.msra.mxu0 %v4780
    %5657 = vmatpush.bf16.msra.mxu0 %v4773
    %5658 = vmatpush.bf16.msra.mxu0 %v4766
    %5659 = vmatpush.bf16.msra.mxu0 %v4759
    %5660 = vmatpush.bf16.msra.mxu0 %v4752
    %5661 = vmatpush.bf16.msra.mxu0 %v4745
    %5662 = vmatpush.bf16.msra.mxu0 %v4738
    %5663 = vmatpush.bf16.msra.mxu0 %v4731
    %5664 = vmatmul.bf16.gmra.mxu0 %v2958
    %v5665 = vpop.f32.mrf.mxu0
    %v5666 = vadd.f32 %v5653, %v5665
    %v5667 = vpop.f32.mrf.mxu0
    %5668 = vdwg.mxu0
    %5669 = vmatpush.bf16.msra.mxu0 0
    %5670 = vmatpush.bf16.msra.mxu0 0
    %5671 = vmatpush.bf16.msra.mxu0 0
    %5672 = vmatpush.bf16.msra.mxu0 0
    %5673 = vmatpush.bf16.msra.mxu0 0
    %5674 = vmatpush.bf16.msra.mxu0 0
    %5675 = vmatpush.bf16.msra.mxu0 0
    %5676 = vmatpush.bf16.msra.mxu0 %v4787
    %5677 = vmatmul.bf16.gmra.mxu0 %v5134
    %v5678 = vpop.f32.mrf.mxu0
    %v5679 = vadd.f32 %v5666, %v5678
    %v5680 = vpop.f32.mrf.mxu0
    %5681 = vdwg.mxu0
    %5682 = vmatpush.bf16.msra.mxu0 %v4501
    %5683 = vmatpush.bf16.msra.mxu0 %v4494
    %5684 = vmatpush.bf16.msra.mxu0 %v4487
    %5685 = vmatpush.bf16.msra.mxu0 %v4480
    %5686 = vmatpush.bf16.msra.mxu0 %v4473
    %5687 = vmatpush.bf16.msra.mxu0 %v4466
    %5688 = vmatpush.bf16.msra.mxu0 %v4459
    %5689 = vmatpush.bf16.msra.mxu0 %v4452
    %5690 = vmatmul.bf16.gmra.mxu0 %v2953
    %v5691 = vpop.f32.mrf.mxu0
    %v5692 = vadd.f32 %v3360, %v5691
    %v5693 = vpop.f32.mrf.mxu0
    %5694 = vdwg.mxu0
    %5695 = vmatpush.bf16.msra.mxu0 %v4557
    %5696 = vmatpush.bf16.msra.mxu0 %v4550
    %5697 = vmatpush.bf16.msra.mxu0 %v4543
    %5698 = vmatpush.bf16.msra.mxu0 %v4536
    %5699 = vmatpush.bf16.msra.mxu0 %v4529
    %5700 = vmatpush.bf16.msra.mxu0 %v4522
    %5701 = vmatpush.bf16.msra.mxu0 %v4515
    %5702 = vmatpush.bf16.msra.mxu0 %v4508
    %5703 = vmatmul.bf16.gmra.mxu0 %v2954
    %v5704 = vpop.f32.mrf.mxu0
    %v5705 = vadd.f32 %v5692, %v5704
    %v5706 = vpop.f32.mrf.mxu0
    %5707 = vdwg.mxu0
    %5708 = vmatpush.bf16.msra.mxu0 %v4613
    %5709 = vmatpush.bf16.msra.mxu0 %v4606
    %5710 = vmatpush.bf16.msra.mxu0 %v4599
    %5711 = vmatpush.bf16.msra.mxu0 %v4592
    %5712 = vmatpush.bf16.msra.mxu0 %v4585
    %5713 = vmatpush.bf16.msra.mxu0 %v4578
    %5714 = vmatpush.bf16.msra.mxu0 %v4571
    %5715 = vmatpush.bf16.msra.mxu0 %v4564
    %5716 = vmatmul.bf16.gmra.mxu0 %v2955
    %v5717 = vpop.f32.mrf.mxu0
    %v5718 = vadd.f32 %v5705, %v5717
    %v5719 = vpop.f32.mrf.mxu0
    %5720 = vdwg.mxu0
    %5721 = vmatpush.bf16.msra.mxu0 %v4669
    %5722 = vmatpush.bf16.msra.mxu0 %v4662
    %5723 = vmatpush.bf16.msra.mxu0 %v4655
    %5724 = vmatpush.bf16.msra.mxu0 %v4648
    %5725 = vmatpush.bf16.msra.mxu0 %v4641
    %5726 = vmatpush.bf16.msra.mxu0 %v4634
    %5727 = vmatpush.bf16.msra.mxu0 %v4627
    %5728 = vmatpush.bf16.msra.mxu0 %v4620
    %5729 = vmatmul.bf16.gmra.mxu0 %v2956
    %v5730 = vpop.f32.mrf.mxu0
    %v5731 = vadd.f32 %v5718, %v5730
    %v5732 = vpop.f32.mrf.mxu0
    %5733 = vdwg.mxu0
    %5734 = vmatpush.bf16.msra.mxu0 %v4725
    %5735 = vmatpush.bf16.msra.mxu0 %v4718
    %5736 = vmatpush.bf16.msra.mxu0 %v4711
    %5737 = vmatpush.bf16.msra.mxu0 %v4704
    %5738 = vmatpush.bf16.msra.mxu0 %v4697
    %5739 = vmatpush.bf16.msra.mxu0 %v4690
    %5740 = vmatpush.bf16.msra.mxu0 %v4683
    %5741 = vmatpush.bf16.msra.mxu0 %v4676
    %5742 = vmatmul.bf16.gmra.mxu0 %v2957
    %v5743 = vpop.f32.mrf.mxu0
    %v5744 = vadd.f32 %v5731, %v5743
    %v5745 = vpop.f32.mrf.mxu0
    %5746 = vdwg.mxu0
    %5747 = vmatpush.bf16.msra.mxu0 %v4781
    %5748 = vmatpush.bf16.msra.mxu0 %v4774
    %5749 = vmatpush.bf16.msra.mxu0 %v4767
    %5750 = vmatpush.bf16.msra.mxu0 %v4760
    %5751 = vmatpush.bf16.msra.mxu0 %v4753
    %5752 = vmatpush.bf16.msra.mxu0 %v4746
    %5753 = vmatpush.bf16.msra.mxu0 %v4739
    %5754 = vmatpush.bf16.msra.mxu0 %v4732
    %5755 = vmatmul.bf16.gmra.mxu0 %v2958
    %v5756 = vpop.f32.mrf.mxu0
    %v5757 = vadd.f32 %v5744, %v5756
    %v5758 = vpop.f32.mrf.mxu0
    %5759 = vdwg.mxu0
    %5760 = vmatpush.bf16.msra.mxu0 0
    %5761 = vmatpush.bf16.msra.mxu0 0
    %5762 = vmatpush.bf16.msra.mxu0 0
    %5763 = vmatpush.bf16.msra.mxu0 0
    %5764 = vmatpush.bf16.msra.mxu0 0
    %5765 = vmatpush.bf16.msra.mxu0 0
    %5766 = vmatpush.bf16.msra.mxu0 0
    %5767 = vmatpush.bf16.msra.mxu0 %v4788
    %5768 = vmatmul.bf16.gmra.mxu0 %v5134
    %v5769 = vpop.f32.mrf.mxu0
    %v5770 = vadd.f32 %v5757, %v5769
    %v5771 = vpop.f32.mrf.mxu0
    %5772 = vdwg.mxu0
    %v5773 = vmax.f32 %v5224, 0.0
    %v5774 = vmax.f32 %v5315, 0.0
    %v5775 = vmax.f32 %v5406, 0.0
    %v5776 = vmax.f32 %v5497, 0.0
    %v5777 = vmax.f32 %v5588, 0.0
    %v5778 = vmax.f32 %v5679, 0.0
    %v5779 = vmax.f32 %v5770, 0.0
    %v5780 = vpack.c.bf16 %v5773, %v5773
    %v5781 = vpack.c.bf16 %v5774, %v5774
    %v5782 = vpack.c.bf16 %v5775, %v5775
    %v5783 = vpack.c.bf16 %v5776, %v5776
    %v5784 = vpack.c.bf16 %v5777, %v5777
    %v5785 = vpack.c.bf16 %v5778, %v5778
    %v5786 = vpack.c.bf16 %v5779, %v5779
    %v5787 = vld [vmem:[#allocation2] sm:$0xff]
    %v5788 = vld [vmem:[#allocation2 + $0x8] sm:$0xff]
    %v5789 = vld [vmem:[#allocation2 + $0x10] sm:$0xff]
    %v5790 = vld [vmem:[#allocation2 + $0x18] sm:$0xff]
    %v5791 = vld [vmem:[#allocation2 + $0x20] sm:$0xff]
    %v5792 = vld [vmem:[#allocation2 + $0x28] sm:$0xff]
    %v5793 = vld [vmem:[#allocation2 + $0x30] sm:$0xff]
    %v5794 = vld [vmem:[#allocation2 + $0x38] sm:$0xff]
    %v5795 = vld [vmem:[#allocation2 + $0x40] sm:$0xff]
    %v5796 = vld [vmem:[#allocation2 + $0x48] sm:$0xff]
    %v5797 = vld [vmem:[#allocation2 + $0x50] sm:$0xff]
    %v5798 = vld [vmem:[#allocation2 + $0x58] sm:$0xff]
    %v5799 = vld [vmem:[#allocation2 + $0x60] sm:$0xff]
    %v5800 = vld [vmem:[#allocation2 + $0x68] sm:$0xff]
    %v5801 = vld [vmem:[#allocation2 + $0x70] sm:$0xff]
    %v5802 = vld [vmem:[#allocation2 + $0x78] sm:$0xff]
    %v5803 = vld [vmem:[#allocation2 + $0x80] sm:$0xff]
    %v5804 = vld [vmem:[#allocation2 + $0x88] sm:$0xff]
    %v5805 = vld [vmem:[#allocation2 + $0x90] sm:$0xff]
    %v5806 = vld [vmem:[#allocation2 + $0x98] sm:$0xff]
    %v5807 = vld [vmem:[#allocation2 + $0xa0] sm:$0xff]
    %v5808 = vld [vmem:[#allocation2 + $0xa8] sm:$0xff]
    %v5809 = vld [vmem:[#allocation2 + $0xb0] sm:$0xff]
    %v5810 = vld [vmem:[#allocation2 + $0xb8] sm:$0xff]
    %v5811 = vld [vmem:[#allocation2 + $0xc0] sm:$0xff]
    %v5812 = vld [vmem:[#allocation2 + $0xc8] sm:$0xff]
    %v5813 = vld [vmem:[#allocation2 + $0xd0] sm:$0xff]
    %v5814 = vld [vmem:[#allocation2 + $0xd8] sm:$0xff]
    %v5815 = vld [vmem:[#allocation2 + $0xe0] sm:$0xff]
    %v5816 = vld [vmem:[#allocation2 + $0xe8] sm:$0xff]
    %v5817 = vld [vmem:[#allocation2 + $0xf0] sm:$0xff]
    %v5818 = vld [vmem:[#allocation2 + $0xf8] sm:$0xff]
    %v5819 = vld [vmem:[#allocation2 + $0x100] sm:$0xff]
    %v5820 = vld [vmem:[#allocation2 + $0x108] sm:$0xff]
    %v5821 = vld [vmem:[#allocation2 + $0x110] sm:$0xff]
    %v5822 = vld [vmem:[#allocation2 + $0x118] sm:$0xff]
    %v5823 = vld [vmem:[#allocation2 + $0x120] sm:$0xff]
    %v5824 = vld [vmem:[#allocation2 + $0x128] sm:$0xff]
    %v5825 = vld [vmem:[#allocation2 + $0x130] sm:$0xff]
    %v5826 = vld [vmem:[#allocation2 + $0x138] sm:$0xff]
    %v5827 = vld [vmem:[#allocation2 + $0x140] sm:$0xff]
    %v5828 = vld [vmem:[#allocation2 + $0x148] sm:$0xff]
    %v5829 = vld [vmem:[#allocation2 + $0x150] sm:$0xff]
    %v5830 = vld [vmem:[#allocation2 + $0x158] sm:$0xff]
    %v5831 = vld [vmem:[#allocation2 + $0x160] sm:$0xff]
    %v5832 = vld [vmem:[#allocation2 + $0x168] sm:$0xff]
    %v5833 = vld [vmem:[#allocation2 + $0x170] sm:$0xff]
    %v5834 = vld [vmem:[#allocation2 + $0x178] sm:$0xff]
    %v5835 = vld [vmem:[#allocation2 + $0x180] sm:$0xff]
    %v5836 = vld [vmem:[#allocation2 + $0x188] sm:$0xff]
    %v5837 = vld [vmem:[#allocation2 + $0x190] sm:$0xff]
    %v5838 = vld [vmem:[#allocation2 + $0x198] sm:$0xff]
    %v5839 = vld [vmem:[#allocation2 + $0x1a0] sm:$0xff]
    %v5840 = vld [vmem:[#allocation2 + $0x1a8] sm:$0xff]
    %v5841 = vld [vmem:[#allocation2 + $0x1b0] sm:$0xff]
    %v5842 = vld [vmem:[#allocation2 + $0x1b8] sm:$0xff]
    %v5843 = vld [vmem:[#allocation2 + $0x1c0] sm:$0xff]
    %v5844 = vld [vmem:[#allocation2 + $0x1c8] sm:$0xff]
    %v5845 = vld [vmem:[#allocation2 + $0x1d0] sm:$0xff]
    %v5846 = vld [vmem:[#allocation2 + $0x1d8] sm:$0xff]
    %v5847 = vld [vmem:[#allocation2 + $0x1e0] sm:$0xff]
    %v5848 = vld [vmem:[#allocation2 + $0x1e8] sm:$0xff]
    %v5849 = vld [vmem:[#allocation2 + $0x1f0] sm:$0xff]
    %v5850 = vld [vmem:[#allocation2 + $0x1f8] sm:$0xff]
    %v5851 = vld [vmem:[#allocation2 + $0x200] sm:$0xff]
    %v5852 = vld [vmem:[#allocation2 + $0x208] sm:$0xff]
    %v5853 = vld [vmem:[#allocation2 + $0x210] sm:$0xff]
    %v5854 = vld [vmem:[#allocation2 + $0x218] sm:$0xff]
    %v5855 = vld [vmem:[#allocation2 + $0x220] sm:$0xff]
    %v5856 = vld [vmem:[#allocation2 + $0x228] sm:$0xff]
    %v5857 = vld [vmem:[#allocation2 + $0x230] sm:$0xff]
    %v5858 = vld [vmem:[#allocation2 + $0x238] sm:$0xff]
    %v5859 = vld [vmem:[#allocation2 + $0x240] sm:$0xff]
    %v5860 = vld [vmem:[#allocation2 + $0x248] sm:$0xff]
    %v5861 = vld [vmem:[#allocation2 + $0x250] sm:$0xff]
    %v5862 = vld [vmem:[#allocation2 + $0x258] sm:$0xff]
    %v5863 = vld [vmem:[#allocation2 + $0x260] sm:$0xff]
    %v5864 = vld [vmem:[#allocation2 + $0x268] sm:$0xff]
    %v5865 = vld [vmem:[#allocation2 + $0x270] sm:$0xff]
    %v5866 = vld [vmem:[#allocation2 + $0x278] sm:$0xff]
    %v5867 = vld [vmem:[#allocation2 + $0x280] sm:$0xff]
    %v5868 = vld [vmem:[#allocation2 + $0x288] sm:$0xff]
    %v5869 = vld [vmem:[#allocation2 + $0x290] sm:$0xff]
    %v5870 = vld [vmem:[#allocation2 + $0x298] sm:$0xff]
    %v5871 = vld [vmem:[#allocation2 + $0x2a0] sm:$0xff]
    %v5872 = vld [vmem:[#allocation2 + $0x2a8] sm:$0xff]
    %v5873 = vld [vmem:[#allocation2 + $0x2b0] sm:$0xff]
    %v5874 = vld [vmem:[#allocation2 + $0x2b8] sm:$0xff]
    %v5875 = vld [vmem:[#allocation2 + $0x2c0] sm:$0xff]
    %v5876 = vld [vmem:[#allocation2 + $0x2c8] sm:$0xff]
    %v5877 = vld [vmem:[#allocation2 + $0x2d0] sm:$0xff]
    %v5878 = vld [vmem:[#allocation2 + $0x2d8] sm:$0xff]
    %v5879 = vld [vmem:[#allocation2 + $0x2e0] sm:$0xff]
    %v5880 = vld [vmem:[#allocation2 + $0x2e8] sm:$0xff]
    %v5881 = vld [vmem:[#allocation2 + $0x2f0] sm:$0xff]
    %v5882 = vld [vmem:[#allocation2 + $0x2f8] sm:$0xff]
    %v5883 = vld [vmem:[#allocation2 + $0x300] sm:$0xff]
    %v5884 = vld [vmem:[#allocation2 + $0x308] sm:$0xff]
    %v5885 = vld [vmem:[#allocation2 + $0x310] sm:$0xff]
    %v5886 = vld [vmem:[#allocation2 + $0x318] sm:$0xff]
    %v5887 = vld [vmem:[#allocation2 + $0x320] sm:$0xff]
    %v5888 = vld [vmem:[#allocation2 + $0x328] sm:$0xff]
    %v5889 = vld [vmem:[#allocation2 + $0x330] sm:$0xff]
    %v5890 = vld [vmem:[#allocation2 + $0x338] sm:$0xff]
    %v5891 = vld [vmem:[#allocation2 + $0x340] sm:$0xff]
    %v5892 = vld [vmem:[#allocation2 + $0x348] sm:$0xff]
    %v5893 = vld [vmem:[#allocation2 + $0x350] sm:$0xff]
    %v5894 = vld [vmem:[#allocation2 + $0x358] sm:$0xff]
    %v5895 = vld [vmem:[#allocation2 + $0x360] sm:$0xff]
    %v5896 = vld [vmem:[#allocation2 + $0x368] sm:$0xff]
    %v5897 = vld [vmem:[#allocation2 + $0x370] sm:$0xff]
    %v5898 = vld [vmem:[#allocation2 + $0x378] sm:$0xff]
    %v5899 = vld [vmem:[#allocation2 + $0x380] sm:$0xff]
    %v5900 = vld [vmem:[#allocation2 + $0x388] sm:$0xff]
    %v5901 = vld [vmem:[#allocation2 + $0x390] sm:$0xff]
    %v5902 = vld [vmem:[#allocation2 + $0x398] sm:$0xff]
    %v5903 = vld [vmem:[#allocation2 + $0x3a0] sm:$0xff]
    %v5904 = vld [vmem:[#allocation2 + $0x3a8] sm:$0xff]
    %v5905 = vld [vmem:[#allocation2 + $0x3b0] sm:$0xff]
    %v5906 = vld [vmem:[#allocation2 + $0x3b8] sm:$0xff]
    %v5907 = vld [vmem:[#allocation2 + $0x3c0] sm:$0xff]
    %v5908 = vld [vmem:[#allocation2 + $0x3c8] sm:$0xff]
    %v5909 = vld [vmem:[#allocation2 + $0x3d0] sm:$0xff]
    %v5910 = vld [vmem:[#allocation2 + $0x3d8] sm:$0xff]
    %v5911 = vld [vmem:[#allocation2 + $0x3e0] sm:$0xff]
    %v5912 = vld [vmem:[#allocation2 + $0x3e8] sm:$0xff]
    %v5913 = vld [vmem:[#allocation2 + $0x3f0] sm:$0xff]
    %v5914 = vld [vmem:[#allocation2 + $0x3f8] sm:$0xff]
    %v5915 = vld [vmem:[#allocation2 + $0x400] sm:$0xff]
    %v5916 = vld [vmem:[#allocation2 + $0x408] sm:$0xff]
    %v5917 = vld [vmem:[#allocation2 + $0x410] sm:$0xff]
    %v5918 = vld [vmem:[#allocation2 + $0x418] sm:$0xff]
    %v5919 = vld [vmem:[#allocation2 + $0x420] sm:$0xff]
    %v5920 = vld [vmem:[#allocation2 + $0x428] sm:$0xff]
    %v5921 = vld [vmem:[#allocation2 + $0x430] sm:$0xff]
    %v5922 = vld [vmem:[#allocation2 + $0x438] sm:$0xff]
    %v5923 = vld [vmem:[#allocation2 + $0x440] sm:$0xff]
    %v5924 = vld [vmem:[#allocation2 + $0x448] sm:$0xff]
    %v5925 = vld [vmem:[#allocation2 + $0x450] sm:$0xff]
    %v5926 = vld [vmem:[#allocation2 + $0x458] sm:$0xff]
    %v5927 = vld [vmem:[#allocation2 + $0x460] sm:$0xff]
    %v5928 = vld [vmem:[#allocation2 + $0x468] sm:$0xff]
    %v5929 = vld [vmem:[#allocation2 + $0x470] sm:$0xff]
    %v5930 = vld [vmem:[#allocation2 + $0x478] sm:$0xff]
    %v5931 = vld [vmem:[#allocation2 + $0x480] sm:$0xff]
    %v5932 = vld [vmem:[#allocation2 + $0x488] sm:$0xff]
    %v5933 = vld [vmem:[#allocation2 + $0x490] sm:$0xff]
    %v5934 = vld [vmem:[#allocation2 + $0x498] sm:$0xff]
    %v5935 = vld [vmem:[#allocation2 + $0x4a0] sm:$0xff]
    %v5936 = vld [vmem:[#allocation2 + $0x4a8] sm:$0xff]
    %v5937 = vld [vmem:[#allocation2 + $0x4b0] sm:$0xff]
    %v5938 = vld [vmem:[#allocation2 + $0x4b8] sm:$0xff]
    %v5939 = vld [vmem:[#allocation2 + $0x4c0] sm:$0xff]
    %v5940 = vld [vmem:[#allocation2 + $0x4c8] sm:$0xff]
    %v5941 = vld [vmem:[#allocation2 + $0x4d0] sm:$0xff]
    %v5942 = vld [vmem:[#allocation2 + $0x4d8] sm:$0xff]
    %v5943 = vld [vmem:[#allocation2 + $0x4e0] sm:$0xff]
    %v5944 = vld [vmem:[#allocation2 + $0x4e8] sm:$0xff]
    %v5945 = vld [vmem:[#allocation2 + $0x4f0] sm:$0xff]
    %v5946 = vld [vmem:[#allocation2 + $0x4f8] sm:$0xff]
    %v5947 = vld [vmem:[#allocation2 + $0x500] sm:$0xff]
    %v5948 = vld [vmem:[#allocation2 + $0x508] sm:$0xff]
    %v5949 = vld [vmem:[#allocation2 + $0x510] sm:$0xff]
    %v5950 = vld [vmem:[#allocation2 + $0x518] sm:$0xff]
    %v5951 = vld [vmem:[#allocation2 + $0x520] sm:$0xff]
    %v5952 = vld [vmem:[#allocation2 + $0x528] sm:$0xff]
    %v5953 = vld [vmem:[#allocation2 + $0x530] sm:$0xff]
    %v5954 = vld [vmem:[#allocation2 + $0x538] sm:$0xff]
    %v5955 = vld [vmem:[#allocation2 + $0x540] sm:$0xff]
    %v5956 = vld [vmem:[#allocation2 + $0x548] sm:$0xff]
    %v5957 = vld [vmem:[#allocation2 + $0x550] sm:$0xff]
    %v5958 = vld [vmem:[#allocation2 + $0x558] sm:$0xff]
    %v5959 = vld [vmem:[#allocation2 + $0x560] sm:$0xff]
    %v5960 = vld [vmem:[#allocation2 + $0x568] sm:$0xff]
    %v5961 = vld [vmem:[#allocation2 + $0x570] sm:$0xff]
    %v5962 = vld [vmem:[#allocation2 + $0x578] sm:$0xff]
    %v5963 = vld [vmem:[#allocation2 + $0x580] sm:$0xff]
    %v5964 = vld [vmem:[#allocation2 + $0x588] sm:$0xff]
    %v5965 = vld [vmem:[#allocation2 + $0x590] sm:$0xff]
    %v5966 = vld [vmem:[#allocation2 + $0x598] sm:$0xff]
    %v5967 = vld [vmem:[#allocation2 + $0x5a0] sm:$0xff]
    %v5968 = vld [vmem:[#allocation2 + $0x5a8] sm:$0xff]
    %v5969 = vld [vmem:[#allocation2 + $0x5b0] sm:$0xff]
    %v5970 = vld [vmem:[#allocation2 + $0x5b8] sm:$0xff]
    %v5971 = vld [vmem:[#allocation2 + $0x5c0] sm:$0xff]
    %v5972 = vld [vmem:[#allocation2 + $0x5c8] sm:$0xff]
    %v5973 = vld [vmem:[#allocation2 + $0x5d0] sm:$0xff]
    %v5974 = vld [vmem:[#allocation2 + $0x5d8] sm:$0xff]
    %v5975 = vld [vmem:[#allocation2 + $0x5e0] sm:$0xff]
    %v5976 = vld [vmem:[#allocation2 + $0x5e8] sm:$0xff]
    %v5977 = vld [vmem:[#allocation2 + $0x5f0] sm:$0xff]
    %v5978 = vld [vmem:[#allocation2 + $0x5f8] sm:$0xff]
    %v5979 = vld [vmem:[#allocation2 + $0x600] sm:$0xff]
    %v5980 = vld [vmem:[#allocation2 + $0x608] sm:$0xff]
    %v5981 = vld [vmem:[#allocation2 + $0x610] sm:$0xff]
    %v5982 = vld [vmem:[#allocation2 + $0x618] sm:$0xff]
    %v5983 = vld [vmem:[%s6] sm:$0xf]
    %v5985 = vperm.slane %v5983, 0
    %v5986 = vperm.slane %v5983, 1
    %v5987 = vperm.slane %v5983, 2
    %v5988 = vperm.slane %v5983, 3
    %v6189 = vunpack.c.l.b16 %v5787
    %v6190 = vunpack.c.h.b16 %v5787
    %v6191 = vunpack.c.l.b16 %v5788
    %v6192 = vunpack.c.h.b16 %v5788
    %v6193 = vunpack.c.l.b16 %v5789
    %v6194 = vunpack.c.h.b16 %v5789
    %v6195 = vunpack.c.l.b16 %v5790
    %v6196 = vunpack.c.h.b16 %v5790
    %v6197 = vunpack.c.l.b16 %v5791
    %v6198 = vunpack.c.h.b16 %v5791
    %v6199 = vunpack.c.l.b16 %v5792
    %v6200 = vunpack.c.h.b16 %v5792
    %v6201 = vunpack.c.l.b16 %v5793
    %v6202 = vunpack.c.h.b16 %v5793
    %v6203 = vunpack.c.l.b16 %v5794
    %v6204 = vunpack.c.h.b16 %v5794
    %v6205 = vunpack.c.l.b16 %v5795
    %v6206 = vunpack.c.h.b16 %v5795
    %v6207 = vunpack.c.l.b16 %v5796
    %v6208 = vunpack.c.h.b16 %v5796
    %v6209 = vunpack.c.l.b16 %v5797
    %v6210 = vunpack.c.h.b16 %v5797
    %v6211 = vunpack.c.l.b16 %v5798
    %v6212 = vunpack.c.h.b16 %v5798
    %v6213 = vunpack.c.l.b16 %v5799
    %v6214 = vunpack.c.h.b16 %v5799
    %v6215 = vunpack.c.l.b16 %v5800
    %v6216 = vunpack.c.h.b16 %v5800
    %v6217 = vunpack.c.l.b16 %v5801
    %v6218 = vunpack.c.h.b16 %v5801
    %v6219 = vunpack.c.l.b16 %v5802
    %v6220 = vunpack.c.h.b16 %v5802
    %v6221 = vunpack.c.l.b16 %v5803
    %v6222 = vunpack.c.h.b16 %v5803
    %v6223 = vunpack.c.l.b16 %v5804
    %v6224 = vunpack.c.h.b16 %v5804
    %v6225 = vunpack.c.l.b16 %v5805
    %v6226 = vunpack.c.h.b16 %v5805
    %v6227 = vunpack.c.l.b16 %v5806
    %v6228 = vunpack.c.h.b16 %v5806
    %v6229 = vunpack.c.l.b16 %v5807
    %v6230 = vunpack.c.h.b16 %v5807
    %v6231 = vunpack.c.l.b16 %v5808
    %v6232 = vunpack.c.h.b16 %v5808
    %v6233 = vunpack.c.l.b16 %v5809
    %v6234 = vunpack.c.h.b16 %v5809
    %v6235 = vunpack.c.l.b16 %v5810
    %v6236 = vunpack.c.h.b16 %v5810
    %v6237 = vunpack.c.l.b16 %v5811
    %v6238 = vunpack.c.h.b16 %v5811
    %v6239 = vunpack.c.l.b16 %v5812
    %v6240 = vunpack.c.h.b16 %v5812
    %v6241 = vunpack.c.l.b16 %v5813
    %v6242 = vunpack.c.h.b16 %v5813
    %v6243 = vunpack.c.l.b16 %v5814
    %v6244 = vunpack.c.h.b16 %v5814
    %v6245 = vunpack.c.l.b16 %v5815
    %v6246 = vunpack.c.h.b16 %v5815
    %v6247 = vunpack.c.l.b16 %v5816
    %v6248 = vunpack.c.h.b16 %v5816
    %v6249 = vunpack.c.l.b16 %v5817
    %v6250 = vunpack.c.h.b16 %v5817
    %v6251 = vunpack.c.l.b16 %v5818
    %v6252 = vunpack.c.h.b16 %v5818
    %v6253 = vunpack.c.l.b16 %v5819
    %v6254 = vunpack.c.h.b16 %v5819
    %v6255 = vunpack.c.l.b16 %v5820
    %v6256 = vunpack.c.h.b16 %v5820
    %v6257 = vunpack.c.l.b16 %v5821
    %v6258 = vunpack.c.h.b16 %v5821
    %v6259 = vunpack.c.l.b16 %v5822
    %v6260 = vunpack.c.h.b16 %v5822
    %v6261 = vunpack.c.l.b16 %v5823
    %v6262 = vunpack.c.h.b16 %v5823
    %v6263 = vunpack.c.l.b16 %v5824
    %v6264 = vunpack.c.h.b16 %v5824
    %v6265 = vunpack.c.l.b16 %v5825
    %v6266 = vunpack.c.h.b16 %v5825
    %v6267 = vunpack.c.l.b16 %v5826
    %v6268 = vunpack.c.h.b16 %v5826
    %v6269 = vunpack.c.l.b16 %v5827
    %v6270 = vunpack.c.h.b16 %v5827
    %v6271 = vunpack.c.l.b16 %v5828
    %v6272 = vunpack.c.h.b16 %v5828
    %v6273 = vunpack.c.l.b16 %v5829
    %v6274 = vunpack.c.h.b16 %v5829
    %v6275 = vunpack.c.l.b16 %v5830
    %v6276 = vunpack.c.h.b16 %v5830
    %v6277 = vunpack.c.l.b16 %v5831
    %v6278 = vunpack.c.h.b16 %v5831
    %v6279 = vunpack.c.l.b16 %v5832
    %v6280 = vunpack.c.h.b16 %v5832
    %v6281 = vunpack.c.l.b16 %v5833
    %v6282 = vunpack.c.h.b16 %v5833
    %v6283 = vunpack.c.l.b16 %v5834
    %v6284 = vunpack.c.h.b16 %v5834
    %v6285 = vunpack.c.l.b16 %v5835
    %v6286 = vunpack.c.h.b16 %v5835
    %v6287 = vunpack.c.l.b16 %v5836
    %v6288 = vunpack.c.h.b16 %v5836
    %v6289 = vunpack.c.l.b16 %v5837
    %v6290 = vunpack.c.h.b16 %v5837
    %v6291 = vunpack.c.l.b16 %v5838
    %v6292 = vunpack.c.h.b16 %v5838
    %v6293 = vunpack.c.l.b16 %v5839
    %v6294 = vunpack.c.h.b16 %v5839
    %v6295 = vunpack.c.l.b16 %v5840
    %v6296 = vunpack.c.h.b16 %v5840
    %v6297 = vunpack.c.l.b16 %v5841
    %v6298 = vunpack.c.h.b16 %v5841
    %v6299 = vunpack.c.l.b16 %v5842
    %v6300 = vunpack.c.h.b16 %v5842
    %v6301 = vunpack.c.l.b16 %v5843
    %v6302 = vunpack.c.h.b16 %v5843
    %v6303 = vunpack.c.l.b16 %v5844
    %v6304 = vunpack.c.h.b16 %v5844
    %v6305 = vunpack.c.l.b16 %v5845
    %v6306 = vunpack.c.h.b16 %v5845
    %v6307 = vunpack.c.l.b16 %v5846
    %v6308 = vunpack.c.h.b16 %v5846
    %v6309 = vunpack.c.l.b16 %v5847
    %v6310 = vunpack.c.h.b16 %v5847
    %v6311 = vunpack.c.l.b16 %v5848
    %v6312 = vunpack.c.h.b16 %v5848
    %v6313 = vunpack.c.l.b16 %v5849
    %v6314 = vunpack.c.h.b16 %v5849
    %v6315 = vunpack.c.l.b16 %v5850
    %v6316 = vunpack.c.h.b16 %v5850
    %v6317 = vunpack.c.l.b16 %v5851
    %v6318 = vunpack.c.h.b16 %v5851
    %v6319 = vunpack.c.l.b16 %v5852
    %v6320 = vunpack.c.h.b16 %v5852
    %v6321 = vunpack.c.l.b16 %v5853
    %v6322 = vunpack.c.h.b16 %v5853
    %v6323 = vunpack.c.l.b16 %v5854
    %v6324 = vunpack.c.h.b16 %v5854
    %v6325 = vunpack.c.l.b16 %v5855
    %v6326 = vunpack.c.h.b16 %v5855
    %v6327 = vunpack.c.l.b16 %v5856
    %v6328 = vunpack.c.h.b16 %v5856
    %v6329 = vunpack.c.l.b16 %v5857
    %v6330 = vunpack.c.h.b16 %v5857
    %v6331 = vunpack.c.l.b16 %v5858
    %v6332 = vunpack.c.h.b16 %v5858
    %v6333 = vunpack.c.l.b16 %v5859
    %v6334 = vunpack.c.h.b16 %v5859
    %v6335 = vunpack.c.l.b16 %v5860
    %v6336 = vunpack.c.h.b16 %v5860
    %v6337 = vunpack.c.l.b16 %v5861
    %v6338 = vunpack.c.h.b16 %v5861
    %v6339 = vunpack.c.l.b16 %v5862
    %v6340 = vunpack.c.h.b16 %v5862
    %v6341 = vunpack.c.l.b16 %v5863
    %v6342 = vunpack.c.h.b16 %v5863
    %v6343 = vunpack.c.l.b16 %v5864
    %v6344 = vunpack.c.h.b16 %v5864
    %v6345 = vunpack.c.l.b16 %v5865
    %v6346 = vunpack.c.h.b16 %v5865
    %v6347 = vunpack.c.l.b16 %v5866
    %v6348 = vunpack.c.h.b16 %v5866
    %v6349 = vunpack.c.l.b16 %v5867
    %v6350 = vunpack.c.h.b16 %v5867
    %v6351 = vunpack.c.l.b16 %v5868
    %v6352 = vunpack.c.h.b16 %v5868
    %v6353 = vunpack.c.l.b16 %v5869
    %v6354 = vunpack.c.h.b16 %v5869
    %v6355 = vunpack.c.l.b16 %v5870
    %v6356 = vunpack.c.h.b16 %v5870
    %v6357 = vunpack.c.l.b16 %v5871
    %v6358 = vunpack.c.h.b16 %v5871
    %v6359 = vunpack.c.l.b16 %v5872
    %v6360 = vunpack.c.h.b16 %v5872
    %v6361 = vunpack.c.l.b16 %v5873
    %v6362 = vunpack.c.h.b16 %v5873
    %v6363 = vunpack.c.l.b16 %v5874
    %v6364 = vunpack.c.h.b16 %v5874
    %v6365 = vunpack.c.l.b16 %v5875
    %v6366 = vunpack.c.h.b16 %v5875
    %v6367 = vunpack.c.l.b16 %v5876
    %v6368 = vunpack.c.h.b16 %v5876
    %v6369 = vunpack.c.l.b16 %v5877
    %v6370 = vunpack.c.h.b16 %v5877
    %v6371 = vunpack.c.l.b16 %v5878
    %v6372 = vunpack.c.h.b16 %v5878
    %v6373 = vunpack.c.l.b16 %v5879
    %v6374 = vunpack.c.h.b16 %v5879
    %v6375 = vunpack.c.l.b16 %v5880
    %v6376 = vunpack.c.h.b16 %v5880
    %v6377 = vunpack.c.l.b16 %v5881
    %v6378 = vunpack.c.h.b16 %v5881
    %v6379 = vunpack.c.l.b16 %v5882
    %v6380 = vunpack.c.h.b16 %v5882
    %v6381 = vunpack.c.l.b16 %v5883
    %v6382 = vunpack.c.h.b16 %v5883
    %v6383 = vunpack.c.l.b16 %v5884
    %v6384 = vunpack.c.h.b16 %v5884
    %v6385 = vunpack.c.l.b16 %v5885
    %v6386 = vunpack.c.h.b16 %v5885
    %v6387 = vunpack.c.l.b16 %v5886
    %v6388 = vunpack.c.h.b16 %v5886
    %v6389 = vunpack.c.l.b16 %v5887
    %v6390 = vunpack.c.h.b16 %v5887
    %v6391 = vunpack.c.l.b16 %v5888
    %v6392 = vunpack.c.h.b16 %v5888
    %v6393 = vunpack.c.l.b16 %v5889
    %v6394 = vunpack.c.h.b16 %v5889
    %v6395 = vunpack.c.l.b16 %v5890
    %v6396 = vunpack.c.h.b16 %v5890
    %v6397 = vunpack.c.l.b16 %v5891
    %v6398 = vunpack.c.h.b16 %v5891
    %v6399 = vunpack.c.l.b16 %v5892
    %v6400 = vunpack.c.h.b16 %v5892
    %v6401 = vunpack.c.l.b16 %v5893
    %v6402 = vunpack.c.h.b16 %v5893
    %v6403 = vunpack.c.l.b16 %v5894
    %v6404 = vunpack.c.h.b16 %v5894
    %v6405 = vunpack.c.l.b16 %v5895
    %v6406 = vunpack.c.h.b16 %v5895
    %v6407 = vunpack.c.l.b16 %v5896
    %v6408 = vunpack.c.h.b16 %v5896
    %v6409 = vunpack.c.l.b16 %v5897
    %v6410 = vunpack.c.h.b16 %v5897
    %v6411 = vunpack.c.l.b16 %v5898
    %v6412 = vunpack.c.h.b16 %v5898
    %v6413 = vunpack.c.l.b16 %v5899
    %v6414 = vunpack.c.h.b16 %v5899
    %v6415 = vunpack.c.l.b16 %v5900
    %v6416 = vunpack.c.h.b16 %v5900
    %v6417 = vunpack.c.l.b16 %v5901
    %v6418 = vunpack.c.h.b16 %v5901
    %v6419 = vunpack.c.l.b16 %v5902
    %v6420 = vunpack.c.h.b16 %v5902
    %v6421 = vunpack.c.l.b16 %v5903
    %v6422 = vunpack.c.h.b16 %v5903
    %v6423 = vunpack.c.l.b16 %v5904
    %v6424 = vunpack.c.h.b16 %v5904
    %v6425 = vunpack.c.l.b16 %v5905
    %v6426 = vunpack.c.h.b16 %v5905
    %v6427 = vunpack.c.l.b16 %v5906
    %v6428 = vunpack.c.h.b16 %v5906
    %v6429 = vunpack.c.l.b16 %v5907
    %v6430 = vunpack.c.h.b16 %v5907
    %v6431 = vunpack.c.l.b16 %v5908
    %v6432 = vunpack.c.h.b16 %v5908
    %v6433 = vunpack.c.l.b16 %v5909
    %v6434 = vunpack.c.h.b16 %v5909
    %v6435 = vunpack.c.l.b16 %v5910
    %v6436 = vunpack.c.h.b16 %v5910
    %v6437 = vunpack.c.l.b16 %v5911
    %v6438 = vunpack.c.h.b16 %v5911
    %v6439 = vunpack.c.l.b16 %v5912
    %v6440 = vunpack.c.h.b16 %v5912
    %v6441 = vunpack.c.l.b16 %v5913
    %v6442 = vunpack.c.h.b16 %v5913
    %v6443 = vunpack.c.l.b16 %v5914
    %v6444 = vunpack.c.h.b16 %v5914
    %v6445 = vunpack.c.l.b16 %v5915
    %v6446 = vunpack.c.h.b16 %v5915
    %v6447 = vunpack.c.l.b16 %v5916
    %v6448 = vunpack.c.h.b16 %v5916
    %v6449 = vunpack.c.l.b16 %v5917
    %v6450 = vunpack.c.h.b16 %v5917
    %v6451 = vunpack.c.l.b16 %v5918
    %v6452 = vunpack.c.h.b16 %v5918
    %v6453 = vunpack.c.l.b16 %v5919
    %v6454 = vunpack.c.h.b16 %v5919
    %v6455 = vunpack.c.l.b16 %v5920
    %v6456 = vunpack.c.h.b16 %v5920
    %v6457 = vunpack.c.l.b16 %v5921
    %v6458 = vunpack.c.h.b16 %v5921
    %v6459 = vunpack.c.l.b16 %v5922
    %v6460 = vunpack.c.h.b16 %v5922
    %v6461 = vunpack.c.l.b16 %v5923
    %v6462 = vunpack.c.h.b16 %v5923
    %v6463 = vunpack.c.l.b16 %v5924
    %v6464 = vunpack.c.h.b16 %v5924
    %v6465 = vunpack.c.l.b16 %v5925
    %v6466 = vunpack.c.h.b16 %v5925
    %v6467 = vunpack.c.l.b16 %v5926
    %v6468 = vunpack.c.h.b16 %v5926
    %v6469 = vunpack.c.l.b16 %v5927
    %v6470 = vunpack.c.h.b16 %v5927
    %v6471 = vunpack.c.l.b16 %v5928
    %v6472 = vunpack.c.h.b16 %v5928
    %v6473 = vunpack.c.l.b16 %v5929
    %v6474 = vunpack.c.h.b16 %v5929
    %v6475 = vunpack.c.l.b16 %v5930
    %v6476 = vunpack.c.h.b16 %v5930
    %v6477 = vunpack.c.l.b16 %v5931
    %v6478 = vunpack.c.h.b16 %v5931
    %v6479 = vunpack.c.l.b16 %v5932
    %v6480 = vunpack.c.h.b16 %v5932
    %v6481 = vunpack.c.l.b16 %v5933
    %v6482 = vunpack.c.h.b16 %v5933
    %v6483 = vunpack.c.l.b16 %v5934
    %v6484 = vunpack.c.h.b16 %v5934
    %v6485 = vunpack.c.l.b16 %v5935
    %v6486 = vunpack.c.h.b16 %v5935
    %v6487 = vunpack.c.l.b16 %v5936
    %v6488 = vunpack.c.h.b16 %v5936
    %v6489 = vunpack.c.l.b16 %v5937
    %v6490 = vunpack.c.h.b16 %v5937
    %v6491 = vunpack.c.l.b16 %v5938
    %v6492 = vunpack.c.h.b16 %v5938
    %v6493 = vunpack.c.l.b16 %v5939
    %v6494 = vunpack.c.h.b16 %v5939
    %v6495 = vunpack.c.l.b16 %v5940
    %v6496 = vunpack.c.h.b16 %v5940
    %v6497 = vunpack.c.l.b16 %v5941
    %v6498 = vunpack.c.h.b16 %v5941
    %v6499 = vunpack.c.l.b16 %v5942
    %v6500 = vunpack.c.h.b16 %v5942
    %v6501 = vunpack.c.l.b16 %v5943
    %v6502 = vunpack.c.h.b16 %v5943
    %v6503 = vunpack.c.l.b16 %v5944
    %v6504 = vunpack.c.h.b16 %v5944
    %v6505 = vunpack.c.l.b16 %v5945
    %v6506 = vunpack.c.h.b16 %v5945
    %v6507 = vunpack.c.l.b16 %v5946
    %v6508 = vunpack.c.h.b16 %v5946
    %v6509 = vunpack.c.l.b16 %v5947
    %v6510 = vunpack.c.h.b16 %v5947
    %v6511 = vunpack.c.l.b16 %v5948
    %v6512 = vunpack.c.h.b16 %v5948
    %v6513 = vunpack.c.l.b16 %v5949
    %v6514 = vunpack.c.h.b16 %v5949
    %v6515 = vunpack.c.l.b16 %v5950
    %v6516 = vunpack.c.h.b16 %v5950
    %v6517 = vunpack.c.l.b16 %v5951
    %v6518 = vunpack.c.h.b16 %v5951
    %v6519 = vunpack.c.l.b16 %v5952
    %v6520 = vunpack.c.h.b16 %v5952
    %v6521 = vunpack.c.l.b16 %v5953
    %v6522 = vunpack.c.h.b16 %v5953
    %v6523 = vunpack.c.l.b16 %v5954
    %v6524 = vunpack.c.h.b16 %v5954
    %v6525 = vunpack.c.l.b16 %v5955
    %v6526 = vunpack.c.h.b16 %v5955
    %v6527 = vunpack.c.l.b16 %v5956
    %v6528 = vunpack.c.h.b16 %v5956
    %v6529 = vunpack.c.l.b16 %v5957
    %v6530 = vunpack.c.h.b16 %v5957
    %v6531 = vunpack.c.l.b16 %v5958
    %v6532 = vunpack.c.h.b16 %v5958
    %v6533 = vunpack.c.l.b16 %v5959
    %v6534 = vunpack.c.h.b16 %v5959
    %v6535 = vunpack.c.l.b16 %v5960
    %v6536 = vunpack.c.h.b16 %v5960
    %v6537 = vunpack.c.l.b16 %v5961
    %v6538 = vunpack.c.h.b16 %v5961
    %v6539 = vunpack.c.l.b16 %v5962
    %v6540 = vunpack.c.h.b16 %v5962
    %v6541 = vunpack.c.l.b16 %v5963
    %v6542 = vunpack.c.h.b16 %v5963
    %v6543 = vunpack.c.l.b16 %v5964
    %v6544 = vunpack.c.h.b16 %v5964
    %v6545 = vunpack.c.l.b16 %v5965
    %v6546 = vunpack.c.h.b16 %v5965
    %v6547 = vunpack.c.l.b16 %v5966
    %v6548 = vunpack.c.h.b16 %v5966
    %v6549 = vunpack.c.l.b16 %v5967
    %v6550 = vunpack.c.h.b16 %v5967
    %v6551 = vunpack.c.l.b16 %v5968
    %v6552 = vunpack.c.h.b16 %v5968
    %v6553 = vunpack.c.l.b16 %v5969
    %v6554 = vunpack.c.h.b16 %v5969
    %v6555 = vunpack.c.l.b16 %v5970
    %v6556 = vunpack.c.h.b16 %v5970
    %v6557 = vunpack.c.l.b16 %v5971
    %v6558 = vunpack.c.h.b16 %v5971
    %v6559 = vunpack.c.l.b16 %v5972
    %v6560 = vunpack.c.h.b16 %v5972
    %v6561 = vunpack.c.l.b16 %v5973
    %v6562 = vunpack.c.h.b16 %v5973
    %v6563 = vunpack.c.l.b16 %v5974
    %v6564 = vunpack.c.h.b16 %v5974
    %v6565 = vunpack.c.l.b16 %v5975
    %v6566 = vunpack.c.h.b16 %v5975
    %v6567 = vunpack.c.l.b16 %v5976
    %v6568 = vunpack.c.h.b16 %v5976
    %v6569 = vunpack.c.l.b16 %v5977
    %v6570 = vunpack.c.h.b16 %v5977
    %v6571 = vunpack.c.l.b16 %v5978
    %v6572 = vunpack.c.h.b16 %v5978
    %v6573 = vunpack.c.l.b16 %v5979
    %v6574 = vunpack.c.h.b16 %v5979
    %v6575 = vunpack.c.l.b16 %v5980
    %v6576 = vunpack.c.h.b16 %v5980
    %v6577 = vunpack.c.l.b16 %v5981
    %v6578 = vunpack.c.h.b16 %v5981
    %v6579 = vunpack.c.l.b16 %v5982
    %v6580 = vunpack.c.h.b16 %v5982
    %v6581 = vpack.c.b16 %v6193, %v6189
    %v6582 = vpack.c.b16 %v6194, %v6190
    %v6583 = vpack.c.b16 %v6195, %v6191
    %v6584 = vpack.c.b16 %v6196, %v6192
    %v6585 = vpack.c.b16 %v6201, %v6197
    %v6586 = vpack.c.b16 %v6202, %v6198
    %v6587 = vpack.c.b16 %v6203, %v6199
    %v6588 = vpack.c.b16 %v6204, %v6200
    %v6589 = vpack.c.b16 %v6209, %v6205
    %v6590 = vpack.c.b16 %v6210, %v6206
    %v6591 = vpack.c.b16 %v6211, %v6207
    %v6592 = vpack.c.b16 %v6212, %v6208
    %v6593 = vpack.c.b16 %v6217, %v6213
    %v6594 = vpack.c.b16 %v6218, %v6214
    %v6595 = vpack.c.b16 %v6219, %v6215
    %v6596 = vpack.c.b16 %v6220, %v6216
    %v6597 = vpack.c.b16 %v6225, %v6221
    %v6598 = vpack.c.b16 %v6226, %v6222
    %v6599 = vpack.c.b16 %v6227, %v6223
    %v6600 = vpack.c.b16 %v6228, %v6224
    %v6601 = vpack.c.b16 %v6233, %v6229
    %v6602 = vpack.c.b16 %v6234, %v6230
    %v6603 = vpack.c.b16 %v6235, %v6231
    %v6604 = vpack.c.b16 %v6236, %v6232
    %v6605 = vpack.c.b16 %v6241, %v6237
    %v6606 = vpack.c.b16 %v6242, %v6238
    %v6607 = vpack.c.b16 %v6243, %v6239
    %v6608 = vpack.c.b16 %v6244, %v6240
    %v6609 = vpack.c.b16 %v6249, %v6245
    %v6610 = vpack.c.b16 %v6250, %v6246
    %v6611 = vpack.c.b16 %v6251, %v6247
    %v6612 = vpack.c.b16 %v6252, %v6248
    %v6613 = vpack.c.b16 %v6257, %v6253
    %v6614 = vpack.c.b16 %v6258, %v6254
    %v6615 = vpack.c.b16 %v6259, %v6255
    %v6616 = vpack.c.b16 %v6260, %v6256
    %v6617 = vpack.c.b16 %v6265, %v6261
    %v6618 = vpack.c.b16 %v6266, %v6262
    %v6619 = vpack.c.b16 %v6267, %v6263
    %v6620 = vpack.c.b16 %v6268, %v6264
    %v6621 = vpack.c.b16 %v6273, %v6269
    %v6622 = vpack.c.b16 %v6274, %v6270
    %v6623 = vpack.c.b16 %v6275, %v6271
    %v6624 = vpack.c.b16 %v6276, %v6272
    %v6625 = vpack.c.b16 %v6281, %v6277
    %v6626 = vpack.c.b16 %v6282, %v6278
    %v6627 = vpack.c.b16 %v6283, %v6279
    %v6628 = vpack.c.b16 %v6284, %v6280
    %v6629 = vpack.c.b16 %v6289, %v6285
    %v6630 = vpack.c.b16 %v6290, %v6286
    %v6631 = vpack.c.b16 %v6291, %v6287
    %v6632 = vpack.c.b16 %v6292, %v6288
    %v6633 = vpack.c.b16 %v6297, %v6293
    %v6634 = vpack.c.b16 %v6298, %v6294
    %v6635 = vpack.c.b16 %v6299, %v6295
    %v6636 = vpack.c.b16 %v6300, %v6296
    %v6637 = vpack.c.b16 %v6305, %v6301
    %v6638 = vpack.c.b16 %v6306, %v6302
    %v6639 = vpack.c.b16 %v6307, %v6303
    %v6640 = vpack.c.b16 %v6308, %v6304
    %v6641 = vpack.c.b16 %v6313, %v6309
    %v6642 = vpack.c.b16 %v6314, %v6310
    %v6643 = vpack.c.b16 %v6315, %v6311
    %v6644 = vpack.c.b16 %v6316, %v6312
    %v6645 = vpack.c.b16 %v6321, %v6317
    %v6646 = vpack.c.b16 %v6322, %v6318
    %v6647 = vpack.c.b16 %v6323, %v6319
    %v6648 = vpack.c.b16 %v6324, %v6320
    %v6649 = vpack.c.b16 %v6329, %v6325
    %v6650 = vpack.c.b16 %v6330, %v6326
    %v6651 = vpack.c.b16 %v6331, %v6327
    %v6652 = vpack.c.b16 %v6332, %v6328
    %v6653 = vpack.c.b16 %v6337, %v6333
    %v6654 = vpack.c.b16 %v6338, %v6334
    %v6655 = vpack.c.b16 %v6339, %v6335
    %v6656 = vpack.c.b16 %v6340, %v6336
    %v6657 = vpack.c.b16 %v6345, %v6341
    %v6658 = vpack.c.b16 %v6346, %v6342
    %v6659 = vpack.c.b16 %v6347, %v6343
    %v6660 = vpack.c.b16 %v6348, %v6344
    %v6661 = vpack.c.b16 %v6353, %v6349
    %v6662 = vpack.c.b16 %v6354, %v6350
    %v6663 = vpack.c.b16 %v6355, %v6351
    %v6664 = vpack.c.b16 %v6356, %v6352
    %v6665 = vpack.c.b16 %v6361, %v6357
    %v6666 = vpack.c.b16 %v6362, %v6358
    %v6667 = vpack.c.b16 %v6363, %v6359
    %v6668 = vpack.c.b16 %v6364, %v6360
    %v6669 = vpack.c.b16 %v6369, %v6365
    %v6670 = vpack.c.b16 %v6370, %v6366
    %v6671 = vpack.c.b16 %v6371, %v6367
    %v6672 = vpack.c.b16 %v6372, %v6368
    %v6673 = vpack.c.b16 %v6377, %v6373
    %v6674 = vpack.c.b16 %v6378, %v6374
    %v6675 = vpack.c.b16 %v6379, %v6375
    %v6676 = vpack.c.b16 %v6380, %v6376
    %v6677 = vpack.c.b16 %v6385, %v6381
    %v6678 = vpack.c.b16 %v6386, %v6382
    %v6679 = vpack.c.b16 %v6387, %v6383
    %v6680 = vpack.c.b16 %v6388, %v6384
    %v6681 = vpack.c.b16 %v6393, %v6389
    %v6682 = vpack.c.b16 %v6394, %v6390
    %v6683 = vpack.c.b16 %v6395, %v6391
    %v6684 = vpack.c.b16 %v6396, %v6392
    %v6685 = vpack.c.b16 %v6401, %v6397
    %v6686 = vpack.c.b16 %v6402, %v6398
    %v6687 = vpack.c.b16 %v6403, %v6399
    %v6688 = vpack.c.b16 %v6404, %v6400
    %v6689 = vpack.c.b16 %v6409, %v6405
    %v6690 = vpack.c.b16 %v6410, %v6406
    %v6691 = vpack.c.b16 %v6411, %v6407
    %v6692 = vpack.c.b16 %v6412, %v6408
    %v6693 = vpack.c.b16 %v6417, %v6413
    %v6694 = vpack.c.b16 %v6418, %v6414
    %v6695 = vpack.c.b16 %v6419, %v6415
    %v6696 = vpack.c.b16 %v6420, %v6416
    %v6697 = vpack.c.b16 %v6425, %v6421
    %v6698 = vpack.c.b16 %v6426, %v6422
    %v6699 = vpack.c.b16 %v6427, %v6423
    %v6700 = vpack.c.b16 %v6428, %v6424
    %v6701 = vpack.c.b16 %v6433, %v6429
    %v6702 = vpack.c.b16 %v6434, %v6430
    %v6703 = vpack.c.b16 %v6435, %v6431
    %v6704 = vpack.c.b16 %v6436, %v6432
    %v6705 = vpack.c.b16 %v6441, %v6437
    %v6706 = vpack.c.b16 %v6442, %v6438
    %v6707 = vpack.c.b16 %v6443, %v6439
    %v6708 = vpack.c.b16 %v6444, %v6440
    %v6709 = vpack.c.b16 %v6449, %v6445
    %v6710 = vpack.c.b16 %v6450, %v6446
    %v6711 = vpack.c.b16 %v6451, %v6447
    %v6712 = vpack.c.b16 %v6452, %v6448
    %v6713 = vpack.c.b16 %v6457, %v6453
    %v6714 = vpack.c.b16 %v6458, %v6454
    %v6715 = vpack.c.b16 %v6459, %v6455
    %v6716 = vpack.c.b16 %v6460, %v6456
    %v6717 = vpack.c.b16 %v6465, %v6461
    %v6718 = vpack.c.b16 %v6466, %v6462
    %v6719 = vpack.c.b16 %v6467, %v6463
    %v6720 = vpack.c.b16 %v6468, %v6464
    %v6721 = vpack.c.b16 %v6473, %v6469
    %v6722 = vpack.c.b16 %v6474, %v6470
    %v6723 = vpack.c.b16 %v6475, %v6471
    %v6724 = vpack.c.b16 %v6476, %v6472
    %v6725 = vpack.c.b16 %v6481, %v6477
    %v6726 = vpack.c.b16 %v6482, %v6478
    %v6727 = vpack.c.b16 %v6483, %v6479
    %v6728 = vpack.c.b16 %v6484, %v6480
    %v6729 = vpack.c.b16 %v6489, %v6485
    %v6730 = vpack.c.b16 %v6490, %v6486
    %v6731 = vpack.c.b16 %v6491, %v6487
    %v6732 = vpack.c.b16 %v6492, %v6488
    %v6733 = vpack.c.b16 %v6497, %v6493
    %v6734 = vpack.c.b16 %v6498, %v6494
    %v6735 = vpack.c.b16 %v6499, %v6495
    %v6736 = vpack.c.b16 %v6500, %v6496
    %v6737 = vpack.c.b16 %v6505, %v6501
    %v6738 = vpack.c.b16 %v6506, %v6502
    %v6739 = vpack.c.b16 %v6507, %v6503
    %v6740 = vpack.c.b16 %v6508, %v6504
    %v6741 = vpack.c.b16 %v6513, %v6509
    %v6742 = vpack.c.b16 %v6514, %v6510
    %v6743 = vpack.c.b16 %v6515, %v6511
    %v6744 = vpack.c.b16 %v6516, %v6512
    %v6745 = vpack.c.b16 %v6521, %v6517
    %v6746 = vpack.c.b16 %v6522, %v6518
    %v6747 = vpack.c.b16 %v6523, %v6519
    %v6748 = vpack.c.b16 %v6524, %v6520
    %v6749 = vpack.c.b16 %v6529, %v6525
    %v6750 = vpack.c.b16 %v6530, %v6526
    %v6751 = vpack.c.b16 %v6531, %v6527
    %v6752 = vpack.c.b16 %v6532, %v6528
    %v6753 = vpack.c.b16 %v6537, %v6533
    %v6754 = vpack.c.b16 %v6538, %v6534
    %v6755 = vpack.c.b16 %v6539, %v6535
    %v6756 = vpack.c.b16 %v6540, %v6536
    %v6757 = vpack.c.b16 %v6545, %v6541
    %v6758 = vpack.c.b16 %v6546, %v6542
    %v6759 = vpack.c.b16 %v6547, %v6543
    %v6760 = vpack.c.b16 %v6548, %v6544
    %v6761 = vpack.c.b16 %v6553, %v6549
    %v6762 = vpack.c.b16 %v6554, %v6550
    %v6763 = vpack.c.b16 %v6555, %v6551
    %v6764 = vpack.c.b16 %v6556, %v6552
    %v6765 = vpack.c.b16 %v6561, %v6557
    %v6766 = vpack.c.b16 %v6562, %v6558
    %v6767 = vpack.c.b16 %v6563, %v6559
    %v6768 = vpack.c.b16 %v6564, %v6560
    %v6769 = vpack.c.b16 %v6569, %v6565
    %v6770 = vpack.c.b16 %v6570, %v6566
    %v6771 = vpack.c.b16 %v6571, %v6567
    %v6772 = vpack.c.b16 %v6572, %v6568
    %v6773 = vpack.c.b16 %v6577, %v6573
    %v6774 = vpack.c.b16 %v6578, %v6574
    %v6775 = vpack.c.b16 %v6579, %v6575
    %v6776 = vpack.c.b16 %v6580, %v6576
    %v6974 = vsel %vm5132, %v5786, 0
    %6976 = vmatpush.bf16.msra.mxu0 %v6609
    %6977 = vmatpush.bf16.msra.mxu0 %v6605
    %6978 = vmatpush.bf16.msra.mxu0 %v6601
    %6979 = vmatpush.bf16.msra.mxu0 %v6597
    %6980 = vmatpush.bf16.msra.mxu0 %v6593
    %6981 = vmatpush.bf16.msra.mxu0 %v6589
    %6982 = vmatpush.bf16.msra.mxu0 %v6585
    %6983 = vmatpush.bf16.msra.mxu0 %v6581
    %6984 = vmatmul.bf16.gmra.mxu0 %v5780
    %v6985 = vpop.f32.mrf.mxu0
    %v6986 = vadd.f32 %v5985, %v6985
    %v6987 = vpop.f32.mrf.mxu0
    %6988 = vdwg.mxu0
    %6989 = vmatpush.bf16.msra.mxu0 %v6641
    %6990 = vmatpush.bf16.msra.mxu0 %v6637
    %6991 = vmatpush.bf16.msra.mxu0 %v6633
    %6992 = vmatpush.bf16.msra.mxu0 %v6629
    %6993 = vmatpush.bf16.msra.mxu0 %v6625
    %6994 = vmatpush.bf16.msra.mxu0 %v6621
    %6995 = vmatpush.bf16.msra.mxu0 %v6617
    %6996 = vmatpush.bf16.msra.mxu0 %v6613
    %6997 = vmatmul.bf16.gmra.mxu0 %v5781
    %v6998 = vpop.f32.mrf.mxu0
    %v6999 = vadd.f32 %v6986, %v6998
    %v7000 = vpop.f32.mrf.mxu0
    %7001 = vdwg.mxu0
    %7002 = vmatpush.bf16.msra.mxu0 %v6673
    %7003 = vmatpush.bf16.msra.mxu0 %v6669
    %7004 = vmatpush.bf16.msra.mxu0 %v6665
    %7005 = vmatpush.bf16.msra.mxu0 %v6661
    %7006 = vmatpush.bf16.msra.mxu0 %v6657
    %7007 = vmatpush.bf16.msra.mxu0 %v6653
    %7008 = vmatpush.bf16.msra.mxu0 %v6649
    %7009 = vmatpush.bf16.msra.mxu0 %v6645
    %7010 = vmatmul.bf16.gmra.mxu0 %v5782
    %v7011 = vpop.f32.mrf.mxu0
    %v7012 = vadd.f32 %v6999, %v7011
    %v7013 = vpop.f32.mrf.mxu0
    %7014 = vdwg.mxu0
    %7015 = vmatpush.bf16.msra.mxu0 %v6705
    %7016 = vmatpush.bf16.msra.mxu0 %v6701
    %7017 = vmatpush.bf16.msra.mxu0 %v6697
    %7018 = vmatpush.bf16.msra.mxu0 %v6693
    %7019 = vmatpush.bf16.msra.mxu0 %v6689
    %7020 = vmatpush.bf16.msra.mxu0 %v6685
    %7021 = vmatpush.bf16.msra.mxu0 %v6681
    %7022 = vmatpush.bf16.msra.mxu0 %v6677
    %7023 = vmatmul.bf16.gmra.mxu0 %v5783
    %v7024 = vpop.f32.mrf.mxu0
    %v7025 = vadd.f32 %v7012, %v7024
    %v7026 = vpop.f32.mrf.mxu0
    %7027 = vdwg.mxu0
    %7028 = vmatpush.bf16.msra.mxu0 %v6737
    %7029 = vmatpush.bf16.msra.mxu0 %v6733
    %7030 = vmatpush.bf16.msra.mxu0 %v6729
    %7031 = vmatpush.bf16.msra.mxu0 %v6725
    %7032 = vmatpush.bf16.msra.mxu0 %v6721
    %7033 = vmatpush.bf16.msra.mxu0 %v6717
    %7034 = vmatpush.bf16.msra.mxu0 %v6713
    %7035 = vmatpush.bf16.msra.mxu0 %v6709
    %7036 = vmatmul.bf16.gmra.mxu0 %v5784
    %v7037 = vpop.f32.mrf.mxu0
    %v7038 = vadd.f32 %v7025, %v7037
    %v7039 = vpop.f32.mrf.mxu0
    %7040 = vdwg.mxu0
    %7041 = vmatpush.bf16.msra.mxu0 %v6769
    %7042 = vmatpush.bf16.msra.mxu0 %v6765
    %7043 = vmatpush.bf16.msra.mxu0 %v6761
    %7044 = vmatpush.bf16.msra.mxu0 %v6757
    %7045 = vmatpush.bf16.msra.mxu0 %v6753
    %7046 = vmatpush.bf16.msra.mxu0 %v6749
    %7047 = vmatpush.bf16.msra.mxu0 %v6745
    %7048 = vmatpush.bf16.msra.mxu0 %v6741
    %7049 = vmatmul.bf16.gmra.mxu0 %v5785
    %v7050 = vpop.f32.mrf.mxu0
    %v7051 = vadd.f32 %v7038, %v7050
    %v7052 = vpop.f32.mrf.mxu0
    %7053 = vdwg.mxu0
    %7054 = vmatpush.bf16.msra.mxu0 0
    %7055 = vmatpush.bf16.msra.mxu0 0
    %7056 = vmatpush.bf16.msra.mxu0 0
    %7057 = vmatpush.bf16.msra.mxu0 0
    %7058 = vmatpush.bf16.msra.mxu0 0
    %7059 = vmatpush.bf16.msra.mxu0 0
    %7060 = vmatpush.bf16.msra.mxu0 0
    %7061 = vmatpush.bf16.msra.mxu0 %v6773
    %7062 = vmatmul.bf16.gmra.mxu0 %v6974
    %v7063 = vpop.f32.mrf.mxu0
    %v7064 = vadd.f32 %v7051, %v7063
    %v7065 = vpop.f32.mrf.mxu0
    %7066 = vdwg.mxu0
    %7067 = vmatpush.bf16.msra.mxu0 %v6610
    %7068 = vmatpush.bf16.msra.mxu0 %v6606
    %7069 = vmatpush.bf16.msra.mxu0 %v6602
    %7070 = vmatpush.bf16.msra.mxu0 %v6598
    %7071 = vmatpush.bf16.msra.mxu0 %v6594
    %7072 = vmatpush.bf16.msra.mxu0 %v6590
    %7073 = vmatpush.bf16.msra.mxu0 %v6586
    %7074 = vmatpush.bf16.msra.mxu0 %v6582
    %7075 = vmatmul.bf16.gmra.mxu0 %v5780
    %v7076 = vpop.f32.mrf.mxu0
    %v7077 = vadd.f32 %v5986, %v7076
    %v7078 = vpop.f32.mrf.mxu0
    %7079 = vdwg.mxu0
    %7080 = vmatpush.bf16.msra.mxu0 %v6642
    %7081 = vmatpush.bf16.msra.mxu0 %v6638
    %7082 = vmatpush.bf16.msra.mxu0 %v6634
    %7083 = vmatpush.bf16.msra.mxu0 %v6630
    %7084 = vmatpush.bf16.msra.mxu0 %v6626
    %7085 = vmatpush.bf16.msra.mxu0 %v6622
    %7086 = vmatpush.bf16.msra.mxu0 %v6618
    %7087 = vmatpush.bf16.msra.mxu0 %v6614
    %7088 = vmatmul.bf16.gmra.mxu0 %v5781
    %v7089 = vpop.f32.mrf.mxu0
    %v7090 = vadd.f32 %v7077, %v7089
    %v7091 = vpop.f32.mrf.mxu0
    %7092 = vdwg.mxu0
    %7093 = vmatpush.bf16.msra.mxu0 %v6674
    %7094 = vmatpush.bf16.msra.mxu0 %v6670
    %7095 = vmatpush.bf16.msra.mxu0 %v6666
    %7096 = vmatpush.bf16.msra.mxu0 %v6662
    %7097 = vmatpush.bf16.msra.mxu0 %v6658
    %7098 = vmatpush.bf16.msra.mxu0 %v6654
    %7099 = vmatpush.bf16.msra.mxu0 %v6650
    %7100 = vmatpush.bf16.msra.mxu0 %v6646
    %7101 = vmatmul.bf16.gmra.mxu0 %v5782
    %v7102 = vpop.f32.mrf.mxu0
    %v7103 = vadd.f32 %v7090, %v7102
    %v7104 = vpop.f32.mrf.mxu0
    %7105 = vdwg.mxu0
    %7106 = vmatpush.bf16.msra.mxu0 %v6706
    %7107 = vmatpush.bf16.msra.mxu0 %v6702
    %7108 = vmatpush.bf16.msra.mxu0 %v6698
    %7109 = vmatpush.bf16.msra.mxu0 %v6694
    %7110 = vmatpush.bf16.msra.mxu0 %v6690
    %7111 = vmatpush.bf16.msra.mxu0 %v6686
    %7112 = vmatpush.bf16.msra.mxu0 %v6682
    %7113 = vmatpush.bf16.msra.mxu0 %v6678
    %7114 = vmatmul.bf16.gmra.mxu0 %v5783
    %v7115 = vpop.f32.mrf.mxu0
    %v7116 = vadd.f32 %v7103, %v7115
    %v7117 = vpop.f32.mrf.mxu0
    %7118 = vdwg.mxu0
    %7119 = vmatpush.bf16.msra.mxu0 %v6738
    %7120 = vmatpush.bf16.msra.mxu0 %v6734
    %7121 = vmatpush.bf16.msra.mxu0 %v6730
    %7122 = vmatpush.bf16.msra.mxu0 %v6726
    %7123 = vmatpush.bf16.msra.mxu0 %v6722
    %7124 = vmatpush.bf16.msra.mxu0 %v6718
    %7125 = vmatpush.bf16.msra.mxu0 %v6714
    %7126 = vmatpush.bf16.msra.mxu0 %v6710
    %7127 = vmatmul.bf16.gmra.mxu0 %v5784
    %v7128 = vpop.f32.mrf.mxu0
    %v7129 = vadd.f32 %v7116, %v7128
    %v7130 = vpop.f32.mrf.mxu0
    %7131 = vdwg.mxu0
    %7132 = vmatpush.bf16.msra.mxu0 %v6770
    %7133 = vmatpush.bf16.msra.mxu0 %v6766
    %7134 = vmatpush.bf16.msra.mxu0 %v6762
    %7135 = vmatpush.bf16.msra.mxu0 %v6758
    %7136 = vmatpush.bf16.msra.mxu0 %v6754
    %7137 = vmatpush.bf16.msra.mxu0 %v6750
    %7138 = vmatpush.bf16.msra.mxu0 %v6746
    %7139 = vmatpush.bf16.msra.mxu0 %v6742
    %7140 = vmatmul.bf16.gmra.mxu0 %v5785
    %v7141 = vpop.f32.mrf.mxu0
    %v7142 = vadd.f32 %v7129, %v7141
    %v7143 = vpop.f32.mrf.mxu0
    %7144 = vdwg.mxu0
    %7145 = vmatpush.bf16.msra.mxu0 0
    %7146 = vmatpush.bf16.msra.mxu0 0
    %7147 = vmatpush.bf16.msra.mxu0 0
    %7148 = vmatpush.bf16.msra.mxu0 0
    %7149 = vmatpush.bf16.msra.mxu0 0
    %7150 = vmatpush.bf16.msra.mxu0 0
    %7151 = vmatpush.bf16.msra.mxu0 0
    %7152 = vmatpush.bf16.msra.mxu0 %v6774
    %7153 = vmatmul.bf16.gmra.mxu0 %v6974
    %v7154 = vpop.f32.mrf.mxu0
    %v7155 = vadd.f32 %v7142, %v7154
    %v7156 = vpop.f32.mrf.mxu0
    %7157 = vdwg.mxu0
    %7158 = vmatpush.bf16.msra.mxu0 %v6611
    %7159 = vmatpush.bf16.msra.mxu0 %v6607
    %7160 = vmatpush.bf16.msra.mxu0 %v6603
    %7161 = vmatpush.bf16.msra.mxu0 %v6599
    %7162 = vmatpush.bf16.msra.mxu0 %v6595
    %7163 = vmatpush.bf16.msra.mxu0 %v6591
    %7164 = vmatpush.bf16.msra.mxu0 %v6587
    %7165 = vmatpush.bf16.msra.mxu0 %v6583
    %7166 = vmatmul.bf16.gmra.mxu0 %v5780
    %v7167 = vpop.f32.mrf.mxu0
    %v7168 = vadd.f32 %v5987, %v7167
    %v7169 = vpop.f32.mrf.mxu0
    %7170 = vdwg.mxu0
    %7171 = vmatpush.bf16.msra.mxu0 %v6643
    %7172 = vmatpush.bf16.msra.mxu0 %v6639
    %7173 = vmatpush.bf16.msra.mxu0 %v6635
    %7174 = vmatpush.bf16.msra.mxu0 %v6631
    %7175 = vmatpush.bf16.msra.mxu0 %v6627
    %7176 = vmatpush.bf16.msra.mxu0 %v6623
    %7177 = vmatpush.bf16.msra.mxu0 %v6619
    %7178 = vmatpush.bf16.msra.mxu0 %v6615
    %7179 = vmatmul.bf16.gmra.mxu0 %v5781
    %v7180 = vpop.f32.mrf.mxu0
    %v7181 = vadd.f32 %v7168, %v7180
    %v7182 = vpop.f32.mrf.mxu0
    %7183 = vdwg.mxu0
    %7184 = vmatpush.bf16.msra.mxu0 %v6675
    %7185 = vmatpush.bf16.msra.mxu0 %v6671
    %7186 = vmatpush.bf16.msra.mxu0 %v6667
    %7187 = vmatpush.bf16.msra.mxu0 %v6663
    %7188 = vmatpush.bf16.msra.mxu0 %v6659
    %7189 = vmatpush.bf16.msra.mxu0 %v6655
    %7190 = vmatpush.bf16.msra.mxu0 %v6651
    %7191 = vmatpush.bf16.msra.mxu0 %v6647
    %7192 = vmatmul.bf16.gmra.mxu0 %v5782
    %v7193 = vpop.f32.mrf.mxu0
    %v7194 = vadd.f32 %v7181, %v7193
    %v7195 = vpop.f32.mrf.mxu0
    %7196 = vdwg.mxu0
    %7197 = vmatpush.bf16.msra.mxu0 %v6707
    %7198 = vmatpush.bf16.msra.mxu0 %v6703
    %7199 = vmatpush.bf16.msra.mxu0 %v6699
    %7200 = vmatpush.bf16.msra.mxu0 %v6695
    %7201 = vmatpush.bf16.msra.mxu0 %v6691
    %7202 = vmatpush.bf16.msra.mxu0 %v6687
    %7203 = vmatpush.bf16.msra.mxu0 %v6683
    %7204 = vmatpush.bf16.msra.mxu0 %v6679
    %7205 = vmatmul.bf16.gmra.mxu0 %v5783
    %v7206 = vpop.f32.mrf.mxu0
    %v7207 = vadd.f32 %v7194, %v7206
    %v7208 = vpop.f32.mrf.mxu0
    %7209 = vdwg.mxu0
    %7210 = vmatpush.bf16.msra.mxu0 %v6739
    %7211 = vmatpush.bf16.msra.mxu0 %v6735
    %7212 = vmatpush.bf16.msra.mxu0 %v6731
    %7213 = vmatpush.bf16.msra.mxu0 %v6727
    %7214 = vmatpush.bf16.msra.mxu0 %v6723
    %7215 = vmatpush.bf16.msra.mxu0 %v6719
    %7216 = vmatpush.bf16.msra.mxu0 %v6715
    %7217 = vmatpush.bf16.msra.mxu0 %v6711
    %7218 = vmatmul.bf16.gmra.mxu0 %v5784
    %v7219 = vpop.f32.mrf.mxu0
    %v7220 = vadd.f32 %v7207, %v7219
    %v7221 = vpop.f32.mrf.mxu0
    %7222 = vdwg.mxu0
    %7223 = vmatpush.bf16.msra.mxu0 %v6771
    %7224 = vmatpush.bf16.msra.mxu0 %v6767
    %7225 = vmatpush.bf16.msra.mxu0 %v6763
    %7226 = vmatpush.bf16.msra.mxu0 %v6759
    %7227 = vmatpush.bf16.msra.mxu0 %v6755
    %7228 = vmatpush.bf16.msra.mxu0 %v6751
    %7229 = vmatpush.bf16.msra.mxu0 %v6747
    %7230 = vmatpush.bf16.msra.mxu0 %v6743
    %7231 = vmatmul.bf16.gmra.mxu0 %v5785
    %v7232 = vpop.f32.mrf.mxu0
    %v7233 = vadd.f32 %v7220, %v7232
    %v7234 = vpop.f32.mrf.mxu0
    %7235 = vdwg.mxu0
    %7236 = vmatpush.bf16.msra.mxu0 0
    %7237 = vmatpush.bf16.msra.mxu0 0
    %7238 = vmatpush.bf16.msra.mxu0 0
    %7239 = vmatpush.bf16.msra.mxu0 0
    %7240 = vmatpush.bf16.msra.mxu0 0
    %7241 = vmatpush.bf16.msra.mxu0 0
    %7242 = vmatpush.bf16.msra.mxu0 0
    %7243 = vmatpush.bf16.msra.mxu0 %v6775
    %7244 = vmatmul.bf16.gmra.mxu0 %v6974
    %v7245 = vpop.f32.mrf.mxu0
    %v7246 = vadd.f32 %v7233, %v7245
    %v7247 = vpop.f32.mrf.mxu0
    %7248 = vdwg.mxu0
    %7249 = vmatpush.bf16.msra.mxu0 %v6612
    %7250 = vmatpush.bf16.msra.mxu0 %v6608
    %7251 = vmatpush.bf16.msra.mxu0 %v6604
    %7252 = vmatpush.bf16.msra.mxu0 %v6600
    %7253 = vmatpush.bf16.msra.mxu0 %v6596
    %7254 = vmatpush.bf16.msra.mxu0 %v6592
    %7255 = vmatpush.bf16.msra.mxu0 %v6588
    %7256 = vmatpush.bf16.msra.mxu0 %v6584
    %7257 = vmatmul.bf16.gmra.mxu0 %v5780
    %v7258 = vpop.f32.mrf.mxu0
    %v7259 = vadd.f32 %v5988, %v7258
    %v7260 = vpop.f32.mrf.mxu0
    %7261 = vdwg.mxu0
    %7262 = vmatpush.bf16.msra.mxu0 %v6644
    %7263 = vmatpush.bf16.msra.mxu0 %v6640
    %7264 = vmatpush.bf16.msra.mxu0 %v6636
    %7265 = vmatpush.bf16.msra.mxu0 %v6632
    %7266 = vmatpush.bf16.msra.mxu0 %v6628
    %7267 = vmatpush.bf16.msra.mxu0 %v6624
    %7268 = vmatpush.bf16.msra.mxu0 %v6620
    %7269 = vmatpush.bf16.msra.mxu0 %v6616
    %7270 = vmatmul.bf16.gmra.mxu0 %v5781
    %v7271 = vpop.f32.mrf.mxu0
    %v7272 = vadd.f32 %v7259, %v7271
    %v7273 = vpop.f32.mrf.mxu0
    %7274 = vdwg.mxu0
    %7275 = vmatpush.bf16.msra.mxu0 %v6676
    %7276 = vmatpush.bf16.msra.mxu0 %v6672
    %7277 = vmatpush.bf16.msra.mxu0 %v6668
    %7278 = vmatpush.bf16.msra.mxu0 %v6664
    %7279 = vmatpush.bf16.msra.mxu0 %v6660
    %7280 = vmatpush.bf16.msra.mxu0 %v6656
    %7281 = vmatpush.bf16.msra.mxu0 %v6652
    %7282 = vmatpush.bf16.msra.mxu0 %v6648
    %7283 = vmatmul.bf16.gmra.mxu0 %v5782
    %v7284 = vpop.f32.mrf.mxu0
    %v7285 = vadd.f32 %v7272, %v7284
    %v7286 = vpop.f32.mrf.mxu0
    %7287 = vdwg.mxu0
    %7288 = vmatpush.bf16.msra.mxu0 %v6708
    %7289 = vmatpush.bf16.msra.mxu0 %v6704
    %7290 = vmatpush.bf16.msra.mxu0 %v6700
    %7291 = vmatpush.bf16.msra.mxu0 %v6696
    %7292 = vmatpush.bf16.msra.mxu0 %v6692
    %7293 = vmatpush.bf16.msra.mxu0 %v6688
    %7294 = vmatpush.bf16.msra.mxu0 %v6684
    %7295 = vmatpush.bf16.msra.mxu0 %v6680
    %7296 = vmatmul.bf16.gmra.mxu0 %v5783
    %v7297 = vpop.f32.mrf.mxu0
    %v7298 = vadd.f32 %v7285, %v7297
    %v7299 = vpop.f32.mrf.mxu0
    %7300 = vdwg.mxu0
    %7301 = vmatpush.bf16.msra.mxu0 %v6740
    %7302 = vmatpush.bf16.msra.mxu0 %v6736
    %7303 = vmatpush.bf16.msra.mxu0 %v6732
    %7304 = vmatpush.bf16.msra.mxu0 %v6728
    %7305 = vmatpush.bf16.msra.mxu0 %v6724
    %7306 = vmatpush.bf16.msra.mxu0 %v6720
    %7307 = vmatpush.bf16.msra.mxu0 %v6716
    %7308 = vmatpush.bf16.msra.mxu0 %v6712
    %7309 = vmatmul.bf16.gmra.mxu0 %v5784
    %v7310 = vpop.f32.mrf.mxu0
    %v7311 = vadd.f32 %v7298, %v7310
    %v7312 = vpop.f32.mrf.mxu0
    %7313 = vdwg.mxu0
    %7314 = vmatpush.bf16.msra.mxu0 %v6772
    %7315 = vmatpush.bf16.msra.mxu0 %v6768
    %7316 = vmatpush.bf16.msra.mxu0 %v6764
    %7317 = vmatpush.bf16.msra.mxu0 %v6760
    %7318 = vmatpush.bf16.msra.mxu0 %v6756
    %7319 = vmatpush.bf16.msra.mxu0 %v6752
    %7320 = vmatpush.bf16.msra.mxu0 %v6748
    %7321 = vmatpush.bf16.msra.mxu0 %v6744
    %7322 = vmatmul.bf16.gmra.mxu0 %v5785
    %v7323 = vpop.f32.mrf.mxu0
    %v7324 = vadd.f32 %v7311, %v7323
    %v7325 = vpop.f32.mrf.mxu0
    %7326 = vdwg.mxu0
    %7327 = vmatpush.bf16.msra.mxu0 0
    %7328 = vmatpush.bf16.msra.mxu0 0
    %7329 = vmatpush.bf16.msra.mxu0 0
    %7330 = vmatpush.bf16.msra.mxu0 0
    %7331 = vmatpush.bf16.msra.mxu0 0
    %7332 = vmatpush.bf16.msra.mxu0 0
    %7333 = vmatpush.bf16.msra.mxu0 0
    %7334 = vmatpush.bf16.msra.mxu0 %v6776
    %7335 = vmatmul.bf16.gmra.mxu0 %v6974
    %v7336 = vpop.f32.mrf.mxu0
    %v7337 = vadd.f32 %v7324, %v7336
    %v7338 = vpop.f32.mrf.mxu0
    %7339 = vdwg.mxu0
    %v7340 = vmax.f32 %v7064, 0.0
    %v7341 = vmax.f32 %v7155, 0.0
    %v7342 = vmax.f32 %v7246, 0.0
    %v7343 = vmax.f32 %v7337, 0.0
    %v7344 = vpack.c.bf16 %v7340, %v7340
    %v7345 = vpack.c.bf16 %v7341, %v7341
    %v7346 = vpack.c.bf16 %v7342, %v7342
    %v7347 = vpack.c.bf16 %v7343, %v7343
    %v7348 = vld [vmem:[%s7] sm:$0xff]
    %v7349 = vld [vmem:[%s7 + $0x8] sm:$0xff]
    %v7350 = vld [vmem:[%s7 + $0x10] sm:$0xff]
    %v7351 = vld [vmem:[%s7 + $0x18] sm:$0xf]
    %v7352 = vld [vmem:[%s7 + $0x1c] sm:$0xff]
    %v7353 = vld [vmem:[%s7 + $0x24] sm:$0xff]
    %v7354 = vld [vmem:[%s7 + $0x2c] sm:$0xff]
    %v7355 = vld [vmem:[%s7 + $0x34] sm:$0xf]
    %v7356 = vld [vmem:[%s7 + $0x38] sm:$0xff]
    %v7357 = vld [vmem:[%s7 + $0x40] sm:$0xff]
    %v7358 = vld [vmem:[%s7 + $0x48] sm:$0xff]
    %v7359 = vld [vmem:[%s7 + $0x50] sm:$0xf]
    %v7360 = vld [vmem:[%s7 + $0x54] sm:$0xff]
    %v7361 = vld [vmem:[%s7 + $0x5c] sm:$0xff]
    %v7362 = vld [vmem:[%s7 + $0x64] sm:$0xff]
    %v7363 = vld [vmem:[%s7 + $0x6c] sm:$0xf]
    %v7364 = vld [vmem:[%s7 + $0x70] sm:$0xff]
    %v7365 = vld [vmem:[%s7 + $0x78] sm:$0xff]
    %v7366 = vld [vmem:[%s7 + $0x80] sm:$0xff]
    %v7367 = vld [vmem:[%s7 + $0x88] sm:$0xf]
    %v7368 = vld [vmem:[%s7 + $0x8c] sm:$0xff]
    %v7369 = vld [vmem:[%s7 + $0x94] sm:$0xff]
    %v7370 = vld [vmem:[%s7 + $0x9c] sm:$0xff]
    %v7371 = vld [vmem:[%s7 + $0xa4] sm:$0xf]
    %v7372 = vld [vmem:[%s7 + $0xa8] sm:$0xff]
    %v7373 = vld [vmem:[%s7 + $0xb0] sm:$0xff]
    %v7374 = vld [vmem:[%s7 + $0xb8] sm:$0xff]
    %v7375 = vld [vmem:[%s7 + $0xc0] sm:$0xf]
    %v7376 = vld [vmem:[%s7 + $0xc4] sm:$0xff]
    %v7377 = vld [vmem:[%s7 + $0xcc] sm:$0xff]
    %v7378 = vld [vmem:[%s7 + $0xd4] sm:$0xff]
    %v7379 = vld [vmem:[%s7 + $0xdc] sm:$0xf]
    %v7380 = vld [vmem:[%s7 + $0xe0] sm:$0xff]
    %v7381 = vld [vmem:[%s7 + $0xe8] sm:$0xff]
    %v7382 = vld [vmem:[%s7 + $0xf0] sm:$0xff]
    %v7383 = vld [vmem:[%s7 + $0xf8] sm:$0xf]
    %v7384 = vld [vmem:[%s7 + $0xfc] sm:$0xff]
    %v7385 = vld [vmem:[%s7 + $0x104] sm:$0xff]
    %v7386 = vld [vmem:[%s7 + $0x10c] sm:$0xff]
    %v7387 = vld [vmem:[%s7 + $0x114] sm:$0xf]
    %v7388 = vld [vmem:[%s7 + $0x118] sm:$0xff]
    %v7389 = vld [vmem:[%s7 + $0x120] sm:$0xff]
    %v7390 = vld [vmem:[%s7 + $0x128] sm:$0xff]
    %v7391 = vld [vmem:[%s7 + $0x130] sm:$0xf]
    %v7392 = vld [vmem:[%s7 + $0x134] sm:$0xff]
    %v7393 = vld [vmem:[%s7 + $0x13c] sm:$0xff]
    %v7394 = vld [vmem:[%s7 + $0x144] sm:$0xff]
    %v7395 = vld [vmem:[%s7 + $0x14c] sm:$0xf]
    %v7396 = vld [vmem:[%s7 + $0x150] sm:$0xff]
    %v7397 = vld [vmem:[%s7 + $0x158] sm:$0xff]
    %v7398 = vld [vmem:[%s7 + $0x160] sm:$0xff]
    %v7399 = vld [vmem:[%s7 + $0x168] sm:$0xf]
    %v7400 = vld [vmem:[%s7 + $0x16c] sm:$0xff]
    %v7401 = vld [vmem:[%s7 + $0x174] sm:$0xff]
    %v7402 = vld [vmem:[%s7 + $0x17c] sm:$0xff]
    %v7403 = vld [vmem:[%s7 + $0x184] sm:$0xf]
    %v7404 = vld [vmem:[%s7 + $0x188] sm:$0xff]
    %v7405 = vld [vmem:[%s7 + $0x190] sm:$0xff]
    %v7406 = vld [vmem:[%s7 + $0x198] sm:$0xff]
    %v7407 = vld [vmem:[%s7 + $0x1a0] sm:$0xf]
    %v7408 = vld [vmem:[%s7 + $0x1a4] sm:$0xff]
    %v7409 = vld [vmem:[%s7 + $0x1ac] sm:$0xff]
    %v7410 = vld [vmem:[%s7 + $0x1b4] sm:$0xff]
    %v7411 = vld [vmem:[%s7 + $0x1bc] sm:$0xf]
    %v7412 = vld [vmem:[%s7 + $0x1c0] sm:$0xff]
    %v7413 = vld [vmem:[%s7 + $0x1c8] sm:$0xff]
    %v7414 = vld [vmem:[%s7 + $0x1d0] sm:$0xff]
    %v7415 = vld [vmem:[%s7 + $0x1d8] sm:$0xf]
    %v7416 = vld [vmem:[%s7 + $0x1dc] sm:$0xff]
    %v7417 = vld [vmem:[%s7 + $0x1e4] sm:$0xff]
    %v7418 = vld [vmem:[%s7 + $0x1ec] sm:$0xff]
    %v7419 = vld [vmem:[%s7 + $0x1f4] sm:$0xf]
    %v7420 = vld [vmem:[%s7 + $0x1f8] sm:$0xff]
    %v7421 = vld [vmem:[%s7 + $0x200] sm:$0xff]
    %v7422 = vld [vmem:[%s7 + $0x208] sm:$0xff]
    %v7423 = vld [vmem:[%s7 + $0x210] sm:$0xf]
    %v7424 = vld [vmem:[%s7 + $0x214] sm:$0xff]
    %v7425 = vld [vmem:[%s7 + $0x21c] sm:$0xff]
    %v7426 = vld [vmem:[%s7 + $0x224] sm:$0xff]
    %v7427 = vld [vmem:[%s7 + $0x22c] sm:$0xf]
    %v7428 = vld [vmem:[%s7 + $0x230] sm:$0xff]
    %v7429 = vld [vmem:[%s7 + $0x238] sm:$0xff]
    %v7430 = vld [vmem:[%s7 + $0x240] sm:$0xff]
    %v7431 = vld [vmem:[%s7 + $0x248] sm:$0xf]
    %v7432 = vld [vmem:[%s7 + $0x24c] sm:$0xff]
    %v7433 = vld [vmem:[%s7 + $0x254] sm:$0xff]
    %v7434 = vld [vmem:[%s7 + $0x25c] sm:$0xff]
    %v7435 = vld [vmem:[%s7 + $0x264] sm:$0xf]
    %v7436 = vld [vmem:[%s7 + $0x268] sm:$0xff]
    %v7437 = vld [vmem:[%s7 + $0x270] sm:$0xff]
    %v7438 = vld [vmem:[%s7 + $0x278] sm:$0xff]
    %v7439 = vld [vmem:[%s7 + $0x280] sm:$0xf]
    %v7440 = vld [vmem:[%s7 + $0x284] sm:$0xff]
    %v7441 = vld [vmem:[%s7 + $0x28c] sm:$0xff]
    %v7442 = vld [vmem:[%s7 + $0x294] sm:$0xff]
    %v7443 = vld [vmem:[%s7 + $0x29c] sm:$0xf]
    %v7444 = vld [vmem:[%s7 + $0x2a0] sm:$0xff]
    %v7445 = vld [vmem:[%s7 + $0x2a8] sm:$0xff]
    %v7446 = vld [vmem:[%s7 + $0x2b0] sm:$0xff]
    %v7447 = vld [vmem:[%s7 + $0x2b8] sm:$0xf]
    %v7448 = vld [vmem:[%s7 + $0x2bc] sm:$0xff]
    %v7449 = vld [vmem:[%s7 + $0x2c4] sm:$0xff]
    %v7450 = vld [vmem:[%s7 + $0x2cc] sm:$0xff]
    %v7451 = vld [vmem:[%s7 + $0x2d4] sm:$0xf]
    %v7452 = vld [vmem:[%s7 + $0x2d8] sm:$0xff]
    %v7453 = vld [vmem:[%s7 + $0x2e0] sm:$0xff]
    %v7454 = vld [vmem:[%s7 + $0x2e8] sm:$0xff]
    %v7455 = vld [vmem:[%s7 + $0x2f0] sm:$0xf]
    %v7456 = vld [vmem:[%s7 + $0x2f4] sm:$0xff]
    %v7457 = vld [vmem:[%s7 + $0x2fc] sm:$0xff]
    %v7458 = vld [vmem:[%s7 + $0x304] sm:$0xff]
    %v7459 = vld [vmem:[%s7 + $0x30c] sm:$0xf]
    %v7460 = vld [vmem:[%s7 + $0x310] sm:$0xff]
    %v7461 = vld [vmem:[%s7 + $0x318] sm:$0xff]
    %v7462 = vld [vmem:[%s7 + $0x320] sm:$0xff]
    %v7463 = vld [vmem:[%s7 + $0x328] sm:$0xf]
    %v7464 = vld [vmem:[%s7 + $0x32c] sm:$0xff]
    %v7465 = vld [vmem:[%s7 + $0x334] sm:$0xff]
    %v7466 = vld [vmem:[%s7 + $0x33c] sm:$0xff]
    %v7467 = vld [vmem:[%s7 + $0x344] sm:$0xf]
    %v7468 = vld [vmem:[%s7 + $0x348] sm:$0xff]
    %v7469 = vld [vmem:[%s7 + $0x350] sm:$0xff]
    %v7470 = vld [vmem:[%s7 + $0x358] sm:$0xff]
    %v7471 = vld [vmem:[%s7 + $0x360] sm:$0xf]
    %v7472 = vld [vmem:[%s7 + $0x364] sm:$0xff]
    %v7473 = vld [vmem:[%s7 + $0x36c] sm:$0xff]
    %v7474 = vld [vmem:[%s7 + $0x374] sm:$0xff]
    %v7475 = vld [vmem:[%s7 + $0x37c] sm:$0xf]
    %v7476 = vld [vmem:[%s7 + $0x380] sm:$0xff]
    %v7477 = vld [vmem:[%s7 + $0x388] sm:$0xff]
    %v7478 = vld [vmem:[%s7 + $0x390] sm:$0xff]
    %v7479 = vld [vmem:[%s7 + $0x398] sm:$0xf]
    %v7480 = vld [vmem:[%s7 + $0x39c] sm:$0xff]
    %v7481 = vld [vmem:[%s7 + $0x3a4] sm:$0xff]
    %v7482 = vld [vmem:[%s7 + $0x3ac] sm:$0xff]
    %v7483 = vld [vmem:[%s7 + $0x3b4] sm:$0xf]
    %v7484 = vld [vmem:[%s7 + $0x3b8] sm:$0xff]
    %v7485 = vld [vmem:[%s7 + $0x3c0] sm:$0xff]
    %v7486 = vld [vmem:[%s7 + $0x3c8] sm:$0xff]
    %v7487 = vld [vmem:[%s7 + $0x3d0] sm:$0xf]
    %v7488 = vld [vmem:[%s7 + $0x3d4] sm:$0xff]
    %v7489 = vld [vmem:[%s7 + $0x3dc] sm:$0xff]
    %v7490 = vld [vmem:[%s7 + $0x3e4] sm:$0xff]
    %v7491 = vld [vmem:[%s7 + $0x3ec] sm:$0xf]
    %v7492 = vld [vmem:[%s7 + $0x3f0] sm:$0xff]
    %v7493 = vld [vmem:[%s7 + $0x3f8] sm:$0xff]
    %v7494 = vld [vmem:[%s7 + $0x400] sm:$0xff]
    %v7495 = vld [vmem:[%s7 + $0x408] sm:$0xf]
    %v7496 = vld [vmem:[%s7 + $0x40c] sm:$0xff]
    %v7497 = vld [vmem:[%s7 + $0x414] sm:$0xff]
    %v7498 = vld [vmem:[%s7 + $0x41c] sm:$0xff]
    %v7499 = vld [vmem:[%s7 + $0x424] sm:$0xf]
    %v7500 = vld [vmem:[%s7 + $0x428] sm:$0xff]
    %v7501 = vld [vmem:[%s7 + $0x430] sm:$0xff]
    %v7502 = vld [vmem:[%s7 + $0x438] sm:$0xff]
    %v7503 = vld [vmem:[%s7 + $0x440] sm:$0xf]
    %v7504 = vld [vmem:[%s7 + $0x444] sm:$0xff]
    %v7505 = vld [vmem:[%s7 + $0x44c] sm:$0xff]
    %v7506 = vld [vmem:[%s7 + $0x454] sm:$0xff]
    %v7507 = vld [vmem:[%s7 + $0x45c] sm:$0xf]
    %v7508 = vld [vmem:[%s7 + $0x460] sm:$0xff]
    %v7509 = vld [vmem:[%s7 + $0x468] sm:$0xff]
    %v7510 = vld [vmem:[%s7 + $0x470] sm:$0xff]
    %v7511 = vld [vmem:[%s7 + $0x478] sm:$0xf]
    %v7512 = vld [vmem:[%s7 + $0x47c] sm:$0xff]
    %v7513 = vld [vmem:[%s7 + $0x484] sm:$0xff]
    %v7514 = vld [vmem:[%s7 + $0x48c] sm:$0xff]
    %v7515 = vld [vmem:[%s7 + $0x494] sm:$0xf]
    %v7516 = vld [vmem:[%s7 + $0x498] sm:$0xff]
    %v7517 = vld [vmem:[%s7 + $0x4a0] sm:$0xff]
    %v7518 = vld [vmem:[%s7 + $0x4a8] sm:$0xff]
    %v7519 = vld [vmem:[%s7 + $0x4b0] sm:$0xf]
    %v7520 = vld [vmem:[%s7 + $0x4b4] sm:$0xff]
    %v7521 = vld [vmem:[%s7 + $0x4bc] sm:$0xff]
    %v7522 = vld [vmem:[%s7 + $0x4c4] sm:$0xff]
    %v7523 = vld [vmem:[%s7 + $0x4cc] sm:$0xf]
    %v7524 = vld [vmem:[%s7 + $0x4d0] sm:$0xff]
    %v7525 = vld [vmem:[%s7 + $0x4d8] sm:$0xff]
    %v7526 = vld [vmem:[%s7 + $0x4e0] sm:$0xff]
    %v7527 = vld [vmem:[%s7 + $0x4e8] sm:$0xf]
    %v7528 = vld [vmem:[%s7 + $0x4ec] sm:$0xff]
    %v7529 = vld [vmem:[%s7 + $0x4f4] sm:$0xff]
    %v7530 = vld [vmem:[%s7 + $0x4fc] sm:$0xff]
    %v7531 = vld [vmem:[%s7 + $0x504] sm:$0xf]
    %v7532 = vld [vmem:[%s7 + $0x508] sm:$0xff]
    %v7533 = vld [vmem:[%s7 + $0x510] sm:$0xff]
    %v7534 = vld [vmem:[%s7 + $0x518] sm:$0xff]
    %v7535 = vld [vmem:[%s7 + $0x520] sm:$0xf]
    %v7536 = vld [vmem:[%s7 + $0x524] sm:$0xff]
    %v7537 = vld [vmem:[%s7 + $0x52c] sm:$0xff]
    %v7538 = vld [vmem:[%s7 + $0x534] sm:$0xff]
    %v7539 = vld [vmem:[%s7 + $0x53c] sm:$0xf]
    %v7540 = vld [vmem:[%s7 + $0x540] sm:$0xff]
    %v7541 = vld [vmem:[%s7 + $0x548] sm:$0xff]
    %v7542 = vld [vmem:[%s7 + $0x550] sm:$0xff]
    %v7543 = vld [vmem:[%s7 + $0x558] sm:$0xf]
    %v7544 = vld [vmem:[%s7 + $0x55c] sm:$0xff]
    %v7545 = vld [vmem:[%s7 + $0x564] sm:$0xff]
    %v7546 = vld [vmem:[%s7 + $0x56c] sm:$0xff]
    %v7547 = vld [vmem:[%s7 + $0x574] sm:$0xf]
    %v7548 = vld [vmem:[%s7 + $0x578] sm:$0xff]
    %v7549 = vld [vmem:[%s7 + $0x580] sm:$0xff]
    %v7550 = vld [vmem:[%s7 + $0x588] sm:$0xff]
    %v7551 = vld [vmem:[%s7 + $0x590] sm:$0xf]
    %v7552 = vld [vmem:[%s7 + $0x594] sm:$0xff]
    %v7553 = vld [vmem:[%s7 + $0x59c] sm:$0xff]
    %v7554 = vld [vmem:[%s7 + $0x5a4] sm:$0xff]
    %v7555 = vld [vmem:[%s7 + $0x5ac] sm:$0xf]
    %v7556 = vld [vmem:[%s7 + $0x5b0] sm:$0xff]
    %v7557 = vld [vmem:[%s7 + $0x5b8] sm:$0xff]
    %v7558 = vld [vmem:[%s7 + $0x5c0] sm:$0xff]
    %v7559 = vld [vmem:[%s7 + $0x5c8] sm:$0xf]
    %v7560 = vld [vmem:[%s7 + $0x5cc] sm:$0xff]
    %v7561 = vld [vmem:[%s7 + $0x5d4] sm:$0xff]
    %v7562 = vld [vmem:[%s7 + $0x5dc] sm:$0xff]
    %v7563 = vld [vmem:[%s7 + $0x5e4] sm:$0xf]
    %v7564 = vld [vmem:[%s7 + $0x5e8] sm:$0xff]
    %v7565 = vld [vmem:[%s7 + $0x5f0] sm:$0xff]
    %v7566 = vld [vmem:[%s7 + $0x5f8] sm:$0xff]
    %v7567 = vld [vmem:[%s7 + $0x600] sm:$0xf]
    %v7568 = vld [vmem:[%s7 + $0x604] sm:$0xff]
    %v7569 = vld [vmem:[%s7 + $0x60c] sm:$0xff]
    %v7570 = vld [vmem:[%s7 + $0x614] sm:$0xff]
    %v7571 = vld [vmem:[%s7 + $0x61c] sm:$0xf]
    %v7572 = vld [vmem:[%s7 + $0x620] sm:$0xff]
    %v7573 = vld [vmem:[%s7 + $0x628] sm:$0xff]
    %v7574 = vld [vmem:[%s7 + $0x630] sm:$0xff]
    %v7575 = vld [vmem:[%s7 + $0x638] sm:$0xf]
    %v7576 = vld [vmem:[%s7 + $0x63c] sm:$0xff]
    %v7577 = vld [vmem:[%s7 + $0x644] sm:$0xff]
    %v7578 = vld [vmem:[%s7 + $0x64c] sm:$0xff]
    %v7579 = vld [vmem:[%s7 + $0x654] sm:$0xf]
    %v7580 = vld [vmem:[%s7 + $0x658] sm:$0xff]
    %v7581 = vld [vmem:[%s7 + $0x660] sm:$0xff]
    %v7582 = vld [vmem:[%s7 + $0x668] sm:$0xff]
    %v7583 = vld [vmem:[%s7 + $0x670] sm:$0xf]
    %v7584 = vld [vmem:[%s8] sm:$0x7f]
    %v7586 = vperm.slane %v7584, 0
    %v7587 = vperm.slane %v7584, 1
    %v7588 = vperm.slane %v7584, 2
    %v7589 = vperm.slane %v7584, 3
    %v7590 = vperm.slane %v7584, 4
    %v7591 = vperm.slane %v7584, 5
    %v7592 = vperm.slane %v7584, 6
    %v7836 = vunpack.c.l.b16 %v7348
    %v7837 = vunpack.c.h.b16 %v7348
    %v7838 = vunpack.c.l.b16 %v7349
    %v7839 = vunpack.c.h.b16 %v7349
    %v7840 = vunpack.c.l.b16 %v7350
    %v7841 = vunpack.c.h.b16 %v7350
    %v7842 = vunpack.c.l.b16 %v7351
    %v7843 = vunpack.c.l.b16 %v7352
    %v7844 = vunpack.c.h.b16 %v7352
    %v7845 = vunpack.c.l.b16 %v7353
    %v7846 = vunpack.c.h.b16 %v7353
    %v7847 = vunpack.c.l.b16 %v7354
    %v7848 = vunpack.c.h.b16 %v7354
    %v7849 = vunpack.c.l.b16 %v7355
    %v7850 = vunpack.c.l.b16 %v7356
    %v7851 = vunpack.c.h.b16 %v7356
    %v7852 = vunpack.c.l.b16 %v7357
    %v7853 = vunpack.c.h.b16 %v7357
    %v7854 = vunpack.c.l.b16 %v7358
    %v7855 = vunpack.c.h.b16 %v7358
    %v7856 = vunpack.c.l.b16 %v7359
    %v7857 = vunpack.c.l.b16 %v7360
    %v7858 = vunpack.c.h.b16 %v7360
    %v7859 = vunpack.c.l.b16 %v7361
    %v7860 = vunpack.c.h.b16 %v7361
    %v7861 = vunpack.c.l.b16 %v7362
    %v7862 = vunpack.c.h.b16 %v7362
    %v7863 = vunpack.c.l.b16 %v7363
    %v7864 = vunpack.c.l.b16 %v7364
    %v7865 = vunpack.c.h.b16 %v7364
    %v7866 = vunpack.c.l.b16 %v7365
    %v7867 = vunpack.c.h.b16 %v7365
    %v7868 = vunpack.c.l.b16 %v7366
    %v7869 = vunpack.c.h.b16 %v7366
    %v7870 = vunpack.c.l.b16 %v7367
    %v7871 = vunpack.c.l.b16 %v7368
    %v7872 = vunpack.c.h.b16 %v7368
    %v7873 = vunpack.c.l.b16 %v7369
    %v7874 = vunpack.c.h.b16 %v7369
    %v7875 = vunpack.c.l.b16 %v7370
    %v7876 = vunpack.c.h.b16 %v7370
    %v7877 = vunpack.c.l.b16 %v7371
    %v7878 = vunpack.c.l.b16 %v7372
    %v7879 = vunpack.c.h.b16 %v7372
    %v7880 = vunpack.c.l.b16 %v7373
    %v7881 = vunpack.c.h.b16 %v7373
    %v7882 = vunpack.c.l.b16 %v7374
    %v7883 = vunpack.c.h.b16 %v7374
    %v7884 = vunpack.c.l.b16 %v7375
    %v7885 = vunpack.c.l.b16 %v7376
    %v7886 = vunpack.c.h.b16 %v7376
    %v7887 = vunpack.c.l.b16 %v7377
    %v7888 = vunpack.c.h.b16 %v7377
    %v7889 = vunpack.c.l.b16 %v7378
    %v7890 = vunpack.c.h.b16 %v7378
    %v7891 = vunpack.c.l.b16 %v7379
    %v7892 = vunpack.c.l.b16 %v7380
    %v7893 = vunpack.c.h.b16 %v7380
    %v7894 = vunpack.c.l.b16 %v7381
    %v7895 = vunpack.c.h.b16 %v7381
    %v7896 = vunpack.c.l.b16 %v7382
    %v7897 = vunpack.c.h.b16 %v7382
    %v7898 = vunpack.c.l.b16 %v7383
    %v7899 = vunpack.c.l.b16 %v7384
    %v7900 = vunpack.c.h.b16 %v7384
    %v7901 = vunpack.c.l.b16 %v7385
    %v7902 = vunpack.c.h.b16 %v7385
    %v7903 = vunpack.c.l.b16 %v7386
    %v7904 = vunpack.c.h.b16 %v7386
    %v7905 = vunpack.c.l.b16 %v7387
    %v7906 = vunpack.c.l.b16 %v7388
    %v7907 = vunpack.c.h.b16 %v7388
    %v7908 = vunpack.c.l.b16 %v7389
    %v7909 = vunpack.c.h.b16 %v7389
    %v7910 = vunpack.c.l.b16 %v7390
    %v7911 = vunpack.c.h.b16 %v7390
    %v7912 = vunpack.c.l.b16 %v7391
    %v7913 = vunpack.c.l.b16 %v7392
    %v7914 = vunpack.c.h.b16 %v7392
    %v7915 = vunpack.c.l.b16 %v7393
    %v7916 = vunpack.c.h.b16 %v7393
    %v7917 = vunpack.c.l.b16 %v7394
    %v7918 = vunpack.c.h.b16 %v7394
    %v7919 = vunpack.c.l.b16 %v7395
    %v7920 = vunpack.c.l.b16 %v7396
    %v7921 = vunpack.c.h.b16 %v7396
    %v7922 = vunpack.c.l.b16 %v7397
    %v7923 = vunpack.c.h.b16 %v7397
    %v7924 = vunpack.c.l.b16 %v7398
    %v7925 = vunpack.c.h.b16 %v7398
    %v7926 = vunpack.c.l.b16 %v7399
    %v7927 = vunpack.c.l.b16 %v7400
    %v7928 = vunpack.c.h.b16 %v7400
    %v7929 = vunpack.c.l.b16 %v7401
    %v7930 = vunpack.c.h.b16 %v7401
    %v7931 = vunpack.c.l.b16 %v7402
    %v7932 = vunpack.c.h.b16 %v7402
    %v7933 = vunpack.c.l.b16 %v7403
    %v7934 = vunpack.c.l.b16 %v7404
    %v7935 = vunpack.c.h.b16 %v7404
    %v7936 = vunpack.c.l.b16 %v7405
    %v7937 = vunpack.c.h.b16 %v7405
    %v7938 = vunpack.c.l.b16 %v7406
    %v7939 = vunpack.c.h.b16 %v7406
    %v7940 = vunpack.c.l.b16 %v7407
    %v7941 = vunpack.c.l.b16 %v7408
    %v7942 = vunpack.c.h.b16 %v7408
    %v7943 = vunpack.c.l.b16 %v7409
    %v7944 = vunpack.c.h.b16 %v7409
    %v7945 = vunpack.c.l.b16 %v7410
    %v7946 = vunpack.c.h.b16 %v7410
    %v7947 = vunpack.c.l.b16 %v7411
    %v7948 = vunpack.c.l.b16 %v7412
    %v7949 = vunpack.c.h.b16 %v7412
    %v7950 = vunpack.c.l.b16 %v7413
    %v7951 = vunpack.c.h.b16 %v7413
    %v7952 = vunpack.c.l.b16 %v7414
    %v7953 = vunpack.c.h.b16 %v7414
    %v7954 = vunpack.c.l.b16 %v7415
    %v7955 = vunpack.c.l.b16 %v7416
    %v7956 = vunpack.c.h.b16 %v7416
    %v7957 = vunpack.c.l.b16 %v7417
    %v7958 = vunpack.c.h.b16 %v7417
    %v7959 = vunpack.c.l.b16 %v7418
    %v7960 = vunpack.c.h.b16 %v7418
    %v7961 = vunpack.c.l.b16 %v7419
    %v7962 = vunpack.c.l.b16 %v7420
    %v7963 = vunpack.c.h.b16 %v7420
    %v7964 = vunpack.c.l.b16 %v7421
    %v7965 = vunpack.c.h.b16 %v7421
    %v7966 = vunpack.c.l.b16 %v7422
    %v7967 = vunpack.c.h.b16 %v7422
    %v7968 = vunpack.c.l.b16 %v7423
    %v7969 = vunpack.c.l.b16 %v7424
    %v7970 = vunpack.c.h.b16 %v7424
    %v7971 = vunpack.c.l.b16 %v7425
    %v7972 = vunpack.c.h.b16 %v7425
    %v7973 = vunpack.c.l.b16 %v7426
    %v7974 = vunpack.c.h.b16 %v7426
    %v7975 = vunpack.c.l.b16 %v7427
    %v7976 = vunpack.c.l.b16 %v7428
    %v7977 = vunpack.c.h.b16 %v7428
    %v7978 = vunpack.c.l.b16 %v7429
    %v7979 = vunpack.c.h.b16 %v7429
    %v7980 = vunpack.c.l.b16 %v7430
    %v7981 = vunpack.c.h.b16 %v7430
    %v7982 = vunpack.c.l.b16 %v7431
    %v7983 = vunpack.c.l.b16 %v7432
    %v7984 = vunpack.c.h.b16 %v7432
    %v7985 = vunpack.c.l.b16 %v7433
    %v7986 = vunpack.c.h.b16 %v7433
    %v7987 = vunpack.c.l.b16 %v7434
    %v7988 = vunpack.c.h.b16 %v7434
    %v7989 = vunpack.c.l.b16 %v7435
    %v7990 = vunpack.c.l.b16 %v7436
    %v7991 = vunpack.c.h.b16 %v7436
    %v7992 = vunpack.c.l.b16 %v7437
    %v7993 = vunpack.c.h.b16 %v7437
    %v7994 = vunpack.c.l.b16 %v7438
    %v7995 = vunpack.c.h.b16 %v7438
    %v7996 = vunpack.c.l.b16 %v7439
    %v7997 = vunpack.c.l.b16 %v7440
    %v7998 = vunpack.c.h.b16 %v7440
    %v7999 = vunpack.c.l.b16 %v7441
    %v8000 = vunpack.c.h.b16 %v7441
    %v8001 = vunpack.c.l.b16 %v7442
    %v8002 = vunpack.c.h.b16 %v7442
    %v8003 = vunpack.c.l.b16 %v7443
    %v8004 = vunpack.c.l.b16 %v7444
    %v8005 = vunpack.c.h.b16 %v7444
    %v8006 = vunpack.c.l.b16 %v7445
    %v8007 = vunpack.c.h.b16 %v7445
    %v8008 = vunpack.c.l.b16 %v7446
    %v8009 = vunpack.c.h.b16 %v7446
    %v8010 = vunpack.c.l.b16 %v7447
    %v8011 = vunpack.c.l.b16 %v7448
    %v8012 = vunpack.c.h.b16 %v7448
    %v8013 = vunpack.c.l.b16 %v7449
    %v8014 = vunpack.c.h.b16 %v7449
    %v8015 = vunpack.c.l.b16 %v7450
    %v8016 = vunpack.c.h.b16 %v7450
    %v8017 = vunpack.c.l.b16 %v7451
    %v8018 = vunpack.c.l.b16 %v7452
    %v8019 = vunpack.c.h.b16 %v7452
    %v8020 = vunpack.c.l.b16 %v7453
    %v8021 = vunpack.c.h.b16 %v7453
    %v8022 = vunpack.c.l.b16 %v7454
    %v8023 = vunpack.c.h.b16 %v7454
    %v8024 = vunpack.c.l.b16 %v7455
    %v8025 = vunpack.c.l.b16 %v7456
    %v8026 = vunpack.c.h.b16 %v7456
    %v8027 = vunpack.c.l.b16 %v7457
    %v8028 = vunpack.c.h.b16 %v7457
    %v8029 = vunpack.c.l.b16 %v7458
    %v8030 = vunpack.c.h.b16 %v7458
    %v8031 = vunpack.c.l.b16 %v7459
    %v8032 = vunpack.c.l.b16 %v7460
    %v8033 = vunpack.c.h.b16 %v7460
    %v8034 = vunpack.c.l.b16 %v7461
    %v8035 = vunpack.c.h.b16 %v7461
    %v8036 = vunpack.c.l.b16 %v7462
    %v8037 = vunpack.c.h.b16 %v7462
    %v8038 = vunpack.c.l.b16 %v7463
    %v8039 = vunpack.c.l.b16 %v7464
    %v8040 = vunpack.c.h.b16 %v7464
    %v8041 = vunpack.c.l.b16 %v7465
    %v8042 = vunpack.c.h.b16 %v7465
    %v8043 = vunpack.c.l.b16 %v7466
    %v8044 = vunpack.c.h.b16 %v7466
    %v8045 = vunpack.c.l.b16 %v7467
    %v8046 = vunpack.c.l.b16 %v7468
    %v8047 = vunpack.c.h.b16 %v7468
    %v8048 = vunpack.c.l.b16 %v7469
    %v8049 = vunpack.c.h.b16 %v7469
    %v8050 = vunpack.c.l.b16 %v7470
    %v8051 = vunpack.c.h.b16 %v7470
    %v8052 = vunpack.c.l.b16 %v7471
    %v8053 = vunpack.c.l.b16 %v7472
    %v8054 = vunpack.c.h.b16 %v7472
    %v8055 = vunpack.c.l.b16 %v7473
    %v8056 = vunpack.c.h.b16 %v7473
    %v8057 = vunpack.c.l.b16 %v7474
    %v8058 = vunpack.c.h.b16 %v7474
    %v8059 = vunpack.c.l.b16 %v7475
    %v8060 = vunpack.c.l.b16 %v7476
    %v8061 = vunpack.c.h.b16 %v7476
    %v8062 = vunpack.c.l.b16 %v7477
    %v8063 = vunpack.c.h.b16 %v7477
    %v8064 = vunpack.c.l.b16 %v7478
    %v8065 = vunpack.c.h.b16 %v7478
    %v8066 = vunpack.c.l.b16 %v7479
    %v8067 = vunpack.c.l.b16 %v7480
    %v8068 = vunpack.c.h.b16 %v7480
    %v8069 = vunpack.c.l.b16 %v7481
    %v8070 = vunpack.c.h.b16 %v7481
    %v8071 = vunpack.c.l.b16 %v7482
    %v8072 = vunpack.c.h.b16 %v7482
    %v8073 = vunpack.c.l.b16 %v7483
    %v8074 = vunpack.c.l.b16 %v7484
    %v8075 = vunpack.c.h.b16 %v7484
    %v8076 = vunpack.c.l.b16 %v7485
    %v8077 = vunpack.c.h.b16 %v7485
    %v8078 = vunpack.c.l.b16 %v7486
    %v8079 = vunpack.c.h.b16 %v7486
    %v8080 = vunpack.c.l.b16 %v7487
    %v8081 = vunpack.c.l.b16 %v7488
    %v8082 = vunpack.c.h.b16 %v7488
    %v8083 = vunpack.c.l.b16 %v7489
    %v8084 = vunpack.c.h.b16 %v7489
    %v8085 = vunpack.c.l.b16 %v7490
    %v8086 = vunpack.c.h.b16 %v7490
    %v8087 = vunpack.c.l.b16 %v7491
    %v8088 = vunpack.c.l.b16 %v7492
    %v8089 = vunpack.c.h.b16 %v7492
    %v8090 = vunpack.c.l.b16 %v7493
    %v8091 = vunpack.c.h.b16 %v7493
    %v8092 = vunpack.c.l.b16 %v7494
    %v8093 = vunpack.c.h.b16 %v7494
    %v8094 = vunpack.c.l.b16 %v7495
    %v8095 = vunpack.c.l.b16 %v7496
    %v8096 = vunpack.c.h.b16 %v7496
    %v8097 = vunpack.c.l.b16 %v7497
    %v8098 = vunpack.c.h.b16 %v7497
    %v8099 = vunpack.c.l.b16 %v7498
    %v8100 = vunpack.c.h.b16 %v7498
    %v8101 = vunpack.c.l.b16 %v7499
    %v8102 = vunpack.c.l.b16 %v7500
    %v8103 = vunpack.c.h.b16 %v7500
    %v8104 = vunpack.c.l.b16 %v7501
    %v8105 = vunpack.c.h.b16 %v7501
    %v8106 = vunpack.c.l.b16 %v7502
    %v8107 = vunpack.c.h.b16 %v7502
    %v8108 = vunpack.c.l.b16 %v7503
    %v8109 = vunpack.c.l.b16 %v7504
    %v8110 = vunpack.c.h.b16 %v7504
    %v8111 = vunpack.c.l.b16 %v7505
    %v8112 = vunpack.c.h.b16 %v7505
    %v8113 = vunpack.c.l.b16 %v7506
    %v8114 = vunpack.c.h.b16 %v7506
    %v8115 = vunpack.c.l.b16 %v7507
    %v8116 = vunpack.c.l.b16 %v7508
    %v8117 = vunpack.c.h.b16 %v7508
    %v8118 = vunpack.c.l.b16 %v7509
    %v8119 = vunpack.c.h.b16 %v7509
    %v8120 = vunpack.c.l.b16 %v7510
    %v8121 = vunpack.c.h.b16 %v7510
    %v8122 = vunpack.c.l.b16 %v7511
    %v8123 = vunpack.c.l.b16 %v7512
    %v8124 = vunpack.c.h.b16 %v7512
    %v8125 = vunpack.c.l.b16 %v7513
    %v8126 = vunpack.c.h.b16 %v7513
    %v8127 = vunpack.c.l.b16 %v7514
    %v8128 = vunpack.c.h.b16 %v7514
    %v8129 = vunpack.c.l.b16 %v7515
    %v8130 = vunpack.c.l.b16 %v7516
    %v8131 = vunpack.c.h.b16 %v7516
    %v8132 = vunpack.c.l.b16 %v7517
    %v8133 = vunpack.c.h.b16 %v7517
    %v8134 = vunpack.c.l.b16 %v7518
    %v8135 = vunpack.c.h.b16 %v7518
    %v8136 = vunpack.c.l.b16 %v7519
    %v8137 = vunpack.c.l.b16 %v7520
    %v8138 = vunpack.c.h.b16 %v7520
    %v8139 = vunpack.c.l.b16 %v7521
    %v8140 = vunpack.c.h.b16 %v7521
    %v8141 = vunpack.c.l.b16 %v7522
    %v8142 = vunpack.c.h.b16 %v7522
    %v8143 = vunpack.c.l.b16 %v7523
    %v8144 = vunpack.c.l.b16 %v7524
    %v8145 = vunpack.c.h.b16 %v7524
    %v8146 = vunpack.c.l.b16 %v7525
    %v8147 = vunpack.c.h.b16 %v7525
    %v8148 = vunpack.c.l.b16 %v7526
    %v8149 = vunpack.c.h.b16 %v7526
    %v8150 = vunpack.c.l.b16 %v7527
    %v8151 = vunpack.c.l.b16 %v7528
    %v8152 = vunpack.c.h.b16 %v7528
    %v8153 = vunpack.c.l.b16 %v7529
    %v8154 = vunpack.c.h.b16 %v7529
    %v8155 = vunpack.c.l.b16 %v7530
    %v8156 = vunpack.c.h.b16 %v7530
    %v8157 = vunpack.c.l.b16 %v7531
    %v8158 = vunpack.c.l.b16 %v7532
    %v8159 = vunpack.c.h.b16 %v7532
    %v8160 = vunpack.c.l.b16 %v7533
    %v8161 = vunpack.c.h.b16 %v7533
    %v8162 = vunpack.c.l.b16 %v7534
    %v8163 = vunpack.c.h.b16 %v7534
    %v8164 = vunpack.c.l.b16 %v7535
    %v8165 = vunpack.c.l.b16 %v7536
    %v8166 = vunpack.c.h.b16 %v7536
    %v8167 = vunpack.c.l.b16 %v7537
    %v8168 = vunpack.c.h.b16 %v7537
    %v8169 = vunpack.c.l.b16 %v7538
    %v8170 = vunpack.c.h.b16 %v7538
    %v8171 = vunpack.c.l.b16 %v7539
    %v8172 = vunpack.c.l.b16 %v7540
    %v8173 = vunpack.c.h.b16 %v7540
    %v8174 = vunpack.c.l.b16 %v7541
    %v8175 = vunpack.c.h.b16 %v7541
    %v8176 = vunpack.c.l.b16 %v7542
    %v8177 = vunpack.c.h.b16 %v7542
    %v8178 = vunpack.c.l.b16 %v7543
    %v8179 = vunpack.c.l.b16 %v7544
    %v8180 = vunpack.c.h.b16 %v7544
    %v8181 = vunpack.c.l.b16 %v7545
    %v8182 = vunpack.c.h.b16 %v7545
    %v8183 = vunpack.c.l.b16 %v7546
    %v8184 = vunpack.c.h.b16 %v7546
    %v8185 = vunpack.c.l.b16 %v7547
    %v8186 = vunpack.c.l.b16 %v7548
    %v8187 = vunpack.c.h.b16 %v7548
    %v8188 = vunpack.c.l.b16 %v7549
    %v8189 = vunpack.c.h.b16 %v7549
    %v8190 = vunpack.c.l.b16 %v7550
    %v8191 = vunpack.c.h.b16 %v7550
    %v8192 = vunpack.c.l.b16 %v7551
    %v8193 = vunpack.c.l.b16 %v7552
    %v8194 = vunpack.c.h.b16 %v7552
    %v8195 = vunpack.c.l.b16 %v7553
    %v8196 = vunpack.c.h.b16 %v7553
    %v8197 = vunpack.c.l.b16 %v7554
    %v8198 = vunpack.c.h.b16 %v7554
    %v8199 = vunpack.c.l.b16 %v7555
    %v8200 = vunpack.c.l.b16 %v7556
    %v8201 = vunpack.c.h.b16 %v7556
    %v8202 = vunpack.c.l.b16 %v7557
    %v8203 = vunpack.c.h.b16 %v7557
    %v8204 = vunpack.c.l.b16 %v7558
    %v8205 = vunpack.c.h.b16 %v7558
    %v8206 = vunpack.c.l.b16 %v7559
    %v8207 = vunpack.c.l.b16 %v7560
    %v8208 = vunpack.c.h.b16 %v7560
    %v8209 = vunpack.c.l.b16 %v7561
    %v8210 = vunpack.c.h.b16 %v7561
    %v8211 = vunpack.c.l.b16 %v7562
    %v8212 = vunpack.c.h.b16 %v7562
    %v8213 = vunpack.c.l.b16 %v7563
    %v8214 = vunpack.c.l.b16 %v7564
    %v8215 = vunpack.c.h.b16 %v7564
    %v8216 = vunpack.c.l.b16 %v7565
    %v8217 = vunpack.c.h.b16 %v7565
    %v8218 = vunpack.c.l.b16 %v7566
    %v8219 = vunpack.c.h.b16 %v7566
    %v8220 = vunpack.c.l.b16 %v7567
    %v8221 = vunpack.c.l.b16 %v7568
    %v8222 = vunpack.c.h.b16 %v7568
    %v8223 = vunpack.c.l.b16 %v7569
    %v8224 = vunpack.c.h.b16 %v7569
    %v8225 = vunpack.c.l.b16 %v7570
    %v8226 = vunpack.c.h.b16 %v7570
    %v8227 = vunpack.c.l.b16 %v7571
    %v8228 = vunpack.c.l.b16 %v7572
    %v8229 = vunpack.c.h.b16 %v7572
    %v8230 = vunpack.c.l.b16 %v7573
    %v8231 = vunpack.c.h.b16 %v7573
    %v8232 = vunpack.c.l.b16 %v7574
    %v8233 = vunpack.c.h.b16 %v7574
    %v8234 = vunpack.c.l.b16 %v7575
    %v8235 = vunpack.c.l.b16 %v7576
    %v8236 = vunpack.c.h.b16 %v7576
    %v8237 = vunpack.c.l.b16 %v7577
    %v8238 = vunpack.c.h.b16 %v7577
    %v8239 = vunpack.c.l.b16 %v7578
    %v8240 = vunpack.c.h.b16 %v7578
    %v8241 = vunpack.c.l.b16 %v7579
    %v8242 = vunpack.c.l.b16 %v7580
    %v8243 = vunpack.c.h.b16 %v7580
    %v8244 = vunpack.c.l.b16 %v7581
    %v8245 = vunpack.c.h.b16 %v7581
    %v8246 = vunpack.c.l.b16 %v7582
    %v8247 = vunpack.c.h.b16 %v7582
    %v8248 = vunpack.c.l.b16 %v7583
    %v8249 = vpack.c.b16 %v7843, %v7836
    %v8250 = vpack.c.b16 %v7844, %v7837
    %v8251 = vpack.c.b16 %v7845, %v7838
    %v8252 = vpack.c.b16 %v7846, %v7839
    %v8253 = vpack.c.b16 %v7847, %v7840
    %v8254 = vpack.c.b16 %v7848, %v7841
    %v8255 = vpack.c.b16 %v7849, %v7842
    %v8256 = vpack.c.b16 %v7857, %v7850
    %v8257 = vpack.c.b16 %v7858, %v7851
    %v8258 = vpack.c.b16 %v7859, %v7852
    %v8259 = vpack.c.b16 %v7860, %v7853
    %v8260 = vpack.c.b16 %v7861, %v7854
    %v8261 = vpack.c.b16 %v7862, %v7855
    %v8262 = vpack.c.b16 %v7863, %v7856
    %v8263 = vpack.c.b16 %v7871, %v7864
    %v8264 = vpack.c.b16 %v7872, %v7865
    %v8265 = vpack.c.b16 %v7873, %v7866
    %v8266 = vpack.c.b16 %v7874, %v7867
    %v8267 = vpack.c.b16 %v7875, %v7868
    %v8268 = vpack.c.b16 %v7876, %v7869
    %v8269 = vpack.c.b16 %v7877, %v7870
    %v8270 = vpack.c.b16 %v7885, %v7878
    %v8271 = vpack.c.b16 %v7886, %v7879
    %v8272 = vpack.c.b16 %v7887, %v7880
    %v8273 = vpack.c.b16 %v7888, %v7881
    %v8274 = vpack.c.b16 %v7889, %v7882
    %v8275 = vpack.c.b16 %v7890, %v7883
    %v8276 = vpack.c.b16 %v7891, %v7884
    %v8277 = vpack.c.b16 %v7899, %v7892
    %v8278 = vpack.c.b16 %v7900, %v7893
    %v8279 = vpack.c.b16 %v7901, %v7894
    %v8280 = vpack.c.b16 %v7902, %v7895
    %v8281 = vpack.c.b16 %v7903, %v7896
    %v8282 = vpack.c.b16 %v7904, %v7897
    %v8283 = vpack.c.b16 %v7905, %v7898
    %v8284 = vpack.c.b16 %v7913, %v7906
    %v8285 = vpack.c.b16 %v7914, %v7907
    %v8286 = vpack.c.b16 %v7915, %v7908
    %v8287 = vpack.c.b16 %v7916, %v7909
    %v8288 = vpack.c.b16 %v7917, %v7910
    %v8289 = vpack.c.b16 %v7918, %v7911
    %v8290 = vpack.c.b16 %v7919, %v7912
    %v8291 = vpack.c.b16 %v7927, %v7920
    %v8292 = vpack.c.b16 %v7928, %v7921
    %v8293 = vpack.c.b16 %v7929, %v7922
    %v8294 = vpack.c.b16 %v7930, %v7923
    %v8295 = vpack.c.b16 %v7931, %v7924
    %v8296 = vpack.c.b16 %v7932, %v7925
    %v8297 = vpack.c.b16 %v7933, %v7926
    %v8298 = vpack.c.b16 %v7941, %v7934
    %v8299 = vpack.c.b16 %v7942, %v7935
    %v8300 = vpack.c.b16 %v7943, %v7936
    %v8301 = vpack.c.b16 %v7944, %v7937
    %v8302 = vpack.c.b16 %v7945, %v7938
    %v8303 = vpack.c.b16 %v7946, %v7939
    %v8304 = vpack.c.b16 %v7947, %v7940
    %v8305 = vpack.c.b16 %v7955, %v7948
    %v8306 = vpack.c.b16 %v7956, %v7949
    %v8307 = vpack.c.b16 %v7957, %v7950
    %v8308 = vpack.c.b16 %v7958, %v7951
    %v8309 = vpack.c.b16 %v7959, %v7952
    %v8310 = vpack.c.b16 %v7960, %v7953
    %v8311 = vpack.c.b16 %v7961, %v7954
    %v8312 = vpack.c.b16 %v7969, %v7962
    %v8313 = vpack.c.b16 %v7970, %v7963
    %v8314 = vpack.c.b16 %v7971, %v7964
    %v8315 = vpack.c.b16 %v7972, %v7965
    %v8316 = vpack.c.b16 %v7973, %v7966
    %v8317 = vpack.c.b16 %v7974, %v7967
    %v8318 = vpack.c.b16 %v7975, %v7968
    %v8319 = vpack.c.b16 %v7983, %v7976
    %v8320 = vpack.c.b16 %v7984, %v7977
    %v8321 = vpack.c.b16 %v7985, %v7978
    %v8322 = vpack.c.b16 %v7986, %v7979
    %v8323 = vpack.c.b16 %v7987, %v7980
    %v8324 = vpack.c.b16 %v7988, %v7981
    %v8325 = vpack.c.b16 %v7989, %v7982
    %v8326 = vpack.c.b16 %v7997, %v7990
    %v8327 = vpack.c.b16 %v7998, %v7991
    %v8328 = vpack.c.b16 %v7999, %v7992
    %v8329 = vpack.c.b16 %v8000, %v7993
    %v8330 = vpack.c.b16 %v8001, %v7994
    %v8331 = vpack.c.b16 %v8002, %v7995
    %v8332 = vpack.c.b16 %v8003, %v7996
    %v8333 = vpack.c.b16 %v8011, %v8004
    %v8334 = vpack.c.b16 %v8012, %v8005
    %v8335 = vpack.c.b16 %v8013, %v8006
    %v8336 = vpack.c.b16 %v8014, %v8007
    %v8337 = vpack.c.b16 %v8015, %v8008
    %v8338 = vpack.c.b16 %v8016, %v8009
    %v8339 = vpack.c.b16 %v8017, %v8010
    %v8340 = vpack.c.b16 %v8025, %v8018
    %v8341 = vpack.c.b16 %v8026, %v8019
    %v8342 = vpack.c.b16 %v8027, %v8020
    %v8343 = vpack.c.b16 %v8028, %v8021
    %v8344 = vpack.c.b16 %v8029, %v8022
    %v8345 = vpack.c.b16 %v8030, %v8023
    %v8346 = vpack.c.b16 %v8031, %v8024
    %v8347 = vpack.c.b16 %v8039, %v8032
    %v8348 = vpack.c.b16 %v8040, %v8033
    %v8349 = vpack.c.b16 %v8041, %v8034
    %v8350 = vpack.c.b16 %v8042, %v8035
    %v8351 = vpack.c.b16 %v8043, %v8036
    %v8352 = vpack.c.b16 %v8044, %v8037
    %v8353 = vpack.c.b16 %v8045, %v8038
    %v8354 = vpack.c.b16 %v8053, %v8046
    %v8355 = vpack.c.b16 %v8054, %v8047
    %v8356 = vpack.c.b16 %v8055, %v8048
    %v8357 = vpack.c.b16 %v8056, %v8049
    %v8358 = vpack.c.b16 %v8057, %v8050
    %v8359 = vpack.c.b16 %v8058, %v8051
    %v8360 = vpack.c.b16 %v8059, %v8052
    %v8361 = vpack.c.b16 %v8067, %v8060
    %v8362 = vpack.c.b16 %v8068, %v8061
    %v8363 = vpack.c.b16 %v8069, %v8062
    %v8364 = vpack.c.b16 %v8070, %v8063
    %v8365 = vpack.c.b16 %v8071, %v8064
    %v8366 = vpack.c.b16 %v8072, %v8065
    %v8367 = vpack.c.b16 %v8073, %v8066
    %v8368 = vpack.c.b16 %v8081, %v8074
    %v8369 = vpack.c.b16 %v8082, %v8075
    %v8370 = vpack.c.b16 %v8083, %v8076
    %v8371 = vpack.c.b16 %v8084, %v8077
    %v8372 = vpack.c.b16 %v8085, %v8078
    %v8373 = vpack.c.b16 %v8086, %v8079
    %v8374 = vpack.c.b16 %v8087, %v8080
    %v8375 = vpack.c.b16 %v8095, %v8088
    %v8376 = vpack.c.b16 %v8096, %v8089
    %v8377 = vpack.c.b16 %v8097, %v8090
    %v8378 = vpack.c.b16 %v8098, %v8091
    %v8379 = vpack.c.b16 %v8099, %v8092
    %v8380 = vpack.c.b16 %v8100, %v8093
    %v8381 = vpack.c.b16 %v8101, %v8094
    %v8382 = vpack.c.b16 %v8109, %v8102
    %v8383 = vpack.c.b16 %v8110, %v8103
    %v8384 = vpack.c.b16 %v8111, %v8104
    %v8385 = vpack.c.b16 %v8112, %v8105
    %v8386 = vpack.c.b16 %v8113, %v8106
    %v8387 = vpack.c.b16 %v8114, %v8107
    %v8388 = vpack.c.b16 %v8115, %v8108
    %v8389 = vpack.c.b16 %v8123, %v8116
    %v8390 = vpack.c.b16 %v8124, %v8117
    %v8391 = vpack.c.b16 %v8125, %v8118
    %v8392 = vpack.c.b16 %v8126, %v8119
    %v8393 = vpack.c.b16 %v8127, %v8120
    %v8394 = vpack.c.b16 %v8128, %v8121
    %v8395 = vpack.c.b16 %v8129, %v8122
    %v8396 = vpack.c.b16 %v8137, %v8130
    %v8397 = vpack.c.b16 %v8138, %v8131
    %v8398 = vpack.c.b16 %v8139, %v8132
    %v8399 = vpack.c.b16 %v8140, %v8133
    %v8400 = vpack.c.b16 %v8141, %v8134
    %v8401 = vpack.c.b16 %v8142, %v8135
    %v8402 = vpack.c.b16 %v8143, %v8136
    %v8403 = vpack.c.b16 %v8151, %v8144
    %v8404 = vpack.c.b16 %v8152, %v8145
    %v8405 = vpack.c.b16 %v8153, %v8146
    %v8406 = vpack.c.b16 %v8154, %v8147
    %v8407 = vpack.c.b16 %v8155, %v8148
    %v8408 = vpack.c.b16 %v8156, %v8149
    %v8409 = vpack.c.b16 %v8157, %v8150
    %v8410 = vpack.c.b16 %v8165, %v8158
    %v8411 = vpack.c.b16 %v8166, %v8159
    %v8412 = vpack.c.b16 %v8167, %v8160
    %v8413 = vpack.c.b16 %v8168, %v8161
    %v8414 = vpack.c.b16 %v8169, %v8162
    %v8415 = vpack.c.b16 %v8170, %v8163
    %v8416 = vpack.c.b16 %v8171, %v8164
    %v8417 = vpack.c.b16 %v8179, %v8172
    %v8418 = vpack.c.b16 %v8180, %v8173
    %v8419 = vpack.c.b16 %v8181, %v8174
    %v8420 = vpack.c.b16 %v8182, %v8175
    %v8421 = vpack.c.b16 %v8183, %v8176
    %v8422 = vpack.c.b16 %v8184, %v8177
    %v8423 = vpack.c.b16 %v8185, %v8178
    %v8424 = vpack.c.b16 %v8193, %v8186
    %v8425 = vpack.c.b16 %v8194, %v8187
    %v8426 = vpack.c.b16 %v8195, %v8188
    %v8427 = vpack.c.b16 %v8196, %v8189
    %v8428 = vpack.c.b16 %v8197, %v8190
    %v8429 = vpack.c.b16 %v8198, %v8191
    %v8430 = vpack.c.b16 %v8199, %v8192
    %v8431 = vpack.c.b16 %v8207, %v8200
    %v8432 = vpack.c.b16 %v8208, %v8201
    %v8433 = vpack.c.b16 %v8209, %v8202
    %v8434 = vpack.c.b16 %v8210, %v8203
    %v8435 = vpack.c.b16 %v8211, %v8204
    %v8436 = vpack.c.b16 %v8212, %v8205
    %v8437 = vpack.c.b16 %v8213, %v8206
    %v8438 = vpack.c.b16 %v8221, %v8214
    %v8439 = vpack.c.b16 %v8222, %v8215
    %v8440 = vpack.c.b16 %v8223, %v8216
    %v8441 = vpack.c.b16 %v8224, %v8217
    %v8442 = vpack.c.b16 %v8225, %v8218
    %v8443 = vpack.c.b16 %v8226, %v8219
    %v8444 = vpack.c.b16 %v8227, %v8220
    %v8445 = vpack.c.b16 %v8235, %v8228
    %v8446 = vpack.c.b16 %v8236, %v8229
    %v8447 = vpack.c.b16 %v8237, %v8230
    %v8448 = vpack.c.b16 %v8238, %v8231
    %v8449 = vpack.c.b16 %v8239, %v8232
    %v8450 = vpack.c.b16 %v8240, %v8233
    %v8451 = vpack.c.b16 %v8241, %v8234
    %v8452 = vpack.c.b16 %v8242, %v8242
    %v8453 = vpack.c.b16 %v8243, %v8243
    %v8454 = vpack.c.b16 %v8244, %v8244
    %v8455 = vpack.c.b16 %v8245, %v8245
    %v8456 = vpack.c.b16 %v8246, %v8246
    %v8457 = vpack.c.b16 %v8247, %v8247
    %v8458 = vpack.c.b16 %v8248, %v8248
    %vm8662 = vcmask 719872
    %v8664 = vsel %vm8662, %v7347, 0
    %vm8666 = vcmask 1043456
    %v8668 = vsel %vm8666, %v8452, 0
    %v8671 = vsel %vm8666, %v8453, 0
    %v8674 = vsel %vm8666, %v8454, 0
    %v8677 = vsel %vm8666, %v8455, 0
    %v8680 = vsel %vm8666, %v8456, 0
    %v8683 = vsel %vm8666, %v8457, 0
    %v8686 = vsel %vm8666, %v8458, 0
    %8688 = vmatpush.bf16.msra.mxu0 %v8298
    %8689 = vmatpush.bf16.msra.mxu0 %v8291
    %8690 = vmatpush.bf16.msra.mxu0 %v8284
    %8691 = vmatpush.bf16.msra.mxu0 %v8277
    %8692 = vmatpush.bf16.msra.mxu0 %v8270
    %8693 = vmatpush.bf16.msra.mxu0 %v8263
    %8694 = vmatpush.bf16.msra.mxu0 %v8256
    %8695 = vmatpush.bf16.msra.mxu0 %v8249
    %8696 = vmatmul.bf16.gmra.mxu0 %v7344
    %v8697 = vpop.f32.mrf.mxu0
    %v8698 = vadd.f32 %v7586, %v8697
    %v8699 = vpop.f32.mrf.mxu0
    %8700 = vdwg.mxu0
    %8701 = vmatpush.bf16.msra.mxu0 %v8354
    %8702 = vmatpush.bf16.msra.mxu0 %v8347
    %8703 = vmatpush.bf16.msra.mxu0 %v8340
    %8704 = vmatpush.bf16.msra.mxu0 %v8333
    %8705 = vmatpush.bf16.msra.mxu0 %v8326
    %8706 = vmatpush.bf16.msra.mxu0 %v8319
    %8707 = vmatpush.bf16.msra.mxu0 %v8312
    %8708 = vmatpush.bf16.msra.mxu0 %v8305
    %8709 = vmatmul.bf16.gmra.mxu0 %v7345
    %v8710 = vpop.f32.mrf.mxu0
    %v8711 = vadd.f32 %v8698, %v8710
    %v8712 = vpop.f32.mrf.mxu0
    %8713 = vdwg.mxu0
    %8714 = vmatpush.bf16.msra.mxu0 %v8410
    %8715 = vmatpush.bf16.msra.mxu0 %v8403
    %8716 = vmatpush.bf16.msra.mxu0 %v8396
    %8717 = vmatpush.bf16.msra.mxu0 %v8389
    %8718 = vmatpush.bf16.msra.mxu0 %v8382
    %8719 = vmatpush.bf16.msra.mxu0 %v8375
    %8720 = vmatpush.bf16.msra.mxu0 %v8368
    %8721 = vmatpush.bf16.msra.mxu0 %v8361
    %8722 = vmatmul.bf16.gmra.mxu0 %v7346
    %v8723 = vpop.f32.mrf.mxu0
    %v8724 = vadd.f32 %v8711, %v8723
    %v8725 = vpop.f32.mrf.mxu0
    %8726 = vdwg.mxu0
    %8727 = vmatpush.bf16.msra.mxu0 0
    %8728 = vmatpush.bf16.msra.mxu0 0
    %8729 = vmatpush.bf16.msra.mxu0 %v8668
    %8730 = vmatpush.bf16.msra.mxu0 %v8445
    %8731 = vmatpush.bf16.msra.mxu0 %v8438
    %8732 = vmatpush.bf16.msra.mxu0 %v8431
    %8733 = vmatpush.bf16.msra.mxu0 %v8424
    %8734 = vmatpush.bf16.msra.mxu0 %v8417
    %8735 = vmatmul.bf16.gmra.mxu0 %v8664
    %v8736 = vpop.f32.mrf.mxu0
    %v8737 = vadd.f32 %v8724, %v8736
    %v8738 = vpop.f32.mrf.mxu0
    %8739 = vdwg.mxu0
    %8740 = vmatpush.bf16.msra.mxu0 %v8299
    %8741 = vmatpush.bf16.msra.mxu0 %v8292
    %8742 = vmatpush.bf16.msra.mxu0 %v8285
    %8743 = vmatpush.bf16.msra.mxu0 %v8278
    %8744 = vmatpush.bf16.msra.mxu0 %v8271
    %8745 = vmatpush.bf16.msra.mxu0 %v8264
    %8746 = vmatpush.bf16.msra.mxu0 %v8257
    %8747 = vmatpush.bf16.msra.mxu0 %v8250
    %8748 = vmatmul.bf16.gmra.mxu0 %v7344
    %v8749 = vpop.f32.mrf.mxu0
    %v8750 = vadd.f32 %v7587, %v8749
    %v8751 = vpop.f32.mrf.mxu0
    %8752 = vdwg.mxu0
    %8753 = vmatpush.bf16.msra.mxu0 %v8355
    %8754 = vmatpush.bf16.msra.mxu0 %v8348
    %8755 = vmatpush.bf16.msra.mxu0 %v8341
    %8756 = vmatpush.bf16.msra.mxu0 %v8334
    %8757 = vmatpush.bf16.msra.mxu0 %v8327
    %8758 = vmatpush.bf16.msra.mxu0 %v8320
    %8759 = vmatpush.bf16.msra.mxu0 %v8313
    %8760 = vmatpush.bf16.msra.mxu0 %v8306
    %8761 = vmatmul.bf16.gmra.mxu0 %v7345
    %v8762 = vpop.f32.mrf.mxu0
    %v8763 = vadd.f32 %v8750, %v8762
    %v8764 = vpop.f32.mrf.mxu0
    %8765 = vdwg.mxu0
    %8766 = vmatpush.bf16.msra.mxu0 %v8411
    %8767 = vmatpush.bf16.msra.mxu0 %v8404
    %8768 = vmatpush.bf16.msra.mxu0 %v8397
    %8769 = vmatpush.bf16.msra.mxu0 %v8390
    %8770 = vmatpush.bf16.msra.mxu0 %v8383
    %8771 = vmatpush.bf16.msra.mxu0 %v8376
    %8772 = vmatpush.bf16.msra.mxu0 %v8369
    %8773 = vmatpush.bf16.msra.mxu0 %v8362
    %8774 = vmatmul.bf16.gmra.mxu0 %v7346
    %v8775 = vpop.f32.mrf.mxu0
    %v8776 = vadd.f32 %v8763, %v8775
    %v8777 = vpop.f32.mrf.mxu0
    %8778 = vdwg.mxu0
    %8779 = vmatpush.bf16.msra.mxu0 0
    %8780 = vmatpush.bf16.msra.mxu0 0
    %8781 = vmatpush.bf16.msra.mxu0 %v8671
    %8782 = vmatpush.bf16.msra.mxu0 %v8446
    %8783 = vmatpush.bf16.msra.mxu0 %v8439
    %8784 = vmatpush.bf16.msra.mxu0 %v8432
    %8785 = vmatpush.bf16.msra.mxu0 %v8425
    %8786 = vmatpush.bf16.msra.mxu0 %v8418
    %8787 = vmatmul.bf16.gmra.mxu0 %v8664
    %v8788 = vpop.f32.mrf.mxu0
    %v8789 = vadd.f32 %v8776, %v8788
    %v8790 = vpop.f32.mrf.mxu0
    %8791 = vdwg.mxu0
    %8792 = vmatpush.bf16.msra.mxu0 %v8300
    %8793 = vmatpush.bf16.msra.mxu0 %v8293
    %8794 = vmatpush.bf16.msra.mxu0 %v8286
    %8795 = vmatpush.bf16.msra.mxu0 %v8279
    %8796 = vmatpush.bf16.msra.mxu0 %v8272
    %8797 = vmatpush.bf16.msra.mxu0 %v8265
    %8798 = vmatpush.bf16.msra.mxu0 %v8258
    %8799 = vmatpush.bf16.msra.mxu0 %v8251
    %8800 = vmatmul.bf16.gmra.mxu0 %v7344
    %v8801 = vpop.f32.mrf.mxu0
    %v8802 = vadd.f32 %v7588, %v8801
    %v8803 = vpop.f32.mrf.mxu0
    %8804 = vdwg.mxu0
    %8805 = vmatpush.bf16.msra.mxu0 %v8356
    %8806 = vmatpush.bf16.msra.mxu0 %v8349
    %8807 = vmatpush.bf16.msra.mxu0 %v8342
    %8808 = vmatpush.bf16.msra.mxu0 %v8335
    %8809 = vmatpush.bf16.msra.mxu0 %v8328
    %8810 = vmatpush.bf16.msra.mxu0 %v8321
    %8811 = vmatpush.bf16.msra.mxu0 %v8314
    %8812 = vmatpush.bf16.msra.mxu0 %v8307
    %8813 = vmatmul.bf16.gmra.mxu0 %v7345
    %v8814 = vpop.f32.mrf.mxu0
    %v8815 = vadd.f32 %v8802, %v8814
    %v8816 = vpop.f32.mrf.mxu0
    %8817 = vdwg.mxu0
    %8818 = vmatpush.bf16.msra.mxu0 %v8412
    %8819 = vmatpush.bf16.msra.mxu0 %v8405
    %8820 = vmatpush.bf16.msra.mxu0 %v8398
    %8821 = vmatpush.bf16.msra.mxu0 %v8391
    %8822 = vmatpush.bf16.msra.mxu0 %v8384
    %8823 = vmatpush.bf16.msra.mxu0 %v8377
    %8824 = vmatpush.bf16.msra.mxu0 %v8370
    %8825 = vmatpush.bf16.msra.mxu0 %v8363
    %8826 = vmatmul.bf16.gmra.mxu0 %v7346
    %v8827 = vpop.f32.mrf.mxu0
    %v8828 = vadd.f32 %v8815, %v8827
    %v8829 = vpop.f32.mrf.mxu0
    %8830 = vdwg.mxu0
    %8831 = vmatpush.bf16.msra.mxu0 0
    %8832 = vmatpush.bf16.msra.mxu0 0
    %8833 = vmatpush.bf16.msra.mxu0 %v8674
    %8834 = vmatpush.bf16.msra.mxu0 %v8447
    %8835 = vmatpush.bf16.msra.mxu0 %v8440
    %8836 = vmatpush.bf16.msra.mxu0 %v8433
    %8837 = vmatpush.bf16.msra.mxu0 %v8426
    %8838 = vmatpush.bf16.msra.mxu0 %v8419
    %8839 = vmatmul.bf16.gmra.mxu0 %v8664
    %v8840 = vpop.f32.mrf.mxu0
    %v8841 = vadd.f32 %v8828, %v8840
    %v8842 = vpop.f32.mrf.mxu0
    %8843 = vdwg.mxu0
    %8844 = vmatpush.bf16.msra.mxu0 %v8301
    %8845 = vmatpush.bf16.msra.mxu0 %v8294
    %8846 = vmatpush.bf16.msra.mxu0 %v8287
    %8847 = vmatpush.bf16.msra.mxu0 %v8280
    %8848 = vmatpush.bf16.msra.mxu0 %v8273
    %8849 = vmatpush.bf16.msra.mxu0 %v8266
    %8850 = vmatpush.bf16.msra.mxu0 %v8259
    %8851 = vmatpush.bf16.msra.mxu0 %v8252
    %8852 = vmatmul.bf16.gmra.mxu0 %v7344
    %v8853 = vpop.f32.mrf.mxu0
    %v8854 = vadd.f32 %v7589, %v8853
    %v8855 = vpop.f32.mrf.mxu0
    %8856 = vdwg.mxu0
    %8857 = vmatpush.bf16.msra.mxu0 %v8357
    %8858 = vmatpush.bf16.msra.mxu0 %v8350
    %8859 = vmatpush.bf16.msra.mxu0 %v8343
    %8860 = vmatpush.bf16.msra.mxu0 %v8336
    %8861 = vmatpush.bf16.msra.mxu0 %v8329
    %8862 = vmatpush.bf16.msra.mxu0 %v8322
    %8863 = vmatpush.bf16.msra.mxu0 %v8315
    %8864 = vmatpush.bf16.msra.mxu0 %v8308
    %8865 = vmatmul.bf16.gmra.mxu0 %v7345
    %v8866 = vpop.f32.mrf.mxu0
    %v8867 = vadd.f32 %v8854, %v8866
    %v8868 = vpop.f32.mrf.mxu0
    %8869 = vdwg.mxu0
    %8870 = vmatpush.bf16.msra.mxu0 %v8413
    %8871 = vmatpush.bf16.msra.mxu0 %v8406
    %8872 = vmatpush.bf16.msra.mxu0 %v8399
    %8873 = vmatpush.bf16.msra.mxu0 %v8392
    %8874 = vmatpush.bf16.msra.mxu0 %v8385
    %8875 = vmatpush.bf16.msra.mxu0 %v8378
    %8876 = vmatpush.bf16.msra.mxu0 %v8371
    %8877 = vmatpush.bf16.msra.mxu0 %v8364
    %8878 = vmatmul.bf16.gmra.mxu0 %v7346
    %v8879 = vpop.f32.mrf.mxu0
    %v8880 = vadd.f32 %v8867, %v8879
    %v8881 = vpop.f32.mrf.mxu0
    %8882 = vdwg.mxu0
    %8883 = vmatpush.bf16.msra.mxu0 0
    %8884 = vmatpush.bf16.msra.mxu0 0
    %8885 = vmatpush.bf16.msra.mxu0 %v8677
    %8886 = vmatpush.bf16.msra.mxu0 %v8448
    %8887 = vmatpush.bf16.msra.mxu0 %v8441
    %8888 = vmatpush.bf16.msra.mxu0 %v8434
    %8889 = vmatpush.bf16.msra.mxu0 %v8427
    %8890 = vmatpush.bf16.msra.mxu0 %v8420
    %8891 = vmatmul.bf16.gmra.mxu0 %v8664
    %v8892 = vpop.f32.mrf.mxu0
    %v8893 = vadd.f32 %v8880, %v8892
    %v8894 = vpop.f32.mrf.mxu0
    %8895 = vdwg.mxu0
    %8896 = vmatpush.bf16.msra.mxu0 %v8302
    %8897 = vmatpush.bf16.msra.mxu0 %v8295
    %8898 = vmatpush.bf16.msra.mxu0 %v8288
    %8899 = vmatpush.bf16.msra.mxu0 %v8281
    %8900 = vmatpush.bf16.msra.mxu0 %v8274
    %8901 = vmatpush.bf16.msra.mxu0 %v8267
    %8902 = vmatpush.bf16.msra.mxu0 %v8260
    %8903 = vmatpush.bf16.msra.mxu0 %v8253
    %8904 = vmatmul.bf16.gmra.mxu0 %v7344
    %v8905 = vpop.f32.mrf.mxu0
    %v8906 = vadd.f32 %v7590, %v8905
    %v8907 = vpop.f32.mrf.mxu0
    %8908 = vdwg.mxu0
    %8909 = vmatpush.bf16.msra.mxu0 %v8358
    %8910 = vmatpush.bf16.msra.mxu0 %v8351
    %8911 = vmatpush.bf16.msra.mxu0 %v8344
    %8912 = vmatpush.bf16.msra.mxu0 %v8337
    %8913 = vmatpush.bf16.msra.mxu0 %v8330
    %8914 = vmatpush.bf16.msra.mxu0 %v8323
    %8915 = vmatpush.bf16.msra.mxu0 %v8316
    %8916 = vmatpush.bf16.msra.mxu0 %v8309
    %8917 = vmatmul.bf16.gmra.mxu0 %v7345
    %v8918 = vpop.f32.mrf.mxu0
    %v8919 = vadd.f32 %v8906, %v8918
    %v8920 = vpop.f32.mrf.mxu0
    %8921 = vdwg.mxu0
    %8922 = vmatpush.bf16.msra.mxu0 %v8414
    %8923 = vmatpush.bf16.msra.mxu0 %v8407
    %8924 = vmatpush.bf16.msra.mxu0 %v8400
    %8925 = vmatpush.bf16.msra.mxu0 %v8393
    %8926 = vmatpush.bf16.msra.mxu0 %v8386
    %8927 = vmatpush.bf16.msra.mxu0 %v8379
    %8928 = vmatpush.bf16.msra.mxu0 %v8372
    %8929 = vmatpush.bf16.msra.mxu0 %v8365
    %8930 = vmatmul.bf16.gmra.mxu0 %v7346
    %v8931 = vpop.f32.mrf.mxu0
    %v8932 = vadd.f32 %v8919, %v8931
    %v8933 = vpop.f32.mrf.mxu0
    %8934 = vdwg.mxu0
    %8935 = vmatpush.bf16.msra.mxu0 0
    %8936 = vmatpush.bf16.msra.mxu0 0
    %8937 = vmatpush.bf16.msra.mxu0 %v8680
    %8938 = vmatpush.bf16.msra.mxu0 %v8449
    %8939 = vmatpush.bf16.msra.mxu0 %v8442
    %8940 = vmatpush.bf16.msra.mxu0 %v8435
    %8941 = vmatpush.bf16.msra.mxu0 %v8428
    %8942 = vmatpush.bf16.msra.mxu0 %v8421
    %8943 = vmatmul.bf16.gmra.mxu0 %v8664
    %v8944 = vpop.f32.mrf.mxu0
    %v8945 = vadd.f32 %v8932, %v8944
    %v8946 = vpop.f32.mrf.mxu0
    %8947 = vdwg.mxu0
    %8948 = vmatpush.bf16.msra.mxu0 %v8303
    %8949 = vmatpush.bf16.msra.mxu0 %v8296
    %8950 = vmatpush.bf16.msra.mxu0 %v8289
    %8951 = vmatpush.bf16.msra.mxu0 %v8282
    %8952 = vmatpush.bf16.msra.mxu0 %v8275
    %8953 = vmatpush.bf16.msra.mxu0 %v8268
    %8954 = vmatpush.bf16.msra.mxu0 %v8261
    %8955 = vmatpush.bf16.msra.mxu0 %v8254
    %8956 = vmatmul.bf16.gmra.mxu0 %v7344
    %v8957 = vpop.f32.mrf.mxu0
    %v8958 = vadd.f32 %v7591, %v8957
    %v8959 = vpop.f32.mrf.mxu0
    %8960 = vdwg.mxu0
    %8961 = vmatpush.bf16.msra.mxu0 %v8359
    %8962 = vmatpush.bf16.msra.mxu0 %v8352
    %8963 = vmatpush.bf16.msra.mxu0 %v8345
    %8964 = vmatpush.bf16.msra.mxu0 %v8338
    %8965 = vmatpush.bf16.msra.mxu0 %v8331
    %8966 = vmatpush.bf16.msra.mxu0 %v8324
    %8967 = vmatpush.bf16.msra.mxu0 %v8317
    %8968 = vmatpush.bf16.msra.mxu0 %v8310
    %8969 = vmatmul.bf16.gmra.mxu0 %v7345
    %v8970 = vpop.f32.mrf.mxu0
    %v8971 = vadd.f32 %v8958, %v8970
    %v8972 = vpop.f32.mrf.mxu0
    %8973 = vdwg.mxu0
    %8974 = vmatpush.bf16.msra.mxu0 %v8415
    %8975 = vmatpush.bf16.msra.mxu0 %v8408
    %8976 = vmatpush.bf16.msra.mxu0 %v8401
    %8977 = vmatpush.bf16.msra.mxu0 %v8394
    %8978 = vmatpush.bf16.msra.mxu0 %v8387
    %8979 = vmatpush.bf16.msra.mxu0 %v8380
    %8980 = vmatpush.bf16.msra.mxu0 %v8373
    %8981 = vmatpush.bf16.msra.mxu0 %v8366
    %8982 = vmatmul.bf16.gmra.mxu0 %v7346
    %v8983 = vpop.f32.mrf.mxu0
    %v8984 = vadd.f32 %v8971, %v8983
    %v8985 = vpop.f32.mrf.mxu0
    %8986 = vdwg.mxu0
    %8987 = vmatpush.bf16.msra.mxu0 0
    %8988 = vmatpush.bf16.msra.mxu0 0
    %8989 = vmatpush.bf16.msra.mxu0 %v8683
    %8990 = vmatpush.bf16.msra.mxu0 %v8450
    %8991 = vmatpush.bf16.msra.mxu0 %v8443
    %8992 = vmatpush.bf16.msra.mxu0 %v8436
    %8993 = vmatpush.bf16.msra.mxu0 %v8429
    %8994 = vmatpush.bf16.msra.mxu0 %v8422
    %8995 = vmatmul.bf16.gmra.mxu0 %v8664
    %v8996 = vpop.f32.mrf.mxu0
    %v8997 = vadd.f32 %v8984, %v8996
    %v8998 = vpop.f32.mrf.mxu0
    %8999 = vdwg.mxu0
    %9000 = vmatpush.bf16.msra.mxu0 %v8304
    %9001 = vmatpush.bf16.msra.mxu0 %v8297
    %9002 = vmatpush.bf16.msra.mxu0 %v8290
    %9003 = vmatpush.bf16.msra.mxu0 %v8283
    %9004 = vmatpush.bf16.msra.mxu0 %v8276
    %9005 = vmatpush.bf16.msra.mxu0 %v8269
    %9006 = vmatpush.bf16.msra.mxu0 %v8262
    %9007 = vmatpush.bf16.msra.mxu0 %v8255
    %9008 = vmatmul.bf16.gmra.mxu0 %v7344
    %v9009 = vpop.f32.mrf.mxu0
    %v9010 = vadd.f32 %v7592, %v9009
    %v9011 = vpop.f32.mrf.mxu0
    %9012 = vdwg.mxu0
    %9013 = vmatpush.bf16.msra.mxu0 %v8360
    %9014 = vmatpush.bf16.msra.mxu0 %v8353
    %9015 = vmatpush.bf16.msra.mxu0 %v8346
    %9016 = vmatpush.bf16.msra.mxu0 %v8339
    %9017 = vmatpush.bf16.msra.mxu0 %v8332
    %9018 = vmatpush.bf16.msra.mxu0 %v8325
    %9019 = vmatpush.bf16.msra.mxu0 %v8318
    %9020 = vmatpush.bf16.msra.mxu0 %v8311
    %9021 = vmatmul.bf16.gmra.mxu0 %v7345
    %v9022 = vpop.f32.mrf.mxu0
    %v9023 = vadd.f32 %v9010, %v9022
    %v9024 = vpop.f32.mrf.mxu0
    %9025 = vdwg.mxu0
    %9026 = vmatpush.bf16.msra.mxu0 %v8416
    %9027 = vmatpush.bf16.msra.mxu0 %v8409
    %9028 = vmatpush.bf16.msra.mxu0 %v8402
    %9029 = vmatpush.bf16.msra.mxu0 %v8395
    %9030 = vmatpush.bf16.msra.mxu0 %v8388
    %9031 = vmatpush.bf16.msra.mxu0 %v8381
    %9032 = vmatpush.bf16.msra.mxu0 %v8374
    %9033 = vmatpush.bf16.msra.mxu0 %v8367
    %9034 = vmatmul.bf16.gmra.mxu0 %v7346
    %v9035 = vpop.f32.mrf.mxu0
    %v9036 = vadd.f32 %v9023, %v9035
    %v9037 = vpop.f32.mrf.mxu0
    %9038 = vdwg.mxu0
    %9039 = vmatpush.bf16.msra.mxu0 0
    %9040 = vmatpush.bf16.msra.mxu0 0
    %9041 = vmatpush.bf16.msra.mxu0 %v8686
    %9042 = vmatpush.bf16.msra.mxu0 %v8451
    %9043 = vmatpush.bf16.msra.mxu0 %v8444
    %9044 = vmatpush.bf16.msra.mxu0 %v8437
    %9045 = vmatpush.bf16.msra.mxu0 %v8430
    %9046 = vmatpush.bf16.msra.mxu0 %v8423
    %9047 = vmatmul.bf16.gmra.mxu0 %v8664
    %v9048 = vpop.f32.mrf.mxu0
    %v9049 = vadd.f32 %v9036, %v9048
    %v9050 = vpop.f32.mrf.mxu0
    %9051 = vdwg.mxu0
    %v9052 = vmax.f32 %v8737, 0.0
    %v9053 = vmax.f32 %v8789, 0.0
    %v9054 = vmax.f32 %v8841, 0.0
    %v9055 = vmax.f32 %v8893, 0.0
    %v9056 = vmax.f32 %v8945, 0.0
    %v9057 = vmax.f32 %v8997, 0.0
    %v9058 = vmax.f32 %v9049, 0.0
    %v9059 = vpack.c.bf16 %v9052, %v9052
    %v9060 = vpack.c.bf16 %v9053, %v9053
    %v9061 = vpack.c.bf16 %v9054, %v9054
    %v9062 = vpack.c.bf16 %v9055, %v9055
    %v9063 = vpack.c.bf16 %v9056, %v9056
    %v9064 = vpack.c.bf16 %v9057, %v9057
    %v9065 = vpack.c.bf16 %v9058, %v9058
    %v9066 = vld [vmem:[%s9] sm:$0xff]
    %v9067 = vld [vmem:[%s9 + $0x8] sm:$0xff]
    %v9068 = vld [vmem:[%s9 + $0x10] sm:$0xff]
    %v9069 = vld [vmem:[%s9 + $0x18] sm:$0xf]
    %v9070 = vld [vmem:[%s9 + $0x1c] sm:$0xff]
    %v9071 = vld [vmem:[%s9 + $0x24] sm:$0xff]
    %v9072 = vld [vmem:[%s9 + $0x2c] sm:$0xff]
    %v9073 = vld [vmem:[%s9 + $0x34] sm:$0xf]
    %v9074 = vld [vmem:[%s9 + $0x38] sm:$0xff]
    %v9075 = vld [vmem:[%s9 + $0x40] sm:$0xff]
    %v9076 = vld [vmem:[%s9 + $0x48] sm:$0xff]
    %v9077 = vld [vmem:[%s9 + $0x50] sm:$0xf]
    %v9078 = vld [vmem:[%s9 + $0x54] sm:$0xff]
    %v9079 = vld [vmem:[%s9 + $0x5c] sm:$0xff]
    %v9080 = vld [vmem:[%s9 + $0x64] sm:$0xff]
    %v9081 = vld [vmem:[%s9 + $0x6c] sm:$0xf]
    %v9082 = vld [vmem:[%s9 + $0x70] sm:$0xff]
    %v9083 = vld [vmem:[%s9 + $0x78] sm:$0xff]
    %v9084 = vld [vmem:[%s9 + $0x80] sm:$0xff]
    %v9085 = vld [vmem:[%s9 + $0x88] sm:$0xf]
    %v9086 = vld [vmem:[%s9 + $0x8c] sm:$0xff]
    %v9087 = vld [vmem:[%s9 + $0x94] sm:$0xff]
    %v9088 = vld [vmem:[%s9 + $0x9c] sm:$0xff]
    %v9089 = vld [vmem:[%s9 + $0xa4] sm:$0xf]
    %v9090 = vld [vmem:[%s9 + $0xa8] sm:$0xff]
    %v9091 = vld [vmem:[%s9 + $0xb0] sm:$0xff]
    %v9092 = vld [vmem:[%s9 + $0xb8] sm:$0xff]
    %v9093 = vld [vmem:[%s9 + $0xc0] sm:$0xf]
    %v9094 = vld [vmem:[%s9 + $0xc4] sm:$0xff]
    %v9095 = vld [vmem:[%s9 + $0xcc] sm:$0xff]
    %v9096 = vld [vmem:[%s9 + $0xd4] sm:$0xff]
    %v9097 = vld [vmem:[%s9 + $0xdc] sm:$0xf]
    %v9098 = vld [vmem:[%s9 + $0xe0] sm:$0xff]
    %v9099 = vld [vmem:[%s9 + $0xe8] sm:$0xff]
    %v9100 = vld [vmem:[%s9 + $0xf0] sm:$0xff]
    %v9101 = vld [vmem:[%s9 + $0xf8] sm:$0xf]
    %v9102 = vld [vmem:[%s9 + $0xfc] sm:$0xff]
    %v9103 = vld [vmem:[%s9 + $0x104] sm:$0xff]
    %v9104 = vld [vmem:[%s9 + $0x10c] sm:$0xff]
    %v9105 = vld [vmem:[%s9 + $0x114] sm:$0xf]
    %v9106 = vld [vmem:[%s9 + $0x118] sm:$0xff]
    %v9107 = vld [vmem:[%s9 + $0x120] sm:$0xff]
    %v9108 = vld [vmem:[%s9 + $0x128] sm:$0xff]
    %v9109 = vld [vmem:[%s9 + $0x130] sm:$0xf]
    %v9110 = vld [vmem:[%s9 + $0x134] sm:$0xff]
    %v9111 = vld [vmem:[%s9 + $0x13c] sm:$0xff]
    %v9112 = vld [vmem:[%s9 + $0x144] sm:$0xff]
    %v9113 = vld [vmem:[%s9 + $0x14c] sm:$0xf]
    %v9114 = vld [vmem:[%s9 + $0x150] sm:$0xff]
    %v9115 = vld [vmem:[%s9 + $0x158] sm:$0xff]
    %v9116 = vld [vmem:[%s9 + $0x160] sm:$0xff]
    %v9117 = vld [vmem:[%s9 + $0x168] sm:$0xf]
    %v9118 = vld [vmem:[%s9 + $0x16c] sm:$0xff]
    %v9119 = vld [vmem:[%s9 + $0x174] sm:$0xff]
    %v9120 = vld [vmem:[%s9 + $0x17c] sm:$0xff]
    %v9121 = vld [vmem:[%s9 + $0x184] sm:$0xf]
    %v9122 = vld [vmem:[%s9 + $0x188] sm:$0xff]
    %v9123 = vld [vmem:[%s9 + $0x190] sm:$0xff]
    %v9124 = vld [vmem:[%s9 + $0x198] sm:$0xff]
    %v9125 = vld [vmem:[%s9 + $0x1a0] sm:$0xf]
    %v9126 = vld [vmem:[%s9 + $0x1a4] sm:$0xff]
    %v9127 = vld [vmem:[%s9 + $0x1ac] sm:$0xff]
    %v9128 = vld [vmem:[%s9 + $0x1b4] sm:$0xff]
    %v9129 = vld [vmem:[%s9 + $0x1bc] sm:$0xf]
    %v9130 = vld [vmem:[%s9 + $0x1c0] sm:$0xff]
    %v9131 = vld [vmem:[%s9 + $0x1c8] sm:$0xff]
    %v9132 = vld [vmem:[%s9 + $0x1d0] sm:$0xff]
    %v9133 = vld [vmem:[%s9 + $0x1d8] sm:$0xf]
    %v9134 = vld [vmem:[%s9 + $0x1dc] sm:$0xff]
    %v9135 = vld [vmem:[%s9 + $0x1e4] sm:$0xff]
    %v9136 = vld [vmem:[%s9 + $0x1ec] sm:$0xff]
    %v9137 = vld [vmem:[%s9 + $0x1f4] sm:$0xf]
    %v9138 = vld [vmem:[%s9 + $0x1f8] sm:$0xff]
    %v9139 = vld [vmem:[%s9 + $0x200] sm:$0xff]
    %v9140 = vld [vmem:[%s9 + $0x208] sm:$0xff]
    %v9141 = vld [vmem:[%s9 + $0x210] sm:$0xf]
    %v9142 = vld [vmem:[%s9 + $0x214] sm:$0xff]
    %v9143 = vld [vmem:[%s9 + $0x21c] sm:$0xff]
    %v9144 = vld [vmem:[%s9 + $0x224] sm:$0xff]
    %v9145 = vld [vmem:[%s9 + $0x22c] sm:$0xf]
    %v9146 = vld [vmem:[%s9 + $0x230] sm:$0xff]
    %v9147 = vld [vmem:[%s9 + $0x238] sm:$0xff]
    %v9148 = vld [vmem:[%s9 + $0x240] sm:$0xff]
    %v9149 = vld [vmem:[%s9 + $0x248] sm:$0xf]
    %v9150 = vld [vmem:[%s9 + $0x24c] sm:$0xff]
    %v9151 = vld [vmem:[%s9 + $0x254] sm:$0xff]
    %v9152 = vld [vmem:[%s9 + $0x25c] sm:$0xff]
    %v9153 = vld [vmem:[%s9 + $0x264] sm:$0xf]
    %v9154 = vld [vmem:[%s9 + $0x268] sm:$0xff]
    %v9155 = vld [vmem:[%s9 + $0x270] sm:$0xff]
    %v9156 = vld [vmem:[%s9 + $0x278] sm:$0xff]
    %v9157 = vld [vmem:[%s9 + $0x280] sm:$0xf]
    %v9158 = vld [vmem:[%s9 + $0x284] sm:$0xff]
    %v9159 = vld [vmem:[%s9 + $0x28c] sm:$0xff]
    %v9160 = vld [vmem:[%s9 + $0x294] sm:$0xff]
    %v9161 = vld [vmem:[%s9 + $0x29c] sm:$0xf]
    %v9162 = vld [vmem:[%s9 + $0x2a0] sm:$0xff]
    %v9163 = vld [vmem:[%s9 + $0x2a8] sm:$0xff]
    %v9164 = vld [vmem:[%s9 + $0x2b0] sm:$0xff]
    %v9165 = vld [vmem:[%s9 + $0x2b8] sm:$0xf]
    %v9166 = vld [vmem:[%s9 + $0x2bc] sm:$0xff]
    %v9167 = vld [vmem:[%s9 + $0x2c4] sm:$0xff]
    %v9168 = vld [vmem:[%s9 + $0x2cc] sm:$0xff]
    %v9169 = vld [vmem:[%s9 + $0x2d4] sm:$0xf]
    %v9170 = vld [vmem:[%s9 + $0x2d8] sm:$0xff]
    %v9171 = vld [vmem:[%s9 + $0x2e0] sm:$0xff]
    %v9172 = vld [vmem:[%s9 + $0x2e8] sm:$0xff]
    %v9173 = vld [vmem:[%s9 + $0x2f0] sm:$0xf]
    %v9174 = vld [vmem:[%s9 + $0x2f4] sm:$0xff]
    %v9175 = vld [vmem:[%s9 + $0x2fc] sm:$0xff]
    %v9176 = vld [vmem:[%s9 + $0x304] sm:$0xff]
    %v9177 = vld [vmem:[%s9 + $0x30c] sm:$0xf]
    %v9178 = vld [vmem:[%s9 + $0x310] sm:$0xff]
    %v9179 = vld [vmem:[%s9 + $0x318] sm:$0xff]
    %v9180 = vld [vmem:[%s9 + $0x320] sm:$0xff]
    %v9181 = vld [vmem:[%s9 + $0x328] sm:$0xf]
    %v9182 = vld [vmem:[%s9 + $0x32c] sm:$0xff]
    %v9183 = vld [vmem:[%s9 + $0x334] sm:$0xff]
    %v9184 = vld [vmem:[%s9 + $0x33c] sm:$0xff]
    %v9185 = vld [vmem:[%s9 + $0x344] sm:$0xf]
    %v9186 = vld [vmem:[%s9 + $0x348] sm:$0xff]
    %v9187 = vld [vmem:[%s9 + $0x350] sm:$0xff]
    %v9188 = vld [vmem:[%s9 + $0x358] sm:$0xff]
    %v9189 = vld [vmem:[%s9 + $0x360] sm:$0xf]
    %v9190 = vld [vmem:[%s9 + $0x364] sm:$0xff]
    %v9191 = vld [vmem:[%s9 + $0x36c] sm:$0xff]
    %v9192 = vld [vmem:[%s9 + $0x374] sm:$0xff]
    %v9193 = vld [vmem:[%s9 + $0x37c] sm:$0xf]
    %v9194 = vld [vmem:[%s9 + $0x380] sm:$0xff]
    %v9195 = vld [vmem:[%s9 + $0x388] sm:$0xff]
    %v9196 = vld [vmem:[%s9 + $0x390] sm:$0xff]
    %v9197 = vld [vmem:[%s9 + $0x398] sm:$0xf]
    %v9198 = vld [vmem:[%s9 + $0x39c] sm:$0xff]
    %v9199 = vld [vmem:[%s9 + $0x3a4] sm:$0xff]
    %v9200 = vld [vmem:[%s9 + $0x3ac] sm:$0xff]
    %v9201 = vld [vmem:[%s9 + $0x3b4] sm:$0xf]
    %v9202 = vld [vmem:[%s9 + $0x3b8] sm:$0xff]
    %v9203 = vld [vmem:[%s9 + $0x3c0] sm:$0xff]
    %v9204 = vld [vmem:[%s9 + $0x3c8] sm:$0xff]
    %v9205 = vld [vmem:[%s9 + $0x3d0] sm:$0xf]
    %v9206 = vld [vmem:[%s9 + $0x3d4] sm:$0xff]
    %v9207 = vld [vmem:[%s9 + $0x3dc] sm:$0xff]
    %v9208 = vld [vmem:[%s9 + $0x3e4] sm:$0xff]
    %v9209 = vld [vmem:[%s9 + $0x3ec] sm:$0xf]
    %v9210 = vld [vmem:[%s9 + $0x3f0] sm:$0xff]
    %v9211 = vld [vmem:[%s9 + $0x3f8] sm:$0xff]
    %v9212 = vld [vmem:[%s9 + $0x400] sm:$0xff]
    %v9213 = vld [vmem:[%s9 + $0x408] sm:$0xf]
    %v9214 = vld [vmem:[%s9 + $0x40c] sm:$0xff]
    %v9215 = vld [vmem:[%s9 + $0x414] sm:$0xff]
    %v9216 = vld [vmem:[%s9 + $0x41c] sm:$0xff]
    %v9217 = vld [vmem:[%s9 + $0x424] sm:$0xf]
    %v9218 = vld [vmem:[%s9 + $0x428] sm:$0xff]
    %v9219 = vld [vmem:[%s9 + $0x430] sm:$0xff]
    %v9220 = vld [vmem:[%s9 + $0x438] sm:$0xff]
    %v9221 = vld [vmem:[%s9 + $0x440] sm:$0xf]
    %v9222 = vld [vmem:[%s9 + $0x444] sm:$0xff]
    %v9223 = vld [vmem:[%s9 + $0x44c] sm:$0xff]
    %v9224 = vld [vmem:[%s9 + $0x454] sm:$0xff]
    %v9225 = vld [vmem:[%s9 + $0x45c] sm:$0xf]
    %v9226 = vld [vmem:[%s9 + $0x460] sm:$0xff]
    %v9227 = vld [vmem:[%s9 + $0x468] sm:$0xff]
    %v9228 = vld [vmem:[%s9 + $0x470] sm:$0xff]
    %v9229 = vld [vmem:[%s9 + $0x478] sm:$0xf]
    %v9230 = vld [vmem:[%s9 + $0x47c] sm:$0xff]
    %v9231 = vld [vmem:[%s9 + $0x484] sm:$0xff]
    %v9232 = vld [vmem:[%s9 + $0x48c] sm:$0xff]
    %v9233 = vld [vmem:[%s9 + $0x494] sm:$0xf]
    %v9234 = vld [vmem:[%s9 + $0x498] sm:$0xff]
    %v9235 = vld [vmem:[%s9 + $0x4a0] sm:$0xff]
    %v9236 = vld [vmem:[%s9 + $0x4a8] sm:$0xff]
    %v9237 = vld [vmem:[%s9 + $0x4b0] sm:$0xf]
    %v9238 = vld [vmem:[%s9 + $0x4b4] sm:$0xff]
    %v9239 = vld [vmem:[%s9 + $0x4bc] sm:$0xff]
    %v9240 = vld [vmem:[%s9 + $0x4c4] sm:$0xff]
    %v9241 = vld [vmem:[%s9 + $0x4cc] sm:$0xf]
    %v9242 = vld [vmem:[%s9 + $0x4d0] sm:$0xff]
    %v9243 = vld [vmem:[%s9 + $0x4d8] sm:$0xff]
    %v9244 = vld [vmem:[%s9 + $0x4e0] sm:$0xff]
    %v9245 = vld [vmem:[%s9 + $0x4e8] sm:$0xf]
    %v9246 = vld [vmem:[%s9 + $0x4ec] sm:$0xff]
    %v9247 = vld [vmem:[%s9 + $0x4f4] sm:$0xff]
    %v9248 = vld [vmem:[%s9 + $0x4fc] sm:$0xff]
    %v9249 = vld [vmem:[%s9 + $0x504] sm:$0xf]
    %v9250 = vld [vmem:[%s9 + $0x508] sm:$0xff]
    %v9251 = vld [vmem:[%s9 + $0x510] sm:$0xff]
    %v9252 = vld [vmem:[%s9 + $0x518] sm:$0xff]
    %v9253 = vld [vmem:[%s9 + $0x520] sm:$0xf]
    %v9254 = vld [vmem:[%s9 + $0x524] sm:$0xff]
    %v9255 = vld [vmem:[%s9 + $0x52c] sm:$0xff]
    %v9256 = vld [vmem:[%s9 + $0x534] sm:$0xff]
    %v9257 = vld [vmem:[%s9 + $0x53c] sm:$0xf]
    %v9258 = vld [vmem:[%s9 + $0x540] sm:$0xff]
    %v9259 = vld [vmem:[%s9 + $0x548] sm:$0xff]
    %v9260 = vld [vmem:[%s9 + $0x550] sm:$0xff]
    %v9261 = vld [vmem:[%s9 + $0x558] sm:$0xf]
    %v9262 = vld [vmem:[%s9 + $0x55c] sm:$0xff]
    %v9263 = vld [vmem:[%s9 + $0x564] sm:$0xff]
    %v9264 = vld [vmem:[%s9 + $0x56c] sm:$0xff]
    %v9265 = vld [vmem:[%s9 + $0x574] sm:$0xf]
    %v9266 = vld [vmem:[%s9 + $0x578] sm:$0xff]
    %v9267 = vld [vmem:[%s9 + $0x580] sm:$0xff]
    %v9268 = vld [vmem:[%s9 + $0x588] sm:$0xff]
    %v9269 = vld [vmem:[%s9 + $0x590] sm:$0xf]
    %v9270 = vld [vmem:[%s9 + $0x594] sm:$0xff]
    %v9271 = vld [vmem:[%s9 + $0x59c] sm:$0xff]
    %v9272 = vld [vmem:[%s9 + $0x5a4] sm:$0xff]
    %v9273 = vld [vmem:[%s9 + $0x5ac] sm:$0xf]
    %v9274 = vld [vmem:[%s9 + $0x5b0] sm:$0xff]
    %v9275 = vld [vmem:[%s9 + $0x5b8] sm:$0xff]
    %v9276 = vld [vmem:[%s9 + $0x5c0] sm:$0xff]
    %v9277 = vld [vmem:[%s9 + $0x5c8] sm:$0xf]
    %v9278 = vld [vmem:[%s9 + $0x5cc] sm:$0xff]
    %v9279 = vld [vmem:[%s9 + $0x5d4] sm:$0xff]
    %v9280 = vld [vmem:[%s9 + $0x5dc] sm:$0xff]
    %v9281 = vld [vmem:[%s9 + $0x5e4] sm:$0xf]
    %v9282 = vld [vmem:[%s9 + $0x5e8] sm:$0xff]
    %v9283 = vld [vmem:[%s9 + $0x5f0] sm:$0xff]
    %v9284 = vld [vmem:[%s9 + $0x5f8] sm:$0xff]
    %v9285 = vld [vmem:[%s9 + $0x600] sm:$0xf]
    %v9286 = vld [vmem:[%s9 + $0x604] sm:$0xff]
    %v9287 = vld [vmem:[%s9 + $0x60c] sm:$0xff]
    %v9288 = vld [vmem:[%s9 + $0x614] sm:$0xff]
    %v9289 = vld [vmem:[%s9 + $0x61c] sm:$0xf]
    %v9290 = vld [vmem:[%s9 + $0x620] sm:$0xff]
    %v9291 = vld [vmem:[%s9 + $0x628] sm:$0xff]
    %v9292 = vld [vmem:[%s9 + $0x630] sm:$0xff]
    %v9293 = vld [vmem:[%s9 + $0x638] sm:$0xf]
    %v9294 = vld [vmem:[%s9 + $0x63c] sm:$0xff]
    %v9295 = vld [vmem:[%s9 + $0x644] sm:$0xff]
    %v9296 = vld [vmem:[%s9 + $0x64c] sm:$0xff]
    %v9297 = vld [vmem:[%s9 + $0x654] sm:$0xf]
    %v9298 = vld [vmem:[%s9 + $0x658] sm:$0xff]
    %v9299 = vld [vmem:[%s9 + $0x660] sm:$0xff]
    %v9300 = vld [vmem:[%s9 + $0x668] sm:$0xff]
    %v9301 = vld [vmem:[%s9 + $0x670] sm:$0xf]
    %v9302 = vld [vmem:[%s9 + $0x674] sm:$0xff]
    %v9303 = vld [vmem:[%s9 + $0x67c] sm:$0xff]
    %v9304 = vld [vmem:[%s9 + $0x684] sm:$0xff]
    %v9305 = vld [vmem:[%s9 + $0x68c] sm:$0xf]
    %v9306 = vld [vmem:[%s9 + $0x690] sm:$0xff]
    %v9307 = vld [vmem:[%s9 + $0x698] sm:$0xff]
    %v9308 = vld [vmem:[%s9 + $0x6a0] sm:$0xff]
    %v9309 = vld [vmem:[%s9 + $0x6a8] sm:$0xf]
    %v9310 = vld [vmem:[%s9 + $0x6ac] sm:$0xff]
    %v9311 = vld [vmem:[%s9 + $0x6b4] sm:$0xff]
    %v9312 = vld [vmem:[%s9 + $0x6bc] sm:$0xff]
    %v9313 = vld [vmem:[%s9 + $0x6c4] sm:$0xf]
    %v9314 = vld [vmem:[%s9 + $0x6c8] sm:$0xff]
    %v9315 = vld [vmem:[%s9 + $0x6d0] sm:$0xff]
    %v9316 = vld [vmem:[%s9 + $0x6d8] sm:$0xff]
    %v9317 = vld [vmem:[%s9 + $0x6e0] sm:$0xf]
    %v9318 = vld [vmem:[%s9 + $0x6e4] sm:$0xff]
    %v9319 = vld [vmem:[%s9 + $0x6ec] sm:$0xff]
    %v9320 = vld [vmem:[%s9 + $0x6f4] sm:$0xff]
    %v9321 = vld [vmem:[%s9 + $0x6fc] sm:$0xf]
    %v9322 = vld [vmem:[%s9 + $0x700] sm:$0xff]
    %v9323 = vld [vmem:[%s9 + $0x708] sm:$0xff]
    %v9324 = vld [vmem:[%s9 + $0x710] sm:$0xff]
    %v9325 = vld [vmem:[%s9 + $0x718] sm:$0xf]
    %v9326 = vld [vmem:[%s9 + $0x71c] sm:$0xff]
    %v9327 = vld [vmem:[%s9 + $0x724] sm:$0xff]
    %v9328 = vld [vmem:[%s9 + $0x72c] sm:$0xff]
    %v9329 = vld [vmem:[%s9 + $0x734] sm:$0xf]
    %v9330 = vld [vmem:[%s9 + $0x738] sm:$0xff]
    %v9331 = vld [vmem:[%s9 + $0x740] sm:$0xff]
    %v9332 = vld [vmem:[%s9 + $0x748] sm:$0xff]
    %v9333 = vld [vmem:[%s9 + $0x750] sm:$0xf]
    %v9334 = vld [vmem:[%s9 + $0x754] sm:$0xff]
    %v9335 = vld [vmem:[%s9 + $0x75c] sm:$0xff]
    %v9336 = vld [vmem:[%s9 + $0x764] sm:$0xff]
    %v9337 = vld [vmem:[%s9 + $0x76c] sm:$0xf]
    %v9338 = vld [vmem:[%s9 + $0x770] sm:$0xff]
    %v9339 = vld [vmem:[%s9 + $0x778] sm:$0xff]
    %v9340 = vld [vmem:[%s9 + $0x780] sm:$0xff]
    %v9341 = vld [vmem:[%s9 + $0x788] sm:$0xf]
    %v9342 = vld [vmem:[%s9 + $0x78c] sm:$0xff]
    %v9343 = vld [vmem:[%s9 + $0x794] sm:$0xff]
    %v9344 = vld [vmem:[%s9 + $0x79c] sm:$0xff]
    %v9345 = vld [vmem:[%s9 + $0x7a4] sm:$0xf]
    %v9346 = vld [vmem:[%s9 + $0x7a8] sm:$0xff]
    %v9347 = vld [vmem:[%s9 + $0x7b0] sm:$0xff]
    %v9348 = vld [vmem:[%s9 + $0x7b8] sm:$0xff]
    %v9349 = vld [vmem:[%s9 + $0x7c0] sm:$0xf]
    %v9350 = vld [vmem:[%s9 + $0x7c4] sm:$0xff]
    %v9351 = vld [vmem:[%s9 + $0x7cc] sm:$0xff]
    %v9352 = vld [vmem:[%s9 + $0x7d4] sm:$0xff]
    %v9353 = vld [vmem:[%s9 + $0x7dc] sm:$0xf]
    %v9354 = vld [vmem:[%s9 + $0x7e0] sm:$0xff]
    %v9355 = vld [vmem:[%s9 + $0x7e8] sm:$0xff]
    %v9356 = vld [vmem:[%s9 + $0x7f0] sm:$0xff]
    %v9357 = vld [vmem:[%s9 + $0x7f8] sm:$0xf]
    %v9358 = vld [vmem:[%s9 + $0x7fc] sm:$0xff]
    %v9359 = vld [vmem:[%s9 + $0x804] sm:$0xff]
    %v9360 = vld [vmem:[%s9 + $0x80c] sm:$0xff]
    %v9361 = vld [vmem:[%s9 + $0x814] sm:$0xf]
    %v9362 = vld [vmem:[%s9 + $0x818] sm:$0xff]
    %v9363 = vld [vmem:[%s9 + $0x820] sm:$0xff]
    %v9364 = vld [vmem:[%s9 + $0x828] sm:$0xff]
    %v9365 = vld [vmem:[%s9 + $0x830] sm:$0xf]
    %v9366 = vld [vmem:[%s9 + $0x834] sm:$0xff]
    %v9367 = vld [vmem:[%s9 + $0x83c] sm:$0xff]
    %v9368 = vld [vmem:[%s9 + $0x844] sm:$0xff]
    %v9369 = vld [vmem:[%s9 + $0x84c] sm:$0xf]
    %v9370 = vld [vmem:[%s9 + $0x850] sm:$0xff]
    %v9371 = vld [vmem:[%s9 + $0x858] sm:$0xff]
    %v9372 = vld [vmem:[%s9 + $0x860] sm:$0xff]
    %v9373 = vld [vmem:[%s9 + $0x868] sm:$0xf]
    %v9374 = vld [vmem:[%s9 + $0x86c] sm:$0xff]
    %v9375 = vld [vmem:[%s9 + $0x874] sm:$0xff]
    %v9376 = vld [vmem:[%s9 + $0x87c] sm:$0xff]
    %v9377 = vld [vmem:[%s9 + $0x884] sm:$0xf]
    %v9378 = vld [vmem:[%s9 + $0x888] sm:$0xff]
    %v9379 = vld [vmem:[%s9 + $0x890] sm:$0xff]
    %v9380 = vld [vmem:[%s9 + $0x898] sm:$0xff]
    %v9381 = vld [vmem:[%s9 + $0x8a0] sm:$0xf]
    %v9382 = vld [vmem:[%s9 + $0x8a4] sm:$0xff]
    %v9383 = vld [vmem:[%s9 + $0x8ac] sm:$0xff]
    %v9384 = vld [vmem:[%s9 + $0x8b4] sm:$0xff]
    %v9385 = vld [vmem:[%s9 + $0x8bc] sm:$0xf]
    %v9386 = vld [vmem:[%s9 + $0x8c0] sm:$0xff]
    %v9387 = vld [vmem:[%s9 + $0x8c8] sm:$0xff]
    %v9388 = vld [vmem:[%s9 + $0x8d0] sm:$0xff]
    %v9389 = vld [vmem:[%s9 + $0x8d8] sm:$0xf]
    %v9390 = vld [vmem:[%s9 + $0x8dc] sm:$0xff]
    %v9391 = vld [vmem:[%s9 + $0x8e4] sm:$0xff]
    %v9392 = vld [vmem:[%s9 + $0x8ec] sm:$0xff]
    %v9393 = vld [vmem:[%s9 + $0x8f4] sm:$0xf]
    %v9394 = vld [vmem:[%s9 + $0x8f8] sm:$0xff]
    %v9395 = vld [vmem:[%s9 + $0x900] sm:$0xff]
    %v9396 = vld [vmem:[%s9 + $0x908] sm:$0xff]
    %v9397 = vld [vmem:[%s9 + $0x910] sm:$0xf]
    %v9398 = vld [vmem:[%s9 + $0x914] sm:$0xff]
    %v9399 = vld [vmem:[%s9 + $0x91c] sm:$0xff]
    %v9400 = vld [vmem:[%s9 + $0x924] sm:$0xff]
    %v9401 = vld [vmem:[%s9 + $0x92c] sm:$0xf]
    %v9402 = vld [vmem:[%s9 + $0x930] sm:$0xff]
    %v9403 = vld [vmem:[%s9 + $0x938] sm:$0xff]
    %v9404 = vld [vmem:[%s9 + $0x940] sm:$0xff]
    %v9405 = vld [vmem:[%s9 + $0x948] sm:$0xf]
    %v9406 = vld [vmem:[%s9 + $0x94c] sm:$0xff]
    %v9407 = vld [vmem:[%s9 + $0x954] sm:$0xff]
    %v9408 = vld [vmem:[%s9 + $0x95c] sm:$0xff]
    %v9409 = vld [vmem:[%s9 + $0x964] sm:$0xf]
    %v9410 = vld [vmem:[%s9 + $0x968] sm:$0xff]
    %v9411 = vld [vmem:[%s9 + $0x970] sm:$0xff]
    %v9412 = vld [vmem:[%s9 + $0x978] sm:$0xff]
    %v9413 = vld [vmem:[%s9 + $0x980] sm:$0xf]
    %v9414 = vld [vmem:[%s9 + $0x984] sm:$0xff]
    %v9415 = vld [vmem:[%s9 + $0x98c] sm:$0xff]
    %v9416 = vld [vmem:[%s9 + $0x994] sm:$0xff]
    %v9417 = vld [vmem:[%s9 + $0x99c] sm:$0xf]
    %v9418 = vld [vmem:[%s9 + $0x9a0] sm:$0xff]
    %v9419 = vld [vmem:[%s9 + $0x9a8] sm:$0xff]
    %v9420 = vld [vmem:[%s9 + $0x9b0] sm:$0xff]
    %v9421 = vld [vmem:[%s9 + $0x9b8] sm:$0xf]
    %v9422 = vld [vmem:[%s9 + $0x9bc] sm:$0xff]
    %v9423 = vld [vmem:[%s9 + $0x9c4] sm:$0xff]
    %v9424 = vld [vmem:[%s9 + $0x9cc] sm:$0xff]
    %v9425 = vld [vmem:[%s9 + $0x9d4] sm:$0xf]
    %v9426 = vld [vmem:[%s9 + $0x9d8] sm:$0xff]
    %v9427 = vld [vmem:[%s9 + $0x9e0] sm:$0xff]
    %v9428 = vld [vmem:[%s9 + $0x9e8] sm:$0xff]
    %v9429 = vld [vmem:[%s9 + $0x9f0] sm:$0xf]
    %v9430 = vld [vmem:[%s9 + $0x9f4] sm:$0xff]
    %v9431 = vld [vmem:[%s9 + $0x9fc] sm:$0xff]
    %v9432 = vld [vmem:[%s9 + $0xa04] sm:$0xff]
    %v9433 = vld [vmem:[%s9 + $0xa0c] sm:$0xf]
    %v9434 = vld [vmem:[%s9 + $0xa10] sm:$0xff]
    %v9435 = vld [vmem:[%s9 + $0xa18] sm:$0xff]
    %v9436 = vld [vmem:[%s9 + $0xa20] sm:$0xff]
    %v9437 = vld [vmem:[%s9 + $0xa28] sm:$0xf]
    %v9438 = vld [vmem:[%s9 + $0xa2c] sm:$0xff]
    %v9439 = vld [vmem:[%s9 + $0xa34] sm:$0xff]
    %v9440 = vld [vmem:[%s9 + $0xa3c] sm:$0xff]
    %v9441 = vld [vmem:[%s9 + $0xa44] sm:$0xf]
    %v9442 = vld [vmem:[%s9 + $0xa48] sm:$0xff]
    %v9443 = vld [vmem:[%s9 + $0xa50] sm:$0xff]
    %v9444 = vld [vmem:[%s9 + $0xa58] sm:$0xff]
    %v9445 = vld [vmem:[%s9 + $0xa60] sm:$0xf]
    %v9446 = vld [vmem:[%s9 + $0xa64] sm:$0xff]
    %v9447 = vld [vmem:[%s9 + $0xa6c] sm:$0xff]
    %v9448 = vld [vmem:[%s9 + $0xa74] sm:$0xff]
    %v9449 = vld [vmem:[%s9 + $0xa7c] sm:$0xf]
    %v9450 = vld [vmem:[%s9 + $0xa80] sm:$0xff]
    %v9451 = vld [vmem:[%s9 + $0xa88] sm:$0xff]
    %v9452 = vld [vmem:[%s9 + $0xa90] sm:$0xff]
    %v9453 = vld [vmem:[%s9 + $0xa98] sm:$0xf]
    %v9454 = vld [vmem:[%s9 + $0xa9c] sm:$0xff]
    %v9455 = vld [vmem:[%s9 + $0xaa4] sm:$0xff]
    %v9456 = vld [vmem:[%s9 + $0xaac] sm:$0xff]
    %v9457 = vld [vmem:[%s9 + $0xab4] sm:$0xf]
    %v9458 = vld [vmem:[%s10] sm:$0x7f]
    %v9460 = vperm.slane %v9458, 0
    %v9461 = vperm.slane %v9458, 1
    %v9462 = vperm.slane %v9458, 2
    %v9463 = vperm.slane %v9458, 3
    %v9464 = vperm.slane %v9458, 4
    %v9465 = vperm.slane %v9458, 5
    %v9466 = vperm.slane %v9458, 6
    %v9866 = vunpack.c.l.b16 %v9066
    %v9867 = vunpack.c.h.b16 %v9066
    %v9868 = vunpack.c.l.b16 %v9067
    %v9869 = vunpack.c.h.b16 %v9067
    %v9870 = vunpack.c.l.b16 %v9068
    %v9871 = vunpack.c.h.b16 %v9068
    %v9872 = vunpack.c.l.b16 %v9069
    %v9873 = vunpack.c.l.b16 %v9070
    %v9874 = vunpack.c.h.b16 %v9070
    %v9875 = vunpack.c.l.b16 %v9071
    %v9876 = vunpack.c.h.b16 %v9071
    %v9877 = vunpack.c.l.b16 %v9072
    %v9878 = vunpack.c.h.b16 %v9072
    %v9879 = vunpack.c.l.b16 %v9073
    %v9880 = vunpack.c.l.b16 %v9074
    %v9881 = vunpack.c.h.b16 %v9074
    %v9882 = vunpack.c.l.b16 %v9075
    %v9883 = vunpack.c.h.b16 %v9075
    %v9884 = vunpack.c.l.b16 %v9076
    %v9885 = vunpack.c.h.b16 %v9076
    %v9886 = vunpack.c.l.b16 %v9077
    %v9887 = vunpack.c.l.b16 %v9078
    %v9888 = vunpack.c.h.b16 %v9078
    %v9889 = vunpack.c.l.b16 %v9079
    %v9890 = vunpack.c.h.b16 %v9079
    %v9891 = vunpack.c.l.b16 %v9080
    %v9892 = vunpack.c.h.b16 %v9080
    %v9893 = vunpack.c.l.b16 %v9081
    %v9894 = vunpack.c.l.b16 %v9082
    %v9895 = vunpack.c.h.b16 %v9082
    %v9896 = vunpack.c.l.b16 %v9083
    %v9897 = vunpack.c.h.b16 %v9083
    %v9898 = vunpack.c.l.b16 %v9084
    %v9899 = vunpack.c.h.b16 %v9084
    %v9900 = vunpack.c.l.b16 %v9085
    %v9901 = vunpack.c.l.b16 %v9086
    %v9902 = vunpack.c.h.b16 %v9086
    %v9903 = vunpack.c.l.b16 %v9087
    %v9904 = vunpack.c.h.b16 %v9087
    %v9905 = vunpack.c.l.b16 %v9088
    %v9906 = vunpack.c.h.b16 %v9088
    %v9907 = vunpack.c.l.b16 %v9089
    %v9908 = vunpack.c.l.b16 %v9090
    %v9909 = vunpack.c.h.b16 %v9090
    %v9910 = vunpack.c.l.b16 %v9091
    %v9911 = vunpack.c.h.b16 %v9091
    %v9912 = vunpack.c.l.b16 %v9092
    %v9913 = vunpack.c.h.b16 %v9092
    %v9914 = vunpack.c.l.b16 %v9093
    %v9915 = vunpack.c.l.b16 %v9094
    %v9916 = vunpack.c.h.b16 %v9094
    %v9917 = vunpack.c.l.b16 %v9095
    %v9918 = vunpack.c.h.b16 %v9095
    %v9919 = vunpack.c.l.b16 %v9096
    %v9920 = vunpack.c.h.b16 %v9096
    %v9921 = vunpack.c.l.b16 %v9097
    %v9922 = vunpack.c.l.b16 %v9098
    %v9923 = vunpack.c.h.b16 %v9098
    %v9924 = vunpack.c.l.b16 %v9099
    %v9925 = vunpack.c.h.b16 %v9099
    %v9926 = vunpack.c.l.b16 %v9100
    %v9927 = vunpack.c.h.b16 %v9100
    %v9928 = vunpack.c.l.b16 %v9101
    %v9929 = vunpack.c.l.b16 %v9102
    %v9930 = vunpack.c.h.b16 %v9102
    %v9931 = vunpack.c.l.b16 %v9103
    %v9932 = vunpack.c.h.b16 %v9103
    %v9933 = vunpack.c.l.b16 %v9104
    %v9934 = vunpack.c.h.b16 %v9104
    %v9935 = vunpack.c.l.b16 %v9105
    %v9936 = vunpack.c.l.b16 %v9106
    %v9937 = vunpack.c.h.b16 %v9106
    %v9938 = vunpack.c.l.b16 %v9107
    %v9939 = vunpack.c.h.b16 %v9107
    %v9940 = vunpack.c.l.b16 %v9108
    %v9941 = vunpack.c.h.b16 %v9108
    %v9942 = vunpack.c.l.b16 %v9109
    %v9943 = vunpack.c.l.b16 %v9110
    %v9944 = vunpack.c.h.b16 %v9110
    %v9945 = vunpack.c.l.b16 %v9111
    %v9946 = vunpack.c.h.b16 %v9111
    %v9947 = vunpack.c.l.b16 %v9112
    %v9948 = vunpack.c.h.b16 %v9112
    %v9949 = vunpack.c.l.b16 %v9113
    %v9950 = vunpack.c.l.b16 %v9114
    %v9951 = vunpack.c.h.b16 %v9114
    %v9952 = vunpack.c.l.b16 %v9115
    %v9953 = vunpack.c.h.b16 %v9115
    %v9954 = vunpack.c.l.b16 %v9116
    %v9955 = vunpack.c.h.b16 %v9116
    %v9956 = vunpack.c.l.b16 %v9117
    %v9957 = vunpack.c.l.b16 %v9118
    %v9958 = vunpack.c.h.b16 %v9118
    %v9959 = vunpack.c.l.b16 %v9119
    %v9960 = vunpack.c.h.b16 %v9119
    %v9961 = vunpack.c.l.b16 %v9120
    %v9962 = vunpack.c.h.b16 %v9120
    %v9963 = vunpack.c.l.b16 %v9121
    %v9964 = vunpack.c.l.b16 %v9122
    %v9965 = vunpack.c.h.b16 %v9122
    %v9966 = vunpack.c.l.b16 %v9123
    %v9967 = vunpack.c.h.b16 %v9123
    %v9968 = vunpack.c.l.b16 %v9124
    %v9969 = vunpack.c.h.b16 %v9124
    %v9970 = vunpack.c.l.b16 %v9125
    %v9971 = vunpack.c.l.b16 %v9126
    %v9972 = vunpack.c.h.b16 %v9126
    %v9973 = vunpack.c.l.b16 %v9127
    %v9974 = vunpack.c.h.b16 %v9127
    %v9975 = vunpack.c.l.b16 %v9128
    %v9976 = vunpack.c.h.b16 %v9128
    %v9977 = vunpack.c.l.b16 %v9129
    %v9978 = vunpack.c.l.b16 %v9130
    %v9979 = vunpack.c.h.b16 %v9130
    %v9980 = vunpack.c.l.b16 %v9131
    %v9981 = vunpack.c.h.b16 %v9131
    %v9982 = vunpack.c.l.b16 %v9132
    %v9983 = vunpack.c.h.b16 %v9132
    %v9984 = vunpack.c.l.b16 %v9133
    %v9985 = vunpack.c.l.b16 %v9134
    %v9986 = vunpack.c.h.b16 %v9134
    %v9987 = vunpack.c.l.b16 %v9135
    %v9988 = vunpack.c.h.b16 %v9135
    %v9989 = vunpack.c.l.b16 %v9136
    %v9990 = vunpack.c.h.b16 %v9136
    %v9991 = vunpack.c.l.b16 %v9137
    %v9992 = vunpack.c.l.b16 %v9138
    %v9993 = vunpack.c.h.b16 %v9138
    %v9994 = vunpack.c.l.b16 %v9139
    %v9995 = vunpack.c.h.b16 %v9139
    %v9996 = vunpack.c.l.b16 %v9140
    %v9997 = vunpack.c.h.b16 %v9140
    %v9998 = vunpack.c.l.b16 %v9141
    %v9999 = vunpack.c.l.b16 %v9142
    %v10000 = vunpack.c.h.b16 %v9142
    %v10001 = vunpack.c.l.b16 %v9143
    %v10002 = vunpack.c.h.b16 %v9143
    %v10003 = vunpack.c.l.b16 %v9144
    %v10004 = vunpack.c.h.b16 %v9144
    %v10005 = vunpack.c.l.b16 %v9145
    %v10006 = vunpack.c.l.b16 %v9146
    %v10007 = vunpack.c.h.b16 %v9146
    %v10008 = vunpack.c.l.b16 %v9147
    %v10009 = vunpack.c.h.b16 %v9147
    %v10010 = vunpack.c.l.b16 %v9148
    %v10011 = vunpack.c.h.b16 %v9148
    %v10012 = vunpack.c.l.b16 %v9149
    %v10013 = vunpack.c.l.b16 %v9150
    %v10014 = vunpack.c.h.b16 %v9150
    %v10015 = vunpack.c.l.b16 %v9151
    %v10016 = vunpack.c.h.b16 %v9151
    %v10017 = vunpack.c.l.b16 %v9152
    %v10018 = vunpack.c.h.b16 %v9152
    %v10019 = vunpack.c.l.b16 %v9153
    %v10020 = vunpack.c.l.b16 %v9154
    %v10021 = vunpack.c.h.b16 %v9154
    %v10022 = vunpack.c.l.b16 %v9155
    %v10023 = vunpack.c.h.b16 %v9155
    %v10024 = vunpack.c.l.b16 %v9156
    %v10025 = vunpack.c.h.b16 %v9156
    %v10026 = vunpack.c.l.b16 %v9157
    %v10027 = vunpack.c.l.b16 %v9158
    %v10028 = vunpack.c.h.b16 %v9158
    %v10029 = vunpack.c.l.b16 %v9159
    %v10030 = vunpack.c.h.b16 %v9159
    %v10031 = vunpack.c.l.b16 %v9160
    %v10032 = vunpack.c.h.b16 %v9160
    %v10033 = vunpack.c.l.b16 %v9161
    %v10034 = vunpack.c.l.b16 %v9162
    %v10035 = vunpack.c.h.b16 %v9162
    %v10036 = vunpack.c.l.b16 %v9163
    %v10037 = vunpack.c.h.b16 %v9163
    %v10038 = vunpack.c.l.b16 %v9164
    %v10039 = vunpack.c.h.b16 %v9164
    %v10040 = vunpack.c.l.b16 %v9165
    %v10041 = vunpack.c.l.b16 %v9166
    %v10042 = vunpack.c.h.b16 %v9166
    %v10043 = vunpack.c.l.b16 %v9167
    %v10044 = vunpack.c.h.b16 %v9167
    %v10045 = vunpack.c.l.b16 %v9168
    %v10046 = vunpack.c.h.b16 %v9168
    %v10047 = vunpack.c.l.b16 %v9169
    %v10048 = vunpack.c.l.b16 %v9170
    %v10049 = vunpack.c.h.b16 %v9170
    %v10050 = vunpack.c.l.b16 %v9171
    %v10051 = vunpack.c.h.b16 %v9171
    %v10052 = vunpack.c.l.b16 %v9172
    %v10053 = vunpack.c.h.b16 %v9172
    %v10054 = vunpack.c.l.b16 %v9173
    %v10055 = vunpack.c.l.b16 %v9174
    %v10056 = vunpack.c.h.b16 %v9174
    %v10057 = vunpack.c.l.b16 %v9175
    %v10058 = vunpack.c.h.b16 %v9175
    %v10059 = vunpack.c.l.b16 %v9176
    %v10060 = vunpack.c.h.b16 %v9176
    %v10061 = vunpack.c.l.b16 %v9177
    %v10062 = vunpack.c.l.b16 %v9178
    %v10063 = vunpack.c.h.b16 %v9178
    %v10064 = vunpack.c.l.b16 %v9179
    %v10065 = vunpack.c.h.b16 %v9179
    %v10066 = vunpack.c.l.b16 %v9180
    %v10067 = vunpack.c.h.b16 %v9180
    %v10068 = vunpack.c.l.b16 %v9181
    %v10069 = vunpack.c.l.b16 %v9182
    %v10070 = vunpack.c.h.b16 %v9182
    %v10071 = vunpack.c.l.b16 %v9183
    %v10072 = vunpack.c.h.b16 %v9183
    %v10073 = vunpack.c.l.b16 %v9184
    %v10074 = vunpack.c.h.b16 %v9184
    %v10075 = vunpack.c.l.b16 %v9185
    %v10076 = vunpack.c.l.b16 %v9186
    %v10077 = vunpack.c.h.b16 %v9186
    %v10078 = vunpack.c.l.b16 %v9187
    %v10079 = vunpack.c.h.b16 %v9187
    %v10080 = vunpack.c.l.b16 %v9188
    %v10081 = vunpack.c.h.b16 %v9188
    %v10082 = vunpack.c.l.b16 %v9189
    %v10083 = vunpack.c.l.b16 %v9190
    %v10084 = vunpack.c.h.b16 %v9190
    %v10085 = vunpack.c.l.b16 %v9191
    %v10086 = vunpack.c.h.b16 %v9191
    %v10087 = vunpack.c.l.b16 %v9192
    %v10088 = vunpack.c.h.b16 %v9192
    %v10089 = vunpack.c.l.b16 %v9193
    %v10090 = vunpack.c.l.b16 %v9194
    %v10091 = vunpack.c.h.b16 %v9194
    %v10092 = vunpack.c.l.b16 %v9195
    %v10093 = vunpack.c.h.b16 %v9195
    %v10094 = vunpack.c.l.b16 %v9196
    %v10095 = vunpack.c.h.b16 %v9196
    %v10096 = vunpack.c.l.b16 %v9197
    %v10097 = vunpack.c.l.b16 %v9198
    %v10098 = vunpack.c.h.b16 %v9198
    %v10099 = vunpack.c.l.b16 %v9199
    %v10100 = vunpack.c.h.b16 %v9199
    %v10101 = vunpack.c.l.b16 %v9200
    %v10102 = vunpack.c.h.b16 %v9200
    %v10103 = vunpack.c.l.b16 %v9201
    %v10104 = vunpack.c.l.b16 %v9202
    %v10105 = vunpack.c.h.b16 %v9202
    %v10106 = vunpack.c.l.b16 %v9203
    %v10107 = vunpack.c.h.b16 %v9203
    %v10108 = vunpack.c.l.b16 %v9204
    %v10109 = vunpack.c.h.b16 %v9204
    %v10110 = vunpack.c.l.b16 %v9205
    %v10111 = vunpack.c.l.b16 %v9206
    %v10112 = vunpack.c.h.b16 %v9206
    %v10113 = vunpack.c.l.b16 %v9207
    %v10114 = vunpack.c.h.b16 %v9207
    %v10115 = vunpack.c.l.b16 %v9208
    %v10116 = vunpack.c.h.b16 %v9208
    %v10117 = vunpack.c.l.b16 %v9209
    %v10118 = vunpack.c.l.b16 %v9210
    %v10119 = vunpack.c.h.b16 %v9210
    %v10120 = vunpack.c.l.b16 %v9211
    %v10121 = vunpack.c.h.b16 %v9211
    %v10122 = vunpack.c.l.b16 %v9212
    %v10123 = vunpack.c.h.b16 %v9212
    %v10124 = vunpack.c.l.b16 %v9213
    %v10125 = vunpack.c.l.b16 %v9214
    %v10126 = vunpack.c.h.b16 %v9214
    %v10127 = vunpack.c.l.b16 %v9215
    %v10128 = vunpack.c.h.b16 %v9215
    %v10129 = vunpack.c.l.b16 %v9216
    %v10130 = vunpack.c.h.b16 %v9216
    %v10131 = vunpack.c.l.b16 %v9217
    %v10132 = vunpack.c.l.b16 %v9218
    %v10133 = vunpack.c.h.b16 %v9218
    %v10134 = vunpack.c.l.b16 %v9219
    %v10135 = vunpack.c.h.b16 %v9219
    %v10136 = vunpack.c.l.b16 %v9220
    %v10137 = vunpack.c.h.b16 %v9220
    %v10138 = vunpack.c.l.b16 %v9221
    %v10139 = vunpack.c.l.b16 %v9222
    %v10140 = vunpack.c.h.b16 %v9222
    %v10141 = vunpack.c.l.b16 %v9223
    %v10142 = vunpack.c.h.b16 %v9223
    %v10143 = vunpack.c.l.b16 %v9224
    %v10144 = vunpack.c.h.b16 %v9224
    %v10145 = vunpack.c.l.b16 %v9225
    %v10146 = vunpack.c.l.b16 %v9226
    %v10147 = vunpack.c.h.b16 %v9226
    %v10148 = vunpack.c.l.b16 %v9227
    %v10149 = vunpack.c.h.b16 %v9227
    %v10150 = vunpack.c.l.b16 %v9228
    %v10151 = vunpack.c.h.b16 %v9228
    %v10152 = vunpack.c.l.b16 %v9229
    %v10153 = vunpack.c.l.b16 %v9230
    %v10154 = vunpack.c.h.b16 %v9230
    %v10155 = vunpack.c.l.b16 %v9231
    %v10156 = vunpack.c.h.b16 %v9231
    %v10157 = vunpack.c.l.b16 %v9232
    %v10158 = vunpack.c.h.b16 %v9232
    %v10159 = vunpack.c.l.b16 %v9233
    %v10160 = vunpack.c.l.b16 %v9234
    %v10161 = vunpack.c.h.b16 %v9234
    %v10162 = vunpack.c.l.b16 %v9235
    %v10163 = vunpack.c.h.b16 %v9235
    %v10164 = vunpack.c.l.b16 %v9236
    %v10165 = vunpack.c.h.b16 %v9236
    %v10166 = vunpack.c.l.b16 %v9237
    %v10167 = vunpack.c.l.b16 %v9238
    %v10168 = vunpack.c.h.b16 %v9238
    %v10169 = vunpack.c.l.b16 %v9239
    %v10170 = vunpack.c.h.b16 %v9239
    %v10171 = vunpack.c.l.b16 %v9240
    %v10172 = vunpack.c.h.b16 %v9240
    %v10173 = vunpack.c.l.b16 %v9241
    %v10174 = vunpack.c.l.b16 %v9242
    %v10175 = vunpack.c.h.b16 %v9242
    %v10176 = vunpack.c.l.b16 %v9243
    %v10177 = vunpack.c.h.b16 %v9243
    %v10178 = vunpack.c.l.b16 %v9244
    %v10179 = vunpack.c.h.b16 %v9244
    %v10180 = vunpack.c.l.b16 %v9245
    %v10181 = vunpack.c.l.b16 %v9246
    %v10182 = vunpack.c.h.b16 %v9246
    %v10183 = vunpack.c.l.b16 %v9247
    %v10184 = vunpack.c.h.b16 %v9247
    %v10185 = vunpack.c.l.b16 %v9248
    %v10186 = vunpack.c.h.b16 %v9248
    %v10187 = vunpack.c.l.b16 %v9249
    %v10188 = vunpack.c.l.b16 %v9250
    %v10189 = vunpack.c.h.b16 %v9250
    %v10190 = vunpack.c.l.b16 %v9251
    %v10191 = vunpack.c.h.b16 %v9251
    %v10192 = vunpack.c.l.b16 %v9252
    %v10193 = vunpack.c.h.b16 %v9252
    %v10194 = vunpack.c.l.b16 %v9253
    %v10195 = vunpack.c.l.b16 %v9254
    %v10196 = vunpack.c.h.b16 %v9254
    %v10197 = vunpack.c.l.b16 %v9255
    %v10198 = vunpack.c.h.b16 %v9255
    %v10199 = vunpack.c.l.b16 %v9256
    %v10200 = vunpack.c.h.b16 %v9256
    %v10201 = vunpack.c.l.b16 %v9257
    %v10202 = vunpack.c.l.b16 %v9258
    %v10203 = vunpack.c.h.b16 %v9258
    %v10204 = vunpack.c.l.b16 %v9259
    %v10205 = vunpack.c.h.b16 %v9259
    %v10206 = vunpack.c.l.b16 %v9260
    %v10207 = vunpack.c.h.b16 %v9260
    %v10208 = vunpack.c.l.b16 %v9261
    %v10209 = vunpack.c.l.b16 %v9262
    %v10210 = vunpack.c.h.b16 %v9262
    %v10211 = vunpack.c.l.b16 %v9263
    %v10212 = vunpack.c.h.b16 %v9263
    %v10213 = vunpack.c.l.b16 %v9264
    %v10214 = vunpack.c.h.b16 %v9264
    %v10215 = vunpack.c.l.b16 %v9265
    %v10216 = vunpack.c.l.b16 %v9266
    %v10217 = vunpack.c.h.b16 %v9266
    %v10218 = vunpack.c.l.b16 %v9267
    %v10219 = vunpack.c.h.b16 %v9267
    %v10220 = vunpack.c.l.b16 %v9268
    %v10221 = vunpack.c.h.b16 %v9268
    %v10222 = vunpack.c.l.b16 %v9269
    %v10223 = vunpack.c.l.b16 %v9270
    %v10224 = vunpack.c.h.b16 %v9270
    %v10225 = vunpack.c.l.b16 %v9271
    %v10226 = vunpack.c.h.b16 %v9271
    %v10227 = vunpack.c.l.b16 %v9272
    %v10228 = vunpack.c.h.b16 %v9272
    %v10229 = vunpack.c.l.b16 %v9273
    %v10230 = vunpack.c.l.b16 %v9274
    %v10231 = vunpack.c.h.b16 %v9274
    %v10232 = vunpack.c.l.b16 %v9275
    %v10233 = vunpack.c.h.b16 %v9275
    %v10234 = vunpack.c.l.b16 %v9276
    %v10235 = vunpack.c.h.b16 %v9276
    %v10236 = vunpack.c.l.b16 %v9277
    %v10237 = vunpack.c.l.b16 %v9278
    %v10238 = vunpack.c.h.b16 %v9278
    %v10239 = vunpack.c.l.b16 %v9279
    %v10240 = vunpack.c.h.b16 %v9279
    %v10241 = vunpack.c.l.b16 %v9280
    %v10242 = vunpack.c.h.b16 %v9280
    %v10243 = vunpack.c.l.b16 %v9281
    %v10244 = vunpack.c.l.b16 %v9282
    %v10245 = vunpack.c.h.b16 %v9282
    %v10246 = vunpack.c.l.b16 %v9283
    %v10247 = vunpack.c.h.b16 %v9283
    %v10248 = vunpack.c.l.b16 %v9284
    %v10249 = vunpack.c.h.b16 %v9284
    %v10250 = vunpack.c.l.b16 %v9285
    %v10251 = vunpack.c.l.b16 %v9286
    %v10252 = vunpack.c.h.b16 %v9286
    %v10253 = vunpack.c.l.b16 %v9287
    %v10254 = vunpack.c.h.b16 %v9287
    %v10255 = vunpack.c.l.b16 %v9288
    %v10256 = vunpack.c.h.b16 %v9288
    %v10257 = vunpack.c.l.b16 %v9289
    %v10258 = vunpack.c.l.b16 %v9290
    %v10259 = vunpack.c.h.b16 %v9290
    %v10260 = vunpack.c.l.b16 %v9291
    %v10261 = vunpack.c.h.b16 %v9291
    %v10262 = vunpack.c.l.b16 %v9292
    %v10263 = vunpack.c.h.b16 %v9292
    %v10264 = vunpack.c.l.b16 %v9293
    %v10265 = vunpack.c.l.b16 %v9294
    %v10266 = vunpack.c.h.b16 %v9294
    %v10267 = vunpack.c.l.b16 %v9295
    %v10268 = vunpack.c.h.b16 %v9295
    %v10269 = vunpack.c.l.b16 %v9296
    %v10270 = vunpack.c.h.b16 %v9296
    %v10271 = vunpack.c.l.b16 %v9297
    %v10272 = vunpack.c.l.b16 %v9298
    %v10273 = vunpack.c.h.b16 %v9298
    %v10274 = vunpack.c.l.b16 %v9299
    %v10275 = vunpack.c.h.b16 %v9299
    %v10276 = vunpack.c.l.b16 %v9300
    %v10277 = vunpack.c.h.b16 %v9300
    %v10278 = vunpack.c.l.b16 %v9301
    %v10279 = vunpack.c.l.b16 %v9302
    %v10280 = vunpack.c.h.b16 %v9302
    %v10281 = vunpack.c.l.b16 %v9303
    %v10282 = vunpack.c.h.b16 %v9303
    %v10283 = vunpack.c.l.b16 %v9304
    %v10284 = vunpack.c.h.b16 %v9304
    %v10285 = vunpack.c.l.b16 %v9305
    %v10286 = vunpack.c.l.b16 %v9306
    %v10287 = vunpack.c.h.b16 %v9306
    %v10288 = vunpack.c.l.b16 %v9307
    %v10289 = vunpack.c.h.b16 %v9307
    %v10290 = vunpack.c.l.b16 %v9308
    %v10291 = vunpack.c.h.b16 %v9308
    %v10292 = vunpack.c.l.b16 %v9309
    %v10293 = vunpack.c.l.b16 %v9310
    %v10294 = vunpack.c.h.b16 %v9310
    %v10295 = vunpack.c.l.b16 %v9311
    %v10296 = vunpack.c.h.b16 %v9311
    %v10297 = vunpack.c.l.b16 %v9312
    %v10298 = vunpack.c.h.b16 %v9312
    %v10299 = vunpack.c.l.b16 %v9313
    %v10300 = vunpack.c.l.b16 %v9314
    %v10301 = vunpack.c.h.b16 %v9314
    %v10302 = vunpack.c.l.b16 %v9315
    %v10303 = vunpack.c.h.b16 %v9315
    %v10304 = vunpack.c.l.b16 %v9316
    %v10305 = vunpack.c.h.b16 %v9316
    %v10306 = vunpack.c.l.b16 %v9317
    %v10307 = vunpack.c.l.b16 %v9318
    %v10308 = vunpack.c.h.b16 %v9318
    %v10309 = vunpack.c.l.b16 %v9319
    %v10310 = vunpack.c.h.b16 %v9319
    %v10311 = vunpack.c.l.b16 %v9320
    %v10312 = vunpack.c.h.b16 %v9320
    %v10313 = vunpack.c.l.b16 %v9321
    %v10314 = vunpack.c.l.b16 %v9322
    %v10315 = vunpack.c.h.b16 %v9322
    %v10316 = vunpack.c.l.b16 %v9323
    %v10317 = vunpack.c.h.b16 %v9323
    %v10318 = vunpack.c.l.b16 %v9324
    %v10319 = vunpack.c.h.b16 %v9324
    %v10320 = vunpack.c.l.b16 %v9325
    %v10321 = vunpack.c.l.b16 %v9326
    %v10322 = vunpack.c.h.b16 %v9326
    %v10323 = vunpack.c.l.b16 %v9327
    %v10324 = vunpack.c.h.b16 %v9327
    %v10325 = vunpack.c.l.b16 %v9328
    %v10326 = vunpack.c.h.b16 %v9328
    %v10327 = vunpack.c.l.b16 %v9329
    %v10328 = vunpack.c.l.b16 %v9330
    %v10329 = vunpack.c.h.b16 %v9330
    %v10330 = vunpack.c.l.b16 %v9331
    %v10331 = vunpack.c.h.b16 %v9331
    %v10332 = vunpack.c.l.b16 %v9332
    %v10333 = vunpack.c.h.b16 %v9332
    %v10334 = vunpack.c.l.b16 %v9333
    %v10335 = vunpack.c.l.b16 %v9334
    %v10336 = vunpack.c.h.b16 %v9334
    %v10337 = vunpack.c.l.b16 %v9335
    %v10338 = vunpack.c.h.b16 %v9335
    %v10339 = vunpack.c.l.b16 %v9336
    %v10340 = vunpack.c.h.b16 %v9336
    %v10341 = vunpack.c.l.b16 %v9337
    %v10342 = vunpack.c.l.b16 %v9338
    %v10343 = vunpack.c.h.b16 %v9338
    %v10344 = vunpack.c.l.b16 %v9339
    %v10345 = vunpack.c.h.b16 %v9339
    %v10346 = vunpack.c.l.b16 %v9340
    %v10347 = vunpack.c.h.b16 %v9340
    %v10348 = vunpack.c.l.b16 %v9341
    %v10349 = vunpack.c.l.b16 %v9342
    %v10350 = vunpack.c.h.b16 %v9342
    %v10351 = vunpack.c.l.b16 %v9343
    %v10352 = vunpack.c.h.b16 %v9343
    %v10353 = vunpack.c.l.b16 %v9344
    %v10354 = vunpack.c.h.b16 %v9344
    %v10355 = vunpack.c.l.b16 %v9345
    %v10356 = vunpack.c.l.b16 %v9346
    %v10357 = vunpack.c.h.b16 %v9346
    %v10358 = vunpack.c.l.b16 %v9347
    %v10359 = vunpack.c.h.b16 %v9347
    %v10360 = vunpack.c.l.b16 %v9348
    %v10361 = vunpack.c.h.b16 %v9348
    %v10362 = vunpack.c.l.b16 %v9349
    %v10363 = vunpack.c.l.b16 %v9350
    %v10364 = vunpack.c.h.b16 %v9350
    %v10365 = vunpack.c.l.b16 %v9351
    %v10366 = vunpack.c.h.b16 %v9351
    %v10367 = vunpack.c.l.b16 %v9352
    %v10368 = vunpack.c.h.b16 %v9352
    %v10369 = vunpack.c.l.b16 %v9353
    %v10370 = vunpack.c.l.b16 %v9354
    %v10371 = vunpack.c.h.b16 %v9354
    %v10372 = vunpack.c.l.b16 %v9355
    %v10373 = vunpack.c.h.b16 %v9355
    %v10374 = vunpack.c.l.b16 %v9356
    %v10375 = vunpack.c.h.b16 %v9356
    %v10376 = vunpack.c.l.b16 %v9357
    %v10377 = vunpack.c.l.b16 %v9358
    %v10378 = vunpack.c.h.b16 %v9358
    %v10379 = vunpack.c.l.b16 %v9359
    %v10380 = vunpack.c.h.b16 %v9359
    %v10381 = vunpack.c.l.b16 %v9360
    %v10382 = vunpack.c.h.b16 %v9360
    %v10383 = vunpack.c.l.b16 %v9361
    %v10384 = vunpack.c.l.b16 %v9362
    %v10385 = vunpack.c.h.b16 %v9362
    %v10386 = vunpack.c.l.b16 %v9363
    %v10387 = vunpack.c.h.b16 %v9363
    %v10388 = vunpack.c.l.b16 %v9364
    %v10389 = vunpack.c.h.b16 %v9364
    %v10390 = vunpack.c.l.b16 %v9365
    %v10391 = vunpack.c.l.b16 %v9366
    %v10392 = vunpack.c.h.b16 %v9366
    %v10393 = vunpack.c.l.b16 %v9367
    %v10394 = vunpack.c.h.b16 %v9367
    %v10395 = vunpack.c.l.b16 %v9368
    %v10396 = vunpack.c.h.b16 %v9368
    %v10397 = vunpack.c.l.b16 %v9369
    %v10398 = vunpack.c.l.b16 %v9370
    %v10399 = vunpack.c.h.b16 %v9370
    %v10400 = vunpack.c.l.b16 %v9371
    %v10401 = vunpack.c.h.b16 %v9371
    %v10402 = vunpack.c.l.b16 %v9372
    %v10403 = vunpack.c.h.b16 %v9372
    %v10404 = vunpack.c.l.b16 %v9373
    %v10405 = vunpack.c.l.b16 %v9374
    %v10406 = vunpack.c.h.b16 %v9374
    %v10407 = vunpack.c.l.b16 %v9375
    %v10408 = vunpack.c.h.b16 %v9375
    %v10409 = vunpack.c.l.b16 %v9376
    %v10410 = vunpack.c.h.b16 %v9376
    %v10411 = vunpack.c.l.b16 %v9377
    %v10412 = vunpack.c.l.b16 %v9378
    %v10413 = vunpack.c.h.b16 %v9378
    %v10414 = vunpack.c.l.b16 %v9379
    %v10415 = vunpack.c.h.b16 %v9379
    %v10416 = vunpack.c.l.b16 %v9380
    %v10417 = vunpack.c.h.b16 %v9380
    %v10418 = vunpack.c.l.b16 %v9381
    %v10419 = vunpack.c.l.b16 %v9382
    %v10420 = vunpack.c.h.b16 %v9382
    %v10421 = vunpack.c.l.b16 %v9383
    %v10422 = vunpack.c.h.b16 %v9383
    %v10423 = vunpack.c.l.b16 %v9384
    %v10424 = vunpack.c.h.b16 %v9384
    %v10425 = vunpack.c.l.b16 %v9385
    %v10426 = vunpack.c.l.b16 %v9386
    %v10427 = vunpack.c.h.b16 %v9386
    %v10428 = vunpack.c.l.b16 %v9387
    %v10429 = vunpack.c.h.b16 %v9387
    %v10430 = vunpack.c.l.b16 %v9388
    %v10431 = vunpack.c.h.b16 %v9388
    %v10432 = vunpack.c.l.b16 %v9389
    %v10433 = vunpack.c.l.b16 %v9390
    %v10434 = vunpack.c.h.b16 %v9390
    %v10435 = vunpack.c.l.b16 %v9391
    %v10436 = vunpack.c.h.b16 %v9391
    %v10437 = vunpack.c.l.b16 %v9392
    %v10438 = vunpack.c.h.b16 %v9392
    %v10439 = vunpack.c.l.b16 %v9393
    %v10440 = vunpack.c.l.b16 %v9394
    %v10441 = vunpack.c.h.b16 %v9394
    %v10442 = vunpack.c.l.b16 %v9395
    %v10443 = vunpack.c.h.b16 %v9395
    %v10444 = vunpack.c.l.b16 %v9396
    %v10445 = vunpack.c.h.b16 %v9396
    %v10446 = vunpack.c.l.b16 %v9397
    %v10447 = vunpack.c.l.b16 %v9398
    %v10448 = vunpack.c.h.b16 %v9398
    %v10449 = vunpack.c.l.b16 %v9399
    %v10450 = vunpack.c.h.b16 %v9399
    %v10451 = vunpack.c.l.b16 %v9400
    %v10452 = vunpack.c.h.b16 %v9400
    %v10453 = vunpack.c.l.b16 %v9401
    %v10454 = vunpack.c.l.b16 %v9402
    %v10455 = vunpack.c.h.b16 %v9402
    %v10456 = vunpack.c.l.b16 %v9403
    %v10457 = vunpack.c.h.b16 %v9403
    %v10458 = vunpack.c.l.b16 %v9404
    %v10459 = vunpack.c.h.b16 %v9404
    %v10460 = vunpack.c.l.b16 %v9405
    %v10461 = vunpack.c.l.b16 %v9406
    %v10462 = vunpack.c.h.b16 %v9406
    %v10463 = vunpack.c.l.b16 %v9407
    %v10464 = vunpack.c.h.b16 %v9407
    %v10465 = vunpack.c.l.b16 %v9408
    %v10466 = vunpack.c.h.b16 %v9408
    %v10467 = vunpack.c.l.b16 %v9409
    %v10468 = vunpack.c.l.b16 %v9410
    %v10469 = vunpack.c.h.b16 %v9410
    %v10470 = vunpack.c.l.b16 %v9411
    %v10471 = vunpack.c.h.b16 %v9411
    %v10472 = vunpack.c.l.b16 %v9412
    %v10473 = vunpack.c.h.b16 %v9412
    %v10474 = vunpack.c.l.b16 %v9413
    %v10475 = vunpack.c.l.b16 %v9414
    %v10476 = vunpack.c.h.b16 %v9414
    %v10477 = vunpack.c.l.b16 %v9415
    %v10478 = vunpack.c.h.b16 %v9415
    %v10479 = vunpack.c.l.b16 %v9416
    %v10480 = vunpack.c.h.b16 %v9416
    %v10481 = vunpack.c.l.b16 %v9417
    %v10482 = vunpack.c.l.b16 %v9418
    %v10483 = vunpack.c.h.b16 %v9418
    %v10484 = vunpack.c.l.b16 %v9419
    %v10485 = vunpack.c.h.b16 %v9419
    %v10486 = vunpack.c.l.b16 %v9420
    %v10487 = vunpack.c.h.b16 %v9420
    %v10488 = vunpack.c.l.b16 %v9421
    %v10489 = vunpack.c.l.b16 %v9422
    %v10490 = vunpack.c.h.b16 %v9422
    %v10491 = vunpack.c.l.b16 %v9423
    %v10492 = vunpack.c.h.b16 %v9423
    %v10493 = vunpack.c.l.b16 %v9424
    %v10494 = vunpack.c.h.b16 %v9424
    %v10495 = vunpack.c.l.b16 %v9425
    %v10496 = vunpack.c.l.b16 %v9426
    %v10497 = vunpack.c.h.b16 %v9426
    %v10498 = vunpack.c.l.b16 %v9427
    %v10499 = vunpack.c.h.b16 %v9427
    %v10500 = vunpack.c.l.b16 %v9428
    %v10501 = vunpack.c.h.b16 %v9428
    %v10502 = vunpack.c.l.b16 %v9429
    %v10503 = vunpack.c.l.b16 %v9430
    %v10504 = vunpack.c.h.b16 %v9430
    %v10505 = vunpack.c.l.b16 %v9431
    %v10506 = vunpack.c.h.b16 %v9431
    %v10507 = vunpack.c.l.b16 %v9432
    %v10508 = vunpack.c.h.b16 %v9432
    %v10509 = vunpack.c.l.b16 %v9433
    %v10510 = vunpack.c.l.b16 %v9434
    %v10511 = vunpack.c.h.b16 %v9434
    %v10512 = vunpack.c.l.b16 %v9435
    %v10513 = vunpack.c.h.b16 %v9435
    %v10514 = vunpack.c.l.b16 %v9436
    %v10515 = vunpack.c.h.b16 %v9436
    %v10516 = vunpack.c.l.b16 %v9437
    %v10517 = vunpack.c.l.b16 %v9438
    %v10518 = vunpack.c.h.b16 %v9438
    %v10519 = vunpack.c.l.b16 %v9439
    %v10520 = vunpack.c.h.b16 %v9439
    %v10521 = vunpack.c.l.b16 %v9440
    %v10522 = vunpack.c.h.b16 %v9440
    %v10523 = vunpack.c.l.b16 %v9441
    %v10524 = vunpack.c.l.b16 %v9442
    %v10525 = vunpack.c.h.b16 %v9442
    %v10526 = vunpack.c.l.b16 %v9443
    %v10527 = vunpack.c.h.b16 %v9443
    %v10528 = vunpack.c.l.b16 %v9444
    %v10529 = vunpack.c.h.b16 %v9444
    %v10530 = vunpack.c.l.b16 %v9445
    %v10531 = vunpack.c.l.b16 %v9446
    %v10532 = vunpack.c.h.b16 %v9446
    %v10533 = vunpack.c.l.b16 %v9447
    %v10534 = vunpack.c.h.b16 %v9447
    %v10535 = vunpack.c.l.b16 %v9448
    %v10536 = vunpack.c.h.b16 %v9448
    %v10537 = vunpack.c.l.b16 %v9449
    %v10538 = vunpack.c.l.b16 %v9450
    %v10539 = vunpack.c.h.b16 %v9450
    %v10540 = vunpack.c.l.b16 %v9451
    %v10541 = vunpack.c.h.b16 %v9451
    %v10542 = vunpack.c.l.b16 %v9452
    %v10543 = vunpack.c.h.b16 %v9452
    %v10544 = vunpack.c.l.b16 %v9453
    %v10545 = vunpack.c.l.b16 %v9454
    %v10546 = vunpack.c.h.b16 %v9454
    %v10547 = vunpack.c.l.b16 %v9455
    %v10548 = vunpack.c.h.b16 %v9455
    %v10549 = vunpack.c.l.b16 %v9456
    %v10550 = vunpack.c.h.b16 %v9456
    %v10551 = vunpack.c.l.b16 %v9457
    %v10552 = vpack.c.b16 %v9873, %v9866
    %v10553 = vpack.c.b16 %v9874, %v9867
    %v10554 = vpack.c.b16 %v9875, %v9868
    %v10555 = vpack.c.b16 %v9876, %v9869
    %v10556 = vpack.c.b16 %v9877, %v9870
    %v10557 = vpack.c.b16 %v9878, %v9871
    %v10558 = vpack.c.b16 %v9879, %v9872
    %v10559 = vpack.c.b16 %v9887, %v9880
    %v10560 = vpack.c.b16 %v9888, %v9881
    %v10561 = vpack.c.b16 %v9889, %v9882
    %v10562 = vpack.c.b16 %v9890, %v9883
    %v10563 = vpack.c.b16 %v9891, %v9884
    %v10564 = vpack.c.b16 %v9892, %v9885
    %v10565 = vpack.c.b16 %v9893, %v9886
    %v10566 = vpack.c.b16 %v9901, %v9894
    %v10567 = vpack.c.b16 %v9902, %v9895
    %v10568 = vpack.c.b16 %v9903, %v9896
    %v10569 = vpack.c.b16 %v9904, %v9897
    %v10570 = vpack.c.b16 %v9905, %v9898
    %v10571 = vpack.c.b16 %v9906, %v9899
    %v10572 = vpack.c.b16 %v9907, %v9900
    %v10573 = vpack.c.b16 %v9915, %v9908
    %v10574 = vpack.c.b16 %v9916, %v9909
    %v10575 = vpack.c.b16 %v9917, %v9910
    %v10576 = vpack.c.b16 %v9918, %v9911
    %v10577 = vpack.c.b16 %v9919, %v9912
    %v10578 = vpack.c.b16 %v9920, %v9913
    %v10579 = vpack.c.b16 %v9921, %v9914
    %v10580 = vpack.c.b16 %v9929, %v9922
    %v10581 = vpack.c.b16 %v9930, %v9923
    %v10582 = vpack.c.b16 %v9931, %v9924
    %v10583 = vpack.c.b16 %v9932, %v9925
    %v10584 = vpack.c.b16 %v9933, %v9926
    %v10585 = vpack.c.b16 %v9934, %v9927
    %v10586 = vpack.c.b16 %v9935, %v9928
    %v10587 = vpack.c.b16 %v9943, %v9936
    %v10588 = vpack.c.b16 %v9944, %v9937
    %v10589 = vpack.c.b16 %v9945, %v9938
    %v10590 = vpack.c.b16 %v9946, %v9939
    %v10591 = vpack.c.b16 %v9947, %v9940
    %v10592 = vpack.c.b16 %v9948, %v9941
    %v10593 = vpack.c.b16 %v9949, %v9942
    %v10594 = vpack.c.b16 %v9957, %v9950
    %v10595 = vpack.c.b16 %v9958, %v9951
    %v10596 = vpack.c.b16 %v9959, %v9952
    %v10597 = vpack.c.b16 %v9960, %v9953
    %v10598 = vpack.c.b16 %v9961, %v9954
    %v10599 = vpack.c.b16 %v9962, %v9955
    %v10600 = vpack.c.b16 %v9963, %v9956
    %v10601 = vpack.c.b16 %v9971, %v9964
    %v10602 = vpack.c.b16 %v9972, %v9965
    %v10603 = vpack.c.b16 %v9973, %v9966
    %v10604 = vpack.c.b16 %v9974, %v9967
    %v10605 = vpack.c.b16 %v9975, %v9968
    %v10606 = vpack.c.b16 %v9976, %v9969
    %v10607 = vpack.c.b16 %v9977, %v9970
    %v10608 = vpack.c.b16 %v9985, %v9978
    %v10609 = vpack.c.b16 %v9986, %v9979
    %v10610 = vpack.c.b16 %v9987, %v9980
    %v10611 = vpack.c.b16 %v9988, %v9981
    %v10612 = vpack.c.b16 %v9989, %v9982
    %v10613 = vpack.c.b16 %v9990, %v9983
    %v10614 = vpack.c.b16 %v9991, %v9984
    %v10615 = vpack.c.b16 %v9999, %v9992
    %v10616 = vpack.c.b16 %v10000, %v9993
    %v10617 = vpack.c.b16 %v10001, %v9994
    %v10618 = vpack.c.b16 %v10002, %v9995
    %v10619 = vpack.c.b16 %v10003, %v9996
    %v10620 = vpack.c.b16 %v10004, %v9997
    %v10621 = vpack.c.b16 %v10005, %v9998
    %v10622 = vpack.c.b16 %v10013, %v10006
    %v10623 = vpack.c.b16 %v10014, %v10007
    %v10624 = vpack.c.b16 %v10015, %v10008
    %v10625 = vpack.c.b16 %v10016, %v10009
    %v10626 = vpack.c.b16 %v10017, %v10010
    %v10627 = vpack.c.b16 %v10018, %v10011
    %v10628 = vpack.c.b16 %v10019, %v10012
    %v10629 = vpack.c.b16 %v10027, %v10020
    %v10630 = vpack.c.b16 %v10028, %v10021
    %v10631 = vpack.c.b16 %v10029, %v10022
    %v10632 = vpack.c.b16 %v10030, %v10023
    %v10633 = vpack.c.b16 %v10031, %v10024
    %v10634 = vpack.c.b16 %v10032, %v10025
    %v10635 = vpack.c.b16 %v10033, %v10026
    %v10636 = vpack.c.b16 %v10041, %v10034
    %v10637 = vpack.c.b16 %v10042, %v10035
    %v10638 = vpack.c.b16 %v10043, %v10036
    %v10639 = vpack.c.b16 %v10044, %v10037
    %v10640 = vpack.c.b16 %v10045, %v10038
    %v10641 = vpack.c.b16 %v10046, %v10039
    %v10642 = vpack.c.b16 %v10047, %v10040
    %v10643 = vpack.c.b16 %v10055, %v10048
    %v10644 = vpack.c.b16 %v10056, %v10049
    %v10645 = vpack.c.b16 %v10057, %v10050
    %v10646 = vpack.c.b16 %v10058, %v10051
    %v10647 = vpack.c.b16 %v10059, %v10052
    %v10648 = vpack.c.b16 %v10060, %v10053
    %v10649 = vpack.c.b16 %v10061, %v10054
    %v10650 = vpack.c.b16 %v10069, %v10062
    %v10651 = vpack.c.b16 %v10070, %v10063
    %v10652 = vpack.c.b16 %v10071, %v10064
    %v10653 = vpack.c.b16 %v10072, %v10065
    %v10654 = vpack.c.b16 %v10073, %v10066
    %v10655 = vpack.c.b16 %v10074, %v10067
    %v10656 = vpack.c.b16 %v10075, %v10068
    %v10657 = vpack.c.b16 %v10083, %v10076
    %v10658 = vpack.c.b16 %v10084, %v10077
    %v10659 = vpack.c.b16 %v10085, %v10078
    %v10660 = vpack.c.b16 %v10086, %v10079
    %v10661 = vpack.c.b16 %v10087, %v10080
    %v10662 = vpack.c.b16 %v10088, %v10081
    %v10663 = vpack.c.b16 %v10089, %v10082
    %v10664 = vpack.c.b16 %v10097, %v10090
    %v10665 = vpack.c.b16 %v10098, %v10091
    %v10666 = vpack.c.b16 %v10099, %v10092
    %v10667 = vpack.c.b16 %v10100, %v10093
    %v10668 = vpack.c.b16 %v10101, %v10094
    %v10669 = vpack.c.b16 %v10102, %v10095
    %v10670 = vpack.c.b16 %v10103, %v10096
    %v10671 = vpack.c.b16 %v10111, %v10104
    %v10672 = vpack.c.b16 %v10112, %v10105
    %v10673 = vpack.c.b16 %v10113, %v10106
    %v10674 = vpack.c.b16 %v10114, %v10107
    %v10675 = vpack.c.b16 %v10115, %v10108
    %v10676 = vpack.c.b16 %v10116, %v10109
    %v10677 = vpack.c.b16 %v10117, %v10110
    %v10678 = vpack.c.b16 %v10125, %v10118
    %v10679 = vpack.c.b16 %v10126, %v10119
    %v10680 = vpack.c.b16 %v10127, %v10120
    %v10681 = vpack.c.b16 %v10128, %v10121
    %v10682 = vpack.c.b16 %v10129, %v10122
    %v10683 = vpack.c.b16 %v10130, %v10123
    %v10684 = vpack.c.b16 %v10131, %v10124
    %v10685 = vpack.c.b16 %v10139, %v10132
    %v10686 = vpack.c.b16 %v10140, %v10133
    %v10687 = vpack.c.b16 %v10141, %v10134
    %v10688 = vpack.c.b16 %v10142, %v10135
    %v10689 = vpack.c.b16 %v10143, %v10136
    %v10690 = vpack.c.b16 %v10144, %v10137
    %v10691 = vpack.c.b16 %v10145, %v10138
    %v10692 = vpack.c.b16 %v10153, %v10146
    %v10693 = vpack.c.b16 %v10154, %v10147
    %v10694 = vpack.c.b16 %v10155, %v10148
    %v10695 = vpack.c.b16 %v10156, %v10149
    %v10696 = vpack.c.b16 %v10157, %v10150
    %v10697 = vpack.c.b16 %v10158, %v10151
    %v10698 = vpack.c.b16 %v10159, %v10152
    %v10699 = vpack.c.b16 %v10167, %v10160
    %v10700 = vpack.c.b16 %v10168, %v10161
    %v10701 = vpack.c.b16 %v10169, %v10162
    %v10702 = vpack.c.b16 %v10170, %v10163
    %v10703 = vpack.c.b16 %v10171, %v10164
    %v10704 = vpack.c.b16 %v10172, %v10165
    %v10705 = vpack.c.b16 %v10173, %v10166
    %v10706 = vpack.c.b16 %v10181, %v10174
    %v10707 = vpack.c.b16 %v10182, %v10175
    %v10708 = vpack.c.b16 %v10183, %v10176
    %v10709 = vpack.c.b16 %v10184, %v10177
    %v10710 = vpack.c.b16 %v10185, %v10178
    %v10711 = vpack.c.b16 %v10186, %v10179
    %v10712 = vpack.c.b16 %v10187, %v10180
    %v10713 = vpack.c.b16 %v10195, %v10188
    %v10714 = vpack.c.b16 %v10196, %v10189
    %v10715 = vpack.c.b16 %v10197, %v10190
    %v10716 = vpack.c.b16 %v10198, %v10191
    %v10717 = vpack.c.b16 %v10199, %v10192
    %v10718 = vpack.c.b16 %v10200, %v10193
    %v10719 = vpack.c.b16 %v10201, %v10194
    %v10720 = vpack.c.b16 %v10209, %v10202
    %v10721 = vpack.c.b16 %v10210, %v10203
    %v10722 = vpack.c.b16 %v10211, %v10204
    %v10723 = vpack.c.b16 %v10212, %v10205
    %v10724 = vpack.c.b16 %v10213, %v10206
    %v10725 = vpack.c.b16 %v10214, %v10207
    %v10726 = vpack.c.b16 %v10215, %v10208
    %v10727 = vpack.c.b16 %v10223, %v10216
    %v10728 = vpack.c.b16 %v10224, %v10217
    %v10729 = vpack.c.b16 %v10225, %v10218
    %v10730 = vpack.c.b16 %v10226, %v10219
    %v10731 = vpack.c.b16 %v10227, %v10220
    %v10732 = vpack.c.b16 %v10228, %v10221
    %v10733 = vpack.c.b16 %v10229, %v10222
    %v10734 = vpack.c.b16 %v10237, %v10230
    %v10735 = vpack.c.b16 %v10238, %v10231
    %v10736 = vpack.c.b16 %v10239, %v10232
    %v10737 = vpack.c.b16 %v10240, %v10233
    %v10738 = vpack.c.b16 %v10241, %v10234
    %v10739 = vpack.c.b16 %v10242, %v10235
    %v10740 = vpack.c.b16 %v10243, %v10236
    %v10741 = vpack.c.b16 %v10251, %v10244
    %v10742 = vpack.c.b16 %v10252, %v10245
    %v10743 = vpack.c.b16 %v10253, %v10246
    %v10744 = vpack.c.b16 %v10254, %v10247
    %v10745 = vpack.c.b16 %v10255, %v10248
    %v10746 = vpack.c.b16 %v10256, %v10249
    %v10747 = vpack.c.b16 %v10257, %v10250
    %v10748 = vpack.c.b16 %v10265, %v10258
    %v10749 = vpack.c.b16 %v10266, %v10259
    %v10750 = vpack.c.b16 %v10267, %v10260
    %v10751 = vpack.c.b16 %v10268, %v10261
    %v10752 = vpack.c.b16 %v10269, %v10262
    %v10753 = vpack.c.b16 %v10270, %v10263
    %v10754 = vpack.c.b16 %v10271, %v10264
    %v10755 = vpack.c.b16 %v10279, %v10272
    %v10756 = vpack.c.b16 %v10280, %v10273
    %v10757 = vpack.c.b16 %v10281, %v10274
    %v10758 = vpack.c.b16 %v10282, %v10275
    %v10759 = vpack.c.b16 %v10283, %v10276
    %v10760 = vpack.c.b16 %v10284, %v10277
    %v10761 = vpack.c.b16 %v10285, %v10278
    %v10762 = vpack.c.b16 %v10293, %v10286
    %v10763 = vpack.c.b16 %v10294, %v10287
    %v10764 = vpack.c.b16 %v10295, %v10288
    %v10765 = vpack.c.b16 %v10296, %v10289
    %v10766 = vpack.c.b16 %v10297, %v10290
    %v10767 = vpack.c.b16 %v10298, %v10291
    %v10768 = vpack.c.b16 %v10299, %v10292
    %v10769 = vpack.c.b16 %v10307, %v10300
    %v10770 = vpack.c.b16 %v10308, %v10301
    %v10771 = vpack.c.b16 %v10309, %v10302
    %v10772 = vpack.c.b16 %v10310, %v10303
    %v10773 = vpack.c.b16 %v10311, %v10304
    %v10774 = vpack.c.b16 %v10312, %v10305
    %v10775 = vpack.c.b16 %v10313, %v10306
    %v10776 = vpack.c.b16 %v10321, %v10314
    %v10777 = vpack.c.b16 %v10322, %v10315
    %v10778 = vpack.c.b16 %v10323, %v10316
    %v10779 = vpack.c.b16 %v10324, %v10317
    %v10780 = vpack.c.b16 %v10325, %v10318
    %v10781 = vpack.c.b16 %v10326, %v10319
    %v10782 = vpack.c.b16 %v10327, %v10320
    %v10783 = vpack.c.b16 %v10335, %v10328
    %v10784 = vpack.c.b16 %v10336, %v10329
    %v10785 = vpack.c.b16 %v10337, %v10330
    %v10786 = vpack.c.b16 %v10338, %v10331
    %v10787 = vpack.c.b16 %v10339, %v10332
    %v10788 = vpack.c.b16 %v10340, %v10333
    %v10789 = vpack.c.b16 %v10341, %v10334
    %v10790 = vpack.c.b16 %v10349, %v10342
    %v10791 = vpack.c.b16 %v10350, %v10343
    %v10792 = vpack.c.b16 %v10351, %v10344
    %v10793 = vpack.c.b16 %v10352, %v10345
    %v10794 = vpack.c.b16 %v10353, %v10346
    %v10795 = vpack.c.b16 %v10354, %v10347
    %v10796 = vpack.c.b16 %v10355, %v10348
    %v10797 = vpack.c.b16 %v10363, %v10356
    %v10798 = vpack.c.b16 %v10364, %v10357
    %v10799 = vpack.c.b16 %v10365, %v10358
    %v10800 = vpack.c.b16 %v10366, %v10359
    %v10801 = vpack.c.b16 %v10367, %v10360
    %v10802 = vpack.c.b16 %v10368, %v10361
    %v10803 = vpack.c.b16 %v10369, %v10362
    %v10804 = vpack.c.b16 %v10377, %v10370
    %v10805 = vpack.c.b16 %v10378, %v10371
    %v10806 = vpack.c.b16 %v10379, %v10372
    %v10807 = vpack.c.b16 %v10380, %v10373
    %v10808 = vpack.c.b16 %v10381, %v10374
    %v10809 = vpack.c.b16 %v10382, %v10375
    %v10810 = vpack.c.b16 %v10383, %v10376
    %v10811 = vpack.c.b16 %v10391, %v10384
    %v10812 = vpack.c.b16 %v10392, %v10385
    %v10813 = vpack.c.b16 %v10393, %v10386
    %v10814 = vpack.c.b16 %v10394, %v10387
    %v10815 = vpack.c.b16 %v10395, %v10388
    %v10816 = vpack.c.b16 %v10396, %v10389
    %v10817 = vpack.c.b16 %v10397, %v10390
    %v10818 = vpack.c.b16 %v10405, %v10398
    %v10819 = vpack.c.b16 %v10406, %v10399
    %v10820 = vpack.c.b16 %v10407, %v10400
    %v10821 = vpack.c.b16 %v10408, %v10401
    %v10822 = vpack.c.b16 %v10409, %v10402
    %v10823 = vpack.c.b16 %v10410, %v10403
    %v10824 = vpack.c.b16 %v10411, %v10404
    %v10825 = vpack.c.b16 %v10419, %v10412
    %v10826 = vpack.c.b16 %v10420, %v10413
    %v10827 = vpack.c.b16 %v10421, %v10414
    %v10828 = vpack.c.b16 %v10422, %v10415
    %v10829 = vpack.c.b16 %v10423, %v10416
    %v10830 = vpack.c.b16 %v10424, %v10417
    %v10831 = vpack.c.b16 %v10425, %v10418
    %v10832 = vpack.c.b16 %v10433, %v10426
    %v10833 = vpack.c.b16 %v10434, %v10427
    %v10834 = vpack.c.b16 %v10435, %v10428
    %v10835 = vpack.c.b16 %v10436, %v10429
    %v10836 = vpack.c.b16 %v10437, %v10430
    %v10837 = vpack.c.b16 %v10438, %v10431
    %v10838 = vpack.c.b16 %v10439, %v10432
    %v10839 = vpack.c.b16 %v10447, %v10440
    %v10840 = vpack.c.b16 %v10448, %v10441
    %v10841 = vpack.c.b16 %v10449, %v10442
    %v10842 = vpack.c.b16 %v10450, %v10443
    %v10843 = vpack.c.b16 %v10451, %v10444
    %v10844 = vpack.c.b16 %v10452, %v10445
    %v10845 = vpack.c.b16 %v10453, %v10446
    %v10846 = vpack.c.b16 %v10461, %v10454
    %v10847 = vpack.c.b16 %v10462, %v10455
    %v10848 = vpack.c.b16 %v10463, %v10456
    %v10849 = vpack.c.b16 %v10464, %v10457
    %v10850 = vpack.c.b16 %v10465, %v10458
    %v10851 = vpack.c.b16 %v10466, %v10459
    %v10852 = vpack.c.b16 %v10467, %v10460
    %v10853 = vpack.c.b16 %v10475, %v10468
    %v10854 = vpack.c.b16 %v10476, %v10469
    %v10855 = vpack.c.b16 %v10477, %v10470
    %v10856 = vpack.c.b16 %v10478, %v10471
    %v10857 = vpack.c.b16 %v10479, %v10472
    %v10858 = vpack.c.b16 %v10480, %v10473
    %v10859 = vpack.c.b16 %v10481, %v10474
    %v10860 = vpack.c.b16 %v10489, %v10482
    %v10861 = vpack.c.b16 %v10490, %v10483
    %v10862 = vpack.c.b16 %v10491, %v10484
    %v10863 = vpack.c.b16 %v10492, %v10485
    %v10864 = vpack.c.b16 %v10493, %v10486
    %v10865 = vpack.c.b16 %v10494, %v10487
    %v10866 = vpack.c.b16 %v10495, %v10488
    %v10867 = vpack.c.b16 %v10503, %v10496
    %v10868 = vpack.c.b16 %v10504, %v10497
    %v10869 = vpack.c.b16 %v10505, %v10498
    %v10870 = vpack.c.b16 %v10506, %v10499
    %v10871 = vpack.c.b16 %v10507, %v10500
    %v10872 = vpack.c.b16 %v10508, %v10501
    %v10873 = vpack.c.b16 %v10509, %v10502
    %v10874 = vpack.c.b16 %v10517, %v10510
    %v10875 = vpack.c.b16 %v10518, %v10511
    %v10876 = vpack.c.b16 %v10519, %v10512
    %v10877 = vpack.c.b16 %v10520, %v10513
    %v10878 = vpack.c.b16 %v10521, %v10514
    %v10879 = vpack.c.b16 %v10522, %v10515
    %v10880 = vpack.c.b16 %v10523, %v10516
    %v10881 = vpack.c.b16 %v10531, %v10524
    %v10882 = vpack.c.b16 %v10532, %v10525
    %v10883 = vpack.c.b16 %v10533, %v10526
    %v10884 = vpack.c.b16 %v10534, %v10527
    %v10885 = vpack.c.b16 %v10535, %v10528
    %v10886 = vpack.c.b16 %v10536, %v10529
    %v10887 = vpack.c.b16 %v10537, %v10530
    %v10888 = vpack.c.b16 %v10545, %v10538
    %v10889 = vpack.c.b16 %v10546, %v10539
    %v10890 = vpack.c.b16 %v10547, %v10540
    %v10891 = vpack.c.b16 %v10548, %v10541
    %v10892 = vpack.c.b16 %v10549, %v10542
    %v10893 = vpack.c.b16 %v10550, %v10543
    %v10894 = vpack.c.b16 %v10551, %v10544
    %v11239 = vsel %vm5132, %v9065, 0
    %11241 = vmatpush.bf16.msra.mxu0 %v10601
    %11242 = vmatpush.bf16.msra.mxu0 %v10594
    %11243 = vmatpush.bf16.msra.mxu0 %v10587
    %11244 = vmatpush.bf16.msra.mxu0 %v10580
    %11245 = vmatpush.bf16.msra.mxu0 %v10573
    %11246 = vmatpush.bf16.msra.mxu0 %v10566
    %11247 = vmatpush.bf16.msra.mxu0 %v10559
    %11248 = vmatpush.bf16.msra.mxu0 %v10552
    %11249 = vmatmul.bf16.gmra.mxu0 %v9059
    %v11250 = vpop.f32.mrf.mxu0
    %v11251 = vadd.f32 %v9460, %v11250
    %v11252 = vpop.f32.mrf.mxu0
    %11253 = vdwg.mxu0
    %11254 = vmatpush.bf16.msra.mxu0 %v10657
    %11255 = vmatpush.bf16.msra.mxu0 %v10650
    %11256 = vmatpush.bf16.msra.mxu0 %v10643
    %11257 = vmatpush.bf16.msra.mxu0 %v10636
    %11258 = vmatpush.bf16.msra.mxu0 %v10629
    %11259 = vmatpush.bf16.msra.mxu0 %v10622
    %11260 = vmatpush.bf16.msra.mxu0 %v10615
    %11261 = vmatpush.bf16.msra.mxu0 %v10608
    %11262 = vmatmul.bf16.gmra.mxu0 %v9060
    %v11263 = vpop.f32.mrf.mxu0
    %v11264 = vadd.f32 %v11251, %v11263
    %v11265 = vpop.f32.mrf.mxu0
    %11266 = vdwg.mxu0
    %11267 = vmatpush.bf16.msra.mxu0 %v10713
    %11268 = vmatpush.bf16.msra.mxu0 %v10706
    %11269 = vmatpush.bf16.msra.mxu0 %v10699
    %11270 = vmatpush.bf16.msra.mxu0 %v10692
    %11271 = vmatpush.bf16.msra.mxu0 %v10685
    %11272 = vmatpush.bf16.msra.mxu0 %v10678
    %11273 = vmatpush.bf16.msra.mxu0 %v10671
    %11274 = vmatpush.bf16.msra.mxu0 %v10664
    %11275 = vmatmul.bf16.gmra.mxu0 %v9061
    %v11276 = vpop.f32.mrf.mxu0
    %v11277 = vadd.f32 %v11264, %v11276
    %v11278 = vpop.f32.mrf.mxu0
    %11279 = vdwg.mxu0
    %11280 = vmatpush.bf16.msra.mxu0 %v10769
    %11281 = vmatpush.bf16.msra.mxu0 %v10762
    %11282 = vmatpush.bf16.msra.mxu0 %v10755
    %11283 = vmatpush.bf16.msra.mxu0 %v10748
    %11284 = vmatpush.bf16.msra.mxu0 %v10741
    %11285 = vmatpush.bf16.msra.mxu0 %v10734
    %11286 = vmatpush.bf16.msra.mxu0 %v10727
    %11287 = vmatpush.bf16.msra.mxu0 %v10720
    %11288 = vmatmul.bf16.gmra.mxu0 %v9062
    %v11289 = vpop.f32.mrf.mxu0
    %v11290 = vadd.f32 %v11277, %v11289
    %v11291 = vpop.f32.mrf.mxu0
    %11292 = vdwg.mxu0
    %11293 = vmatpush.bf16.msra.mxu0 %v10825
    %11294 = vmatpush.bf16.msra.mxu0 %v10818
    %11295 = vmatpush.bf16.msra.mxu0 %v10811
    %11296 = vmatpush.bf16.msra.mxu0 %v10804
    %11297 = vmatpush.bf16.msra.mxu0 %v10797
    %11298 = vmatpush.bf16.msra.mxu0 %v10790
    %11299 = vmatpush.bf16.msra.mxu0 %v10783
    %11300 = vmatpush.bf16.msra.mxu0 %v10776
    %11301 = vmatmul.bf16.gmra.mxu0 %v9063
    %v11302 = vpop.f32.mrf.mxu0
    %v11303 = vadd.f32 %v11290, %v11302
    %v11304 = vpop.f32.mrf.mxu0
    %11305 = vdwg.mxu0
    %11306 = vmatpush.bf16.msra.mxu0 %v10881
    %11307 = vmatpush.bf16.msra.mxu0 %v10874
    %11308 = vmatpush.bf16.msra.mxu0 %v10867
    %11309 = vmatpush.bf16.msra.mxu0 %v10860
    %11310 = vmatpush.bf16.msra.mxu0 %v10853
    %11311 = vmatpush.bf16.msra.mxu0 %v10846
    %11312 = vmatpush.bf16.msra.mxu0 %v10839
    %11313 = vmatpush.bf16.msra.mxu0 %v10832
    %11314 = vmatmul.bf16.gmra.mxu0 %v9064
    %v11315 = vpop.f32.mrf.mxu0
    %v11316 = vadd.f32 %v11303, %v11315
    %v11317 = vpop.f32.mrf.mxu0
    %11318 = vdwg.mxu0
    %11319 = vmatpush.bf16.msra.mxu0 0
    %11320 = vmatpush.bf16.msra.mxu0 0
    %11321 = vmatpush.bf16.msra.mxu0 0
    %11322 = vmatpush.bf16.msra.mxu0 0
    %11323 = vmatpush.bf16.msra.mxu0 0
    %11324 = vmatpush.bf16.msra.mxu0 0
    %11325 = vmatpush.bf16.msra.mxu0 0
    %11326 = vmatpush.bf16.msra.mxu0 %v10888
    %11327 = vmatmul.bf16.gmra.mxu0 %v11239
    %v11328 = vpop.f32.mrf.mxu0
    %v11329 = vadd.f32 %v11316, %v11328
    %v11330 = vpop.f32.mrf.mxu0
    %11331 = vdwg.mxu0
    %11332 = vmatpush.bf16.msra.mxu0 %v10602
    %11333 = vmatpush.bf16.msra.mxu0 %v10595
    %11334 = vmatpush.bf16.msra.mxu0 %v10588
    %11335 = vmatpush.bf16.msra.mxu0 %v10581
    %11336 = vmatpush.bf16.msra.mxu0 %v10574
    %11337 = vmatpush.bf16.msra.mxu0 %v10567
    %11338 = vmatpush.bf16.msra.mxu0 %v10560
    %11339 = vmatpush.bf16.msra.mxu0 %v10553
    %11340 = vmatmul.bf16.gmra.mxu0 %v9059
    %v11341 = vpop.f32.mrf.mxu0
    %v11342 = vadd.f32 %v9461, %v11341
    %v11343 = vpop.f32.mrf.mxu0
    %11344 = vdwg.mxu0
    %11345 = vmatpush.bf16.msra.mxu0 %v10658
    %11346 = vmatpush.bf16.msra.mxu0 %v10651
    %11347 = vmatpush.bf16.msra.mxu0 %v10644
    %11348 = vmatpush.bf16.msra.mxu0 %v10637
    %11349 = vmatpush.bf16.msra.mxu0 %v10630
    %11350 = vmatpush.bf16.msra.mxu0 %v10623
    %11351 = vmatpush.bf16.msra.mxu0 %v10616
    %11352 = vmatpush.bf16.msra.mxu0 %v10609
    %11353 = vmatmul.bf16.gmra.mxu0 %v9060
    %v11354 = vpop.f32.mrf.mxu0
    %v11355 = vadd.f32 %v11342, %v11354
    %v11356 = vpop.f32.mrf.mxu0
    %11357 = vdwg.mxu0
    %11358 = vmatpush.bf16.msra.mxu0 %v10714
    %11359 = vmatpush.bf16.msra.mxu0 %v10707
    %11360 = vmatpush.bf16.msra.mxu0 %v10700
    %11361 = vmatpush.bf16.msra.mxu0 %v10693
    %11362 = vmatpush.bf16.msra.mxu0 %v10686
    %11363 = vmatpush.bf16.msra.mxu0 %v10679
    %11364 = vmatpush.bf16.msra.mxu0 %v10672
    %11365 = vmatpush.bf16.msra.mxu0 %v10665
    %11366 = vmatmul.bf16.gmra.mxu0 %v9061
    %v11367 = vpop.f32.mrf.mxu0
    %v11368 = vadd.f32 %v11355, %v11367
    %v11369 = vpop.f32.mrf.mxu0
    %11370 = vdwg.mxu0
    %11371 = vmatpush.bf16.msra.mxu0 %v10770
    %11372 = vmatpush.bf16.msra.mxu0 %v10763
    %11373 = vmatpush.bf16.msra.mxu0 %v10756
    %11374 = vmatpush.bf16.msra.mxu0 %v10749
    %11375 = vmatpush.bf16.msra.mxu0 %v10742
    %11376 = vmatpush.bf16.msra.mxu0 %v10735
    %11377 = vmatpush.bf16.msra.mxu0 %v10728
    %11378 = vmatpush.bf16.msra.mxu0 %v10721
    %11379 = vmatmul.bf16.gmra.mxu0 %v9062
    %v11380 = vpop.f32.mrf.mxu0
    %v11381 = vadd.f32 %v11368, %v11380
    %v11382 = vpop.f32.mrf.mxu0
    %11383 = vdwg.mxu0
    %11384 = vmatpush.bf16.msra.mxu0 %v10826
    %11385 = vmatpush.bf16.msra.mxu0 %v10819
    %11386 = vmatpush.bf16.msra.mxu0 %v10812
    %11387 = vmatpush.bf16.msra.mxu0 %v10805
    %11388 = vmatpush.bf16.msra.mxu0 %v10798
    %11389 = vmatpush.bf16.msra.mxu0 %v10791
    %11390 = vmatpush.bf16.msra.mxu0 %v10784
    %11391 = vmatpush.bf16.msra.mxu0 %v10777
    %11392 = vmatmul.bf16.gmra.mxu0 %v9063
    %v11393 = vpop.f32.mrf.mxu0
    %v11394 = vadd.f32 %v11381, %v11393
    %v11395 = vpop.f32.mrf.mxu0
    %11396 = vdwg.mxu0
    %11397 = vmatpush.bf16.msra.mxu0 %v10882
    %11398 = vmatpush.bf16.msra.mxu0 %v10875
    %11399 = vmatpush.bf16.msra.mxu0 %v10868
    %11400 = vmatpush.bf16.msra.mxu0 %v10861
    %11401 = vmatpush.bf16.msra.mxu0 %v10854
    %11402 = vmatpush.bf16.msra.mxu0 %v10847
    %11403 = vmatpush.bf16.msra.mxu0 %v10840
    %11404 = vmatpush.bf16.msra.mxu0 %v10833
    %11405 = vmatmul.bf16.gmra.mxu0 %v9064
    %v11406 = vpop.f32.mrf.mxu0
    %v11407 = vadd.f32 %v11394, %v11406
    %v11408 = vpop.f32.mrf.mxu0
    %11409 = vdwg.mxu0
    %11410 = vmatpush.bf16.msra.mxu0 0
    %11411 = vmatpush.bf16.msra.mxu0 0
    %11412 = vmatpush.bf16.msra.mxu0 0
    %11413 = vmatpush.bf16.msra.mxu0 0
    %11414 = vmatpush.bf16.msra.mxu0 0
    %11415 = vmatpush.bf16.msra.mxu0 0
    %11416 = vmatpush.bf16.msra.mxu0 0
    %11417 = vmatpush.bf16.msra.mxu0 %v10889
    %11418 = vmatmul.bf16.gmra.mxu0 %v11239
    %v11419 = vpop.f32.mrf.mxu0
    %v11420 = vadd.f32 %v11407, %v11419
    %v11421 = vpop.f32.mrf.mxu0
    %11422 = vdwg.mxu0
    %11423 = vmatpush.bf16.msra.mxu0 %v10603
    %11424 = vmatpush.bf16.msra.mxu0 %v10596
    %11425 = vmatpush.bf16.msra.mxu0 %v10589
    %11426 = vmatpush.bf16.msra.mxu0 %v10582
    %11427 = vmatpush.bf16.msra.mxu0 %v10575
    %11428 = vmatpush.bf16.msra.mxu0 %v10568
    %11429 = vmatpush.bf16.msra.mxu0 %v10561
    %11430 = vmatpush.bf16.msra.mxu0 %v10554
    %11431 = vmatmul.bf16.gmra.mxu0 %v9059
    %v11432 = vpop.f32.mrf.mxu0
    %v11433 = vadd.f32 %v9462, %v11432
    %v11434 = vpop.f32.mrf.mxu0
    %11435 = vdwg.mxu0
    %11436 = vmatpush.bf16.msra.mxu0 %v10659
    %11437 = vmatpush.bf16.msra.mxu0 %v10652
    %11438 = vmatpush.bf16.msra.mxu0 %v10645
    %11439 = vmatpush.bf16.msra.mxu0 %v10638
    %11440 = vmatpush.bf16.msra.mxu0 %v10631
    %11441 = vmatpush.bf16.msra.mxu0 %v10624
    %11442 = vmatpush.bf16.msra.mxu0 %v10617
    %11443 = vmatpush.bf16.msra.mxu0 %v10610
    %11444 = vmatmul.bf16.gmra.mxu0 %v9060
    %v11445 = vpop.f32.mrf.mxu0
    %v11446 = vadd.f32 %v11433, %v11445
    %v11447 = vpop.f32.mrf.mxu0
    %11448 = vdwg.mxu0
    %11449 = vmatpush.bf16.msra.mxu0 %v10715
    %11450 = vmatpush.bf16.msra.mxu0 %v10708
    %11451 = vmatpush.bf16.msra.mxu0 %v10701
    %11452 = vmatpush.bf16.msra.mxu0 %v10694
    %11453 = vmatpush.bf16.msra.mxu0 %v10687
    %11454 = vmatpush.bf16.msra.mxu0 %v10680
    %11455 = vmatpush.bf16.msra.mxu0 %v10673
    %11456 = vmatpush.bf16.msra.mxu0 %v10666
    %11457 = vmatmul.bf16.gmra.mxu0 %v9061
    %v11458 = vpop.f32.mrf.mxu0
    %v11459 = vadd.f32 %v11446, %v11458
    %v11460 = vpop.f32.mrf.mxu0
    %11461 = vdwg.mxu0
    %11462 = vmatpush.bf16.msra.mxu0 %v10771
    %11463 = vmatpush.bf16.msra.mxu0 %v10764
    %11464 = vmatpush.bf16.msra.mxu0 %v10757
    %11465 = vmatpush.bf16.msra.mxu0 %v10750
    %11466 = vmatpush.bf16.msra.mxu0 %v10743
    %11467 = vmatpush.bf16.msra.mxu0 %v10736
    %11468 = vmatpush.bf16.msra.mxu0 %v10729
    %11469 = vmatpush.bf16.msra.mxu0 %v10722
    %11470 = vmatmul.bf16.gmra.mxu0 %v9062
    %v11471 = vpop.f32.mrf.mxu0
    %v11472 = vadd.f32 %v11459, %v11471
    %v11473 = vpop.f32.mrf.mxu0
    %11474 = vdwg.mxu0
    %11475 = vmatpush.bf16.msra.mxu0 %v10827
    %11476 = vmatpush.bf16.msra.mxu0 %v10820
    %11477 = vmatpush.bf16.msra.mxu0 %v10813
    %11478 = vmatpush.bf16.msra.mxu0 %v10806
    %11479 = vmatpush.bf16.msra.mxu0 %v10799
    %11480 = vmatpush.bf16.msra.mxu0 %v10792
    %11481 = vmatpush.bf16.msra.mxu0 %v10785
    %11482 = vmatpush.bf16.msra.mxu0 %v10778
    %11483 = vmatmul.bf16.gmra.mxu0 %v9063
    %v11484 = vpop.f32.mrf.mxu0
    %v11485 = vadd.f32 %v11472, %v11484
    %v11486 = vpop.f32.mrf.mxu0
    %11487 = vdwg.mxu0
    %11488 = vmatpush.bf16.msra.mxu0 %v10883
    %11489 = vmatpush.bf16.msra.mxu0 %v10876
    %11490 = vmatpush.bf16.msra.mxu0 %v10869
    %11491 = vmatpush.bf16.msra.mxu0 %v10862
    %11492 = vmatpush.bf16.msra.mxu0 %v10855
    %11493 = vmatpush.bf16.msra.mxu0 %v10848
    %11494 = vmatpush.bf16.msra.mxu0 %v10841
    %11495 = vmatpush.bf16.msra.mxu0 %v10834
    %11496 = vmatmul.bf16.gmra.mxu0 %v9064
    %v11497 = vpop.f32.mrf.mxu0
    %v11498 = vadd.f32 %v11485, %v11497
    %v11499 = vpop.f32.mrf.mxu0
    %11500 = vdwg.mxu0
    %11501 = vmatpush.bf16.msra.mxu0 0
    %11502 = vmatpush.bf16.msra.mxu0 0
    %11503 = vmatpush.bf16.msra.mxu0 0
    %11504 = vmatpush.bf16.msra.mxu0 0
    %11505 = vmatpush.bf16.msra.mxu0 0
    %11506 = vmatpush.bf16.msra.mxu0 0
    %11507 = vmatpush.bf16.msra.mxu0 0
    %11508 = vmatpush.bf16.msra.mxu0 %v10890
    %11509 = vmatmul.bf16.gmra.mxu0 %v11239
    %v11510 = vpop.f32.mrf.mxu0
    %v11511 = vadd.f32 %v11498, %v11510
    %v11512 = vpop.f32.mrf.mxu0
    %11513 = vdwg.mxu0
    %11514 = vmatpush.bf16.msra.mxu0 %v10604
    %11515 = vmatpush.bf16.msra.mxu0 %v10597
    %11516 = vmatpush.bf16.msra.mxu0 %v10590
    %11517 = vmatpush.bf16.msra.mxu0 %v10583
    %11518 = vmatpush.bf16.msra.mxu0 %v10576
    %11519 = vmatpush.bf16.msra.mxu0 %v10569
    %11520 = vmatpush.bf16.msra.mxu0 %v10562
    %11521 = vmatpush.bf16.msra.mxu0 %v10555
    %11522 = vmatmul.bf16.gmra.mxu0 %v9059
    %v11523 = vpop.f32.mrf.mxu0
    %v11524 = vadd.f32 %v9463, %v11523
    %v11525 = vpop.f32.mrf.mxu0
    %11526 = vdwg.mxu0
    %11527 = vmatpush.bf16.msra.mxu0 %v10660
    %11528 = vmatpush.bf16.msra.mxu0 %v10653
    %11529 = vmatpush.bf16.msra.mxu0 %v10646
    %11530 = vmatpush.bf16.msra.mxu0 %v10639
    %11531 = vmatpush.bf16.msra.mxu0 %v10632
    %11532 = vmatpush.bf16.msra.mxu0 %v10625
    %11533 = vmatpush.bf16.msra.mxu0 %v10618
    %11534 = vmatpush.bf16.msra.mxu0 %v10611
    %11535 = vmatmul.bf16.gmra.mxu0 %v9060
    %v11536 = vpop.f32.mrf.mxu0
    %v11537 = vadd.f32 %v11524, %v11536
    %v11538 = vpop.f32.mrf.mxu0
    %11539 = vdwg.mxu0
    %11540 = vmatpush.bf16.msra.mxu0 %v10716
    %11541 = vmatpush.bf16.msra.mxu0 %v10709
    %11542 = vmatpush.bf16.msra.mxu0 %v10702
    %11543 = vmatpush.bf16.msra.mxu0 %v10695
    %11544 = vmatpush.bf16.msra.mxu0 %v10688
    %11545 = vmatpush.bf16.msra.mxu0 %v10681
    %11546 = vmatpush.bf16.msra.mxu0 %v10674
    %11547 = vmatpush.bf16.msra.mxu0 %v10667
    %11548 = vmatmul.bf16.gmra.mxu0 %v9061
    %v11549 = vpop.f32.mrf.mxu0
    %v11550 = vadd.f32 %v11537, %v11549
    %v11551 = vpop.f32.mrf.mxu0
    %11552 = vdwg.mxu0
    %11553 = vmatpush.bf16.msra.mxu0 %v10772
    %11554 = vmatpush.bf16.msra.mxu0 %v10765
    %11555 = vmatpush.bf16.msra.mxu0 %v10758
    %11556 = vmatpush.bf16.msra.mxu0 %v10751
    %11557 = vmatpush.bf16.msra.mxu0 %v10744
    %11558 = vmatpush.bf16.msra.mxu0 %v10737
    %11559 = vmatpush.bf16.msra.mxu0 %v10730
    %11560 = vmatpush.bf16.msra.mxu0 %v10723
    %11561 = vmatmul.bf16.gmra.mxu0 %v9062
    %v11562 = vpop.f32.mrf.mxu0
    %v11563 = vadd.f32 %v11550, %v11562
    %v11564 = vpop.f32.mrf.mxu0
    %11565 = vdwg.mxu0
    %11566 = vmatpush.bf16.msra.mxu0 %v10828
    %11567 = vmatpush.bf16.msra.mxu0 %v10821
    %11568 = vmatpush.bf16.msra.mxu0 %v10814
    %11569 = vmatpush.bf16.msra.mxu0 %v10807
    %11570 = vmatpush.bf16.msra.mxu0 %v10800
    %11571 = vmatpush.bf16.msra.mxu0 %v10793
    %11572 = vmatpush.bf16.msra.mxu0 %v10786
    %11573 = vmatpush.bf16.msra.mxu0 %v10779
    %11574 = vmatmul.bf16.gmra.mxu0 %v9063
    %v11575 = vpop.f32.mrf.mxu0
    %v11576 = vadd.f32 %v11563, %v11575
    %v11577 = vpop.f32.mrf.mxu0
    %11578 = vdwg.mxu0
    %11579 = vmatpush.bf16.msra.mxu0 %v10884
    %11580 = vmatpush.bf16.msra.mxu0 %v10877
    %11581 = vmatpush.bf16.msra.mxu0 %v10870
    %11582 = vmatpush.bf16.msra.mxu0 %v10863
    %11583 = vmatpush.bf16.msra.mxu0 %v10856
    %11584 = vmatpush.bf16.msra.mxu0 %v10849
    %11585 = vmatpush.bf16.msra.mxu0 %v10842
    %11586 = vmatpush.bf16.msra.mxu0 %v10835
    %11587 = vmatmul.bf16.gmra.mxu0 %v9064
    %v11588 = vpop.f32.mrf.mxu0
    %v11589 = vadd.f32 %v11576, %v11588
    %v11590 = vpop.f32.mrf.mxu0
    %11591 = vdwg.mxu0
    %11592 = vmatpush.bf16.msra.mxu0 0
    %11593 = vmatpush.bf16.msra.mxu0 0
    %11594 = vmatpush.bf16.msra.mxu0 0
    %11595 = vmatpush.bf16.msra.mxu0 0
    %11596 = vmatpush.bf16.msra.mxu0 0
    %11597 = vmatpush.bf16.msra.mxu0 0
    %11598 = vmatpush.bf16.msra.mxu0 0
    %11599 = vmatpush.bf16.msra.mxu0 %v10891
    %11600 = vmatmul.bf16.gmra.mxu0 %v11239
    %v11601 = vpop.f32.mrf.mxu0
    %v11602 = vadd.f32 %v11589, %v11601
    %v11603 = vpop.f32.mrf.mxu0
    %11604 = vdwg.mxu0
    %11605 = vmatpush.bf16.msra.mxu0 %v10605
    %11606 = vmatpush.bf16.msra.mxu0 %v10598
    %11607 = vmatpush.bf16.msra.mxu0 %v10591
    %11608 = vmatpush.bf16.msra.mxu0 %v10584
    %11609 = vmatpush.bf16.msra.mxu0 %v10577
    %11610 = vmatpush.bf16.msra.mxu0 %v10570
    %11611 = vmatpush.bf16.msra.mxu0 %v10563
    %11612 = vmatpush.bf16.msra.mxu0 %v10556
    %11613 = vmatmul.bf16.gmra.mxu0 %v9059
    %v11614 = vpop.f32.mrf.mxu0
    %v11615 = vadd.f32 %v9464, %v11614
    %v11616 = vpop.f32.mrf.mxu0
    %11617 = vdwg.mxu0
    %11618 = vmatpush.bf16.msra.mxu0 %v10661
    %11619 = vmatpush.bf16.msra.mxu0 %v10654
    %11620 = vmatpush.bf16.msra.mxu0 %v10647
    %11621 = vmatpush.bf16.msra.mxu0 %v10640
    %11622 = vmatpush.bf16.msra.mxu0 %v10633
    %11623 = vmatpush.bf16.msra.mxu0 %v10626
    %11624 = vmatpush.bf16.msra.mxu0 %v10619
    %11625 = vmatpush.bf16.msra.mxu0 %v10612
    %11626 = vmatmul.bf16.gmra.mxu0 %v9060
    %v11627 = vpop.f32.mrf.mxu0
    %v11628 = vadd.f32 %v11615, %v11627
    %v11629 = vpop.f32.mrf.mxu0
    %11630 = vdwg.mxu0
    %11631 = vmatpush.bf16.msra.mxu0 %v10717
    %11632 = vmatpush.bf16.msra.mxu0 %v10710
    %11633 = vmatpush.bf16.msra.mxu0 %v10703
    %11634 = vmatpush.bf16.msra.mxu0 %v10696
    %11635 = vmatpush.bf16.msra.mxu0 %v10689
    %11636 = vmatpush.bf16.msra.mxu0 %v10682
    %11637 = vmatpush.bf16.msra.mxu0 %v10675
    %11638 = vmatpush.bf16.msra.mxu0 %v10668
    %11639 = vmatmul.bf16.gmra.mxu0 %v9061
    %v11640 = vpop.f32.mrf.mxu0
    %v11641 = vadd.f32 %v11628, %v11640
    %v11642 = vpop.f32.mrf.mxu0
    %11643 = vdwg.mxu0
    %11644 = vmatpush.bf16.msra.mxu0 %v10773
    %11645 = vmatpush.bf16.msra.mxu0 %v10766
    %11646 = vmatpush.bf16.msra.mxu0 %v10759
    %11647 = vmatpush.bf16.msra.mxu0 %v10752
    %11648 = vmatpush.bf16.msra.mxu0 %v10745
    %11649 = vmatpush.bf16.msra.mxu0 %v10738
    %11650 = vmatpush.bf16.msra.mxu0 %v10731
    %11651 = vmatpush.bf16.msra.mxu0 %v10724
    %11652 = vmatmul.bf16.gmra.mxu0 %v9062
    %v11653 = vpop.f32.mrf.mxu0
    %v11654 = vadd.f32 %v11641, %v11653
    %v11655 = vpop.f32.mrf.mxu0
    %11656 = vdwg.mxu0
    %11657 = vmatpush.bf16.msra.mxu0 %v10829
    %11658 = vmatpush.bf16.msra.mxu0 %v10822
    %11659 = vmatpush.bf16.msra.mxu0 %v10815
    %11660 = vmatpush.bf16.msra.mxu0 %v10808
    %11661 = vmatpush.bf16.msra.mxu0 %v10801
    %11662 = vmatpush.bf16.msra.mxu0 %v10794
    %11663 = vmatpush.bf16.msra.mxu0 %v10787
    %11664 = vmatpush.bf16.msra.mxu0 %v10780
    %11665 = vmatmul.bf16.gmra.mxu0 %v9063
    %v11666 = vpop.f32.mrf.mxu0
    %v11667 = vadd.f32 %v11654, %v11666
    %v11668 = vpop.f32.mrf.mxu0
    %11669 = vdwg.mxu0
    %11670 = vmatpush.bf16.msra.mxu0 %v10885
    %11671 = vmatpush.bf16.msra.mxu0 %v10878
    %11672 = vmatpush.bf16.msra.mxu0 %v10871
    %11673 = vmatpush.bf16.msra.mxu0 %v10864
    %11674 = vmatpush.bf16.msra.mxu0 %v10857
    %11675 = vmatpush.bf16.msra.mxu0 %v10850
    %11676 = vmatpush.bf16.msra.mxu0 %v10843
    %11677 = vmatpush.bf16.msra.mxu0 %v10836
    %11678 = vmatmul.bf16.gmra.mxu0 %v9064
    %v11679 = vpop.f32.mrf.mxu0
    %v11680 = vadd.f32 %v11667, %v11679
    %v11681 = vpop.f32.mrf.mxu0
    %11682 = vdwg.mxu0
    %11683 = vmatpush.bf16.msra.mxu0 0
    %11684 = vmatpush.bf16.msra.mxu0 0
    %11685 = vmatpush.bf16.msra.mxu0 0
    %11686 = vmatpush.bf16.msra.mxu0 0
    %11687 = vmatpush.bf16.msra.mxu0 0
    %11688 = vmatpush.bf16.msra.mxu0 0
    %11689 = vmatpush.bf16.msra.mxu0 0
    %11690 = vmatpush.bf16.msra.mxu0 %v10892
    %11691 = vmatmul.bf16.gmra.mxu0 %v11239
    %v11692 = vpop.f32.mrf.mxu0
    %v11693 = vadd.f32 %v11680, %v11692
    %v11694 = vpop.f32.mrf.mxu0
    %11695 = vdwg.mxu0
    %11696 = vmatpush.bf16.msra.mxu0 %v10606
    %11697 = vmatpush.bf16.msra.mxu0 %v10599
    %11698 = vmatpush.bf16.msra.mxu0 %v10592
    %11699 = vmatpush.bf16.msra.mxu0 %v10585
    %11700 = vmatpush.bf16.msra.mxu0 %v10578
    %11701 = vmatpush.bf16.msra.mxu0 %v10571
    %11702 = vmatpush.bf16.msra.mxu0 %v10564
    %11703 = vmatpush.bf16.msra.mxu0 %v10557
    %11704 = vmatmul.bf16.gmra.mxu0 %v9059
    %v11705 = vpop.f32.mrf.mxu0
    %v11706 = vadd.f32 %v9465, %v11705
    %v11707 = vpop.f32.mrf.mxu0
    %11708 = vdwg.mxu0
    %11709 = vmatpush.bf16.msra.mxu0 %v10662
    %11710 = vmatpush.bf16.msra.mxu0 %v10655
    %11711 = vmatpush.bf16.msra.mxu0 %v10648
    %11712 = vmatpush.bf16.msra.mxu0 %v10641
    %11713 = vmatpush.bf16.msra.mxu0 %v10634
    %11714 = vmatpush.bf16.msra.mxu0 %v10627
    %11715 = vmatpush.bf16.msra.mxu0 %v10620
    %11716 = vmatpush.bf16.msra.mxu0 %v10613
    %11717 = vmatmul.bf16.gmra.mxu0 %v9060
    %v11718 = vpop.f32.mrf.mxu0
    %v11719 = vadd.f32 %v11706, %v11718
    %v11720 = vpop.f32.mrf.mxu0
    %11721 = vdwg.mxu0
    %11722 = vmatpush.bf16.msra.mxu0 %v10718
    %11723 = vmatpush.bf16.msra.mxu0 %v10711
    %11724 = vmatpush.bf16.msra.mxu0 %v10704
    %11725 = vmatpush.bf16.msra.mxu0 %v10697
    %11726 = vmatpush.bf16.msra.mxu0 %v10690
    %11727 = vmatpush.bf16.msra.mxu0 %v10683
    %11728 = vmatpush.bf16.msra.mxu0 %v10676
    %11729 = vmatpush.bf16.msra.mxu0 %v10669
    %11730 = vmatmul.bf16.gmra.mxu0 %v9061
    %v11731 = vpop.f32.mrf.mxu0
    %v11732 = vadd.f32 %v11719, %v11731
    %v11733 = vpop.f32.mrf.mxu0
    %11734 = vdwg.mxu0
    %11735 = vmatpush.bf16.msra.mxu0 %v10774
    %11736 = vmatpush.bf16.msra.mxu0 %v10767
    %11737 = vmatpush.bf16.msra.mxu0 %v10760
    %11738 = vmatpush.bf16.msra.mxu0 %v10753
    %11739 = vmatpush.bf16.msra.mxu0 %v10746
    %11740 = vmatpush.bf16.msra.mxu0 %v10739
    %11741 = vmatpush.bf16.msra.mxu0 %v10732
    %11742 = vmatpush.bf16.msra.mxu0 %v10725
    %11743 = vmatmul.bf16.gmra.mxu0 %v9062
    %v11744 = vpop.f32.mrf.mxu0
    %v11745 = vadd.f32 %v11732, %v11744
    %v11746 = vpop.f32.mrf.mxu0
    %11747 = vdwg.mxu0
    %11748 = vmatpush.bf16.msra.mxu0 %v10830
    %11749 = vmatpush.bf16.msra.mxu0 %v10823
    %11750 = vmatpush.bf16.msra.mxu0 %v10816
    %11751 = vmatpush.bf16.msra.mxu0 %v10809
    %11752 = vmatpush.bf16.msra.mxu0 %v10802
    %11753 = vmatpush.bf16.msra.mxu0 %v10795
    %11754 = vmatpush.bf16.msra.mxu0 %v10788
    %11755 = vmatpush.bf16.msra.mxu0 %v10781
    %11756 = vmatmul.bf16.gmra.mxu0 %v9063
    %v11757 = vpop.f32.mrf.mxu0
    %v11758 = vadd.f32 %v11745, %v11757
    %v11759 = vpop.f32.mrf.mxu0
    %11760 = vdwg.mxu0
    %11761 = vmatpush.bf16.msra.mxu0 %v10886
    %11762 = vmatpush.bf16.msra.mxu0 %v10879
    %11763 = vmatpush.bf16.msra.mxu0 %v10872
    %11764 = vmatpush.bf16.msra.mxu0 %v10865
    %11765 = vmatpush.bf16.msra.mxu0 %v10858
    %11766 = vmatpush.bf16.msra.mxu0 %v10851
    %11767 = vmatpush.bf16.msra.mxu0 %v10844
    %11768 = vmatpush.bf16.msra.mxu0 %v10837
    %11769 = vmatmul.bf16.gmra.mxu0 %v9064
    %v11770 = vpop.f32.mrf.mxu0
    %v11771 = vadd.f32 %v11758, %v11770
    %v11772 = vpop.f32.mrf.mxu0
    %11773 = vdwg.mxu0
    %11774 = vmatpush.bf16.msra.mxu0 0
    %11775 = vmatpush.bf16.msra.mxu0 0
    %11776 = vmatpush.bf16.msra.mxu0 0
    %11777 = vmatpush.bf16.msra.mxu0 0
    %11778 = vmatpush.bf16.msra.mxu0 0
    %11779 = vmatpush.bf16.msra.mxu0 0
    %11780 = vmatpush.bf16.msra.mxu0 0
    %11781 = vmatpush.bf16.msra.mxu0 %v10893
    %11782 = vmatmul.bf16.gmra.mxu0 %v11239
    %v11783 = vpop.f32.mrf.mxu0
    %v11784 = vadd.f32 %v11771, %v11783
    %v11785 = vpop.f32.mrf.mxu0
    %11786 = vdwg.mxu0
    %11787 = vmatpush.bf16.msra.mxu0 %v10607
    %11788 = vmatpush.bf16.msra.mxu0 %v10600
    %11789 = vmatpush.bf16.msra.mxu0 %v10593
    %11790 = vmatpush.bf16.msra.mxu0 %v10586
    %11791 = vmatpush.bf16.msra.mxu0 %v10579
    %11792 = vmatpush.bf16.msra.mxu0 %v10572
    %11793 = vmatpush.bf16.msra.mxu0 %v10565
    %11794 = vmatpush.bf16.msra.mxu0 %v10558
    %11795 = vmatmul.bf16.gmra.mxu0 %v9059
    %v11796 = vpop.f32.mrf.mxu0
    %v11797 = vadd.f32 %v9466, %v11796
    %v11798 = vpop.f32.mrf.mxu0
    %11799 = vdwg.mxu0
    %11800 = vmatpush.bf16.msra.mxu0 %v10663
    %11801 = vmatpush.bf16.msra.mxu0 %v10656
    %11802 = vmatpush.bf16.msra.mxu0 %v10649
    %11803 = vmatpush.bf16.msra.mxu0 %v10642
    %11804 = vmatpush.bf16.msra.mxu0 %v10635
    %11805 = vmatpush.bf16.msra.mxu0 %v10628
    %11806 = vmatpush.bf16.msra.mxu0 %v10621
    %11807 = vmatpush.bf16.msra.mxu0 %v10614
    %11808 = vmatmul.bf16.gmra.mxu0 %v9060
    %v11809 = vpop.f32.mrf.mxu0
    %v11810 = vadd.f32 %v11797, %v11809
    %v11811 = vpop.f32.mrf.mxu0
    %11812 = vdwg.mxu0
    %11813 = vmatpush.bf16.msra.mxu0 %v10719
    %11814 = vmatpush.bf16.msra.mxu0 %v10712
    %11815 = vmatpush.bf16.msra.mxu0 %v10705
    %11816 = vmatpush.bf16.msra.mxu0 %v10698
    %11817 = vmatpush.bf16.msra.mxu0 %v10691
    %11818 = vmatpush.bf16.msra.mxu0 %v10684
    %11819 = vmatpush.bf16.msra.mxu0 %v10677
    %11820 = vmatpush.bf16.msra.mxu0 %v10670
    %11821 = vmatmul.bf16.gmra.mxu0 %v9061
    %v11822 = vpop.f32.mrf.mxu0
    %v11823 = vadd.f32 %v11810, %v11822
    %v11824 = vpop.f32.mrf.mxu0
    %11825 = vdwg.mxu0
    %11826 = vmatpush.bf16.msra.mxu0 %v10775
    %11827 = vmatpush.bf16.msra.mxu0 %v10768
    %11828 = vmatpush.bf16.msra.mxu0 %v10761
    %11829 = vmatpush.bf16.msra.mxu0 %v10754
    %11830 = vmatpush.bf16.msra.mxu0 %v10747
    %11831 = vmatpush.bf16.msra.mxu0 %v10740
    %11832 = vmatpush.bf16.msra.mxu0 %v10733
    %11833 = vmatpush.bf16.msra.mxu0 %v10726
    %11834 = vmatmul.bf16.gmra.mxu0 %v9062
    %v11835 = vpop.f32.mrf.mxu0
    %v11836 = vadd.f32 %v11823, %v11835
    %v11837 = vpop.f32.mrf.mxu0
    %11838 = vdwg.mxu0
    %11839 = vmatpush.bf16.msra.mxu0 %v10831
    %11840 = vmatpush.bf16.msra.mxu0 %v10824
    %11841 = vmatpush.bf16.msra.mxu0 %v10817
    %11842 = vmatpush.bf16.msra.mxu0 %v10810
    %11843 = vmatpush.bf16.msra.mxu0 %v10803
    %11844 = vmatpush.bf16.msra.mxu0 %v10796
    %11845 = vmatpush.bf16.msra.mxu0 %v10789
    %11846 = vmatpush.bf16.msra.mxu0 %v10782
    %11847 = vmatmul.bf16.gmra.mxu0 %v9063
    %v11848 = vpop.f32.mrf.mxu0
    %v11849 = vadd.f32 %v11836, %v11848
    %v11850 = vpop.f32.mrf.mxu0
    %11851 = vdwg.mxu0
    %11852 = vmatpush.bf16.msra.mxu0 %v10887
    %11853 = vmatpush.bf16.msra.mxu0 %v10880
    %11854 = vmatpush.bf16.msra.mxu0 %v10873
    %11855 = vmatpush.bf16.msra.mxu0 %v10866
    %11856 = vmatpush.bf16.msra.mxu0 %v10859
    %11857 = vmatpush.bf16.msra.mxu0 %v10852
    %11858 = vmatpush.bf16.msra.mxu0 %v10845
    %11859 = vmatpush.bf16.msra.mxu0 %v10838
    %11860 = vmatmul.bf16.gmra.mxu0 %v9064
    %v11861 = vpop.f32.mrf.mxu0
    %v11862 = vadd.f32 %v11849, %v11861
    %v11863 = vpop.f32.mrf.mxu0
    %11864 = vdwg.mxu0
    %11865 = vmatpush.bf16.msra.mxu0 0
    %11866 = vmatpush.bf16.msra.mxu0 0
    %11867 = vmatpush.bf16.msra.mxu0 0
    %11868 = vmatpush.bf16.msra.mxu0 0
    %11869 = vmatpush.bf16.msra.mxu0 0
    %11870 = vmatpush.bf16.msra.mxu0 0
    %11871 = vmatpush.bf16.msra.mxu0 0
    %11872 = vmatpush.bf16.msra.mxu0 %v10894
    %11873 = vmatmul.bf16.gmra.mxu0 %v11239
    %v11874 = vpop.f32.mrf.mxu0
    %v11875 = vadd.f32 %v11862, %v11874
    %v11876 = vpop.f32.mrf.mxu0
    %11877 = vdwg.mxu0
    %v11878 = vmax.f32 %v11329, 0.0
    %v11879 = vmax.f32 %v11420, 0.0
    %v11880 = vmax.f32 %v11511, 0.0
    %v11881 = vmax.f32 %v11602, 0.0
    %v11882 = vmax.f32 %v11693, 0.0
    %v11883 = vmax.f32 %v11784, 0.0
    %v11884 = vmax.f32 %v11875, 0.0
    %v11885 = vpack.c.bf16 %v11878, %v11878
    %v11886 = vpack.c.bf16 %v11879, %v11879
    %v11887 = vpack.c.bf16 %v11880, %v11880
    %v11888 = vpack.c.bf16 %v11881, %v11881
    %v11889 = vpack.c.bf16 %v11882, %v11882
    %v11890 = vpack.c.bf16 %v11883, %v11883
    %v11891 = vpack.c.bf16 %v11884, %v11884
    %v11892 = vld [vmem:[%s11] sm:$0xf]
    %v11893 = vld [vmem:[%s11 + $0x4] sm:$0xf]
    %v11894 = vld [vmem:[%s11 + $0x8] sm:$0xf]
    %v11895 = vld [vmem:[%s11 + $0xc] sm:$0xf]
    %v11896 = vld [vmem:[%s11 + $0x10] sm:$0xf]
    %v11897 = vld [vmem:[%s11 + $0x14] sm:$0xf]
    %v11898 = vld [vmem:[%s11 + $0x18] sm:$0xf]
    %v11899 = vld [vmem:[%s11 + $0x1c] sm:$0xf]
    %v11900 = vld [vmem:[%s11 + $0x20] sm:$0xf]
    %v11901 = vld [vmem:[%s11 + $0x24] sm:$0xf]
    %v11902 = vld [vmem:[%s11 + $0x28] sm:$0xf]
    %v11903 = vld [vmem:[%s11 + $0x2c] sm:$0xf]
    %v11904 = vld [vmem:[%s11 + $0x30] sm:$0xf]
    %v11905 = vld [vmem:[%s11 + $0x34] sm:$0xf]
    %v11906 = vld [vmem:[%s11 + $0x38] sm:$0xf]
    %v11907 = vld [vmem:[%s11 + $0x3c] sm:$0xf]
    %v11908 = vld [vmem:[%s11 + $0x40] sm:$0xf]
    %v11909 = vld [vmem:[%s11 + $0x44] sm:$0xf]
    %v11910 = vld [vmem:[%s11 + $0x48] sm:$0xf]
    %v11911 = vld [vmem:[%s11 + $0x4c] sm:$0xf]
    %v11912 = vld [vmem:[%s11 + $0x50] sm:$0xf]
    %v11913 = vld [vmem:[%s11 + $0x54] sm:$0xf]
    %v11914 = vld [vmem:[%s11 + $0x58] sm:$0xf]
    %v11915 = vld [vmem:[%s11 + $0x5c] sm:$0xf]
    %v11916 = vld [vmem:[%s11 + $0x60] sm:$0xf]
    %v11917 = vld [vmem:[%s11 + $0x64] sm:$0xf]
    %v11918 = vld [vmem:[%s11 + $0x68] sm:$0xf]
    %v11919 = vld [vmem:[%s11 + $0x6c] sm:$0xf]
    %v11920 = vld [vmem:[%s11 + $0x70] sm:$0xf]
    %v11921 = vld [vmem:[%s11 + $0x74] sm:$0xf]
    %v11922 = vld [vmem:[%s11 + $0x78] sm:$0xf]
    %v11923 = vld [vmem:[%s11 + $0x7c] sm:$0xf]
    %v11924 = vld [vmem:[%s11 + $0x80] sm:$0xf]
    %v11925 = vld [vmem:[%s11 + $0x84] sm:$0xf]
    %v11926 = vld [vmem:[%s11 + $0x88] sm:$0xf]
    %v11927 = vld [vmem:[%s11 + $0x8c] sm:$0xf]
    %v11928 = vld [vmem:[%s11 + $0x90] sm:$0xf]
    %v11929 = vld [vmem:[%s11 + $0x94] sm:$0xf]
    %v11930 = vld [vmem:[%s11 + $0x98] sm:$0xf]
    %v11931 = vld [vmem:[%s11 + $0x9c] sm:$0xf]
    %v11932 = vld [vmem:[%s11 + $0xa0] sm:$0xf]
    %v11933 = vld [vmem:[%s11 + $0xa4] sm:$0xf]
    %v11934 = vld [vmem:[%s11 + $0xa8] sm:$0xf]
    %v11935 = vld [vmem:[%s11 + $0xac] sm:$0xf]
    %v11936 = vld [vmem:[%s11 + $0xb0] sm:$0xf]
    %v11937 = vld [vmem:[%s11 + $0xb4] sm:$0xf]
    %v11938 = vld [vmem:[%s11 + $0xb8] sm:$0xf]
    %v11939 = vld [vmem:[%s11 + $0xbc] sm:$0xf]
    %v11940 = vld [vmem:[%s11 + $0xc0] sm:$0xf]
    %v11941 = vld [vmem:[%s11 + $0xc4] sm:$0xf]
    %v11942 = vld [vmem:[%s11 + $0xc8] sm:$0xf]
    %v11943 = vld [vmem:[%s11 + $0xcc] sm:$0xf]
    %v11944 = vld [vmem:[%s11 + $0xd0] sm:$0xf]
    %v11945 = vld [vmem:[%s11 + $0xd4] sm:$0xf]
    %v11946 = vld [vmem:[%s11 + $0xd8] sm:$0xf]
    %v11947 = vld [vmem:[%s11 + $0xdc] sm:$0xf]
    %v11948 = vld [vmem:[%s11 + $0xe0] sm:$0xf]
    %v11949 = vld [vmem:[%s11 + $0xe4] sm:$0xf]
    %v11950 = vld [vmem:[%s11 + $0xe8] sm:$0xf]
    %v11951 = vld [vmem:[%s11 + $0xec] sm:$0xf]
    %v11952 = vld [vmem:[%s11 + $0xf0] sm:$0xf]
    %v11953 = vld [vmem:[%s11 + $0xf4] sm:$0xf]
    %v11954 = vld [vmem:[%s11 + $0xf8] sm:$0xf]
    %v11955 = vld [vmem:[%s11 + $0xfc] sm:$0xf]
    %v11956 = vld [vmem:[%s11 + $0x100] sm:$0xf]
    %v11957 = vld [vmem:[%s11 + $0x104] sm:$0xf]
    %v11958 = vld [vmem:[%s11 + $0x108] sm:$0xf]
    %v11959 = vld [vmem:[%s11 + $0x10c] sm:$0xf]
    %v11960 = vld [vmem:[%s11 + $0x110] sm:$0xf]
    %v11961 = vld [vmem:[%s11 + $0x114] sm:$0xf]
    %v11962 = vld [vmem:[%s11 + $0x118] sm:$0xf]
    %v11963 = vld [vmem:[%s11 + $0x11c] sm:$0xf]
    %v11964 = vld [vmem:[%s11 + $0x120] sm:$0xf]
    %v11965 = vld [vmem:[%s11 + $0x124] sm:$0xf]
    %v11966 = vld [vmem:[%s11 + $0x128] sm:$0xf]
    %v11967 = vld [vmem:[%s11 + $0x12c] sm:$0xf]
    %v11968 = vld [vmem:[%s11 + $0x130] sm:$0xf]
    %v11969 = vld [vmem:[%s11 + $0x134] sm:$0xf]
    %v11970 = vld [vmem:[%s11 + $0x138] sm:$0xf]
    %v11971 = vld [vmem:[%s11 + $0x13c] sm:$0xf]
    %v11972 = vld [vmem:[%s11 + $0x140] sm:$0xf]
    %v11973 = vld [vmem:[%s11 + $0x144] sm:$0xf]
    %v11974 = vld [vmem:[%s11 + $0x148] sm:$0xf]
    %v11975 = vld [vmem:[%s11 + $0x14c] sm:$0xf]
    %v11976 = vld [vmem:[%s11 + $0x150] sm:$0xf]
    %v11977 = vld [vmem:[%s11 + $0x154] sm:$0xf]
    %v11978 = vld [vmem:[%s11 + $0x158] sm:$0xf]
    %v11979 = vld [vmem:[%s11 + $0x15c] sm:$0xf]
    %v11980 = vld [vmem:[%s11 + $0x160] sm:$0xf]
    %v11981 = vld [vmem:[%s11 + $0x164] sm:$0xf]
    %v11982 = vld [vmem:[%s11 + $0x168] sm:$0xf]
    %v11983 = vld [vmem:[%s11 + $0x16c] sm:$0xf]
    %v11984 = vld [vmem:[%s11 + $0x170] sm:$0xf]
    %v11985 = vld [vmem:[%s11 + $0x174] sm:$0xf]
    %v11986 = vld [vmem:[%s11 + $0x178] sm:$0xf]
    %v11987 = vld [vmem:[%s11 + $0x17c] sm:$0xf]
    %v11988 = vld [vmem:[%s11 + $0x180] sm:$0xf]
    %v11989 = vld [vmem:[%s11 + $0x184] sm:$0xf]
    %v11990 = vld [vmem:[%s12] sm:$0x1]
    %v11992 = vperm.slane %v11990, 0
    %v12092 = vunpack.c.l.b16 %v11892
    %v12093 = vunpack.c.l.b16 %v11893
    %v12094 = vunpack.c.l.b16 %v11894
    %v12095 = vunpack.c.l.b16 %v11895
    %v12096 = vunpack.c.l.b16 %v11896
    %v12097 = vunpack.c.l.b16 %v11897
    %v12098 = vunpack.c.l.b16 %v11898
    %v12099 = vunpack.c.l.b16 %v11899
    %v12100 = vunpack.c.l.b16 %v11900
    %v12101 = vunpack.c.l.b16 %v11901
    %v12102 = vunpack.c.l.b16 %v11902
    %v12103 = vunpack.c.l.b16 %v11903
    %v12104 = vunpack.c.l.b16 %v11904
    %v12105 = vunpack.c.l.b16 %v11905
    %v12106 = vunpack.c.l.b16 %v11906
    %v12107 = vunpack.c.l.b16 %v11907
    %v12108 = vunpack.c.l.b16 %v11908
    %v12109 = vunpack.c.l.b16 %v11909
    %v12110 = vunpack.c.l.b16 %v11910
    %v12111 = vunpack.c.l.b16 %v11911
    %v12112 = vunpack.c.l.b16 %v11912
    %v12113 = vunpack.c.l.b16 %v11913
    %v12114 = vunpack.c.l.b16 %v11914
    %v12115 = vunpack.c.l.b16 %v11915
    %v12116 = vunpack.c.l.b16 %v11916
    %v12117 = vunpack.c.l.b16 %v11917
    %v12118 = vunpack.c.l.b16 %v11918
    %v12119 = vunpack.c.l.b16 %v11919
    %v12120 = vunpack.c.l.b16 %v11920
    %v12121 = vunpack.c.l.b16 %v11921
    %v12122 = vunpack.c.l.b16 %v11922
    %v12123 = vunpack.c.l.b16 %v11923
    %v12124 = vunpack.c.l.b16 %v11924
    %v12125 = vunpack.c.l.b16 %v11925
    %v12126 = vunpack.c.l.b16 %v11926
    %v12127 = vunpack.c.l.b16 %v11927
    %v12128 = vunpack.c.l.b16 %v11928
    %v12129 = vunpack.c.l.b16 %v11929
    %v12130 = vunpack.c.l.b16 %v11930
    %v12131 = vunpack.c.l.b16 %v11931
    %v12132 = vunpack.c.l.b16 %v11932
    %v12133 = vunpack.c.l.b16 %v11933
    %v12134 = vunpack.c.l.b16 %v11934
    %v12135 = vunpack.c.l.b16 %v11935
    %v12136 = vunpack.c.l.b16 %v11936
    %v12137 = vunpack.c.l.b16 %v11937
    %v12138 = vunpack.c.l.b16 %v11938
    %v12139 = vunpack.c.l.b16 %v11939
    %v12140 = vunpack.c.l.b16 %v11940
    %v12141 = vunpack.c.l.b16 %v11941
    %v12142 = vunpack.c.l.b16 %v11942
    %v12143 = vunpack.c.l.b16 %v11943
    %v12144 = vunpack.c.l.b16 %v11944
    %v12145 = vunpack.c.l.b16 %v11945
    %v12146 = vunpack.c.l.b16 %v11946
    %v12147 = vunpack.c.l.b16 %v11947
    %v12148 = vunpack.c.l.b16 %v11948
    %v12149 = vunpack.c.l.b16 %v11949
    %v12150 = vunpack.c.l.b16 %v11950
    %v12151 = vunpack.c.l.b16 %v11951
    %v12152 = vunpack.c.l.b16 %v11952
    %v12153 = vunpack.c.l.b16 %v11953
    %v12154 = vunpack.c.l.b16 %v11954
    %v12155 = vunpack.c.l.b16 %v11955
    %v12156 = vunpack.c.l.b16 %v11956
    %v12157 = vunpack.c.l.b16 %v11957
    %v12158 = vunpack.c.l.b16 %v11958
    %v12159 = vunpack.c.l.b16 %v11959
    %v12160 = vunpack.c.l.b16 %v11960
    %v12161 = vunpack.c.l.b16 %v11961
    %v12162 = vunpack.c.l.b16 %v11962
    %v12163 = vunpack.c.l.b16 %v11963
    %v12164 = vunpack.c.l.b16 %v11964
    %v12165 = vunpack.c.l.b16 %v11965
    %v12166 = vunpack.c.l.b16 %v11966
    %v12167 = vunpack.c.l.b16 %v11967
    %v12168 = vunpack.c.l.b16 %v11968
    %v12169 = vunpack.c.l.b16 %v11969
    %v12170 = vunpack.c.l.b16 %v11970
    %v12171 = vunpack.c.l.b16 %v11971
    %v12172 = vunpack.c.l.b16 %v11972
    %v12173 = vunpack.c.l.b16 %v11973
    %v12174 = vunpack.c.l.b16 %v11974
    %v12175 = vunpack.c.l.b16 %v11975
    %v12176 = vunpack.c.l.b16 %v11976
    %v12177 = vunpack.c.l.b16 %v11977
    %v12178 = vunpack.c.l.b16 %v11978
    %v12179 = vunpack.c.l.b16 %v11979
    %v12180 = vunpack.c.l.b16 %v11980
    %v12181 = vunpack.c.l.b16 %v11981
    %v12182 = vunpack.c.l.b16 %v11982
    %v12183 = vunpack.c.l.b16 %v11983
    %v12184 = vunpack.c.l.b16 %v11984
    %v12185 = vunpack.c.l.b16 %v11985
    %v12186 = vunpack.c.l.b16 %v11986
    %v12187 = vunpack.c.l.b16 %v11987
    %v12188 = vunpack.c.l.b16 %v11988
    %v12189 = vunpack.c.l.b16 %v11989
    %v12190 = vpack.c.b16 %v12093, %v12092
    %v12191 = vpack.c.b16 %v12095, %v12094
    %v12192 = vpack.c.b16 %v12097, %v12096
    %v12193 = vpack.c.b16 %v12099, %v12098
    %v12194 = vpack.c.b16 %v12101, %v12100
    %v12195 = vpack.c.b16 %v12103, %v12102
    %v12196 = vpack.c.b16 %v12105, %v12104
    %v12197 = vpack.c.b16 %v12107, %v12106
    %v12198 = vpack.c.b16 %v12109, %v12108
    %v12199 = vpack.c.b16 %v12111, %v12110
    %v12200 = vpack.c.b16 %v12113, %v12112
    %v12201 = vpack.c.b16 %v12115, %v12114
    %v12202 = vpack.c.b16 %v12117, %v12116
    %v12203 = vpack.c.b16 %v12119, %v12118
    %v12204 = vpack.c.b16 %v12121, %v12120
    %v12205 = vpack.c.b16 %v12123, %v12122
    %v12206 = vpack.c.b16 %v12125, %v12124
    %v12207 = vpack.c.b16 %v12127, %v12126
    %v12208 = vpack.c.b16 %v12129, %v12128
    %v12209 = vpack.c.b16 %v12131, %v12130
    %v12210 = vpack.c.b16 %v12133, %v12132
    %v12211 = vpack.c.b16 %v12135, %v12134
    %v12212 = vpack.c.b16 %v12137, %v12136
    %v12213 = vpack.c.b16 %v12139, %v12138
    %v12214 = vpack.c.b16 %v12141, %v12140
    %v12215 = vpack.c.b16 %v12143, %v12142
    %v12216 = vpack.c.b16 %v12145, %v12144
    %v12217 = vpack.c.b16 %v12147, %v12146
    %v12218 = vpack.c.b16 %v12149, %v12148
    %v12219 = vpack.c.b16 %v12151, %v12150
    %v12220 = vpack.c.b16 %v12153, %v12152
    %v12221 = vpack.c.b16 %v12155, %v12154
    %v12222 = vpack.c.b16 %v12157, %v12156
    %v12223 = vpack.c.b16 %v12159, %v12158
    %v12224 = vpack.c.b16 %v12161, %v12160
    %v12225 = vpack.c.b16 %v12163, %v12162
    %v12226 = vpack.c.b16 %v12165, %v12164
    %v12227 = vpack.c.b16 %v12167, %v12166
    %v12228 = vpack.c.b16 %v12169, %v12168
    %v12229 = vpack.c.b16 %v12171, %v12170
    %v12230 = vpack.c.b16 %v12173, %v12172
    %v12231 = vpack.c.b16 %v12175, %v12174
    %v12232 = vpack.c.b16 %v12177, %v12176
    %v12233 = vpack.c.b16 %v12179, %v12178
    %v12234 = vpack.c.b16 %v12181, %v12180
    %v12235 = vpack.c.b16 %v12183, %v12182
    %v12236 = vpack.c.b16 %v12185, %v12184
    %v12237 = vpack.c.b16 %v12187, %v12186
    %v12238 = vpack.c.b16 %v12189, %v12188
    %v12289 = vsel %vm5132, %v11891, 0
    %12291 = vmatpush.bf16.msra.mxu0 %v12197
    %12292 = vmatpush.bf16.msra.mxu0 %v12196
    %12293 = vmatpush.bf16.msra.mxu0 %v12195
    %12294 = vmatpush.bf16.msra.mxu0 %v12194
    %12295 = vmatpush.bf16.msra.mxu0 %v12193
    %12296 = vmatpush.bf16.msra.mxu0 %v12192
    %12297 = vmatpush.bf16.msra.mxu0 %v12191
    %12298 = vmatpush.bf16.msra.mxu0 %v12190
    %12299 = vmatmul.bf16.gmra.mxu0 %v11885
    %v12300 = vpop.f32.mrf.mxu0
    %v12301 = vadd.f32 %v11992, %v12300
    %v12302 = vpop.f32.mrf.mxu0
    %12303 = vdwg.mxu0
    %12304 = vmatpush.bf16.msra.mxu0 %v12205
    %12305 = vmatpush.bf16.msra.mxu0 %v12204
    %12306 = vmatpush.bf16.msra.mxu0 %v12203
    %12307 = vmatpush.bf16.msra.mxu0 %v12202
    %12308 = vmatpush.bf16.msra.mxu0 %v12201
    %12309 = vmatpush.bf16.msra.mxu0 %v12200
    %12310 = vmatpush.bf16.msra.mxu0 %v12199
    %12311 = vmatpush.bf16.msra.mxu0 %v12198
    %12312 = vmatmul.bf16.gmra.mxu0 %v11886
    %v12313 = vpop.f32.mrf.mxu0
    %v12314 = vadd.f32 %v12301, %v12313
    %v12315 = vpop.f32.mrf.mxu0
    %12316 = vdwg.mxu0
    %12317 = vmatpush.bf16.msra.mxu0 %v12213
    %12318 = vmatpush.bf16.msra.mxu0 %v12212
    %12319 = vmatpush.bf16.msra.mxu0 %v12211
    %12320 = vmatpush.bf16.msra.mxu0 %v12210
    %12321 = vmatpush.bf16.msra.mxu0 %v12209
    %12322 = vmatpush.bf16.msra.mxu0 %v12208
    %12323 = vmatpush.bf16.msra.mxu0 %v12207
    %12324 = vmatpush.bf16.msra.mxu0 %v12206
    %12325 = vmatmul.bf16.gmra.mxu0 %v11887
    %v12326 = vpop.f32.mrf.mxu0
    %v12327 = vadd.f32 %v12314, %v12326
    %v12328 = vpop.f32.mrf.mxu0
    %12329 = vdwg.mxu0
    %12330 = vmatpush.bf16.msra.mxu0 %v12221
    %12331 = vmatpush.bf16.msra.mxu0 %v12220
    %12332 = vmatpush.bf16.msra.mxu0 %v12219
    %12333 = vmatpush.bf16.msra.mxu0 %v12218
    %12334 = vmatpush.bf16.msra.mxu0 %v12217
    %12335 = vmatpush.bf16.msra.mxu0 %v12216
    %12336 = vmatpush.bf16.msra.mxu0 %v12215
    %12337 = vmatpush.bf16.msra.mxu0 %v12214
    %12338 = vmatmul.bf16.gmra.mxu0 %v11888
    %v12339 = vpop.f32.mrf.mxu0
    %v12340 = vadd.f32 %v12327, %v12339
    %v12341 = vpop.f32.mrf.mxu0
    %12342 = vdwg.mxu0
    %12343 = vmatpush.bf16.msra.mxu0 %v12229
    %12344 = vmatpush.bf16.msra.mxu0 %v12228
    %12345 = vmatpush.bf16.msra.mxu0 %v12227
    %12346 = vmatpush.bf16.msra.mxu0 %v12226
    %12347 = vmatpush.bf16.msra.mxu0 %v12225
    %12348 = vmatpush.bf16.msra.mxu0 %v12224
    %12349 = vmatpush.bf16.msra.mxu0 %v12223
    %12350 = vmatpush.bf16.msra.mxu0 %v12222
    %12351 = vmatmul.bf16.gmra.mxu0 %v11889
    %v12352 = vpop.f32.mrf.mxu0
    %v12353 = vadd.f32 %v12340, %v12352
    %v12354 = vpop.f32.mrf.mxu0
    %12355 = vdwg.mxu0
    %12356 = vmatpush.bf16.msra.mxu0 %v12237
    %12357 = vmatpush.bf16.msra.mxu0 %v12236
    %12358 = vmatpush.bf16.msra.mxu0 %v12235
    %12359 = vmatpush.bf16.msra.mxu0 %v12234
    %12360 = vmatpush.bf16.msra.mxu0 %v12233
    %12361 = vmatpush.bf16.msra.mxu0 %v12232
    %12362 = vmatpush.bf16.msra.mxu0 %v12231
    %12363 = vmatpush.bf16.msra.mxu0 %v12230
    %12364 = vmatmul.bf16.gmra.mxu0 %v11890
    %v12365 = vpop.f32.mrf.mxu0
    %v12366 = vadd.f32 %v12353, %v12365
    %v12367 = vpop.f32.mrf.mxu0
    %12368 = vdwg.mxu0
    %12369 = vmatpush.bf16.msra.mxu0 0
    %12370 = vmatpush.bf16.msra.mxu0 0
    %12371 = vmatpush.bf16.msra.mxu0 0
    %12372 = vmatpush.bf16.msra.mxu0 0
    %12373 = vmatpush.bf16.msra.mxu0 0
    %12374 = vmatpush.bf16.msra.mxu0 0
    %12375 = vmatpush.bf16.msra.mxu0 0
    %12376 = vmatpush.bf16.msra.mxu0 %v12238
    %12377 = vmatmul.bf16.gmra.mxu0 %v12289
    %v12378 = vpop.f32.mrf.mxu0
    %v12379 = vadd.f32 %v12366, %v12378
    %v12380 = vpop.f32.mrf.mxu0
    %12381 = vdwg.mxu0
    %v12382 = vsub.f32 0.0, %v12379
    %v12383 = vmul.f32 %v12382, 1.442695
    %v12384 = vpow.pop %v12383
    %v12385 = vadd.f32 %v12384, 1.0
    %v12386 = vrcp.pop %v12385
    %12387 = vst [vmem:[%s13] sm:$0xff] %v12386
    // Predicated region
    $region58: #{convnet_forward.1} parent=1 // pred_check
      _
    $region59: #{convnet_forward.1} parent=1 // pred_check_branch
      %12389 = sbr.rel (0) target = $region61
    $region60: #{convnet_forward.1} parent=1 // pred_region
      _
    $region61: #{convnet_forward.1} parent=1 // pred_fallthru
      _
    // Predicated region
    $region62: #{convnet_forward.1} parent=1 // pred_check
      _
    $region63: #{convnet_forward.1} parent=1 // pred_check_branch
      %12391 = sbr.rel (0) target = $region65
    $region64: #{convnet_forward.1} parent=1 // pred_region
      _
    $region65: #{convnet_forward.1} parent=1 // pred_fallthru
      _
    %12392 = vsyncpa [#allocation3], 1

</llo_original>
